<compile_context>
chip_gen: v5e
topology: v5e:2x2
jax: 0.10.0
libtpu: 0.0.40
codegen_flags: <defaults>
</compile_context>

<pallas_src>
import jax
import jax.numpy as jnp
from jax.experimental import pallas as pl
from jax.experimental.pallas import tpu as pltpu


def _wfull(shape):
    nd = len(shape)
    return pl.BlockSpec(shape, lambda b, _nd=nd: (0,) * _nd)


# ----------------------------- fused kernel --------------------------------

def _make_kernel(H, W, C):
    HW = H * W
    f32 = jnp.float32
    bf16 = jnp.bfloat16

    def kernel(rd_ref, s_ref, sa_ref,
               in_w, in_s, in_b,
               rgb_wr, rgb_wd, rgb_s, rgb_b,
               ca_w1, ca_w2,
               sf_w, sf_s, sf_b,
               t3_w, t3_s, t3_b,
               t1_w, t1_s, t1_b,
               f3_w, f3_s, f3_b,
               f1_w, f1_s, f1_b,
               out_ref,
               pads_ref, pad3_ref, pad2_ref, imcol_ref, padsa_ref):

        def zero_halo(ref, off):
            # Interior is always fully overwritten right after; only the halo
            # (border strips) is zeroed, and it is re-zeroed every grid step.
            Hp, Wp, cin = ref.shape
            ref[0:off, :, :] = jnp.zeros((off, Wp, cin), bf16)
            ref[Hp - off:Hp, :, :] = jnp.zeros((off, Wp, cin), bf16)
            ref[off:Hp - off, 0:off, :] = jnp.zeros((Hp - 2 * off, off, cin), bf16)
            ref[off:Hp - off, Wp - off:Wp, :] = jnp.zeros((Hp - 2 * off, off, cin), bf16)

        def im2col_store(src_ref, off, dil, col0):
            # Store 9 taps directly into lane slices of the shared bf16 slab.
            cin = src_ref.shape[-1]
            for k in range(9):
                ky, kx = divmod(k, 3)
                y0 = off + (ky - 1) * dil
                x0 = off + (kx - 1) * dil
                tap = src_ref[y0:y0 + H, x0:x0 + W, :]
                imcol_ref[:, col0 + k * cin: col0 + (k + 1) * cin] = (
                    tap.reshape(HW, cin))

        def bn_relu(y, scl, bias):
            return jnp.maximum(y * scl[...] + bias[...], 0.0)

        # ------------------- rgb / depth branch -------------------
        # shared 1x1 conv on stacked [rgb; d] + folded BN + ReLU
        y = jnp.dot(rd_ref[0], in_w[...], preferred_element_type=f32)   # (2HW, C)
        y = bn_relu(y, in_s, in_b)
        rc, dc = y[:HW], y[HW:]
        s_rd = rc + dc
        # matches reference: rc*sig(rc) + dc*sig(rc) + rc  (and symmetric for d)
        r2 = jax.nn.sigmoid(rc) * s_rd + rc
        d2 = jax.nn.sigmoid(dc) * s_rd + dc
        # channel shuffle folded into (permuted, split) convrgb weights
        y = (jnp.dot(r2.astype(bf16), rgb_wr[...], preferred_element_type=f32)
             + jnp.dot(d2.astype(bf16), rgb_wd[...], preferred_element_type=f32))
        x1 = bn_relu(y, rgb_s, rgb_b)                                    # (HW, C)

        # ------------------- CBAM: channel attention -------------------
        pooled = jnp.concatenate(
            [jnp.mean(x1, axis=0, keepdims=True),
             jnp.max(x1, axis=0, keepdims=True)], axis=0)                # (2, C)
        h = jnp.maximum(
            jnp.dot(pooled, ca_w1[...], preferred_element_type=f32), 0.0)
        att = jnp.dot(h, ca_w2[...], preferred_element_type=f32)         # (2, C)
        ca = jax.nn.sigmoid(att[0:1] + att[1:2])                         # (1, C)
        x1 = x1 * ca                                                     # (HW, C)

        # ------------------- CBAM: spatial attention (3x3, VPU FMAs) ----
        x1sp = x1.reshape(H, W, C)
        padsa_ref[:, 0:1, :] = jnp.zeros((2, 1, W + 2), f32)
        padsa_ref[:, H + 1:H + 2, :] = jnp.zeros((2, 1, W + 2), f32)
        padsa_ref[:, 1:H + 1, 0:1] = jnp.zeros((2, H, 1), f32)
        padsa_ref[:, 1:H + 1, W + 1:W + 2] = jnp.zeros((2, H, 1), f32)
        padsa_ref[0:1, 1:H + 1, 1:W + 1] = jnp.mean(x1sp, axis=-1)[None]
        padsa_ref[1:2, 1:H + 1, 1:W + 1] = jnp.max(x1sp, axis=-1)[None]
        pm = padsa_ref[...]                                              # (2,H+2,W+2)
        sa_acc = jnp.zeros((H, W), f32)
        for t in range(2):                      # 18 scalar FMAs on the VPU
            for k in range(9):
                ky, kx = divmod(k, 3)
                sa_acc = sa_acc + sa_ref[t * 9 + k] * pm[t, ky:ky + H, kx:kx + W]
        sa = jax.nn.sigmoid(sa_acc)                                      # (H, W)
        rgbd_sp = x1sp * sa[:, :, None]                                  # (H, W, C)

        # ------------------- s branch: fused dilated pyramid -------------
        zero_halo(pads_ref, 3)
        pads_ref[3:H + 3, 3:W + 3, :] = s_ref[0]
        for d_idx, dil in enumerate((1, 2, 3)):
            im2col_store(pads_ref, 3, dil, d_idx * 9 * C)
        # one (HW, 27C) x block-diagonal (27C, 3C) matmul = concat(con1,2,3)
        sc3 = jnp.dot(imcol_ref[...], sf_w[...], preferred_element_type=f32)
        sc3 = bn_relu(sc3, sf_s, sf_b)                                   # (HW, 3C)

        zero_halo(pad3_ref, 1)
        pad3_ref[1:H + 1, 1:W + 1, :] = sc3.reshape(H, W, 3 * C).astype(bf16)
        im2col_store(pad3_ref, 1, 1, 0)
        t3 = jnp.dot(imcol_ref[...], t3_w[...], preferred_element_type=f32)
        t3 = bn_relu(t3, t3_s, t3_b)
        t1 = jnp.dot(t3.astype(bf16), t1_w[...], preferred_element_type=f32)
        t1 = bn_relu(t1, t1_s, t1_b)                                     # (HW, C)

        # ------------------- final fusion -------------------
        zero_halo(pad2_ref, 1)
        # branch outputs written directly into the padded-scratch interior
        pad2_ref[1:H + 1, 1:W + 1, 0:C] = t1.reshape(H, W, C).astype(bf16)
        pad2_ref[1:H + 1, 1:W + 1, C:2 * C] = rgbd_sp.astype(bf16)
        im2col_store(pad2_ref, 1, 1, 0)
        # channel shuffle folded into f3_w; only the first 18*C lanes are valid
        yf = jnp.dot(imcol_ref[:, 0:18 * C], f3_w[...], preferred_element_type=f32)
        yf = bn_relu(yf, f3_s, f3_b)
        yf = jnp.dot(yf.astype(bf16), f1_w[...], preferred_element_type=f32)
        yf = bn_relu(yf, f1_s, f1_b)                                     # (HW, C)
        out_ref[0] = yf

    return kernel


_WEIGHT_ORDER = ('in_w', 'in_s', 'in_b',
                 'rgb_wr', 'rgb_wd', 'rgb_s', 'rgb_b',
                 'ca_w1', 'ca_w2',
                 'sf_w', 'sf_s', 'sf_b',
                 't3_w', 't3_s', 't3_b',
                 't1_w', 't1_s', 't1_b',
                 'f3_w', 'f3_s', 'f3_b',
                 'f1_w', 'f1_s', 'f1_b')


def module_2_start_forward(rgb, d, s, P):
    """rgb, d, s: NCHW float32 tensors. P: prepared params (prepare_params)."""
    B, C, H, W = rgb.shape
    HW = H * W
    to_nhwc = lambda t: jnp.transpose(t, (0, 2, 3, 1))
    # stack rgb/d in the wrapper (fused with the transpose by XLA)
    rd = jnp.concatenate([to_nhwc(rgb).reshape(B, HW, C),
                          to_nhwc(d).reshape(B, HW, C)],
                         axis=1).astype(jnp.bfloat16)                    # (B,2HW,C)
    s_n = to_nhwc(s).astype(jnp.bfloat16)                                # (B,H,W,C)

    weights = [P[k] for k in _WEIGHT_ORDER]
    inputs = [rd, s_n, P['sa_w']] + weights

    in_specs = ([pl.BlockSpec((1, 2 * HW, C), lambda b: (b, 0, 0)),
                 pl.BlockSpec((1, H, W, C), lambda b: (b, 0, 0, 0)),
                 pl.BlockSpec(memory_space=pltpu.MemorySpace.SMEM)]
                + [_wfull(w.shape) for w in weights])

    out = pl.pallas_call(
        _make_kernel(H, W, C),
        out_shape=jax.ShapeDtypeStruct((B, HW, C), jnp.float32),
        grid=(B,),
        in_specs=in_specs,
        out_specs=pl.BlockSpec((1, HW, C), lambda b: (b, 0, 0)),
        scratch_shapes=[
            pltpu.VMEM((H + 6, W + 6, C), jnp.bfloat16),       # padded s
            pltpu.VMEM((H + 2, W + 2, 3 * C), jnp.bfloat16),   # padded pyramid
            pltpu.VMEM((H + 2, W + 2, 2 * C), jnp.bfloat16),   # padded fusion
            pltpu.VMEM((HW, 27 * C), jnp.bfloat16),            # shared im2col slab
            pltpu.VMEM((2, H + 2, W + 2), jnp.float32),        # padded mean/max
        ],
        compiler_params=pltpu.CompilerParams(
            dimension_semantics=("parallel",),
            vmem_limit_bytes=32 * 1024 * 1024),
    )(*inputs)

    return jnp.transpose(out.reshape(B, H, W, C), (0, 3, 1, 2))  # back to NCHW


# --------------------------- parameter creation -----------------------------

def init_params(key, C):
    kit = iter(jax.random.split(key, 64))

    def nrm(shape, scale=0.2):
        return jax.random.normal(next(kit), shape, jnp.float32) * scale

    def bn_fold(cout, conv_bias):
        # eval-mode BatchNorm folded with conv bias into scale / shift
        gamma = 1.0 + 0.1 * jax.random.normal(next(kit), (cout,), jnp.float32)
        beta = 0.1 * jax.random.normal(next(kit), (cout,), jnp.float32)
        mean = 0.1 * jax.random.normal(next(kit), (cout,), jnp.float32)
        var = 1.0 + 0.1 * jnp.abs(jax.random.normal(next(kit), (cout,), jnp.float32))
        scale = gamma / jnp.sqrt(var + 1e-5)
        bias = beta + scale * (conv_bias - mean)
        return scale.reshape(1, cout), bias.reshape(1, cout)

    P = {}
    P['in_w'] = nrm((C, C)); P['in_s'], P['in_b'] = bn_fold(C, nrm((C,)))
    P['rgb_w'] = nrm((2 * C, C)); P['rgb_s'], P['rgb_b'] = bn_fold(C, nrm((C,)))
    for name in ('c1', 'c2', 'c3'):                      # dilated 3x3 convs
        P[name + '_w'] = nrm((9, C, C))
        P[name + '_s'], P[name + '_b'] = bn_fold(C, nrm((C,)))
    P['t3_w'] = nrm((9, 3 * C, C)); P['t3_s'], P['t3_b'] = bn_fold(C, nrm((C,)))
    P['t1_w'] = nrm((C, C));        P['t1_s'], P['t1_b'] = bn_fold(C, nrm((C,)))
    P['f3_w'] = nrm((9, 2 * C, C)); P['f3_s'], P['f3_b'] = bn_fold(C, nrm((C,)))
    P['f1_w'] = nrm((C, C));        P['f1_s'], P['f1_b'] = bn_fold(C, nrm((C,)))
    hidden = max(C // 16, 1)                             # CBAM ratio=16
    P['ca_w1'] = nrm((C, hidden))
    P['ca_w2'] = nrm((hidden, C))
    P['sa_w'] = nrm((9, 2))                              # 3x3 spatial-attn conv
    return P


def prepare_params(P, C):
    """One-time weight preprocessing: fold channel shuffles into conv weights,
    build the block-diagonal fused dilated-conv weight, flatten 3x3 weights
    into im2col (9*Cin, Cout) layout, and cast matmul weights to bf16."""
    bf16 = jnp.bfloat16

    def shuffle_inv_perm(nch, groups=4):
        cpg = nch // groups
        perm = jnp.arange(nch).reshape(groups, cpg).T.reshape(-1)
        return jnp.argsort(perm)

    Q = {}
    Q['in_w'] = P['in_w'].astype(bf16)
    Q['in_s'], Q['in_b'] = P['in_s'], P['in_b']
    # channel_shuffle(cat([rgb, d]), 4) + 1x1 conv == permuted-row 1x1 conv,
    # split so the kernel never materialises the (HW, 2C) concat.
    inv2 = shuffle_inv_perm(2 * C)
    rgb_wp = P['rgb_w'][inv2, :]
    Q['rgb_wr'] = rgb_wp[:C].astype(bf16)
    Q['rgb_wd'] = rgb_wp[C:].astype(bf16)
    Q['rgb_s'], Q['rgb_b'] = P['rgb_s'], P['rgb_b']
    Q['ca_w1'], Q['ca_w2'] = P['ca_w1'], P['ca_w2']
    # fused block-diagonal weight for con_1/con_2/con_3 (dilations 1,2,3)
    sf = jnp.zeros((27 * C, 3 * C), jnp.float32)
    for i, name in enumerate(('c1', 'c2', 'c3')):
        sf = sf.at[i * 9 * C:(i + 1) * 9 * C, i * C:(i + 1) * C].set(
            P[name + '_w'].reshape(9 * C, C))
    Q['sf_w'] = sf.astype(bf16)
    Q['sf_s'] = jnp.concatenate([P['c1_s'], P['c2_s'], P['c3_s']], axis=-1)
    Q['sf_b'] = jnp.concatenate([P['c1_b'], P['c2_b'], P['c3_b']], axis=-1)
    Q['t3_w'] = P['t3_w'].reshape(9 * 3 * C, C).astype(bf16)
    Q['t3_s'], Q['t3_b'] = P['t3_s'], P['t3_b']
    Q['t1_w'] = P['t1_w'].astype(bf16)
    Q['t1_s'], Q['t1_b'] = P['t1_s'], P['t1_b']
    # channel_shuffle(cat([t, rgb_d]), 4) + 3x3 conv == permuted-Cin 3x3 conv
    Q['f3_w'] = P['f3_w'][:, inv2, :].reshape(9 * 2 * C, C).astype(bf16)
    Q['f3_s'], Q['f3_b'] = P['f3_s'], P['f3_b']
    Q['f1_w'] = P['f1_w'].astype(bf16)
    Q['f1_s'], Q['f1_b'] = P['f1_s'], P['f1_b']
    # spatial-attention weights flattened to 18 SMEM scalars,
    # layout [map (mean,max) major, tap minor] matching the kernel loop order.
    Q['sa_w'] = P['sa_w'].T.reshape(-1)                  # (18,) f32
    return Q


# ----------------------------------- main ------------------------------------

if __name__ == "__main__":
    key = jax.random.PRNGKey(0)
    B, C, H, W = 2, 16, 8, 8          # inchannel=16 (divisible by ratio=16)
    kp, kr, kd, ks = jax.random.split(key, 4)
    params = prepare_params(init_params(kp, C), C)

    rgb = jax.random.normal(kr, (B, C, H, W), jnp.float32)
    d = jax.random.normal(kd, (B, C, H, W), jnp.float32)
    s = jax.random.normal(ks, (B, C, H, W), jnp.float32)

    fwd = jax.jit(lambda r, dd, ss: module_2_start_forward(r, dd, ss, params))
    out = fwd(rgb, d, s)
    jax.block_until_ready(out)
    assert out.shape == (B, C, H, W)
    assert bool(jnp.all(jnp.isfinite(out)))
    print("KERNEL_OK")
</pallas_src>

<mosaic_0001>
module attributes {stable_mosaic.version = 11 : i64} {
  func.func @kernel(%arg0: i32, %arg1: memref<1x128x16xbf16, #tpu.memory_space<vmem>>, %arg2: memref<1x8x8x16xbf16, #tpu.memory_space<vmem>>, %arg3: memref<18xf32, #tpu.memory_space<smem>>, %arg4: memref<16x16xbf16, #tpu.memory_space<vmem>>, %arg5: memref<1x16xf32, #tpu.memory_space<vmem>>, %arg6: memref<1x16xf32, #tpu.memory_space<vmem>>, %arg7: memref<16x16xbf16, #tpu.memory_space<vmem>>, %arg8: memref<16x16xbf16, #tpu.memory_space<vmem>>, %arg9: memref<1x16xf32, #tpu.memory_space<vmem>>, %arg10: memref<1x16xf32, #tpu.memory_space<vmem>>, %arg11: memref<16x1xf32, #tpu.memory_space<vmem>>, %arg12: memref<1x16xf32, #tpu.memory_space<vmem>>, %arg13: memref<432x48xbf16, #tpu.memory_space<vmem>>, %arg14: memref<1x48xf32, #tpu.memory_space<vmem>>, %arg15: memref<1x48xf32, #tpu.memory_space<vmem>>, %arg16: memref<432x16xbf16, #tpu.memory_space<vmem>>, %arg17: memref<1x16xf32, #tpu.memory_space<vmem>>, %arg18: memref<1x16xf32, #tpu.memory_space<vmem>>, %arg19: memref<16x16xbf16, #tpu.memory_space<vmem>>, %arg20: memref<1x16xf32, #tpu.memory_space<vmem>>, %arg21: memref<1x16xf32, #tpu.memory_space<vmem>>, %arg22: memref<288x16xbf16, #tpu.memory_space<vmem>>, %arg23: memref<1x16xf32, #tpu.memory_space<vmem>>, %arg24: memref<1x16xf32, #tpu.memory_space<vmem>>, %arg25: memref<16x16xbf16, #tpu.memory_space<vmem>>, %arg26: memref<1x16xf32, #tpu.memory_space<vmem>>, %arg27: memref<1x16xf32, #tpu.memory_space<vmem>>, %arg28: memref<1x64x16xf32, #tpu.memory_space<vmem>>, %arg29: memref<14x14x16xbf16, #tpu.memory_space<vmem>>, %arg30: memref<10x10x48xbf16, #tpu.memory_space<vmem>>, %arg31: memref<10x10x32xbf16, #tpu.memory_space<vmem>>, %arg32: memref<64x432xbf16, #tpu.memory_space<vmem>>, %arg33: memref<2x10x10xf32, #tpu.memory_space<vmem>>) attributes {dimension_semantics = [#tpu.dimension_semantics<parallel>], iteration_bounds = array<i64: 2>, scalar_prefetch = 0 : i64, scratch_operands = 5 : i64, tpu.core_type = #tpu.core_type<tc>, window_params = [{transform_indices = @transform_0, window_bounds = array<i64: 1, 128, 16>}, {transform_indices = @transform_1, window_bounds = array<i64: 1, 8, 8, 16>}, {transform_indices = @transform_2, window_bounds = array<i64: 18>}, {pipeline_mode = #tpu.pipeline_mode<synchronous>, transform_indices = @transform_3, window_bounds = array<i64: 16, 16>}, {pipeline_mode = #tpu.pipeline_mode<synchronous>, transform_indices = @transform_4, window_bounds = array<i64: 1, 16>}, {pipeline_mode = #tpu.pipeline_mode<synchronous>, transform_indices = @transform_5, window_bounds = array<i64: 1, 16>}, {pipeline_mode = #tpu.pipeline_mode<synchronous>, transform_indices = @transform_6, window_bounds = array<i64: 16, 16>}, {pipeline_mode = #tpu.pipeline_mode<synchronous>, transform_indices = @transform_7, window_bounds = array<i64: 16, 16>}, {pipeline_mode = #tpu.pipeline_mode<synchronous>, transform_indices = @transform_8, window_bounds = array<i64: 1, 16>}, {pipeline_mode = #tpu.pipeline_mode<synchronous>, transform_indices = @transform_9, window_bounds = array<i64: 1, 16>}, {pipeline_mode = #tpu.pipeline_mode<synchronous>, transform_indices = @transform_10, window_bounds = array<i64: 16, 1>}, {pipeline_mode = #tpu.pipeline_mode<synchronous>, transform_indices = @transform_11, window_bounds = array<i64: 1, 16>}, {pipeline_mode = #tpu.pipeline_mode<synchronous>, transform_indices = @transform_12, window_bounds = array<i64: 432, 48>}, {pipeline_mode = #tpu.pipeline_mode<synchronous>, transform_indices = @transform_13, window_bounds = array<i64: 1, 48>}, {pipeline_mode = #tpu.pipeline_mode<synchronous>, transform_indices = @transform_14, window_bounds = array<i64: 1, 48>}, {pipeline_mode = #tpu.pipeline_mode<synchronous>, transform_indices = @transform_15, window_bounds = array<i64: 432, 16>}, {pipeline_mode = #tpu.pipeline_mode<synchronous>, transform_indices = @transform_16, window_bounds = array<i64: 1, 16>}, {pipeline_mode = #tpu.pipeline_mode<synchronous>, transform_indices = @transform_17, window_bounds = array<i64: 1, 16>}, {pipeline_mode = #tpu.pipeline_mode<synchronous>, transform_indices = @transform_18, window_bounds = array<i64: 16, 16>}, {pipeline_mode = #tpu.pipeline_mode<synchronous>, transform_indices = @transform_19, window_bounds = array<i64: 1, 16>}, {pipeline_mode = #tpu.pipeline_mode<synchronous>, transform_indices = @transform_20, window_bounds = array<i64: 1, 16>}, {pipeline_mode = #tpu.pipeline_mode<synchronous>, transform_indices = @transform_21, window_bounds = array<i64: 288, 16>}, {pipeline_mode = #tpu.pipeline_mode<synchronous>, transform_indices = @transform_22, window_bounds = array<i64: 1, 16>}, {pipeline_mode = #tpu.pipeline_mode<synchronous>, transform_indices = @transform_23, window_bounds = array<i64: 1, 16>}, {pipeline_mode = #tpu.pipeline_mode<synchronous>, transform_indices = @transform_24, window_bounds = array<i64: 16, 16>}, {pipeline_mode = #tpu.pipeline_mode<synchronous>, transform_indices = @transform_25, window_bounds = array<i64: 1, 16>}, {pipeline_mode = #tpu.pipeline_mode<synchronous>, transform_indices = @transform_26, window_bounds = array<i64: 1, 16>}, {transform_indices = @transform_27, window_bounds = array<i64: 1, 64, 16>}]} {
    %c0 = arith.constant 0 : index
    %c0_0 = arith.constant 0 : index
    %c0_1 = arith.constant 0 : index
    %0 = vector.load %arg1[%c0, %c0_0, %c0_1] : memref<1x128x16xbf16, #tpu.memory_space<vmem>>, vector<1x128x16xbf16>
    %1 = vector.shape_cast %0 : vector<1x128x16xbf16> to vector<128x16xbf16>
    %c0_2 = arith.constant 0 : index
    %c0_3 = arith.constant 0 : index
    %2 = vector.load %arg4[%c0_2, %c0_3] : memref<16x16xbf16, #tpu.memory_space<vmem>>, vector<16x16xbf16>
    %cst = arith.constant dense<0.000000e+00> : vector<128x16xf32>
    %3 = tpu.matmul %1, %2, %cst {dimension_numbers = #tpu.dot_dimension_numbers<[1], [0], [0], [1], [0, 0, 1, 1], [], []>} : vector<128x16xbf16>, vector<16x16xbf16>, vector<128x16xf32> -> vector<128x16xf32>
    %c0_4 = arith.constant 0 : index
    %c0_5 = arith.constant 0 : index
    %4 = vector.load %arg5[%c0_4, %c0_5] : memref<1x16xf32, #tpu.memory_space<vmem>>, vector<1x16xf32>
    %5 = vector.broadcast %4 : vector<1x16xf32> to vector<128x16xf32>
    %6 = arith.mulf %3, %5 : vector<128x16xf32>
    %c0_6 = arith.constant 0 : index
    %c0_7 = arith.constant 0 : index
    %7 = vector.load %arg6[%c0_6, %c0_7] : memref<1x16xf32, #tpu.memory_space<vmem>>, vector<1x16xf32>
    %8 = vector.broadcast %7 : vector<1x16xf32> to vector<128x16xf32>
    %9 = arith.addf %6, %8 : vector<128x16xf32>
    %cst_8 = arith.constant 0.000000e+00 : f32
    %10 = vector.broadcast %cst_8 : f32 to vector<128x16xf32>
    %11 = arith.maximumf %9, %10 : vector<128x16xf32>
    %12 = vector.extract_strided_slice %11 {offsets = [0, 0], sizes = [64, 16], strides = [1, 1]} : vector<128x16xf32> to vector<64x16xf32>
    %13 = vector.extract_strided_slice %11 {offsets = [64, 0], sizes = [64, 16], strides = [1, 1]} : vector<128x16xf32> to vector<64x16xf32>
    %14 = arith.addf %12, %13 : vector<64x16xf32>
    %15 = arith.negf %12 : vector<64x16xf32>
    %16 = math.exp %15 : vector<64x16xf32>
    %cst_9 = arith.constant 1.000000e+00 : f32
    %17 = vector.broadcast %cst_9 : f32 to vector<64x16xf32>
    %18 = arith.addf %17, %16 : vector<64x16xf32>
    %19 = arith.divf %17, %18 : vector<64x16xf32>
    %20 = arith.mulf %19, %14 : vector<64x16xf32>
    %21 = arith.addf %20, %12 : vector<64x16xf32>
    %22 = arith.negf %13 : vector<64x16xf32>
    %23 = math.exp %22 : vector<64x16xf32>
    %cst_10 = arith.constant 1.000000e+00 : f32
    %24 = vector.broadcast %cst_10 : f32 to vector<64x16xf32>
    %25 = arith.addf %24, %23 : vector<64x16xf32>
    %26 = arith.divf %24, %25 : vector<64x16xf32>
    %27 = arith.mulf %26, %14 : vector<64x16xf32>
    %28 = arith.addf %27, %13 : vector<64x16xf32>
    %29 = arith.truncf %21 : vector<64x16xf32> to vector<64x16xbf16>
    %c0_11 = arith.constant 0 : index
    %c0_12 = arith.constant 0 : index
    %30 = vector.load %arg7[%c0_11, %c0_12] : memref<16x16xbf16, #tpu.memory_space<vmem>>, vector<16x16xbf16>
    %cst_13 = arith.constant dense<0.000000e+00> : vector<64x16xf32>
    %31 = tpu.matmul %29, %30, %cst_13 {dimension_numbers = #tpu.dot_dimension_numbers<[1], [0], [0], [1], [0, 0, 1, 1], [], []>} : vector<64x16xbf16>, vector<16x16xbf16>, vector<64x16xf32> -> vector<64x16xf32>
    %32 = arith.truncf %28 : vector<64x16xf32> to vector<64x16xbf16>
    %c0_14 = arith.constant 0 : index
    %c0_15 = arith.constant 0 : index
    %33 = vector.load %arg8[%c0_14, %c0_15] : memref<16x16xbf16, #tpu.memory_space<vmem>>, vector<16x16xbf16>
    %cst_16 = arith.constant dense<0.000000e+00> : vector<64x16xf32>
    %34 = tpu.matmul %32, %33, %cst_16 {dimension_numbers = #tpu.dot_dimension_numbers<[1], [0], [0], [1], [0, 0, 1, 1], [], []>} : vector<64x16xbf16>, vector<16x16xbf16>, vector<64x16xf32> -> vector<64x16xf32>
    %35 = arith.addf %31, %34 : vector<64x16xf32>
    %c0_17 = arith.constant 0 : index
    %c0_18 = arith.constant 0 : index
    %36 = vector.load %arg9[%c0_17, %c0_18] : memref<1x16xf32, #tpu.memory_space<vmem>>, vector<1x16xf32>
    %37 = vector.broadcast %36 : vector<1x16xf32> to vector<64x16xf32>
    %38 = arith.mulf %35, %37 : vector<64x16xf32>
    %c0_19 = arith.constant 0 : index
    %c0_20 = arith.constant 0 : index
    %39 = vector.load %arg10[%c0_19, %c0_20] : memref<1x16xf32, #tpu.memory_space<vmem>>, vector<1x16xf32>
    %40 = vector.broadcast %39 : vector<1x16xf32> to vector<64x16xf32>
    %41 = arith.addf %38, %40 : vector<64x16xf32>
    %cst_21 = arith.constant 0.000000e+00 : f32
    %42 = vector.broadcast %cst_21 : f32 to vector<64x16xf32>
    %43 = arith.maximumf %41, %42 : vector<64x16xf32>
    %cst_22 = arith.constant dense<0.000000e+00> : vector<16xf32>
    %44 = vector.multi_reduction <add>, %43, %cst_22 [0] : vector<64x16xf32> to vector<16xf32>
    %45 = vector.shape_cast %44 : vector<16xf32> to vector<1x16xf32>
    %cst_23 = arith.constant 6.400000e+01 : f32
    %46 = vector.broadcast %cst_23 : f32 to vector<1x16xf32>
    %47 = arith.divf %45, %46 : vector<1x16xf32>
    %cst_24 = arith.constant dense<0xFF800000> : vector<16xf32>
    %48 = vector.multi_reduction <maximumf>, %43, %cst_24 [0] : vector<64x16xf32> to vector<16xf32>
    %49 = vector.shape_cast %48 : vector<16xf32> to vector<1x16xf32>
    %50 = tpu.concatenate %47, %49 in 0 : vector<1x16xf32>, vector<1x16xf32> -> vector<2x16xf32>
    %c0_25 = arith.constant 0 : index
    %c0_26 = arith.constant 0 : index
    %51 = vector.load %arg11[%c0_25, %c0_26] : memref<16x1xf32, #tpu.memory_space<vmem>>, vector<16x1xf32>
    %cst_27 = arith.constant dense<0.000000e+00> : vector<2x1xf32>
    %52 = tpu.matmul %50, %51, %cst_27 {dimension_numbers = #tpu.dot_dimension_numbers<[1], [0], [0], [1], [0, 0, 1, 1], [], []>} : vector<2x16xf32>, vector<16x1xf32>, vector<2x1xf32> -> vector<2x1xf32>
    %cst_28 = arith.constant 0.000000e+00 : f32
    %53 = vector.broadcast %cst_28 : f32 to vector<2x1xf32>
    %54 = arith.maximumf %52, %53 : vector<2x1xf32>
    %c0_29 = arith.constant 0 : index
    %c0_30 = arith.constant 0 : index
    %55 = vector.load %arg12[%c0_29, %c0_30] : memref<1x16xf32, #tpu.memory_space<vmem>>, vector<1x16xf32>
    %cst_31 = arith.constant dense<0.000000e+00> : vector<2x16xf32>
    %56 = tpu.matmul %54, %55, %cst_31 {dimension_numbers = #tpu.dot_dimension_numbers<[1], [0], [0], [1], [0, 0, 1, 1], [], []>} : vector<2x1xf32>, vector<1x16xf32>, vector<2x16xf32> -> vector<2x16xf32>
    %57 = vector.extract_strided_slice %56 {offsets = [0, 0], sizes = [1, 16], strides = [1, 1]} : vector<2x16xf32> to vector<1x16xf32>
    %58 = vector.extract_strided_slice %56 {offsets = [1, 0], sizes = [1, 16], strides = [1, 1]} : vector<2x16xf32> to vector<1x16xf32>
    %59 = arith.addf %57, %58 : vector<1x16xf32>
    %60 = arith.negf %59 : vector<1x16xf32>
    %61 = math.exp %60 : vector<1x16xf32>
    %cst_32 = arith.constant 1.000000e+00 : f32
    %62 = vector.broadcast %cst_32 : f32 to vector<1x16xf32>
    %63 = arith.addf %62, %61 : vector<1x16xf32>
    %64 = arith.divf %62, %63 : vector<1x16xf32>
    %65 = vector.broadcast %64 : vector<1x16xf32> to vector<64x16xf32>
    %66 = arith.mulf %43, %65 : vector<64x16xf32>
    %67 = vector.shape_cast %66 : vector<64x16xf32> to vector<8x8x16xf32>
    %cst_33 = arith.constant 0.000000e+00 : f32
    %68 = vector.broadcast %cst_33 : f32 to vector<2x1x10xf32>
    %c0_34 = arith.constant 0 : index
    %c0_35 = arith.constant 0 : index
    %c0_36 = arith.constant 0 : index
    %69 = vector.load %arg33[%c0_34, %c0_35, %c0_36] : memref<2x10x10xf32, #tpu.memory_space<vmem>>, vector<2x1x10xf32>
    tpu.vector_store %arg33[%c0_34, %c0_35, %c0_36], %68 {strides = array<i32>} : memref<2x10x10xf32, #tpu.memory_space<vmem>>, vector<2x1x10xf32>,
    %cst_37 = arith.constant 0.000000e+00 : f32
    %70 = vector.broadcast %cst_37 : f32 to vector<2x1x10xf32>
    %c0_38 = arith.constant 0 : index
    %c9 = arith.constant 9 : index
    %c0_39 = arith.constant 0 : index
    %71 = vector.load %arg33[%c0_38, %c9, %c0_39] : memref<2x10x10xf32, #tpu.memory_space<vmem>>, vector<2x1x10xf32>
    tpu.vector_store %arg33[%c0_38, %c9, %c0_39], %70 {strides = array<i32>} : memref<2x10x10xf32, #tpu.memory_space<vmem>>, vector<2x1x10xf32>,
    %cst_40 = arith.constant 0.000000e+00 : f32
    %72 = vector.broadcast %cst_40 : f32 to vector<2x8x1xf32>
    %c0_41 = arith.constant 0 : index
    %c1 = arith.constant 1 : index
    %c0_42 = arith.constant 0 : index
    %73 = vector.load %arg33[%c0_41, %c1, %c0_42] : memref<2x10x10xf32, #tpu.memory_space<vmem>>, vector<2x8x1xf32>
    tpu.vector_store %arg33[%c0_41, %c1, %c0_42], %72 {strides = array<i32>} : memref<2x10x10xf32, #tpu.memory_space<vmem>>, vector<2x8x1xf32>,
    %cst_43 = arith.constant 0.000000e+00 : f32
    %74 = vector.broadcast %cst_43 : f32 to vector<2x8x1xf32>
    %c0_44 = arith.constant 0 : index
    %c1_45 = arith.constant 1 : index
    %c9_46 = arith.constant 9 : index
    %75 = vector.load %arg33[%c0_44, %c1_45, %c9_46] : memref<2x10x10xf32, #tpu.memory_space<vmem>>, vector<2x8x1xf32>
    tpu.vector_store %arg33[%c0_44, %c1_45, %c9_46], %74 {strides = array<i32>} : memref<2x10x10xf32, #tpu.memory_space<vmem>>, vector<2x8x1xf32>,
    %cst_47 = arith.constant dense<0.000000e+00> : vector<8x8xf32>
    %76 = vector.multi_reduction <add>, %67, %cst_47 [2] : vector<8x8x16xf32> to vector<8x8xf32>
    %cst_48 = arith.constant 1.600000e+01 : f32
    %77 = vector.broadcast %cst_48 : f32 to vector<8x8xf32>
    %78 = arith.divf %76, %77 : vector<8x8xf32>
    %79 = vector.shape_cast %78 : vector<8x8xf32> to vector<1x8x8xf32>
    %c0_49 = arith.constant 0 : index
    %c1_50 = arith.constant 1 : index
    %c1_51 = arith.constant 1 : index
    %80 = vector.load %arg33[%c0_49, %c1_50, %c1_51] : memref<2x10x10xf32, #tpu.memory_space<vmem>>, vector<1x8x8xf32>
    tpu.vector_store %arg33[%c0_49, %c1_50, %c1_51], %79 {strides = array<i32>} : memref<2x10x10xf32, #tpu.memory_space<vmem>>, vector<1x8x8xf32>,
    %cst_52 = arith.constant dense<0xFF800000> : vector<8x8xf32>
    %81 = vector.multi_reduction <maximumf>, %67, %cst_52 [2] : vector<8x8x16xf32> to vector<8x8xf32>
    %82 = vector.shape_cast %81 : vector<8x8xf32> to vector<1x8x8xf32>
    %c1_53 = arith.constant 1 : index
    %c1_54 = arith.constant 1 : index
    %c1_55 = arith.constant 1 : index
    %83 = vector.load %arg33[%c1_53, %c1_54, %c1_55] : memref<2x10x10xf32, #tpu.memory_space<vmem>>, vector<1x8x8xf32>
    tpu.vector_store %arg33[%c1_53, %c1_54, %c1_55], %82 {strides = array<i32>} : memref<2x10x10xf32, #tpu.memory_space<vmem>>, vector<1x8x8xf32>,
    %c0_56 = arith.constant 0 : index
    %c0_57 = arith.constant 0 : index
    %c0_58 = arith.constant 0 : index
    %84 = vector.load %arg33[%c0_56, %c0_57, %c0_58] : memref<2x10x10xf32, #tpu.memory_space<vmem>>, vector<2x10x10xf32>
    %cst_59 = arith.constant 0.000000e+00 : f32
    %85 = vector.broadcast %cst_59 : f32 to vector<8x8xf32>
    %c0_60 = arith.constant 0 : index
    %86 = memref.load %arg3[%c0_60] : memref<18xf32, #tpu.memory_space<smem>>
    %87 = vector.extract_strided_slice %84 {offsets = [0, 0, 0], sizes = [1, 8, 8], strides = [1, 1, 1]} : vector<2x10x10xf32> to vector<1x8x8xf32>
    %88 = vector.shape_cast %87 : vector<1x8x8xf32> to vector<8x8xf32>
    %89 = vector.broadcast %86 : f32 to vector<8x8xf32>
    %90 = arith.mulf %89, %88 : vector<8x8xf32>
    %91 = arith.addf %85, %90 : vector<8x8xf32>
    %c1_61 = arith.constant 1 : index
    %92 = memref.load %arg3[%c1_61] : memref<18xf32, #tpu.memory_space<smem>>
    %93 = vector.extract_strided_slice %84 {offsets = [0, 0, 1], sizes = [1, 8, 8], strides = [1, 1, 1]} : vector<2x10x10xf32> to vector<1x8x8xf32>
    %94 = vector.shape_cast %93 : vector<1x8x8xf32> to vector<8x8xf32>
    %95 = vector.broadcast %92 : f32 to vector<8x8xf32>
    %96 = arith.mulf %95, %94 : vector<8x8xf32>
    %97 = arith.addf %91, %96 : vector<8x8xf32>
    %c2 = arith.constant 2 : index
    %98 = memref.load %arg3[%c2] : memref<18xf32, #tpu.memory_space<smem>>
    %99 = vector.extract_strided_slice %84 {offsets = [0, 0, 2], sizes = [1, 8, 8], strides = [1, 1, 1]} : vector<2x10x10xf32> to vector<1x8x8xf32>
    %100 = vector.shape_cast %99 : vector<1x8x8xf32> to vector<8x8xf32>
    %101 = vector.broadcast %98 : f32 to vector<8x8xf32>
    %102 = arith.mulf %101, %100 : vector<8x8xf32>
    %103 = arith.addf %97, %102 : vector<8x8xf32>
    %c3 = arith.constant 3 : index
    %104 = memref.load %arg3[%c3] : memref<18xf32, #tpu.memory_space<smem>>
    %105 = vector.extract_strided_slice %84 {offsets = [0, 1, 0], sizes = [1, 8, 8], strides = [1, 1, 1]} : vector<2x10x10xf32> to vector<1x8x8xf32>
    %106 = vector.shape_cast %105 : vector<1x8x8xf32> to vector<8x8xf32>
    %107 = vector.broadcast %104 : f32 to vector<8x8xf32>
    %108 = arith.mulf %107, %106 : vector<8x8xf32>
    %109 = arith.addf %103, %108 : vector<8x8xf32>
    %c4 = arith.constant 4 : index
    %110 = memref.load %arg3[%c4] : memref<18xf32, #tpu.memory_space<smem>>
    %111 = vector.extract_strided_slice %84 {offsets = [0, 1, 1], sizes = [1, 8, 8], strides = [1, 1, 1]} : vector<2x10x10xf32> to vector<1x8x8xf32>
    %112 = vector.shape_cast %111 : vector<1x8x8xf32> to vector<8x8xf32>
    %113 = vector.broadcast %110 : f32 to vector<8x8xf32>
    %114 = arith.mulf %113, %112 : vector<8x8xf32>
    %115 = arith.addf %109, %114 : vector<8x8xf32>
    %c5 = arith.constant 5 : index
    %116 = memref.load %arg3[%c5] : memref<18xf32, #tpu.memory_space<smem>>
    %117 = vector.extract_strided_slice %84 {offsets = [0, 1, 2], sizes = [1, 8, 8], strides = [1, 1, 1]} : vector<2x10x10xf32> to vector<1x8x8xf32>
    %118 = vector.shape_cast %117 : vector<1x8x8xf32> to vector<8x8xf32>
    %119 = vector.broadcast %116 : f32 to vector<8x8xf32>
    %120 = arith.mulf %119, %118 : vector<8x8xf32>
    %121 = arith.addf %115, %120 : vector<8x8xf32>
    %c6 = arith.constant 6 : index
    %122 = memref.load %arg3[%c6] : memref<18xf32, #tpu.memory_space<smem>>
    %123 = vector.extract_strided_slice %84 {offsets = [0, 2, 0], sizes = [1, 8, 8], strides = [1, 1, 1]} : vector<2x10x10xf32> to vector<1x8x8xf32>
    %124 = vector.shape_cast %123 : vector<1x8x8xf32> to vector<8x8xf32>
    %125 = vector.broadcast %122 : f32 to vector<8x8xf32>
    %126 = arith.mulf %125, %124 : vector<8x8xf32>
    %127 = arith.addf %121, %126 : vector<8x8xf32>
    %c7 = arith.constant 7 : index
    %128 = memref.load %arg3[%c7] : memref<18xf32, #tpu.memory_space<smem>>
    %129 = vector.extract_strided_slice %84 {offsets = [0, 2, 1], sizes = [1, 8, 8], strides = [1, 1, 1]} : vector<2x10x10xf32> to vector<1x8x8xf32>
    %130 = vector.shape_cast %129 : vector<1x8x8xf32> to vector<8x8xf32>
    %131 = vector.broadcast %128 : f32 to vector<8x8xf32>
    %132 = arith.mulf %131, %130 : vector<8x8xf32>
    %133 = arith.addf %127, %132 : vector<8x8xf32>
    %c8 = arith.constant 8 : index
    %134 = memref.load %arg3[%c8] : memref<18xf32, #tpu.memory_space<smem>>
    %135 = vector.extract_strided_slice %84 {offsets = [0, 2, 2], sizes = [1, 8, 8], strides = [1, 1, 1]} : vector<2x10x10xf32> to vector<1x8x8xf32>
    %136 = vector.shape_cast %135 : vector<1x8x8xf32> to vector<8x8xf32>
    %137 = vector.broadcast %134 : f32 to vector<8x8xf32>
    %138 = arith.mulf %137, %136 : vector<8x8xf32>
    %139 = arith.addf %133, %138 : vector<8x8xf32>
    %c9_62 = arith.constant 9 : index
    %140 = memref.load %arg3[%c9_62] : memref<18xf32, #tpu.memory_space<smem>>
    %141 = vector.extract_strided_slice %84 {offsets = [1, 0, 0], sizes = [1, 8, 8], strides = [1, 1, 1]} : vector<2x10x10xf32> to vector<1x8x8xf32>
    %142 = vector.shape_cast %141 : vector<1x8x8xf32> to vector<8x8xf32>
    %143 = vector.broadcast %140 : f32 to vector<8x8xf32>
    %144 = arith.mulf %143, %142 : vector<8x8xf32>
    %145 = arith.addf %139, %144 : vector<8x8xf32>
    %c10 = arith.constant 10 : index
    %146 = memref.load %arg3[%c10] : memref<18xf32, #tpu.memory_space<smem>>
    %147 = vector.extract_strided_slice %84 {offsets = [1, 0, 1], sizes = [1, 8, 8], strides = [1, 1, 1]} : vector<2x10x10xf32> to vector<1x8x8xf32>
    %148 = vector.shape_cast %147 : vector<1x8x8xf32> to vector<8x8xf32>
    %149 = vector.broadcast %146 : f32 to vector<8x8xf32>
    %150 = arith.mulf %149, %148 : vector<8x8xf32>
    %151 = arith.addf %145, %150 : vector<8x8xf32>
    %c11 = arith.constant 11 : index
    %152 = memref.load %arg3[%c11] : memref<18xf32, #tpu.memory_space<smem>>
    %153 = vector.extract_strided_slice %84 {offsets = [1, 0, 2], sizes = [1, 8, 8], strides = [1, 1, 1]} : vector<2x10x10xf32> to vector<1x8x8xf32>
    %154 = vector.shape_cast %153 : vector<1x8x8xf32> to vector<8x8xf32>
    %155 = vector.broadcast %152 : f32 to vector<8x8xf32>
    %156 = arith.mulf %155, %154 : vector<8x8xf32>
    %157 = arith.addf %151, %156 : vector<8x8xf32>
    %c12 = arith.constant 12 : index
    %158 = memref.load %arg3[%c12] : memref<18xf32, #tpu.memory_space<smem>>
    %159 = vector.extract_strided_slice %84 {offsets = [1, 1, 0], sizes = [1, 8, 8], strides = [1, 1, 1]} : vector<2x10x10xf32> to vector<1x8x8xf32>
    %160 = vector.shape_cast %159 : vector<1x8x8xf32> to vector<8x8xf32>
    %161 = vector.broadcast %158 : f32 to vector<8x8xf32>
    %162 = arith.mulf %161, %160 : vector<8x8xf32>
    %163 = arith.addf %157, %162 : vector<8x8xf32>
    %c13 = arith.constant 13 : index
    %164 = memref.load %arg3[%c13] : memref<18xf32, #tpu.memory_space<smem>>
    %165 = vector.extract_strided_slice %84 {offsets = [1, 1, 1], sizes = [1, 8, 8], strides = [1, 1, 1]} : vector<2x10x10xf32> to vector<1x8x8xf32>
    %166 = vector.shape_cast %165 : vector<1x8x8xf32> to vector<8x8xf32>
    %167 = vector.broadcast %164 : f32 to vector<8x8xf32>
    %168 = arith.mulf %167, %166 : vector<8x8xf32>
    %169 = arith.addf %163, %168 : vector<8x8xf32>
    %c14 = arith.constant 14 : index
    %170 = memref.load %arg3[%c14] : memref<18xf32, #tpu.memory_space<smem>>
    %171 = vector.extract_strided_slice %84 {offsets = [1, 1, 2], sizes = [1, 8, 8], strides = [1, 1, 1]} : vector<2x10x10xf32> to vector<1x8x8xf32>
    %172 = vector.shape_cast %171 : vector<1x8x8xf32> to vector<8x8xf32>
    %173 = vector.broadcast %170 : f32 to vector<8x8xf32>
    %174 = arith.mulf %173, %172 : vector<8x8xf32>
    %175 = arith.addf %169, %174 : vector<8x8xf32>
    %c15 = arith.constant 15 : index
    %176 = memref.load %arg3[%c15] : memref<18xf32, #tpu.memory_space<smem>>
    %177 = vector.extract_strided_slice %84 {offsets = [1, 2, 0], sizes = [1, 8, 8], strides = [1, 1, 1]} : vector<2x10x10xf32> to vector<1x8x8xf32>
    %178 = vector.shape_cast %177 : vector<1x8x8xf32> to vector<8x8xf32>
    %179 = vector.broadcast %176 : f32 to vector<8x8xf32>
    %180 = arith.mulf %179, %178 : vector<8x8xf32>
    %181 = arith.addf %175, %180 : vector<8x8xf32>
    %c16 = arith.constant 16 : index
    %182 = memref.load %arg3[%c16] : memref<18xf32, #tpu.memory_space<smem>>
    %183 = vector.extract_strided_slice %84 {offsets = [1, 2, 1], sizes = [1, 8, 8], strides = [1, 1, 1]} : vector<2x10x10xf32> to vector<1x8x8xf32>
    %184 = vector.shape_cast %183 : vector<1x8x8xf32> to vector<8x8xf32>
    %185 = vector.broadcast %182 : f32 to vector<8x8xf32>
    %186 = arith.mulf %185, %184 : vector<8x8xf32>
    %187 = arith.addf %181, %186 : vector<8x8xf32>
    %c17 = arith.constant 17 : index
    %188 = memref.load %arg3[%c17] : memref<18xf32, #tpu.memory_space<smem>>
    %189 = vector.extract_strided_slice %84 {offsets = [1, 2, 2], sizes = [1, 8, 8], strides = [1, 1, 1]} : vector<2x10x10xf32> to vector<1x8x8xf32>
    %190 = vector.shape_cast %189 : vector<1x8x8xf32> to vector<8x8xf32>
    %191 = vector.broadcast %188 : f32 to vector<8x8xf32>
    %192 = arith.mulf %191, %190 : vector<8x8xf32>
    %193 = arith.addf %187, %192 : vector<8x8xf32>
    %194 = arith.negf %193 : vector<8x8xf32>
    %195 = math.exp %194 : vector<8x8xf32>
    %cst_63 = arith.constant 1.000000e+00 : f32
    %196 = vector.broadcast %cst_63 : f32 to vector<8x8xf32>
    %197 = arith.addf %196, %195 : vector<8x8xf32>
    %198 = arith.divf %196, %197 : vector<8x8xf32>
    %199 = vector.shape_cast %198 : vector<8x8xf32> to vector<8x8x1xf32>
    %200 = vector.broadcast %199 : vector<8x8x1xf32> to vector<8x8x16xf32>
    %201 = arith.mulf %67, %200 : vector<8x8x16xf32>
    %cst_64 = arith.constant 0.000000e+00 : bf16
    %202 = vector.broadcast %cst_64 : bf16 to vector<3x14x16xbf16>
    %c0_65 = arith.constant 0 : index
    %c0_66 = arith.constant 0 : index
    %c0_67 = arith.constant 0 : index
    %203 = vector.load %arg29[%c0_65, %c0_66, %c0_67] : memref<14x14x16xbf16, #tpu.memory_space<vmem>>, vector<3x14x16xbf16>
    tpu.vector_store %arg29[%c0_65, %c0_66, %c0_67], %202 {strides = array<i32>} : memref<14x14x16xbf16, #tpu.memory_space<vmem>>, vector<3x14x16xbf16>,
    %cst_68 = arith.constant 0.000000e+00 : bf16
    %204 = vector.broadcast %cst_68 : bf16 to vector<3x14x16xbf16>
    %c11_69 = arith.constant 11 : index
    %c0_70 = arith.constant 0 : index
    %c0_71 = arith.constant 0 : index
    %205 = vector.load %arg29[%c11_69, %c0_70, %c0_71] : memref<14x14x16xbf16, #tpu.memory_space<vmem>>, vector<3x14x16xbf16>
    tpu.vector_store %arg29[%c11_69, %c0_70, %c0_71], %204 {strides = array<i32>} : memref<14x14x16xbf16, #tpu.memory_space<vmem>>, vector<3x14x16xbf16>,
    %cst_72 = arith.constant 0.000000e+00 : bf16
    %206 = vector.broadcast %cst_72 : bf16 to vector<8x3x16xbf16>
    %c3_73 = arith.constant 3 : index
    %c0_74 = arith.constant 0 : index
    %c0_75 = arith.constant 0 : index
    %207 = vector.load %arg29[%c3_73, %c0_74, %c0_75] : memref<14x14x16xbf16, #tpu.memory_space<vmem>>, vector<8x3x16xbf16>
    tpu.vector_store %arg29[%c3_73, %c0_74, %c0_75], %206 {strides = array<i32>} : memref<14x14x16xbf16, #tpu.memory_space<vmem>>, vector<8x3x16xbf16>,
    %cst_76 = arith.constant 0.000000e+00 : bf16
    %208 = vector.broadcast %cst_76 : bf16 to vector<8x3x16xbf16>
    %c3_77 = arith.constant 3 : index
    %c11_78 = arith.constant 11 : index
    %c0_79 = arith.constant 0 : index
    %209 = vector.load %arg29[%c3_77, %c11_78, %c0_79] : memref<14x14x16xbf16, #tpu.memory_space<vmem>>, vector<8x3x16xbf16>
    tpu.vector_store %arg29[%c3_77, %c11_78, %c0_79], %208 {strides = array<i32>} : memref<14x14x16xbf16, #tpu.memory_space<vmem>>, vector<8x3x16xbf16>,
    %c0_80 = arith.constant 0 : index
    %c0_81 = arith.constant 0 : index
    %c0_82 = arith.constant 0 : index
    %c0_83 = arith.constant 0 : index
    %210 = vector.load %arg2[%c0_80, %c0_81, %c0_82, %c0_83] : memref<1x8x8x16xbf16, #tpu.memory_space<vmem>>, vector<1x8x8x16xbf16>
    %211 = vector.shape_cast %210 : vector<1x8x8x16xbf16> to vector<8x8x16xbf16>
    %c3_84 = arith.constant 3 : index
    %c3_85 = arith.constant 3 : index
    %c0_86 = arith.constant 0 : index
    %212 = vector.load %arg29[%c3_84, %c3_85, %c0_86] : memref<14x14x16xbf16, #tpu.memory_space<vmem>>, vector<8x8x16xbf16>
    tpu.vector_store %arg29[%c3_84, %c3_85, %c0_86], %211 {strides = array<i32>} : memref<14x14x16xbf16, #tpu.memory_space<vmem>>, vector<8x8x16xbf16>,
    %c2_87 = arith.constant 2 : index
    %c2_88 = arith.constant 2 : index
    %c0_89 = arith.constant 0 : index
    %213 = vector.load %arg29[%c2_87, %c2_88, %c0_89] : memref<14x14x16xbf16, #tpu.memory_space<vmem>>, vector<8x8x16xbf16>
    %214 = vector.shape_cast %213 : vector<8x8x16xbf16> to vector<64x16xbf16>
    %c0_90 = arith.constant 0 : index
    %c0_91 = arith.constant 0 : index
    %215 = vector.load %arg32[%c0_90, %c0_91] : memref<64x432xbf16, #tpu.memory_space<vmem>>, vector<64x16xbf16>
    tpu.vector_store %arg32[%c0_90, %c0_91], %214 {strides = array<i32>} : memref<64x432xbf16, #tpu.memory_space<vmem>>, vector<64x16xbf16>,
    %c2_92 = arith.constant 2 : index
    %c3_93 = arith.constant 3 : index
    %c0_94 = arith.constant 0 : index
    %216 = vector.load %arg29[%c2_92, %c3_93, %c0_94] : memref<14x14x16xbf16, #tpu.memory_space<vmem>>, vector<8x8x16xbf16>
    %217 = vector.shape_cast %216 : vector<8x8x16xbf16> to vector<64x16xbf16>
    %c0_95 = arith.constant 0 : index
    %c16_96 = arith.constant 16 : index
    %218 = vector.load %arg32[%c0_95, %c16_96] : memref<64x432xbf16, #tpu.memory_space<vmem>>, vector<64x16xbf16>
    tpu.vector_store %arg32[%c0_95, %c16_96], %217 {strides = array<i32>} : memref<64x432xbf16, #tpu.memory_space<vmem>>, vector<64x16xbf16>,
    %c2_97 = arith.constant 2 : index
    %c4_98 = arith.constant 4 : index
    %c0_99 = arith.constant 0 : index
    %219 = vector.load %arg29[%c2_97, %c4_98, %c0_99] : memref<14x14x16xbf16, #tpu.memory_space<vmem>>, vector<8x8x16xbf16>
    %220 = vector.shape_cast %219 : vector<8x8x16xbf16> to vector<64x16xbf16>
    %c0_100 = arith.constant 0 : index
    %c32 = arith.constant 32 : index
    %221 = vector.load %arg32[%c0_100, %c32] : memref<64x432xbf16, #tpu.memory_space<vmem>>, vector<64x16xbf16>
    tpu.vector_store %arg32[%c0_100, %c32], %220 {strides = array<i32>} : memref<64x432xbf16, #tpu.memory_space<vmem>>, vector<64x16xbf16>,
    %c3_101 = arith.constant 3 : index
    %c2_102 = arith.constant 2 : index
    %c0_103 = arith.constant 0 : index
    %222 = vector.load %arg29[%c3_101, %c2_102, %c0_103] : memref<14x14x16xbf16, #tpu.memory_space<vmem>>, vector<8x8x16xbf16>
    %223 = vector.shape_cast %222 : vector<8x8x16xbf16> to vector<64x16xbf16>
    %c0_104 = arith.constant 0 : index
    %c48 = arith.constant 48 : index
    %224 = vector.load %arg32[%c0_104, %c48] : memref<64x432xbf16, #tpu.memory_space<vmem>>, vector<64x16xbf16>
    tpu.vector_store %arg32[%c0_104, %c48], %223 {strides = array<i32>} : memref<64x432xbf16, #tpu.memory_space<vmem>>, vector<64x16xbf16>,
    %c3_105 = arith.constant 3 : index
    %c3_106 = arith.constant 3 : index
    %c0_107 = arith.constant 0 : index
    %225 = vector.load %arg29[%c3_105, %c3_106, %c0_107] : memref<14x14x16xbf16, #tpu.memory_space<vmem>>, vector<8x8x16xbf16>
    %226 = vector.shape_cast %225 : vector<8x8x16xbf16> to vector<64x16xbf16>
    %c0_108 = arith.constant 0 : index
    %c64 = arith.constant 64 : index
    %227 = vector.load %arg32[%c0_108, %c64] : memref<64x432xbf16, #tpu.memory_space<vmem>>, vector<64x16xbf16>
    tpu.vector_store %arg32[%c0_108, %c64], %226 {strides = array<i32>} : memref<64x432xbf16, #tpu.memory_space<vmem>>, vector<64x16xbf16>,
    %c3_109 = arith.constant 3 : index
    %c4_110 = arith.constant 4 : index
    %c0_111 = arith.constant 0 : index
    %228 = vector.load %arg29[%c3_109, %c4_110, %c0_111] : memref<14x14x16xbf16, #tpu.memory_space<vmem>>, vector<8x8x16xbf16>
    %229 = vector.shape_cast %228 : vector<8x8x16xbf16> to vector<64x16xbf16>
    %c0_112 = arith.constant 0 : index
    %c80 = arith.constant 80 : index
    %230 = vector.load %arg32[%c0_112, %c80] : memref<64x432xbf16, #tpu.memory_space<vmem>>, vector<64x16xbf16>
    tpu.vector_store %arg32[%c0_112, %c80], %229 {strides = array<i32>} : memref<64x432xbf16, #tpu.memory_space<vmem>>, vector<64x16xbf16>,
    %c4_113 = arith.constant 4 : index
    %c2_114 = arith.constant 2 : index
    %c0_115 = arith.constant 0 : index
    %231 = vector.load %arg29[%c4_113, %c2_114, %c0_115] : memref<14x14x16xbf16, #tpu.memory_space<vmem>>, vector<8x8x16xbf16>
    %232 = vector.shape_cast %231 : vector<8x8x16xbf16> to vector<64x16xbf16>
    %c0_116 = arith.constant 0 : index
    %c96 = arith.constant 96 : index
    %233 = vector.load %arg32[%c0_116, %c96] : memref<64x432xbf16, #tpu.memory_space<vmem>>, vector<64x16xbf16>
    tpu.vector_store %arg32[%c0_116, %c96], %232 {strides = array<i32>} : memref<64x432xbf16, #tpu.memory_space<vmem>>, vector<64x16xbf16>,
    %c4_117 = arith.constant 4 : index
    %c3_118 = arith.constant 3 : index
    %c0_119 = arith.constant 0 : index
    %234 = vector.load %arg29[%c4_117, %c3_118, %c0_119] : memref<14x14x16xbf16, #tpu.memory_space<vmem>>, vector<8x8x16xbf16>
    %235 = vector.shape_cast %234 : vector<8x8x16xbf16> to vector<64x16xbf16>
    %c0_120 = arith.constant 0 : index
    %c112 = arith.constant 112 : index
    %236 = vector.load %arg32[%c0_120, %c112] : memref<64x432xbf16, #tpu.memory_space<vmem>>, vector<64x16xbf16>
    tpu.vector_store %arg32[%c0_120, %c112], %235 {strides = array<i32>} : memref<64x432xbf16, #tpu.memory_space<vmem>>, vector<64x16xbf16>,
    %c4_121 = arith.constant 4 : index
    %c4_122 = arith.constant 4 : index
    %c0_123 = arith.constant 0 : index
    %237 = vector.load %arg29[%c4_121, %c4_122, %c0_123] : memref<14x14x16xbf16, #tpu.memory_space<vmem>>, vector<8x8x16xbf16>
    %238 = vector.shape_cast %237 : vector<8x8x16xbf16> to vector<64x16xbf16>
    %c0_124 = arith.constant 0 : index
    %c128 = arith.constant 128 : index
    %239 = vector.load %arg32[%c0_124, %c128] : memref<64x432xbf16, #tpu.memory_space<vmem>>, vector<64x16xbf16>
    tpu.vector_store %arg32[%c0_124, %c128], %238 {strides = array<i32>} : memref<64x432xbf16, #tpu.memory_space<vmem>>, vector<64x16xbf16>,
    %c1_125 = arith.constant 1 : index
    %c1_126 = arith.constant 1 : index
    %c0_127 = arith.constant 0 : index
    %240 = vector.load %arg29[%c1_125, %c1_126, %c0_127] : memref<14x14x16xbf16, #tpu.memory_space<vmem>>, vector<8x8x16xbf16>
    %241 = vector.shape_cast %240 : vector<8x8x16xbf16> to vector<64x16xbf16>
    %c0_128 = arith.constant 0 : index
    %c144 = arith.constant 144 : index
    %242 = vector.load %arg32[%c0_128, %c144] : memref<64x432xbf16, #tpu.memory_space<vmem>>, vector<64x16xbf16>
    tpu.vector_store %arg32[%c0_128, %c144], %241 {strides = array<i32>} : memref<64x432xbf16, #tpu.memory_space<vmem>>, vector<64x16xbf16>,
    %c1_129 = arith.constant 1 : index
    %c3_130 = arith.constant 3 : index
    %c0_131 = arith.constant 0 : index
    %243 = vector.load %arg29[%c1_129, %c3_130, %c0_131] : memref<14x14x16xbf16, #tpu.memory_space<vmem>>, vector<8x8x16xbf16>
    %244 = vector.shape_cast %243 : vector<8x8x16xbf16> to vector<64x16xbf16>
    %c0_132 = arith.constant 0 : index
    %c160 = arith.constant 160 : index
    %245 = vector.load %arg32[%c0_132, %c160] : memref<64x432xbf16, #tpu.memory_space<vmem>>, vector<64x16xbf16>
    tpu.vector_store %arg32[%c0_132, %c160], %244 {strides = array<i32>} : memref<64x432xbf16, #tpu.memory_space<vmem>>, vector<64x16xbf16>,
    %c1_133 = arith.constant 1 : index
    %c5_134 = arith.constant 5 : index
    %c0_135 = arith.constant 0 : index
    %246 = vector.load %arg29[%c1_133, %c5_134, %c0_135] : memref<14x14x16xbf16, #tpu.memory_space<vmem>>, vector<8x8x16xbf16>
    %247 = vector.shape_cast %246 : vector<8x8x16xbf16> to vector<64x16xbf16>
    %c0_136 = arith.constant 0 : index
    %c176 = arith.constant 176 : index
    %248 = vector.load %arg32[%c0_136, %c176] : memref<64x432xbf16, #tpu.memory_space<vmem>>, vector<64x16xbf16>
    tpu.vector_store %arg32[%c0_136, %c176], %247 {strides = array<i32>} : memref<64x432xbf16, #tpu.memory_space<vmem>>, vector<64x16xbf16>,
    %c3_137 = arith.constant 3 : index
    %c1_138 = arith.constant 1 : index
    %c0_139 = arith.constant 0 : index
    %249 = vector.load %arg29[%c3_137, %c1_138, %c0_139] : memref<14x14x16xbf16, #tpu.memory_space<vmem>>, vector<8x8x16xbf16>
    %250 = vector.shape_cast %249 : vector<8x8x16xbf16> to vector<64x16xbf16>
    %c0_140 = arith.constant 0 : index
    %c192 = arith.constant 192 : index
    %251 = vector.load %arg32[%c0_140, %c192] : memref<64x432xbf16, #tpu.memory_space<vmem>>, vector<64x16xbf16>
    tpu.vector_store %arg32[%c0_140, %c192], %250 {strides = array<i32>} : memref<64x432xbf16, #tpu.memory_space<vmem>>, vector<64x16xbf16>,
    %c3_141 = arith.constant 3 : index
    %c3_142 = arith.constant 3 : index
    %c0_143 = arith.constant 0 : index
    %252 = vector.load %arg29[%c3_141, %c3_142, %c0_143] : memref<14x14x16xbf16, #tpu.memory_space<vmem>>, vector<8x8x16xbf16>
    %253 = vector.shape_cast %252 : vector<8x8x16xbf16> to vector<64x16xbf16>
    %c0_144 = arith.constant 0 : index
    %c208 = arith.constant 208 : index
    %254 = vector.load %arg32[%c0_144, %c208] : memref<64x432xbf16, #tpu.memory_space<vmem>>, vector<64x16xbf16>
    tpu.vector_store %arg32[%c0_144, %c208], %253 {strides = array<i32>} : memref<64x432xbf16, #tpu.memory_space<vmem>>, vector<64x16xbf16>,
    %c3_145 = arith.constant 3 : index
    %c5_146 = arith.constant 5 : index
    %c0_147 = arith.constant 0 : index
    %255 = vector.load %arg29[%c3_145, %c5_146, %c0_147] : memref<14x14x16xbf16, #tpu.memory_space<vmem>>, vector<8x8x16xbf16>
    %256 = vector.shape_cast %255 : vector<8x8x16xbf16> to vector<64x16xbf16>
    %c0_148 = arith.constant 0 : index
    %c224 = arith.constant 224 : index
    %257 = vector.load %arg32[%c0_148, %c224] : memref<64x432xbf16, #tpu.memory_space<vmem>>, vector<64x16xbf16>
    tpu.vector_store %arg32[%c0_148, %c224], %256 {strides = array<i32>} : memref<64x432xbf16, #tpu.memory_space<vmem>>, vector<64x16xbf16>,
    %c5_149 = arith.constant 5 : index
    %c1_150 = arith.constant 1 : index
    %c0_151 = arith.constant 0 : index
    %258 = vector.load %arg29[%c5_149, %c1_150, %c0_151] : memref<14x14x16xbf16, #tpu.memory_space<vmem>>, vector<8x8x16xbf16>
    %259 = vector.shape_cast %258 : vector<8x8x16xbf16> to vector<64x16xbf16>
    %c0_152 = arith.constant 0 : index
    %c240 = arith.constant 240 : index
    %260 = vector.load %arg32[%c0_152, %c240] : memref<64x432xbf16, #tpu.memory_space<vmem>>, vector<64x16xbf16>
    tpu.vector_store %arg32[%c0_152, %c240], %259 {strides = array<i32>} : memref<64x432xbf16, #tpu.memory_space<vmem>>, vector<64x16xbf16>,
    %c5_153 = arith.constant 5 : index
    %c3_154 = arith.constant 3 : index
    %c0_155 = arith.constant 0 : index
    %261 = vector.load %arg29[%c5_153, %c3_154, %c0_155] : memref<14x14x16xbf16, #tpu.memory_space<vmem>>, vector<8x8x16xbf16>
    %262 = vector.shape_cast %261 : vector<8x8x16xbf16> to vector<64x16xbf16>
    %c0_156 = arith.constant 0 : index
    %c256 = arith.constant 256 : index
    %263 = vector.load %arg32[%c0_156, %c256] : memref<64x432xbf16, #tpu.memory_space<vmem>>, vector<64x16xbf16>
    tpu.vector_store %arg32[%c0_156, %c256], %262 {strides = array<i32>} : memref<64x432xbf16, #tpu.memory_space<vmem>>, vector<64x16xbf16>,
    %c5_157 = arith.constant 5 : index
    %c5_158 = arith.constant 5 : index
    %c0_159 = arith.constant 0 : index
    %264 = vector.load %arg29[%c5_157, %c5_158, %c0_159] : memref<14x14x16xbf16, #tpu.memory_space<vmem>>, vector<8x8x16xbf16>
    %265 = vector.shape_cast %264 : vector<8x8x16xbf16> to vector<64x16xbf16>
    %c0_160 = arith.constant 0 : index
    %c272 = arith.constant 272 : index
    %266 = vector.load %arg32[%c0_160, %c272] : memref<64x432xbf16, #tpu.memory_space<vmem>>, vector<64x16xbf16>
    tpu.vector_store %arg32[%c0_160, %c272], %265 {strides = array<i32>} : memref<64x432xbf16, #tpu.memory_space<vmem>>, vector<64x16xbf16>,
    %c0_161 = arith.constant 0 : index
    %c0_162 = arith.constant 0 : index
    %c0_163 = arith.constant 0 : index
    %267 = vector.load %arg29[%c0_161, %c0_162, %c0_163] : memref<14x14x16xbf16, #tpu.memory_space<vmem>>, vector<8x8x16xbf16>
    %268 = vector.shape_cast %267 : vector<8x8x16xbf16> to vector<64x16xbf16>
    %c0_164 = arith.constant 0 : index
    %c288 = arith.constant 288 : index
    %269 = vector.load %arg32[%c0_164, %c288] : memref<64x432xbf16, #tpu.memory_space<vmem>>, vector<64x16xbf16>
    tpu.vector_store %arg32[%c0_164, %c288], %268 {strides = array<i32>} : memref<64x432xbf16, #tpu.memory_space<vmem>>, vector<64x16xbf16>,
    %c0_165 = arith.constant 0 : index
    %c3_166 = arith.constant 3 : index
    %c0_167 = arith.constant 0 : index
    %270 = vector.load %arg29[%c0_165, %c3_166, %c0_167] : memref<14x14x16xbf16, #tpu.memory_space<vmem>>, vector<8x8x16xbf16>
    %271 = vector.shape_cast %270 : vector<8x8x16xbf16> to vector<64x16xbf16>
    %c0_168 = arith.constant 0 : index
    %c304 = arith.constant 304 : index
    %272 = vector.load %arg32[%c0_168, %c304] : memref<64x432xbf16, #tpu.memory_space<vmem>>, vector<64x16xbf16>
    tpu.vector_store %arg32[%c0_168, %c304], %271 {strides = array<i32>} : memref<64x432xbf16, #tpu.memory_space<vmem>>, vector<64x16xbf16>,
    %c0_169 = arith.constant 0 : index
    %c6_170 = arith.constant 6 : index
    %c0_171 = arith.constant 0 : index
    %273 = vector.load %arg29[%c0_169, %c6_170, %c0_171] : memref<14x14x16xbf16, #tpu.memory_space<vmem>>, vector<8x8x16xbf16>
    %274 = vector.shape_cast %273 : vector<8x8x16xbf16> to vector<64x16xbf16>
    %c0_172 = arith.constant 0 : index
    %c320 = arith.constant 320 : index
    %275 = vector.load %arg32[%c0_172, %c320] : memref<64x432xbf16, #tpu.memory_space<vmem>>, vector<64x16xbf16>
    tpu.vector_store %arg32[%c0_172, %c320], %274 {strides = array<i32>} : memref<64x432xbf16, #tpu.memory_space<vmem>>, vector<64x16xbf16>,
    %c3_173 = arith.constant 3 : index
    %c0_174 = arith.constant 0 : index
    %c0_175 = arith.constant 0 : index
    %276 = vector.load %arg29[%c3_173, %c0_174, %c0_175] : memref<14x14x16xbf16, #tpu.memory_space<vmem>>, vector<8x8x16xbf16>
    %277 = vector.shape_cast %276 : vector<8x8x16xbf16> to vector<64x16xbf16>
    %c0_176 = arith.constant 0 : index
    %c336 = arith.constant 336 : index
    %278 = vector.load %arg32[%c0_176, %c336] : memref<64x432xbf16, #tpu.memory_space<vmem>>, vector<64x16xbf16>
    tpu.vector_store %arg32[%c0_176, %c336], %277 {strides = array<i32>} : memref<64x432xbf16, #tpu.memory_space<vmem>>, vector<64x16xbf16>,
    %c3_177 = arith.constant 3 : index
    %c3_178 = arith.constant 3 : index
    %c0_179 = arith.constant 0 : index
    %279 = vector.load %arg29[%c3_177, %c3_178, %c0_179] : memref<14x14x16xbf16, #tpu.memory_space<vmem>>, vector<8x8x16xbf16>
    %280 = vector.shape_cast %279 : vector<8x8x16xbf16> to vector<64x16xbf16>
    %c0_180 = arith.constant 0 : index
    %c352 = arith.constant 352 : index
    %281 = vector.load %arg32[%c0_180, %c352] : memref<64x432xbf16, #tpu.memory_space<vmem>>, vector<64x16xbf16>
    tpu.vector_store %arg32[%c0_180, %c352], %280 {strides = array<i32>} : memref<64x432xbf16, #tpu.memory_space<vmem>>, vector<64x16xbf16>,
    %c3_181 = arith.constant 3 : index
    %c6_182 = arith.constant 6 : index
    %c0_183 = arith.constant 0 : index
    %282 = vector.load %arg29[%c3_181, %c6_182, %c0_183] : memref<14x14x16xbf16, #tpu.memory_space<vmem>>, vector<8x8x16xbf16>
    %283 = vector.shape_cast %282 : vector<8x8x16xbf16> to vector<64x16xbf16>
    %c0_184 = arith.constant 0 : index
    %c368 = arith.constant 368 : index
    %284 = vector.load %arg32[%c0_184, %c368] : memref<64x432xbf16, #tpu.memory_space<vmem>>, vector<64x16xbf16>
    tpu.vector_store %arg32[%c0_184, %c368], %283 {strides = array<i32>} : memref<64x432xbf16, #tpu.memory_space<vmem>>, vector<64x16xbf16>,
    %c6_185 = arith.constant 6 : index
    %c0_186 = arith.constant 0 : index
    %c0_187 = arith.constant 0 : index
    %285 = vector.load %arg29[%c6_185, %c0_186, %c0_187] : memref<14x14x16xbf16, #tpu.memory_space<vmem>>, vector<8x8x16xbf16>
    %286 = vector.shape_cast %285 : vector<8x8x16xbf16> to vector<64x16xbf16>
    %c0_188 = arith.constant 0 : index
    %c384 = arith.constant 384 : index
    %287 = vector.load %arg32[%c0_188, %c384] : memref<64x432xbf16, #tpu.memory_space<vmem>>, vector<64x16xbf16>
    tpu.vector_store %arg32[%c0_188, %c384], %286 {strides = array<i32>} : memref<64x432xbf16, #tpu.memory_space<vmem>>, vector<64x16xbf16>,
    %c6_189 = arith.constant 6 : index
    %c3_190 = arith.constant 3 : index
    %c0_191 = arith.constant 0 : index
    %288 = vector.load %arg29[%c6_189, %c3_190, %c0_191] : memref<14x14x16xbf16, #tpu.memory_space<vmem>>, vector<8x8x16xbf16>
    %289 = vector.shape_cast %288 : vector<8x8x16xbf16> to vector<64x16xbf16>
    %c0_192 = arith.constant 0 : index
    %c400 = arith.constant 400 : index
    %290 = vector.load %arg32[%c0_192, %c400] : memref<64x432xbf16, #tpu.memory_space<vmem>>, vector<64x16xbf16>
    tpu.vector_store %arg32[%c0_192, %c400], %289 {strides = array<i32>} : memref<64x432xbf16, #tpu.memory_space<vmem>>, vector<64x16xbf16>,
    %c6_193 = arith.constant 6 : index
    %c6_194 = arith.constant 6 : index
    %c0_195 = arith.constant 0 : index
    %291 = vector.load %arg29[%c6_193, %c6_194, %c0_195] : memref<14x14x16xbf16, #tpu.memory_space<vmem>>, vector<8x8x16xbf16>
    %292 = vector.shape_cast %291 : vector<8x8x16xbf16> to vector<64x16xbf16>
    %c0_196 = arith.constant 0 : index
    %c416 = arith.constant 416 : index
    %293 = vector.load %arg32[%c0_196, %c416] : memref<64x432xbf16, #tpu.memory_space<vmem>>, vector<64x16xbf16>
    tpu.vector_store %arg32[%c0_196, %c416], %292 {strides = array<i32>} : memref<64x432xbf16, #tpu.memory_space<vmem>>, vector<64x16xbf16>,
    %c0_197 = arith.constant 0 : index
    %c0_198 = arith.constant 0 : index
    %294 = vector.load %arg32[%c0_197, %c0_198] : memref<64x432xbf16, #tpu.memory_space<vmem>>, vector<64x432xbf16>
    %c0_199 = arith.constant 0 : index
    %c0_200 = arith.constant 0 : index
    %295 = vector.load %arg13[%c0_199, %c0_200] : memref<432x48xbf16, #tpu.memory_space<vmem>>, vector<432x48xbf16>
    %cst_201 = arith.constant dense<0.000000e+00> : vector<64x48xf32>
    %296 = tpu.matmul %294, %295, %cst_201 {dimension_numbers = #tpu.dot_dimension_numbers<[1], [0], [0], [1], [0, 0, 1, 1], [], []>} : vector<64x432xbf16>, vector<432x48xbf16>, vector<64x48xf32> -> vector<64x48xf32>
    %c0_202 = arith.constant 0 : index
    %c0_203 = arith.constant 0 : index
    %297 = vector.load %arg14[%c0_202, %c0_203] : memref<1x48xf32, #tpu.memory_space<vmem>>, vector<1x48xf32>
    %298 = vector.broadcast %297 : vector<1x48xf32> to vector<64x48xf32>
    %299 = arith.mulf %296, %298 : vector<64x48xf32>
    %c0_204 = arith.constant 0 : index
    %c0_205 = arith.constant 0 : index
    %300 = vector.load %arg15[%c0_204, %c0_205] : memref<1x48xf32, #tpu.memory_space<vmem>>, vector<1x48xf32>
    %301 = vector.broadcast %300 : vector<1x48xf32> to vector<64x48xf32>
    %302 = arith.addf %299, %301 : vector<64x48xf32>
    %cst_206 = arith.constant 0.000000e+00 : f32
    %303 = vector.broadcast %cst_206 : f32 to vector<64x48xf32>
    %304 = arith.maximumf %302, %303 : vector<64x48xf32>
    %cst_207 = arith.constant 0.000000e+00 : bf16
    %305 = vector.broadcast %cst_207 : bf16 to vector<1x10x48xbf16>
    %c0_208 = arith.constant 0 : index
    %c0_209 = arith.constant 0 : index
    %c0_210 = arith.constant 0 : index
    %306 = vector.load %arg30[%c0_208, %c0_209, %c0_210] : memref<10x10x48xbf16, #tpu.memory_space<vmem>>, vector<1x10x48xbf16>
    tpu.vector_store %arg30[%c0_208, %c0_209, %c0_210], %305 {strides = array<i32>} : memref<10x10x48xbf16, #tpu.memory_space<vmem>>, vector<1x10x48xbf16>,
    %cst_211 = arith.constant 0.000000e+00 : bf16
    %307 = vector.broadcast %cst_211 : bf16 to vector<1x10x48xbf16>
    %c9_212 = arith.constant 9 : index
    %c0_213 = arith.constant 0 : index
    %c0_214 = arith.constant 0 : index
    %308 = vector.load %arg30[%c9_212, %c0_213, %c0_214] : memref<10x10x48xbf16, #tpu.memory_space<vmem>>, vector<1x10x48xbf16>
    tpu.vector_store %arg30[%c9_212, %c0_213, %c0_214], %307 {strides = array<i32>} : memref<10x10x48xbf16, #tpu.memory_space<vmem>>, vector<1x10x48xbf16>,
    %cst_215 = arith.constant 0.000000e+00 : bf16
    %309 = vector.broadcast %cst_215 : bf16 to vector<8x1x48xbf16>
    %c1_216 = arith.constant 1 : index
    %c0_217 = arith.constant 0 : index
    %c0_218 = arith.constant 0 : index
    %310 = vector.load %arg30[%c1_216, %c0_217, %c0_218] : memref<10x10x48xbf16, #tpu.memory_space<vmem>>, vector<8x1x48xbf16>
    tpu.vector_store %arg30[%c1_216, %c0_217, %c0_218], %309 {strides = array<i32>} : memref<10x10x48xbf16, #tpu.memory_space<vmem>>, vector<8x1x48xbf16>,
    %cst_219 = arith.constant 0.000000e+00 : bf16
    %311 = vector.broadcast %cst_219 : bf16 to vector<8x1x48xbf16>
    %c1_220 = arith.constant 1 : index
    %c9_221 = arith.constant 9 : index
    %c0_222 = arith.constant 0 : index
    %312 = vector.load %arg30[%c1_220, %c9_221, %c0_222] : memref<10x10x48xbf16, #tpu.memory_space<vmem>>, vector<8x1x48xbf16>
    tpu.vector_store %arg30[%c1_220, %c9_221, %c0_222], %311 {strides = array<i32>} : memref<10x10x48xbf16, #tpu.memory_space<vmem>>, vector<8x1x48xbf16>,
    %313 = vector.shape_cast %304 : vector<64x48xf32> to vector<8x8x48xf32>
    %314 = arith.truncf %313 : vector<8x8x48xf32> to vector<8x8x48xbf16>
    %c1_223 = arith.constant 1 : index
    %c1_224 = arith.constant 1 : index
    %c0_225 = arith.constant 0 : index
    %315 = vector.load %arg30[%c1_223, %c1_224, %c0_225] : memref<10x10x48xbf16, #tpu.memory_space<vmem>>, vector<8x8x48xbf16>
    tpu.vector_store %arg30[%c1_223, %c1_224, %c0_225], %314 {strides = array<i32>} : memref<10x10x48xbf16, #tpu.memory_space<vmem>>, vector<8x8x48xbf16>,
    %c0_226 = arith.constant 0 : index
    %c0_227 = arith.constant 0 : index
    %c0_228 = arith.constant 0 : index
    %316 = vector.load %arg30[%c0_226, %c0_227, %c0_228] : memref<10x10x48xbf16, #tpu.memory_space<vmem>>, vector<8x8x48xbf16>
    %317 = vector.shape_cast %316 : vector<8x8x48xbf16> to vector<64x48xbf16>
    %c0_229 = arith.constant 0 : index
    %c0_230 = arith.constant 0 : index
    %318 = vector.load %arg32[%c0_229, %c0_230] : memref<64x432xbf16, #tpu.memory_space<vmem>>, vector<64x48xbf16>
    tpu.vector_store %arg32[%c0_229, %c0_230], %317 {strides = array<i32>} : memref<64x432xbf16, #tpu.memory_space<vmem>>, vector<64x48xbf16>,
    %c0_231 = arith.constant 0 : index
    %c1_232 = arith.constant 1 : index
    %c0_233 = arith.constant 0 : index
    %319 = vector.load %arg30[%c0_231, %c1_232, %c0_233] : memref<10x10x48xbf16, #tpu.memory_space<vmem>>, vector<8x8x48xbf16>
    %320 = vector.shape_cast %319 : vector<8x8x48xbf16> to vector<64x48xbf16>
    %c0_234 = arith.constant 0 : index
    %c48_235 = arith.constant 48 : index
    %321 = vector.load %arg32[%c0_234, %c48_235] : memref<64x432xbf16, #tpu.memory_space<vmem>>, vector<64x48xbf16>
    tpu.vector_store %arg32[%c0_234, %c48_235], %320 {strides = array<i32>} : memref<64x432xbf16, #tpu.memory_space<vmem>>, vector<64x48xbf16>,
    %c0_236 = arith.constant 0 : index
    %c2_237 = arith.constant 2 : index
    %c0_238 = arith.constant 0 : index
    %322 = vector.load %arg30[%c0_236, %c2_237, %c0_238] : memref<10x10x48xbf16, #tpu.memory_space<vmem>>, vector<8x8x48xbf16>
    %323 = vector.shape_cast %322 : vector<8x8x48xbf16> to vector<64x48xbf16>
    %c0_239 = arith.constant 0 : index
    %c96_240 = arith.constant 96 : index
    %324 = vector.load %arg32[%c0_239, %c96_240] : memref<64x432xbf16, #tpu.memory_space<vmem>>, vector<64x48xbf16>
    tpu.vector_store %arg32[%c0_239, %c96_240], %323 {strides = array<i32>} : memref<64x432xbf16, #tpu.memory_space<vmem>>, vector<64x48xbf16>,
    %c1_241 = arith.constant 1 : index
    %c0_242 = arith.constant 0 : index
    %c0_243 = arith.constant 0 : index
    %325 = vector.load %arg30[%c1_241, %c0_242, %c0_243] : memref<10x10x48xbf16, #tpu.memory_space<vmem>>, vector<8x8x48xbf16>
    %326 = vector.shape_cast %325 : vector<8x8x48xbf16> to vector<64x48xbf16>
    %c0_244 = arith.constant 0 : index
    %c144_245 = arith.constant 144 : index
    %327 = vector.load %arg32[%c0_244, %c144_245] : memref<64x432xbf16, #tpu.memory_space<vmem>>, vector<64x48xbf16>
    tpu.vector_store %arg32[%c0_244, %c144_245], %326 {strides = array<i32>} : memref<64x432xbf16, #tpu.memory_space<vmem>>, vector<64x48xbf16>,
    %c1_246 = arith.constant 1 : index
    %c1_247 = arith.constant 1 : index
    %c0_248 = arith.constant 0 : index
    %328 = vector.load %arg30[%c1_246, %c1_247, %c0_248] : memref<10x10x48xbf16, #tpu.memory_space<vmem>>, vector<8x8x48xbf16>
    %329 = vector.shape_cast %328 : vector<8x8x48xbf16> to vector<64x48xbf16>
    %c0_249 = arith.constant 0 : index
    %c192_250 = arith.constant 192 : index
    %330 = vector.load %arg32[%c0_249, %c192_250] : memref<64x432xbf16, #tpu.memory_space<vmem>>, vector<64x48xbf16>
    tpu.vector_store %arg32[%c0_249, %c192_250], %329 {strides = array<i32>} : memref<64x432xbf16, #tpu.memory_space<vmem>>, vector<64x48xbf16>,
    %c1_251 = arith.constant 1 : index
    %c2_252 = arith.constant 2 : index
    %c0_253 = arith.constant 0 : index
    %331 = vector.load %arg30[%c1_251, %c2_252, %c0_253] : memref<10x10x48xbf16, #tpu.memory_space<vmem>>, vector<8x8x48xbf16>
    %332 = vector.shape_cast %331 : vector<8x8x48xbf16> to vector<64x48xbf16>
    %c0_254 = arith.constant 0 : index
    %c240_255 = arith.constant 240 : index
    %333 = vector.load %arg32[%c0_254, %c240_255] : memref<64x432xbf16, #tpu.memory_space<vmem>>, vector<64x48xbf16>
    tpu.vector_store %arg32[%c0_254, %c240_255], %332 {strides = array<i32>} : memref<64x432xbf16, #tpu.memory_space<vmem>>, vector<64x48xbf16>,
    %c2_256 = arith.constant 2 : index
    %c0_257 = arith.constant 0 : index
    %c0_258 = arith.constant 0 : index
    %334 = vector.load %arg30[%c2_256, %c0_257, %c0_258] : memref<10x10x48xbf16, #tpu.memory_space<vmem>>, vector<8x8x48xbf16>
    %335 = vector.shape_cast %334 : vector<8x8x48xbf16> to vector<64x48xbf16>
    %c0_259 = arith.constant 0 : index
    %c288_260 = arith.constant 288 : index
    %336 = vector.load %arg32[%c0_259, %c288_260] : memref<64x432xbf16, #tpu.memory_space<vmem>>, vector<64x48xbf16>
    tpu.vector_store %arg32[%c0_259, %c288_260], %335 {strides = array<i32>} : memref<64x432xbf16, #tpu.memory_space<vmem>>, vector<64x48xbf16>,
    %c2_261 = arith.constant 2 : index
    %c1_262 = arith.constant 1 : index
    %c0_263 = arith.constant 0 : index
    %337 = vector.load %arg30[%c2_261, %c1_262, %c0_263] : memref<10x10x48xbf16, #tpu.memory_space<vmem>>, vector<8x8x48xbf16>
    %338 = vector.shape_cast %337 : vector<8x8x48xbf16> to vector<64x48xbf16>
    %c0_264 = arith.constant 0 : index
    %c336_265 = arith.constant 336 : index
    %339 = vector.load %arg32[%c0_264, %c336_265] : memref<64x432xbf16, #tpu.memory_space<vmem>>, vector<64x48xbf16>
    tpu.vector_store %arg32[%c0_264, %c336_265], %338 {strides = array<i32>} : memref<64x432xbf16, #tpu.memory_space<vmem>>, vector<64x48xbf16>,
    %c2_266 = arith.constant 2 : index
    %c2_267 = arith.constant 2 : index
    %c0_268 = arith.constant 0 : index
    %340 = vector.load %arg30[%c2_266, %c2_267, %c0_268] : memref<10x10x48xbf16, #tpu.memory_space<vmem>>, vector<8x8x48xbf16>
    %341 = vector.shape_cast %340 : vector<8x8x48xbf16> to vector<64x48xbf16>
    %c0_269 = arith.constant 0 : index
    %c384_270 = arith.constant 384 : index
    %342 = vector.load %arg32[%c0_269, %c384_270] : memref<64x432xbf16, #tpu.memory_space<vmem>>, vector<64x48xbf16>
    tpu.vector_store %arg32[%c0_269, %c384_270], %341 {strides = array<i32>} : memref<64x432xbf16, #tpu.memory_space<vmem>>, vector<64x48xbf16>,
    %c0_271 = arith.constant 0 : index
    %c0_272 = arith.constant 0 : index
    %343 = vector.load %arg32[%c0_271, %c0_272] : memref<64x432xbf16, #tpu.memory_space<vmem>>, vector<64x432xbf16>
    %c0_273 = arith.constant 0 : index
    %c0_274 = arith.constant 0 : index
    %344 = vector.load %arg16[%c0_273, %c0_274] : memref<432x16xbf16, #tpu.memory_space<vmem>>, vector<432x16xbf16>
    %cst_275 = arith.constant dense<0.000000e+00> : vector<64x16xf32>
    %345 = tpu.matmul %343, %344, %cst_275 {dimension_numbers = #tpu.dot_dimension_numbers<[1], [0], [0], [1], [0, 0, 1, 1], [], []>} : vector<64x432xbf16>, vector<432x16xbf16>, vector<64x16xf32> -> vector<64x16xf32>
    %c0_276 = arith.constant 0 : index
    %c0_277 = arith.constant 0 : index
    %346 = vector.load %arg17[%c0_276, %c0_277] : memref<1x16xf32, #tpu.memory_space<vmem>>, vector<1x16xf32>
    %347 = vector.broadcast %346 : vector<1x16xf32> to vector<64x16xf32>
    %348 = arith.mulf %345, %347 : vector<64x16xf32>
    %c0_278 = arith.constant 0 : index
    %c0_279 = arith.constant 0 : index
    %349 = vector.load %arg18[%c0_278, %c0_279] : memref<1x16xf32, #tpu.memory_space<vmem>>, vector<1x16xf32>
    %350 = vector.broadcast %349 : vector<1x16xf32> to vector<64x16xf32>
    %351 = arith.addf %348, %350 : vector<64x16xf32>
    %cst_280 = arith.constant 0.000000e+00 : f32
    %352 = vector.broadcast %cst_280 : f32 to vector<64x16xf32>
    %353 = arith.maximumf %351, %352 : vector<64x16xf32>
    %354 = arith.truncf %353 : vector<64x16xf32> to vector<64x16xbf16>
    %c0_281 = arith.constant 0 : index
    %c0_282 = arith.constant 0 : index
    %355 = vector.load %arg19[%c0_281, %c0_282] : memref<16x16xbf16, #tpu.memory_space<vmem>>, vector<16x16xbf16>
    %cst_283 = arith.constant dense<0.000000e+00> : vector<64x16xf32>
    %356 = tpu.matmul %354, %355, %cst_283 {dimension_numbers = #tpu.dot_dimension_numbers<[1], [0], [0], [1], [0, 0, 1, 1], [], []>} : vector<64x16xbf16>, vector<16x16xbf16>, vector<64x16xf32> -> vector<64x16xf32>
    %c0_284 = arith.constant 0 : index
    %c0_285 = arith.constant 0 : index
    %357 = vector.load %arg20[%c0_284, %c0_285] : memref<1x16xf32, #tpu.memory_space<vmem>>, vector<1x16xf32>
    %358 = vector.broadcast %357 : vector<1x16xf32> to vector<64x16xf32>
    %359 = arith.mulf %356, %358 : vector<64x16xf32>
    %c0_286 = arith.constant 0 : index
    %c0_287 = arith.constant 0 : index
    %360 = vector.load %arg21[%c0_286, %c0_287] : memref<1x16xf32, #tpu.memory_space<vmem>>, vector<1x16xf32>
    %361 = vector.broadcast %360 : vector<1x16xf32> to vector<64x16xf32>
    %362 = arith.addf %359, %361 : vector<64x16xf32>
    %cst_288 = arith.constant 0.000000e+00 : f32
    %363 = vector.broadcast %cst_288 : f32 to vector<64x16xf32>
    %364 = arith.maximumf %362, %363 : vector<64x16xf32>
    %cst_289 = arith.constant 0.000000e+00 : bf16
    %365 = vector.broadcast %cst_289 : bf16 to vector<1x10x32xbf16>
    %c0_290 = arith.constant 0 : index
    %c0_291 = arith.constant 0 : index
    %c0_292 = arith.constant 0 : index
    %366 = vector.load %arg31[%c0_290, %c0_291, %c0_292] : memref<10x10x32xbf16, #tpu.memory_space<vmem>>, vector<1x10x32xbf16>
    tpu.vector_store %arg31[%c0_290, %c0_291, %c0_292], %365 {strides = array<i32>} : memref<10x10x32xbf16, #tpu.memory_space<vmem>>, vector<1x10x32xbf16>,
    %cst_293 = arith.constant 0.000000e+00 : bf16
    %367 = vector.broadcast %cst_293 : bf16 to vector<1x10x32xbf16>
    %c9_294 = arith.constant 9 : index
    %c0_295 = arith.constant 0 : index
    %c0_296 = arith.constant 0 : index
    %368 = vector.load %arg31[%c9_294, %c0_295, %c0_296] : memref<10x10x32xbf16, #tpu.memory_space<vmem>>, vector<1x10x32xbf16>
    tpu.vector_store %arg31[%c9_294, %c0_295, %c0_296], %367 {strides = array<i32>} : memref<10x10x32xbf16, #tpu.memory_space<vmem>>, vector<1x10x32xbf16>,
    %cst_297 = arith.constant 0.000000e+00 : bf16
    %369 = vector.broadcast %cst_297 : bf16 to vector<8x1x32xbf16>
    %c1_298 = arith.constant 1 : index
    %c0_299 = arith.constant 0 : index
    %c0_300 = arith.constant 0 : index
    %370 = vector.load %arg31[%c1_298, %c0_299, %c0_300] : memref<10x10x32xbf16, #tpu.memory_space<vmem>>, vector<8x1x32xbf16>
    tpu.vector_store %arg31[%c1_298, %c0_299, %c0_300], %369 {strides = array<i32>} : memref<10x10x32xbf16, #tpu.memory_space<vmem>>, vector<8x1x32xbf16>,
    %cst_301 = arith.constant 0.000000e+00 : bf16
    %371 = vector.broadcast %cst_301 : bf16 to vector<8x1x32xbf16>
    %c1_302 = arith.constant 1 : index
    %c9_303 = arith.constant 9 : index
    %c0_304 = arith.constant 0 : index
    %372 = vector.load %arg31[%c1_302, %c9_303, %c0_304] : memref<10x10x32xbf16, #tpu.memory_space<vmem>>, vector<8x1x32xbf16>
    tpu.vector_store %arg31[%c1_302, %c9_303, %c0_304], %371 {strides = array<i32>} : memref<10x10x32xbf16, #tpu.memory_space<vmem>>, vector<8x1x32xbf16>,
    %373 = vector.shape_cast %364 : vector<64x16xf32> to vector<8x8x16xf32>
    %374 = arith.truncf %373 : vector<8x8x16xf32> to vector<8x8x16xbf16>
    %c1_305 = arith.constant 1 : index
    %c1_306 = arith.constant 1 : index
    %c0_307 = arith.constant 0 : index
    %375 = vector.load %arg31[%c1_305, %c1_306, %c0_307] : memref<10x10x32xbf16, #tpu.memory_space<vmem>>, vector<8x8x16xbf16>
    tpu.vector_store %arg31[%c1_305, %c1_306, %c0_307], %374 {strides = array<i32>} : memref<10x10x32xbf16, #tpu.memory_space<vmem>>, vector<8x8x16xbf16>,
    %376 = arith.truncf %201 : vector<8x8x16xf32> to vector<8x8x16xbf16>
    %c1_308 = arith.constant 1 : index
    %c1_309 = arith.constant 1 : index
    %c16_310 = arith.constant 16 : index
    %377 = vector.load %arg31[%c1_308, %c1_309, %c16_310] : memref<10x10x32xbf16, #tpu.memory_space<vmem>>, vector<8x8x16xbf16>
    tpu.vector_store %arg31[%c1_308, %c1_309, %c16_310], %376 {strides = array<i32>} : memref<10x10x32xbf16, #tpu.memory_space<vmem>>, vector<8x8x16xbf16>,
    %c0_311 = arith.constant 0 : index
    %c0_312 = arith.constant 0 : index
    %c0_313 = arith.constant 0 : index
    %378 = vector.load %arg31[%c0_311, %c0_312, %c0_313] : memref<10x10x32xbf16, #tpu.memory_space<vmem>>, vector<8x8x32xbf16>
    %379 = vector.shape_cast %378 : vector<8x8x32xbf16> to vector<64x32xbf16>
    %c0_314 = arith.constant 0 : index
    %c0_315 = arith.constant 0 : index
    %380 = vector.load %arg32[%c0_314, %c0_315] : memref<64x432xbf16, #tpu.memory_space<vmem>>, vector<64x32xbf16>
    tpu.vector_store %arg32[%c0_314, %c0_315], %379 {strides = array<i32>} : memref<64x432xbf16, #tpu.memory_space<vmem>>, vector<64x32xbf16>,
    %c0_316 = arith.constant 0 : index
    %c1_317 = arith.constant 1 : index
    %c0_318 = arith.constant 0 : index
    %381 = vector.load %arg31[%c0_316, %c1_317, %c0_318] : memref<10x10x32xbf16, #tpu.memory_space<vmem>>, vector<8x8x32xbf16>
    %382 = vector.shape_cast %381 : vector<8x8x32xbf16> to vector<64x32xbf16>
    %c0_319 = arith.constant 0 : index
    %c32_320 = arith.constant 32 : index
    %383 = vector.load %arg32[%c0_319, %c32_320] : memref<64x432xbf16, #tpu.memory_space<vmem>>, vector<64x32xbf16>
    tpu.vector_store %arg32[%c0_319, %c32_320], %382 {strides = array<i32>} : memref<64x432xbf16, #tpu.memory_space<vmem>>, vector<64x32xbf16>,
    %c0_321 = arith.constant 0 : index
    %c2_322 = arith.constant 2 : index
    %c0_323 = arith.constant 0 : index
    %384 = vector.load %arg31[%c0_321, %c2_322, %c0_323] : memref<10x10x32xbf16, #tpu.memory_space<vmem>>, vector<8x8x32xbf16>
    %385 = vector.shape_cast %384 : vector<8x8x32xbf16> to vector<64x32xbf16>
    %c0_324 = arith.constant 0 : index
    %c64_325 = arith.constant 64 : index
    %386 = vector.load %arg32[%c0_324, %c64_325] : memref<64x432xbf16, #tpu.memory_space<vmem>>, vector<64x32xbf16>
    tpu.vector_store %arg32[%c0_324, %c64_325], %385 {strides = array<i32>} : memref<64x432xbf16, #tpu.memory_space<vmem>>, vector<64x32xbf16>,
    %c1_326 = arith.constant 1 : index
    %c0_327 = arith.constant 0 : index
    %c0_328 = arith.constant 0 : index
    %387 = vector.load %arg31[%c1_326, %c0_327, %c0_328] : memref<10x10x32xbf16, #tpu.memory_space<vmem>>, vector<8x8x32xbf16>
    %388 = vector.shape_cast %387 : vector<8x8x32xbf16> to vector<64x32xbf16>
    %c0_329 = arith.constant 0 : index
    %c96_330 = arith.constant 96 : index
    %389 = vector.load %arg32[%c0_329, %c96_330] : memref<64x432xbf16, #tpu.memory_space<vmem>>, vector<64x32xbf16>
    tpu.vector_store %arg32[%c0_329, %c96_330], %388 {strides = array<i32>} : memref<64x432xbf16, #tpu.memory_space<vmem>>, vector<64x32xbf16>,
    %c1_331 = arith.constant 1 : index
    %c1_332 = arith.constant 1 : index
    %c0_333 = arith.constant 0 : index
    %390 = vector.load %arg31[%c1_331, %c1_332, %c0_333] : memref<10x10x32xbf16, #tpu.memory_space<vmem>>, vector<8x8x32xbf16>
    %391 = vector.shape_cast %390 : vector<8x8x32xbf16> to vector<64x32xbf16>
    %c0_334 = arith.constant 0 : index
    %c128_335 = arith.constant 128 : index
    %392 = vector.load %arg32[%c0_334, %c128_335] : memref<64x432xbf16, #tpu.memory_space<vmem>>, vector<64x32xbf16>
    tpu.vector_store %arg32[%c0_334, %c128_335], %391 {strides = array<i32>} : memref<64x432xbf16, #tpu.memory_space<vmem>>, vector<64x32xbf16>,
    %c1_336 = arith.constant 1 : index
    %c2_337 = arith.constant 2 : index
    %c0_338 = arith.constant 0 : index
    %393 = vector.load %arg31[%c1_336, %c2_337, %c0_338] : memref<10x10x32xbf16, #tpu.memory_space<vmem>>, vector<8x8x32xbf16>
    %394 = vector.shape_cast %393 : vector<8x8x32xbf16> to vector<64x32xbf16>
    %c0_339 = arith.constant 0 : index
    %c160_340 = arith.constant 160 : index
    %395 = vector.load %arg32[%c0_339, %c160_340] : memref<64x432xbf16, #tpu.memory_space<vmem>>, vector<64x32xbf16>
    tpu.vector_store %arg32[%c0_339, %c160_340], %394 {strides = array<i32>} : memref<64x432xbf16, #tpu.memory_space<vmem>>, vector<64x32xbf16>,
    %c2_341 = arith.constant 2 : index
    %c0_342 = arith.constant 0 : index
    %c0_343 = arith.constant 0 : index
    %396 = vector.load %arg31[%c2_341, %c0_342, %c0_343] : memref<10x10x32xbf16, #tpu.memory_space<vmem>>, vector<8x8x32xbf16>
    %397 = vector.shape_cast %396 : vector<8x8x32xbf16> to vector<64x32xbf16>
    %c0_344 = arith.constant 0 : index
    %c192_345 = arith.constant 192 : index
    %398 = vector.load %arg32[%c0_344, %c192_345] : memref<64x432xbf16, #tpu.memory_space<vmem>>, vector<64x32xbf16>
    tpu.vector_store %arg32[%c0_344, %c192_345], %397 {strides = array<i32>} : memref<64x432xbf16, #tpu.memory_space<vmem>>, vector<64x32xbf16>,
    %c2_346 = arith.constant 2 : index
    %c1_347 = arith.constant 1 : index
    %c0_348 = arith.constant 0 : index
    %399 = vector.load %arg31[%c2_346, %c1_347, %c0_348] : memref<10x10x32xbf16, #tpu.memory_space<vmem>>, vector<8x8x32xbf16>
    %400 = vector.shape_cast %399 : vector<8x8x32xbf16> to vector<64x32xbf16>
    %c0_349 = arith.constant 0 : index
    %c224_350 = arith.constant 224 : index
    %401 = vector.load %arg32[%c0_349, %c224_350] : memref<64x432xbf16, #tpu.memory_space<vmem>>, vector<64x32xbf16>
    tpu.vector_store %arg32[%c0_349, %c224_350], %400 {strides = array<i32>} : memref<64x432xbf16, #tpu.memory_space<vmem>>, vector<64x32xbf16>,
    %c2_351 = arith.constant 2 : index
    %c2_352 = arith.constant 2 : index
    %c0_353 = arith.constant 0 : index
    %402 = vector.load %arg31[%c2_351, %c2_352, %c0_353] : memref<10x10x32xbf16, #tpu.memory_space<vmem>>, vector<8x8x32xbf16>
    %403 = vector.shape_cast %402 : vector<8x8x32xbf16> to vector<64x32xbf16>
    %c0_354 = arith.constant 0 : index
    %c256_355 = arith.constant 256 : index
    %404 = vector.load %arg32[%c0_354, %c256_355] : memref<64x432xbf16, #tpu.memory_space<vmem>>, vector<64x32xbf16>
    tpu.vector_store %arg32[%c0_354, %c256_355], %403 {strides = array<i32>} : memref<64x432xbf16, #tpu.memory_space<vmem>>, vector<64x32xbf16>,
    %c0_356 = arith.constant 0 : index
    %c0_357 = arith.constant 0 : index
    %405 = vector.load %arg32[%c0_356, %c0_357] : memref<64x432xbf16, #tpu.memory_space<vmem>>, vector<64x288xbf16>
    %c0_358 = arith.constant 0 : index
    %c0_359 = arith.constant 0 : index
    %406 = vector.load %arg22[%c0_358, %c0_359] : memref<288x16xbf16, #tpu.memory_space<vmem>>, vector<288x16xbf16>
    %cst_360 = arith.constant dense<0.000000e+00> : vector<64x16xf32>
    %407 = tpu.matmul %405, %406, %cst_360 {dimension_numbers = #tpu.dot_dimension_numbers<[1], [0], [0], [1], [0, 0, 1, 1], [], []>} : vector<64x288xbf16>, vector<288x16xbf16>, vector<64x16xf32> -> vector<64x16xf32>
    %c0_361 = arith.constant 0 : index
    %c0_362 = arith.constant 0 : index
    %408 = vector.load %arg23[%c0_361, %c0_362] : memref<1x16xf32, #tpu.memory_space<vmem>>, vector<1x16xf32>
    %409 = vector.broadcast %408 : vector<1x16xf32> to vector<64x16xf32>
    %410 = arith.mulf %407, %409 : vector<64x16xf32>
    %c0_363 = arith.constant 0 : index
    %c0_364 = arith.constant 0 : index
    %411 = vector.load %arg24[%c0_363, %c0_364] : memref<1x16xf32, #tpu.memory_space<vmem>>, vector<1x16xf32>
    %412 = vector.broadcast %411 : vector<1x16xf32> to vector<64x16xf32>
    %413 = arith.addf %410, %412 : vector<64x16xf32>
    %cst_365 = arith.constant 0.000000e+00 : f32
    %414 = vector.broadcast %cst_365 : f32 to vector<64x16xf32>
    %415 = arith.maximumf %413, %414 : vector<64x16xf32>
    %416 = arith.truncf %415 : vector<64x16xf32> to vector<64x16xbf16>
    %c0_366 = arith.constant 0 : index
    %c0_367 = arith.constant 0 : index
    %417 = vector.load %arg25[%c0_366, %c0_367] : memref<16x16xbf16, #tpu.memory_space<vmem>>, vector<16x16xbf16>
    %cst_368 = arith.constant dense<0.000000e+00> : vector<64x16xf32>
    %418 = tpu.matmul %416, %417, %cst_368 {dimension_numbers = #tpu.dot_dimension_numbers<[1], [0], [0], [1], [0, 0, 1, 1], [], []>} : vector<64x16xbf16>, vector<16x16xbf16>, vector<64x16xf32> -> vector<64x16xf32>
    %c0_369 = arith.constant 0 : index
    %c0_370 = arith.constant 0 : index
    %419 = vector.load %arg26[%c0_369, %c0_370] : memref<1x16xf32, #tpu.memory_space<vmem>>, vector<1x16xf32>
    %420 = vector.broadcast %419 : vector<1x16xf32> to vector<64x16xf32>
    %421 = arith.mulf %418, %420 : vector<64x16xf32>
    %c0_371 = arith.constant 0 : index
    %c0_372 = arith.constant 0 : index
    %422 = vector.load %arg27[%c0_371, %c0_372] : memref<1x16xf32, #tpu.memory_space<vmem>>, vector<1x16xf32>
    %423 = vector.broadcast %422 : vector<1x16xf32> to vector<64x16xf32>
    %424 = arith.addf %421, %423 : vector<64x16xf32>
    %cst_373 = arith.constant 0.000000e+00 : f32
    %425 = vector.broadcast %cst_373 : f32 to vector<64x16xf32>
    %426 = arith.maximumf %424, %425 : vector<64x16xf32>
    %c0_374 = arith.constant 0 : index
    %c0_375 = arith.constant 0 : index
    %c0_376 = arith.constant 0 : index
    %427 = vector.load %arg28[%c0_374, %c0_375, %c0_376] : memref<1x64x16xf32, #tpu.memory_space<vmem>>, vector<1x64x16xf32>
    %428 = vector.shape_cast %427 : vector<1x64x16xf32> to vector<64x16xf32>
    %429 = vector.shape_cast %426 : vector<64x16xf32> to vector<1x64x16xf32>
    tpu.vector_store %arg28[%c0_374, %c0_375, %c0_376], %429 {strides = array<i32>} : memref<1x64x16xf32, #tpu.memory_space<vmem>>, vector<1x64x16xf32>,
    return
  }
  func.func @transform_0(%arg0: i32) -> (i32, i32, i32) {
    %c0_i32 = arith.constant 0 : i32
    %c0_i32_0 = arith.constant 0 : i32
    %c0_i32_1 = arith.constant 0 : i32
    return %arg0, %c0_i32, %c0_i32_0 : i32, i32, i32
  }
  func.func @transform_1(%arg0: i32) -> (i32, i32, i32, i32) {
    %c0_i32 = arith.constant 0 : i32
    %c0_i32_0 = arith.constant 0 : i32
    %c0_i32_1 = arith.constant 0 : i32
    %c0_i32_2 = arith.constant 0 : i32
    return %arg0, %c0_i32, %c0_i32_0, %c0_i32_1 : i32, i32, i32, i32
  }
  func.func @transform_2(%arg0: i32) -> i32 {
    %c0_i32 = arith.constant 0 : i32
    %c0_i32_0 = arith.constant 0 : i32
    return %c0_i32 : i32
  }
  func.func @transform_3(%arg0: i32) -> (i32, i32) {
    %c0_i32 = arith.constant 0 : i32
    %c0_i32_0 = arith.constant 0 : i32
    %c0_i32_1 = arith.constant 0 : i32
    return %c0_i32, %c0_i32_0 : i32, i32
  }
  func.func @transform_4(%arg0: i32) -> (i32, i32) {
    %c0_i32 = arith.constant 0 : i32
    %c0_i32_0 = arith.constant 0 : i32
    %c0_i32_1 = arith.constant 0 : i32
    return %c0_i32, %c0_i32_0 : i32, i32
  }
  func.func @transform_5(%arg0: i32) -> (i32, i32) {
    %c0_i32 = arith.constant 0 : i32
    %c0_i32_0 = arith.constant 0 : i32
    %c0_i32_1 = arith.constant 0 : i32
    return %c0_i32, %c0_i32_0 : i32, i32
  }
  func.func @transform_6(%arg0: i32) -> (i32, i32) {
    %c0_i32 = arith.constant 0 : i32
    %c0_i32_0 = arith.constant 0 : i32
    %c0_i32_1 = arith.constant 0 : i32
    return %c0_i32, %c0_i32_0 : i32, i32
  }
  func.func @transform_7(%arg0: i32) -> (i32, i32) {
    %c0_i32 = arith.constant 0 : i32
    %c0_i32_0 = arith.constant 0 : i32
    %c0_i32_1 = arith.constant 0 : i32
    return %c0_i32, %c0_i32_0 : i32, i32
  }
  func.func @transform_8(%arg0: i32) -> (i32, i32) {
    %c0_i32 = arith.constant 0 : i32
    %c0_i32_0 = arith.constant 0 : i32
    %c0_i32_1 = arith.constant 0 : i32
    return %c0_i32, %c0_i32_0 : i32, i32
  }
  func.func @transform_9(%arg0: i32) -> (i32, i32) {
    %c0_i32 = arith.constant 0 : i32
    %c0_i32_0 = arith.constant 0 : i32
    %c0_i32_1 = arith.constant 0 : i32
    return %c0_i32, %c0_i32_0 : i32, i32
  }
  func.func @transform_10(%arg0: i32) -> (i32, i32) {
    %c0_i32 = arith.constant 0 : i32
    %c0_i32_0 = arith.constant 0 : i32
    %c0_i32_1 = arith.constant 0 : i32
    return %c0_i32, %c0_i32_0 : i32, i32
  }
  func.func @transform_11(%arg0: i32) -> (i32, i32) {
    %c0_i32 = arith.constant 0 : i32
    %c0_i32_0 = arith.constant 0 : i32
    %c0_i32_1 = arith.constant 0 : i32
    return %c0_i32, %c0_i32_0 : i32, i32
  }
  func.func @transform_12(%arg0: i32) -> (i32, i32) {
    %c0_i32 = arith.constant 0 : i32
    %c0_i32_0 = arith.constant 0 : i32
    %c0_i32_1 = arith.constant 0 : i32
    return %c0_i32, %c0_i32_0 : i32, i32
  }
  func.func @transform_13(%arg0: i32) -> (i32, i32) {
    %c0_i32 = arith.constant 0 : i32
    %c0_i32_0 = arith.constant 0 : i32
    %c0_i32_1 = arith.constant 0 : i32
    return %c0_i32, %c0_i32_0 : i32, i32
  }
  func.func @transform_14(%arg0: i32) -> (i32, i32) {
    %c0_i32 = arith.constant 0 : i32
    %c0_i32_0 = arith.constant 0 : i32
    %c0_i32_1 = arith.constant 0 : i32
    return %c0_i32, %c0_i32_0 : i32, i32
  }
  func.func @transform_15(%arg0: i32) -> (i32, i32) {
    %c0_i32 = arith.constant 0 : i32
    %c0_i32_0 = arith.constant 0 : i32
    %c0_i32_1 = arith.constant 0 : i32
    return %c0_i32, %c0_i32_0 : i32, i32
  }
  func.func @transform_16(%arg0: i32) -> (i32, i32) {
    %c0_i32 = arith.constant 0 : i32
    %c0_i32_0 = arith.constant 0 : i32
    %c0_i32_1 = arith.constant 0 : i32
    return %c0_i32, %c0_i32_0 : i32, i32
  }
  func.func @transform_17(%arg0: i32) -> (i32, i32) {
    %c0_i32 = arith.constant 0 : i32
    %c0_i32_0 = arith.constant 0 : i32
    %c0_i32_1 = arith.constant 0 : i32
    return %c0_i32, %c0_i32_0 : i32, i32
  }
  func.func @transform_18(%arg0: i32) -> (i32, i32) {
    %c0_i32 = arith.constant 0 : i32
    %c0_i32_0 = arith.constant 0 : i32
    %c0_i32_1 = arith.constant 0 : i32
    return %c0_i32, %c0_i32_0 : i32, i32
  }
  func.func @transform_19(%arg0: i32) -> (i32, i32) {
    %c0_i32 = arith.constant 0 : i32
    %c0_i32_0 = arith.constant 0 : i32
    %c0_i32_1 = arith.constant 0 : i32
    return %c0_i32, %c0_i32_0 : i32, i32
  }
  func.func @transform_20(%arg0: i32) -> (i32, i32) {
    %c0_i32 = arith.constant 0 : i32
    %c0_i32_0 = arith.constant 0 : i32
    %c0_i32_1 = arith.constant 0 : i32
    return %c0_i32, %c0_i32_0 : i32, i32
  }
  func.func @transform_21(%arg0: i32) -> (i32, i32) {
    %c0_i32 = arith.constant 0 : i32
    %c0_i32_0 = arith.constant 0 : i32
    %c0_i32_1 = arith.constant 0 : i32
    return %c0_i32, %c0_i32_0 : i32, i32
  }
  func.func @transform_22(%arg0: i32) -> (i32, i32) {
    %c0_i32 = arith.constant 0 : i32
    %c0_i32_0 = arith.constant 0 : i32
    %c0_i32_1 = arith.constant 0 : i32
    return %c0_i32, %c0_i32_0 : i32, i32
  }
  func.func @transform_23(%arg0: i32) -> (i32, i32) {
    %c0_i32 = arith.constant 0 : i32
    %c0_i32_0 = arith.constant 0 : i32
    %c0_i32_1 = arith.constant 0 : i32
    return %c0_i32, %c0_i32_0 : i32, i32
  }
  func.func @transform_24(%arg0: i32) -> (i32, i32) {
    %c0_i32 = arith.constant 0 : i32
    %c0_i32_0 = arith.constant 0 : i32
    %c0_i32_1 = arith.constant 0 : i32
    return %c0_i32, %c0_i32_0 : i32, i32
  }
  func.func @transform_25(%arg0: i32) -> (i32, i32) {
    %c0_i32 = arith.constant 0 : i32
    %c0_i32_0 = arith.constant 0 : i32
    %c0_i32_1 = arith.constant 0 : i32
    return %c0_i32, %c0_i32_0 : i32, i32
  }
  func.func @transform_26(%arg0: i32) -> (i32, i32) {
    %c0_i32 = arith.constant 0 : i32
    %c0_i32_0 = arith.constant 0 : i32
    %c0_i32_1 = arith.constant 0 : i32
    return %c0_i32, %c0_i32_0 : i32, i32
  }
  func.func @transform_27(%arg0: i32) -> (i32, i32, i32) {
    %c0_i32 = arith.constant 0 : i32
    %c0_i32_0 = arith.constant 0 : i32
    %c0_i32_1 = arith.constant 0 : i32
    return %arg0, %c0_i32, %c0_i32_0 : i32, i32, i32
  }
}

</mosaic_0001>

<llo_original>
// kernel: _lambda_.1
$region0: #{_lambda_.1}
  #allocation0 [shape = 'u32[]', space=smem, size = 0x4, offset = 0x4, fixed_abs, tag = 'smem constant byte address 0x4 - core index']
  #allocation1 [shape = 'u32[72,128]{1,0:T(1,128)}', space=vmem, size = 0x9000, scoped, tag = 'internal scratch']
  #allocation2 [shape = 'bf16[14,14,16]{2,1,0:T(8,128)(2,1)}', space=vmem, size = 0xe000, scoped, tag = 'scratch operand']
  #allocation3 [shape = 'bf16[10,10,48]{2,1,0:T(8,128)(2,1)}', space=vmem, size = 0xa000, scoped, tag = 'scratch operand']
  #allocation4 [shape = 'bf16[10,10,32]{2,1,0:T(8,128)(2,1)}', space=vmem, size = 0xa000, scoped, tag = 'scratch operand']
  #allocation5 [shape = 'bf16[64,432]{1,0:T(8,128)(2,1)}', space=vmem, size = 0x10000, scoped, tag = 'scratch operand']
  #allocation6 [shape = 'f32[2,10,10]{2,1,0:T(8,128)}', space=vmem, size = 0x4000, scoped, tag = 'scratch operand']
  %s0 = inlined_call_operand.vmem [shape: bf16[2,128,16], index: 0, kind: input, shape index: {}]
  %s1 = inlined_call_operand.vmem [shape: bf16[2,8,8,16], index: 1, kind: input, shape index: {}]
  %s2 = inlined_call_operand.hbm [shape: f32[18], index: 2, kind: input, shape index: {}]
  %s3 = inlined_call_operand.hbm [shape: bf16[16,16], index: 3, kind: input, shape index: {}]
  %s4 = inlined_call_operand.hbm [shape: f32[1,16], index: 4, kind: input, shape index: {}]
  %s5 = inlined_call_operand.hbm [shape: f32[1,16], index: 5, kind: input, shape index: {}]
  %s6 = inlined_call_operand.hbm [shape: bf16[16,16], index: 6, kind: input, shape index: {}]
  %s7 = inlined_call_operand.hbm [shape: bf16[16,16], index: 7, kind: input, shape index: {}]
  %s8 = inlined_call_operand.hbm [shape: f32[1,16], index: 8, kind: input, shape index: {}]
  %s9 = inlined_call_operand.hbm [shape: f32[1,16], index: 9, kind: input, shape index: {}]
  %s10 = inlined_call_operand.hbm [shape: f32[16,1], index: 10, kind: input, shape index: {}]
  %s11 = inlined_call_operand.hbm [shape: f32[1,16], index: 11, kind: input, shape index: {}]
  %s12 = inlined_call_operand.vmem [shape: bf16[432,48], index: 12, kind: input, shape index: {}]
  %s13 = inlined_call_operand.hbm [shape: f32[1,48], index: 13, kind: input, shape index: {}]
  %s14 = inlined_call_operand.hbm [shape: f32[1,48], index: 14, kind: input, shape index: {}]
  %s15 = inlined_call_operand.vmem [shape: bf16[432,16], index: 15, kind: input, shape index: {}]
  %s16 = inlined_call_operand.hbm [shape: f32[1,16], index: 16, kind: input, shape index: {}]
  %s17 = inlined_call_operand.hbm [shape: f32[1,16], index: 17, kind: input, shape index: {}]
  %s18 = inlined_call_operand.vmem [shape: bf16[16,16], index: 18, kind: input, shape index: {}]
  %s19 = inlined_call_operand.hbm [shape: f32[1,16], index: 19, kind: input, shape index: {}]
  %s20 = inlined_call_operand.hbm [shape: f32[1,16], index: 20, kind: input, shape index: {}]
  %s21 = inlined_call_operand.vmem [shape: bf16[288,16], index: 21, kind: input, shape index: {}]
  %s22 = inlined_call_operand.hbm [shape: f32[1,16], index: 22, kind: input, shape index: {}]
  %s23 = inlined_call_operand.hbm [shape: f32[1,16], index: 23, kind: input, shape index: {}]
  %s24 = inlined_call_operand.vmem [shape: bf16[16,16], index: 24, kind: input, shape index: {}]
  %s25 = inlined_call_operand.hbm [shape: f32[1,16], index: 25, kind: input, shape index: {}]
  %s26 = inlined_call_operand.vmem [shape: f32[1,16], index: 26, kind: input, shape index: {}]
  %s27 = inlined_call_operand.hbm [shape: f32[2,64,16], index: 27, kind: output, shape index: {}]
  %s28 = sld [smem:[#allocation0]]
  $region217: #{_lambda_.1} parent=0
    _
  %s30 = ssub.s32 1, %s28
  %s31 = scalar_select 0, %s30, %s28
  $region1: #{_lambda_.1} parent=0
    #allocation7 [shape = 'u8[512]{0}', space=smem, size = 0x200, scoped, tag = 'input window, operand 2, single buffered']
    #allocation8 [shape = 's32[2]{0}', space=sflag, size = 0x8, scoped, tag = 'scoped memory for _lambda_.1']
    #allocation9 [shape = 's32[2]{0}', space=sflag, size = 0x8, scoped, tag = 'scoped memory for _lambda_.1']
    #allocation10 [shape = 's32[2]{0}', space=sflag, size = 0x8, scoped, tag = 'scoped memory for _lambda_.1']
    #allocation11 [shape = 'u8[4096]{0}', space=vmem, size = 0x1000, scoped, tag = 'input window, operand 3, single buffered']
    #allocation12 [shape = 'u8[512]{0}', space=vmem, size = 0x400, scoped, tag = 'input window, operand 4, single buffered']
    #allocation13 [shape = 's32[1]{0}', space=sflag, size = 0x4, scoped, tag = 'scoped memory for _lambda_.1']
    #allocation14 [shape = 'u8[512]{0}', space=vmem, size = 0x400, scoped, tag = 'input window, operand 5, single buffered']
    #allocation15 [shape = 'u8[4096]{0}', space=vmem, size = 0x1000, scoped, tag = 'input window, operand 6, single buffered']
    #allocation16 [shape = 's32[1]{0}', space=sflag, size = 0x4, scoped, tag = 'scoped memory for _lambda_.1']
    #allocation17 [shape = 'u8[4096]{0}', space=vmem, size = 0x1000, scoped, tag = 'input window, operand 7, single buffered']
    #allocation18 [shape = 'u8[512]{0}', space=vmem, size = 0x400, scoped, tag = 'input window, operand 8, single buffered']
    #allocation19 [shape = 's32[1]{0}', space=sflag, size = 0x4, scoped, tag = 'scoped memory for _lambda_.1']
    #allocation20 [shape = 'u8[512]{0}', space=vmem, size = 0x400, scoped, tag = 'input window, operand 9, single buffered']
    #allocation21 [shape = 'u8[8192]{0}', space=vmem, size = 0x2000, scoped, tag = 'input window, operand 10, single buffered']
    #allocation22 [shape = 's32[1]{0}', space=sflag, size = 0x4, scoped, tag = 'scoped memory for _lambda_.1']
    #allocation23 [shape = 'u8[512]{0}', space=vmem, size = 0x400, scoped, tag = 'input window, operand 11, single buffered']
    #allocation24 [shape = 'u8[512]{0}', space=vmem, size = 0x400, scoped, tag = 'input window, operand 13, single buffered']
    #allocation25 [shape = 's32[1]{0}', space=sflag, size = 0x4, scoped, tag = 'scoped memory for _lambda_.1']
    #allocation26 [shape = 'u8[512]{0}', space=vmem, size = 0x400, scoped, tag = 'input window, operand 14, single buffered']
    #allocation27 [shape = 'u8[512]{0}', space=vmem, size = 0x400, scoped, tag = 'input window, operand 16, single buffered']
    #allocation28 [shape = 's32[1]{0}', space=sflag, size = 0x4, scoped, tag = 'scoped memory for _lambda_.1']
    #allocation29 [shape = 'u8[512]{0}', space=vmem, size = 0x400, scoped, tag = 'input window, operand 17, single buffered']
    #allocation30 [shape = 'u8[512]{0}', space=vmem, size = 0x400, scoped, tag = 'input window, operand 19, single buffered']
    #allocation31 [shape = 's32[1]{0}', space=sflag, size = 0x4, scoped, tag = 'scoped memory for _lambda_.1']
    #allocation32 [shape = 'u8[512]{0}', space=vmem, size = 0x400, scoped, tag = 'input window, operand 20, single buffered']
    #allocation33 [shape = 'u8[512]{0}', space=vmem, size = 0x400, scoped, tag = 'input window, operand 22, single buffered']
    #allocation34 [shape = 's32[1]{0}', space=sflag, size = 0x4, scoped, tag = 'scoped memory for _lambda_.1']
    #allocation35 [shape = 'u8[512]{0}', space=vmem, size = 0x400, scoped, tag = 'input window, operand 23, single buffered']
    #allocation36 [shape = 'u8[512]{0}', space=vmem, size = 0x400, scoped, tag = 'input window, operand 25, single buffered']
    #allocation37 [shape = 's32[1]{0}', space=sflag, size = 0x4, scoped, tag = 'scoped memory for _lambda_.1']
    #allocation38 [shape = 'u8[65536]{0}', space=vmem, size = 0x10000, scoped, tag = 'output window, operand 0']
    %32 = vsyncpa [#allocation10], 0
    %33 = vsyncpa [#allocation8], 0
    %34 = vsyncpa [#allocation13], 0
    %35 = vsyncpa [#allocation16], 0
    %36 = vsyncpa [#allocation19], 0
    %37 = vsyncpa [#allocation22], 0
    %38 = vsyncpa [#allocation25], 0
    %39 = vsyncpa [#allocation28], 0
    %40 = vsyncpa [#allocation31], 0
    %41 = vsyncpa [#allocation34], 0
    %42 = vsyncpa [#allocation37], 0
    %43 = vsyncpa [#allocation9], 0
    %s44 = scalar_lea.sflag [#allocation9], 1
    %45 = vsyncpa %s44, 0
    loop: start=0, step=1, limit=4
    $region2: #{_lambda_.1} parent=1 // loop_pre_header
      _
    $region3: #{_lambda_.1} parent=1 // loop_header
      %s47 = sphi 0, %s51
      %p48 = scmp.ge.s32.totalorder %s47, 4
      %s57 = sphi 0, %s59
      %s60 = sphi 0, %s57
      %s61 = sphi 0, %s60
      %s77 = sphi 0, %s61
      %s83 = sphi 0, %s85
      %s86 = sphi 0, %s83
      %s87 = sphi 0, %s86
      %s103 = sphi 0, %s87
      %s107 = sphi 0, %s107
      %s109 = sphi 0, %s107
      %s110 = sphi 0, %s109
      %s124 = sphi 0, %s110
      %s128 = sphi 0, %s128
      %s130 = sphi 0, %s128
      %s131 = sphi 0, %s130
      %s145 = sphi 0, %s131
      %s149 = sphi 0, %s149
      %s151 = sphi 0, %s149
      %s152 = sphi 0, %s151
      %s166 = sphi 0, %s152
      %s170 = sphi 0, %s170
      %s172 = sphi 0, %s170
      %s173 = sphi 0, %s172
      %s187 = sphi 0, %s173
      %s191 = sphi 0, %s191
      %s193 = sphi 0, %s191
      %s194 = sphi 0, %s193
      %s208 = sphi 0, %s194
      %s212 = sphi 0, %s212
      %s214 = sphi 0, %s212
      %s215 = sphi 0, %s214
      %s229 = sphi 0, %s215
      %s233 = sphi 0, %s233
      %s235 = sphi 0, %s233
      %s236 = sphi 0, %s235
      %s250 = sphi 0, %s236
      %s254 = sphi 0, %s254
      %s256 = sphi 0, %s254
      %s257 = sphi 0, %s256
      %s271 = sphi 0, %s257
      %s275 = sphi 0, %s275
      %s277 = sphi 0, %s275
      %s278 = sphi 0, %s277
      %s292 = sphi 0, %s278
      %s296 = sphi 0, %s296
      %s298 = sphi 0, %s296
      %s299 = sphi 0, %s298
      %s313 = sphi 0, %s299
      %s317 = sphi 0, %s317
      %s319 = sphi 0, %s317
      %s320 = sphi 0, %s319
      %s334 = sphi 0, %s320
      %s338 = sphi 0, %s338
      %s340 = sphi 0, %s338
      %s341 = sphi 0, %s340
      %s355 = sphi 0, %s341
      %s359 = sphi 0, %s359
      %s361 = sphi 0, %s359
      %s362 = sphi 0, %s361
      %s376 = sphi 0, %s362
      %s380 = sphi 0, %s380
      %s382 = sphi 0, %s380
      %s383 = sphi 0, %s382
      %s397 = sphi 0, %s383
      %s401 = sphi 0, %s401
      %s403 = sphi 0, %s401
      %s404 = sphi 0, %s403
      %s418 = sphi 0, %s404
      %s422 = sphi 0, %s422
      %s424 = sphi 0, %s422
      %s425 = sphi 0, %s424
      %s439 = sphi 0, %s425
      %s443 = sphi 0, %s443
      %s445 = sphi 0, %s443
      %s446 = sphi 0, %s445
      %s460 = sphi 0, %s446
      %s464 = sphi 0, %s464
      %s466 = sphi 0, %s464
      %s467 = sphi 0, %s466
      %s481 = sphi 0, %s467
      %s485 = sphi 0, %s485
      %s487 = sphi 0, %s485
      %s488 = sphi 0, %s487
      %s502 = sphi 0, %s488
      %s506 = sphi 0, %s506
      %s508 = sphi 0, %s506
      %s509 = sphi 0, %s508
      %s523 = sphi 0, %s509
      %s527 = sphi 0, %s527
      %s529 = sphi 0, %s527
      %s530 = sphi 0, %s529
      %s544 = sphi 0, %s530
      %s548 = sphi 0, %s548
      %s550 = sphi 0, %s548
      %s551 = sphi 0, %s550
      %s565 = sphi 0, %s551
      %s569 = sphi 0, %s569
      %s571 = sphi 0, %s569
      %s572 = sphi 0, %s571
      %s586 = sphi 0, %s572
      %s590 = sphi 0, %s590
      %s592 = sphi 0, %s590
      %s593 = sphi 0, %s592
      %s607 = sphi 0, %s593
      %s611 = sphi 0, %s611
      %s613 = sphi 0, %s611
      %s614 = sphi 0, %s613
      %s628 = sphi 0, %s614
      %s634 = sphi 0, %s636
      %s637 = sphi 0, %s634
      %s638 = sphi 0, %s637
      %s654 = sphi 0, %s638
    $region4: #{_lambda_.1} parent=1 // loop_header_branch
      %50 = sbr.rel (%p48) target = $region8
    $region5: #{_lambda_.1} parent=1 // loop_body
      %s52 = ssub.s32 %s47, 1
      %s53 = ssub.s32 %s47, 2
      %s54 = sadd.s32 %s47, 1
      %s55 = ssub.s32 %s47, %s54
      %p56 = scmp.eq.s32.totalorder %s55, 0
      %s58 = sadd.s32 %s57, 1
      %s59 = scalar_select %p56, %s57, %s58
      %p62 = pneg %p56
      %p63 = scmp.eq.s32.totalorder %s47, 1
      %p64 = por %p62, %p63
      %p65 = scmp.ne.s32.totalorder %s57, %s60
      %p66 = scmp.eq.s32.totalorder %s47, 0
      %p67 = por %p65, %p66
      %p68 = scmp.ne.s32.totalorder %s57, %s60
      %p69 = scmp.eq.s32.totalorder %s52, 1
      %p70 = por %p68, %p69
      %p71 = scmp.ne.s32.totalorder %s60, %s61
      %p72 = scmp.eq.s32.totalorder %s52, 0
      %p73 = por %p71, %p72
      %p74 = scmp.ne.s32.totalorder %s60, %s61
      %p75 = scmp.eq.s32.totalorder %s53, 1
      %p76 = por %p74, %p75
      %p78 = scmp.ne.s32.totalorder %s61, %s77
      %p79 = scmp.eq.s32.totalorder %s53, 0
      %p80 = por %p78, %p79
      %s81 = ssub.s32 %s47, %s54
      %p82 = scmp.eq.s32.totalorder %s81, 0
      %s84 = sadd.s32 %s83, 1
      %s85 = scalar_select %p82, %s83, %s84
      %p88 = pneg %p82
      %p89 = scmp.eq.s32.totalorder %s47, 1
      %p90 = por %p88, %p89
      %p91 = scmp.ne.s32.totalorder %s83, %s86
      %p92 = scmp.eq.s32.totalorder %s47, 0
      %p93 = por %p91, %p92
      %p94 = scmp.ne.s32.totalorder %s83, %s86
      %p95 = scmp.eq.s32.totalorder %s52, 1
      %p96 = por %p94, %p95
      %p97 = scmp.ne.s32.totalorder %s86, %s87
      %p98 = scmp.eq.s32.totalorder %s52, 0
      %p99 = por %p97, %p98
      %p100 = scmp.ne.s32.totalorder %s86, %s87
      %p101 = scmp.eq.s32.totalorder %s53, 1
      %p102 = por %p100, %p101
      %p104 = scmp.ne.s32.totalorder %s87, %s103
      %p105 = scmp.eq.s32.totalorder %s53, 0
      %p106 = por %p104, %p105
      %s108 = sadd.s32 %s107, 1
      %p111 = scmp.eq.s32.totalorder %s47, 1
      %p112 = scmp.ne.s32.totalorder %s107, %s109
      %p113 = scmp.eq.s32.totalorder %s47, 0
      %p114 = por %p112, %p113
      %p115 = scmp.ne.s32.totalorder %s107, %s109
      %p116 = scmp.eq.s32.totalorder %s52, 1
      %p117 = por %p115, %p116
      %p118 = scmp.ne.s32.totalorder %s109, %s110
      %p119 = scmp.eq.s32.totalorder %s52, 0
      %p120 = por %p118, %p119
      %p121 = scmp.ne.s32.totalorder %s109, %s110
      %p122 = scmp.eq.s32.totalorder %s53, 1
      %p123 = por %p121, %p122
      %p125 = scmp.ne.s32.totalorder %s110, %s124
      %p126 = scmp.eq.s32.totalorder %s53, 0
      %p127 = por %p125, %p126
      %s129 = sadd.s32 %s128, 1
      %p132 = scmp.eq.s32.totalorder %s47, 1
      %p133 = scmp.ne.s32.totalorder %s128, %s130
      %p134 = scmp.eq.s32.totalorder %s47, 0
      %p135 = por %p133, %p134
      %p136 = scmp.ne.s32.totalorder %s128, %s130
      %p137 = scmp.eq.s32.totalorder %s52, 1
      %p138 = por %p136, %p137
      %p139 = scmp.ne.s32.totalorder %s130, %s131
      %p140 = scmp.eq.s32.totalorder %s52, 0
      %p141 = por %p139, %p140
      %p142 = scmp.ne.s32.totalorder %s130, %s131
      %p143 = scmp.eq.s32.totalorder %s53, 1
      %p144 = por %p142, %p143
      %p146 = scmp.ne.s32.totalorder %s131, %s145
      %p147 = scmp.eq.s32.totalorder %s53, 0
      %p148 = por %p146, %p147
      %s150 = sadd.s32 %s149, 1
      %p153 = scmp.eq.s32.totalorder %s47, 1
      %p154 = scmp.ne.s32.totalorder %s149, %s151
      %p155 = scmp.eq.s32.totalorder %s47, 0
      %p156 = por %p154, %p155
      %p157 = scmp.ne.s32.totalorder %s149, %s151
      %p158 = scmp.eq.s32.totalorder %s52, 1
      %p159 = por %p157, %p158
      %p160 = scmp.ne.s32.totalorder %s151, %s152
      %p161 = scmp.eq.s32.totalorder %s52, 0
      %p162 = por %p160, %p161
      %p163 = scmp.ne.s32.totalorder %s151, %s152
      %p164 = scmp.eq.s32.totalorder %s53, 1
      %p165 = por %p163, %p164
      %p167 = scmp.ne.s32.totalorder %s152, %s166
      %p168 = scmp.eq.s32.totalorder %s53, 0
      %p169 = por %p167, %p168
      %s171 = sadd.s32 %s170, 1
      %p174 = scmp.eq.s32.totalorder %s47, 1
      %p175 = scmp.ne.s32.totalorder %s170, %s172
      %p176 = scmp.eq.s32.totalorder %s47, 0
      %p177 = por %p175, %p176
      %p178 = scmp.ne.s32.totalorder %s170, %s172
      %p179 = scmp.eq.s32.totalorder %s52, 1
      %p180 = por %p178, %p179
      %p181 = scmp.ne.s32.totalorder %s172, %s173
      %p182 = scmp.eq.s32.totalorder %s52, 0
      %p183 = por %p181, %p182
      %p184 = scmp.ne.s32.totalorder %s172, %s173
      %p185 = scmp.eq.s32.totalorder %s53, 1
      %p186 = por %p184, %p185
      %p188 = scmp.ne.s32.totalorder %s173, %s187
      %p189 = scmp.eq.s32.totalorder %s53, 0
      %p190 = por %p188, %p189
      %s192 = sadd.s32 %s191, 1
      %p195 = scmp.eq.s32.totalorder %s47, 1
      %p196 = scmp.ne.s32.totalorder %s191, %s193
      %p197 = scmp.eq.s32.totalorder %s47, 0
      %p198 = por %p196, %p197
      %p199 = scmp.ne.s32.totalorder %s191, %s193
      %p200 = scmp.eq.s32.totalorder %s52, 1
      %p201 = por %p199, %p200
      %p202 = scmp.ne.s32.totalorder %s193, %s194
      %p203 = scmp.eq.s32.totalorder %s52, 0
      %p204 = por %p202, %p203
      %p205 = scmp.ne.s32.totalorder %s193, %s194
      %p206 = scmp.eq.s32.totalorder %s53, 1
      %p207 = por %p205, %p206
      %p209 = scmp.ne.s32.totalorder %s194, %s208
      %p210 = scmp.eq.s32.totalorder %s53, 0
      %p211 = por %p209, %p210
      %s213 = sadd.s32 %s212, 1
      %p216 = scmp.eq.s32.totalorder %s47, 1
      %p217 = scmp.ne.s32.totalorder %s212, %s214
      %p218 = scmp.eq.s32.totalorder %s47, 0
      %p219 = por %p217, %p218
      %p220 = scmp.ne.s32.totalorder %s212, %s214
      %p221 = scmp.eq.s32.totalorder %s52, 1
      %p222 = por %p220, %p221
      %p223 = scmp.ne.s32.totalorder %s214, %s215
      %p224 = scmp.eq.s32.totalorder %s52, 0
      %p225 = por %p223, %p224
      %p226 = scmp.ne.s32.totalorder %s214, %s215
      %p227 = scmp.eq.s32.totalorder %s53, 1
      %p228 = por %p226, %p227
      %p230 = scmp.ne.s32.totalorder %s215, %s229
      %p231 = scmp.eq.s32.totalorder %s53, 0
      %p232 = por %p230, %p231
      %s234 = sadd.s32 %s233, 1
      %p237 = scmp.eq.s32.totalorder %s47, 1
      %p238 = scmp.ne.s32.totalorder %s233, %s235
      %p239 = scmp.eq.s32.totalorder %s47, 0
      %p240 = por %p238, %p239
      %p241 = scmp.ne.s32.totalorder %s233, %s235
      %p242 = scmp.eq.s32.totalorder %s52, 1
      %p243 = por %p241, %p242
      %p244 = scmp.ne.s32.totalorder %s235, %s236
      %p245 = scmp.eq.s32.totalorder %s52, 0
      %p246 = por %p244, %p245
      %p247 = scmp.ne.s32.totalorder %s235, %s236
      %p248 = scmp.eq.s32.totalorder %s53, 1
      %p249 = por %p247, %p248
      %p251 = scmp.ne.s32.totalorder %s236, %s250
      %p252 = scmp.eq.s32.totalorder %s53, 0
      %p253 = por %p251, %p252
      %s255 = sadd.s32 %s254, 1
      %p258 = scmp.eq.s32.totalorder %s47, 1
      %p259 = scmp.ne.s32.totalorder %s254, %s256
      %p260 = scmp.eq.s32.totalorder %s47, 0
      %p261 = por %p259, %p260
      %p262 = scmp.ne.s32.totalorder %s254, %s256
      %p263 = scmp.eq.s32.totalorder %s52, 1
      %p264 = por %p262, %p263
      %p265 = scmp.ne.s32.totalorder %s256, %s257
      %p266 = scmp.eq.s32.totalorder %s52, 0
      %p267 = por %p265, %p266
      %p268 = scmp.ne.s32.totalorder %s256, %s257
      %p269 = scmp.eq.s32.totalorder %s53, 1
      %p270 = por %p268, %p269
      %p272 = scmp.ne.s32.totalorder %s257, %s271
      %p273 = scmp.eq.s32.totalorder %s53, 0
      %p274 = por %p272, %p273
      %s276 = sadd.s32 %s275, 1
      %p279 = scmp.eq.s32.totalorder %s47, 1
      %p280 = scmp.ne.s32.totalorder %s275, %s277
      %p281 = scmp.eq.s32.totalorder %s47, 0
      %p282 = por %p280, %p281
      %p283 = scmp.ne.s32.totalorder %s275, %s277
      %p284 = scmp.eq.s32.totalorder %s52, 1
      %p285 = por %p283, %p284
      %p286 = scmp.ne.s32.totalorder %s277, %s278
      %p287 = scmp.eq.s32.totalorder %s52, 0
      %p288 = por %p286, %p287
      %p289 = scmp.ne.s32.totalorder %s277, %s278
      %p290 = scmp.eq.s32.totalorder %s53, 1
      %p291 = por %p289, %p290
      %p293 = scmp.ne.s32.totalorder %s278, %s292
      %p294 = scmp.eq.s32.totalorder %s53, 0
      %p295 = por %p293, %p294
      %s297 = sadd.s32 %s296, 1
      %p300 = scmp.eq.s32.totalorder %s47, 1
      %p301 = scmp.ne.s32.totalorder %s296, %s298
      %p302 = scmp.eq.s32.totalorder %s47, 0
      %p303 = por %p301, %p302
      %p304 = scmp.ne.s32.totalorder %s296, %s298
      %p305 = scmp.eq.s32.totalorder %s52, 1
      %p306 = por %p304, %p305
      %p307 = scmp.ne.s32.totalorder %s298, %s299
      %p308 = scmp.eq.s32.totalorder %s52, 0
      %p309 = por %p307, %p308
      %p310 = scmp.ne.s32.totalorder %s298, %s299
      %p311 = scmp.eq.s32.totalorder %s53, 1
      %p312 = por %p310, %p311
      %p314 = scmp.ne.s32.totalorder %s299, %s313
      %p315 = scmp.eq.s32.totalorder %s53, 0
      %p316 = por %p314, %p315
      %s318 = sadd.s32 %s317, 1
      %p321 = scmp.eq.s32.totalorder %s47, 1
      %p322 = scmp.ne.s32.totalorder %s317, %s319
      %p323 = scmp.eq.s32.totalorder %s47, 0
      %p324 = por %p322, %p323
      %p325 = scmp.ne.s32.totalorder %s317, %s319
      %p326 = scmp.eq.s32.totalorder %s52, 1
      %p327 = por %p325, %p326
      %p328 = scmp.ne.s32.totalorder %s319, %s320
      %p329 = scmp.eq.s32.totalorder %s52, 0
      %p330 = por %p328, %p329
      %p331 = scmp.ne.s32.totalorder %s319, %s320
      %p332 = scmp.eq.s32.totalorder %s53, 1
      %p333 = por %p331, %p332
      %p335 = scmp.ne.s32.totalorder %s320, %s334
      %p336 = scmp.eq.s32.totalorder %s53, 0
      %p337 = por %p335, %p336
      %s339 = sadd.s32 %s338, 1
      %p342 = scmp.eq.s32.totalorder %s47, 1
      %p343 = scmp.ne.s32.totalorder %s338, %s340
      %p344 = scmp.eq.s32.totalorder %s47, 0
      %p345 = por %p343, %p344
      %p346 = scmp.ne.s32.totalorder %s338, %s340
      %p347 = scmp.eq.s32.totalorder %s52, 1
      %p348 = por %p346, %p347
      %p349 = scmp.ne.s32.totalorder %s340, %s341
      %p350 = scmp.eq.s32.totalorder %s52, 0
      %p351 = por %p349, %p350
      %p352 = scmp.ne.s32.totalorder %s340, %s341
      %p353 = scmp.eq.s32.totalorder %s53, 1
      %p354 = por %p352, %p353
      %p356 = scmp.ne.s32.totalorder %s341, %s355
      %p357 = scmp.eq.s32.totalorder %s53, 0
      %p358 = por %p356, %p357
      %s360 = sadd.s32 %s359, 1
      %p363 = scmp.eq.s32.totalorder %s47, 1
      %p364 = scmp.ne.s32.totalorder %s359, %s361
      %p365 = scmp.eq.s32.totalorder %s47, 0
      %p366 = por %p364, %p365
      %p367 = scmp.ne.s32.totalorder %s359, %s361
      %p368 = scmp.eq.s32.totalorder %s52, 1
      %p369 = por %p367, %p368
      %p370 = scmp.ne.s32.totalorder %s361, %s362
      %p371 = scmp.eq.s32.totalorder %s52, 0
      %p372 = por %p370, %p371
      %p373 = scmp.ne.s32.totalorder %s361, %s362
      %p374 = scmp.eq.s32.totalorder %s53, 1
      %p375 = por %p373, %p374
      %p377 = scmp.ne.s32.totalorder %s362, %s376
      %p378 = scmp.eq.s32.totalorder %s53, 0
      %p379 = por %p377, %p378
      %s381 = sadd.s32 %s380, 1
      %p384 = scmp.eq.s32.totalorder %s47, 1
      %p385 = scmp.ne.s32.totalorder %s380, %s382
      %p386 = scmp.eq.s32.totalorder %s47, 0
      %p387 = por %p385, %p386
      %p388 = scmp.ne.s32.totalorder %s380, %s382
      %p389 = scmp.eq.s32.totalorder %s52, 1
      %p390 = por %p388, %p389
      %p391 = scmp.ne.s32.totalorder %s382, %s383
      %p392 = scmp.eq.s32.totalorder %s52, 0
      %p393 = por %p391, %p392
      %p394 = scmp.ne.s32.totalorder %s382, %s383
      %p395 = scmp.eq.s32.totalorder %s53, 1
      %p396 = por %p394, %p395
      %p398 = scmp.ne.s32.totalorder %s383, %s397
      %p399 = scmp.eq.s32.totalorder %s53, 0
      %p400 = por %p398, %p399
      %s402 = sadd.s32 %s401, 1
      %p405 = scmp.eq.s32.totalorder %s47, 1
      %p406 = scmp.ne.s32.totalorder %s401, %s403
      %p407 = scmp.eq.s32.totalorder %s47, 0
      %p408 = por %p406, %p407
      %p409 = scmp.ne.s32.totalorder %s401, %s403
      %p410 = scmp.eq.s32.totalorder %s52, 1
      %p411 = por %p409, %p410
      %p412 = scmp.ne.s32.totalorder %s403, %s404
      %p413 = scmp.eq.s32.totalorder %s52, 0
      %p414 = por %p412, %p413
      %p415 = scmp.ne.s32.totalorder %s403, %s404
      %p416 = scmp.eq.s32.totalorder %s53, 1
      %p417 = por %p415, %p416
      %p419 = scmp.ne.s32.totalorder %s404, %s418
      %p420 = scmp.eq.s32.totalorder %s53, 0
      %p421 = por %p419, %p420
      %s423 = sadd.s32 %s422, 1
      %p426 = scmp.eq.s32.totalorder %s47, 1
      %p427 = scmp.ne.s32.totalorder %s422, %s424
      %p428 = scmp.eq.s32.totalorder %s47, 0
      %p429 = por %p427, %p428
      %p430 = scmp.ne.s32.totalorder %s422, %s424
      %p431 = scmp.eq.s32.totalorder %s52, 1
      %p432 = por %p430, %p431
      %p433 = scmp.ne.s32.totalorder %s424, %s425
      %p434 = scmp.eq.s32.totalorder %s52, 0
      %p435 = por %p433, %p434
      %p436 = scmp.ne.s32.totalorder %s424, %s425
      %p437 = scmp.eq.s32.totalorder %s53, 1
      %p438 = por %p436, %p437
      %p440 = scmp.ne.s32.totalorder %s425, %s439
      %p441 = scmp.eq.s32.totalorder %s53, 0
      %p442 = por %p440, %p441
      %s444 = sadd.s32 %s443, 1
      %p447 = scmp.eq.s32.totalorder %s47, 1
      %p448 = scmp.ne.s32.totalorder %s443, %s445
      %p449 = scmp.eq.s32.totalorder %s47, 0
      %p450 = por %p448, %p449
      %p451 = scmp.ne.s32.totalorder %s443, %s445
      %p452 = scmp.eq.s32.totalorder %s52, 1
      %p453 = por %p451, %p452
      %p454 = scmp.ne.s32.totalorder %s445, %s446
      %p455 = scmp.eq.s32.totalorder %s52, 0
      %p456 = por %p454, %p455
      %p457 = scmp.ne.s32.totalorder %s445, %s446
      %p458 = scmp.eq.s32.totalorder %s53, 1
      %p459 = por %p457, %p458
      %p461 = scmp.ne.s32.totalorder %s446, %s460
      %p462 = scmp.eq.s32.totalorder %s53, 0
      %p463 = por %p461, %p462
      %s465 = sadd.s32 %s464, 1
      %p468 = scmp.eq.s32.totalorder %s47, 1
      %p469 = scmp.ne.s32.totalorder %s464, %s466
      %p470 = scmp.eq.s32.totalorder %s47, 0
      %p471 = por %p469, %p470
      %p472 = scmp.ne.s32.totalorder %s464, %s466
      %p473 = scmp.eq.s32.totalorder %s52, 1
      %p474 = por %p472, %p473
      %p475 = scmp.ne.s32.totalorder %s466, %s467
      %p476 = scmp.eq.s32.totalorder %s52, 0
      %p477 = por %p475, %p476
      %p478 = scmp.ne.s32.totalorder %s466, %s467
      %p479 = scmp.eq.s32.totalorder %s53, 1
      %p480 = por %p478, %p479
      %p482 = scmp.ne.s32.totalorder %s467, %s481
      %p483 = scmp.eq.s32.totalorder %s53, 0
      %p484 = por %p482, %p483
      %s486 = sadd.s32 %s485, 1
      %p489 = scmp.eq.s32.totalorder %s47, 1
      %p490 = scmp.ne.s32.totalorder %s485, %s487
      %p491 = scmp.eq.s32.totalorder %s47, 0
      %p492 = por %p490, %p491
      %p493 = scmp.ne.s32.totalorder %s485, %s487
      %p494 = scmp.eq.s32.totalorder %s52, 1
      %p495 = por %p493, %p494
      %p496 = scmp.ne.s32.totalorder %s487, %s488
      %p497 = scmp.eq.s32.totalorder %s52, 0
      %p498 = por %p496, %p497
      %p499 = scmp.ne.s32.totalorder %s487, %s488
      %p500 = scmp.eq.s32.totalorder %s53, 1
      %p501 = por %p499, %p500
      %p503 = scmp.ne.s32.totalorder %s488, %s502
      %p504 = scmp.eq.s32.totalorder %s53, 0
      %p505 = por %p503, %p504
      %s507 = sadd.s32 %s506, 1
      %p510 = scmp.eq.s32.totalorder %s47, 1
      %p511 = scmp.ne.s32.totalorder %s506, %s508
      %p512 = scmp.eq.s32.totalorder %s47, 0
      %p513 = por %p511, %p512
      %p514 = scmp.ne.s32.totalorder %s506, %s508
      %p515 = scmp.eq.s32.totalorder %s52, 1
      %p516 = por %p514, %p515
      %p517 = scmp.ne.s32.totalorder %s508, %s509
      %p518 = scmp.eq.s32.totalorder %s52, 0
      %p519 = por %p517, %p518
      %p520 = scmp.ne.s32.totalorder %s508, %s509
      %p521 = scmp.eq.s32.totalorder %s53, 1
      %p522 = por %p520, %p521
      %p524 = scmp.ne.s32.totalorder %s509, %s523
      %p525 = scmp.eq.s32.totalorder %s53, 0
      %p526 = por %p524, %p525
      %s528 = sadd.s32 %s527, 1
      %p531 = scmp.eq.s32.totalorder %s47, 1
      %p532 = scmp.ne.s32.totalorder %s527, %s529
      %p533 = scmp.eq.s32.totalorder %s47, 0
      %p534 = por %p532, %p533
      %p535 = scmp.ne.s32.totalorder %s527, %s529
      %p536 = scmp.eq.s32.totalorder %s52, 1
      %p537 = por %p535, %p536
      %p538 = scmp.ne.s32.totalorder %s529, %s530
      %p539 = scmp.eq.s32.totalorder %s52, 0
      %p540 = por %p538, %p539
      %p541 = scmp.ne.s32.totalorder %s529, %s530
      %p542 = scmp.eq.s32.totalorder %s53, 1
      %p543 = por %p541, %p542
      %p545 = scmp.ne.s32.totalorder %s530, %s544
      %p546 = scmp.eq.s32.totalorder %s53, 0
      %p547 = por %p545, %p546
      %s549 = sadd.s32 %s548, 1
      %p552 = scmp.eq.s32.totalorder %s47, 1
      %p553 = scmp.ne.s32.totalorder %s548, %s550
      %p554 = scmp.eq.s32.totalorder %s47, 0
      %p555 = por %p553, %p554
      %p556 = scmp.ne.s32.totalorder %s548, %s550
      %p557 = scmp.eq.s32.totalorder %s52, 1
      %p558 = por %p556, %p557
      %p559 = scmp.ne.s32.totalorder %s550, %s551
      %p560 = scmp.eq.s32.totalorder %s52, 0
      %p561 = por %p559, %p560
      %p562 = scmp.ne.s32.totalorder %s550, %s551
      %p563 = scmp.eq.s32.totalorder %s53, 1
      %p564 = por %p562, %p563
      %p566 = scmp.ne.s32.totalorder %s551, %s565
      %p567 = scmp.eq.s32.totalorder %s53, 0
      %p568 = por %p566, %p567
      %s570 = sadd.s32 %s569, 1
      %p573 = scmp.eq.s32.totalorder %s47, 1
      %p574 = scmp.ne.s32.totalorder %s569, %s571
      %p575 = scmp.eq.s32.totalorder %s47, 0
      %p576 = por %p574, %p575
      %p577 = scmp.ne.s32.totalorder %s569, %s571
      %p578 = scmp.eq.s32.totalorder %s52, 1
      %p579 = por %p577, %p578
      %p580 = scmp.ne.s32.totalorder %s571, %s572
      %p581 = scmp.eq.s32.totalorder %s52, 0
      %p582 = por %p580, %p581
      %p583 = scmp.ne.s32.totalorder %s571, %s572
      %p584 = scmp.eq.s32.totalorder %s53, 1
      %p585 = por %p583, %p584
      %p587 = scmp.ne.s32.totalorder %s572, %s586
      %p588 = scmp.eq.s32.totalorder %s53, 0
      %p589 = por %p587, %p588
      %s591 = sadd.s32 %s590, 1
      %p594 = scmp.eq.s32.totalorder %s47, 1
      %p595 = scmp.ne.s32.totalorder %s590, %s592
      %p596 = scmp.eq.s32.totalorder %s47, 0
      %p597 = por %p595, %p596
      %p598 = scmp.ne.s32.totalorder %s590, %s592
      %p599 = scmp.eq.s32.totalorder %s52, 1
      %p600 = por %p598, %p599
      %p601 = scmp.ne.s32.totalorder %s592, %s593
      %p602 = scmp.eq.s32.totalorder %s52, 0
      %p603 = por %p601, %p602
      %p604 = scmp.ne.s32.totalorder %s592, %s593
      %p605 = scmp.eq.s32.totalorder %s53, 1
      %p606 = por %p604, %p605
      %p608 = scmp.ne.s32.totalorder %s593, %s607
      %p609 = scmp.eq.s32.totalorder %s53, 0
      %p610 = por %p608, %p609
      %s612 = sadd.s32 %s611, 1
      %p615 = scmp.eq.s32.totalorder %s47, 1
      %p616 = scmp.ne.s32.totalorder %s611, %s613
      %p617 = scmp.eq.s32.totalorder %s47, 0
      %p618 = por %p616, %p617
      %p619 = scmp.ne.s32.totalorder %s611, %s613
      %p620 = scmp.eq.s32.totalorder %s52, 1
      %p621 = por %p619, %p620
      %p622 = scmp.ne.s32.totalorder %s613, %s614
      %p623 = scmp.eq.s32.totalorder %s52, 0
      %p624 = por %p622, %p623
      %p625 = scmp.ne.s32.totalorder %s613, %s614
      %p626 = scmp.eq.s32.totalorder %s53, 1
      %p627 = por %p625, %p626
      %p629 = scmp.ne.s32.totalorder %s614, %s628
      %p630 = scmp.eq.s32.totalorder %s53, 0
      %p631 = por %p629, %p630
      %s632 = ssub.s32 %s47, %s54
      %p633 = scmp.eq.s32.totalorder %s632, 0
      %s635 = sadd.s32 %s634, 1
      %s636 = scalar_select %p633, %s634, %s635
      %p639 = pneg %p633
      %p640 = scmp.eq.s32.totalorder %s47, 1
      %p641 = por %p639, %p640
      %p642 = scmp.ne.s32.totalorder %s634, %s637
      %p643 = scmp.eq.s32.totalorder %s47, 0
      %p644 = por %p642, %p643
      %p645 = scmp.ne.s32.totalorder %s634, %s637
      %p646 = scmp.eq.s32.totalorder %s52, 1
      %p647 = por %p645, %p646
      %p648 = scmp.ne.s32.totalorder %s637, %s638
      %p649 = scmp.eq.s32.totalorder %s52, 0
      %p650 = por %p648, %p649
      %p651 = scmp.ne.s32.totalorder %s637, %s638
      %p652 = scmp.eq.s32.totalorder %s53, 1
      %p653 = por %p651, %p652
      %p655 = scmp.ne.s32.totalorder %s638, %s654
      %p656 = scmp.eq.s32.totalorder %s53, 0
      %p657 = por %p655, %p656
      %p658 = scmp.le.s32.totalorder 1, %s47
      %p659 = scmp.lt.s32.totalorder %s47, 3
      %p660 = pnand %p658, %p659
      %p661 = pneg %p660
      // Predicated region
      $region9: #{_lambda_.1} parent=5 // pred_check
        _
      $region10: #{_lambda_.1} parent=5 // pred_check_branch
        %663 = sbr.rel (%p660) target = $region12
      $region11: #{_lambda_.1} parent=5 // pred_region
        %s664 = ssub.s32 %s47, 1
        // Predicated region
        $region13: #{_lambda_.1} parent=11 // pred_check
          %p665 = pneg %p120
        $region14: #{_lambda_.1} parent=11 // pred_check_branch
          %667 = sbr.rel (%p665) target = $region16
        $region15: #{_lambda_.1} parent=11 // pred_region
          %669 = vsyncadd [#allocation10], 0
          %s671 = sshll.u32 %s2, 4
          %s672 = int_to_ptr.hbm [resolvable:$true] %s671
          %674 = dma.hbm_to_smem %s672, 16, [#allocation7], [#allocation10]
        $region16: #{_lambda_.1} parent=11 // pred_fallthru
          _
        // Predicated region
        $region17: #{_lambda_.1} parent=11 // pred_check
          %p675 = pneg %p141
        $region18: #{_lambda_.1} parent=11 // pred_check_branch
          %677 = sbr.rel (%p675) target = $region20
        $region19: #{_lambda_.1} parent=11 // pred_region
          %679 = vsyncadd [#allocation8], 0
          %s680 = sshll.u32 %s3, 4
          %s681 = int_to_ptr.hbm [resolvable:$true] %s680
          %s682 = sshll.u32 [#allocation11], 4
          %s683 = int_to_ptr.vmem [resolvable:$true] %s682
          %688 = dma.hbm_to_vmem [thread:$0]  %s681, 128, %s683, [#allocation8], 64, 64, 4
        $region20: #{_lambda_.1} parent=11 // pred_fallthru
          _
        // Predicated region
        $region21: #{_lambda_.1} parent=11 // pred_check
          %p689 = pneg %p162
        $region22: #{_lambda_.1} parent=11 // pred_check_branch
          %691 = sbr.rel (%p689) target = $region24
        $region23: #{_lambda_.1} parent=11 // pred_region
          %693 = vsyncadd [#allocation13], 0
          %s695 = sshll.u32 %s4, 4
          %s696 = int_to_ptr.hbm [resolvable:$true] %s695
          %s697 = sshll.u32 [#allocation12], 4
          %s698 = int_to_ptr.vmem [resolvable:$true] %s697
          %700 = dma.hbm_to_vmem [thread:$0]  %s696, 16, %s698, [#allocation13]
        $region24: #{_lambda_.1} parent=11 // pred_fallthru
          _
        // Predicated region
        $region25: #{_lambda_.1} parent=11 // pred_check
          %p701 = pneg %p183
        $region26: #{_lambda_.1} parent=11 // pred_check_branch
          %703 = sbr.rel (%p701) target = $region28
        $region27: #{_lambda_.1} parent=11 // pred_region
          %705 = vsyncadd [#allocation13], 0
          %s707 = sshll.u32 %s5, 4
          %s708 = int_to_ptr.hbm [resolvable:$true] %s707
          %s709 = sshll.u32 [#allocation14], 4
          %s710 = int_to_ptr.vmem [resolvable:$true] %s709
          %712 = dma.hbm_to_vmem [thread:$0]  %s708, 16, %s710, [#allocation13]
        $region28: #{_lambda_.1} parent=11 // pred_fallthru
          _
        // Predicated region
        $region29: #{_lambda_.1} parent=11 // pred_check
          %p713 = pneg %p204
        $region30: #{_lambda_.1} parent=11 // pred_check_branch
          %715 = sbr.rel (%p713) target = $region32
        $region31: #{_lambda_.1} parent=11 // pred_region
          %717 = vsyncadd [#allocation16], 0
          %s718 = sshll.u32 %s6, 4
          %s719 = int_to_ptr.hbm [resolvable:$true] %s718
          %s720 = sshll.u32 [#allocation15], 4
          %s721 = int_to_ptr.vmem [resolvable:$true] %s720
          %726 = dma.hbm_to_vmem [thread:$0]  %s719, 128, %s721, [#allocation16], 64, 64, 4
        $region32: #{_lambda_.1} parent=11 // pred_fallthru
          _
        // Predicated region
        $region33: #{_lambda_.1} parent=11 // pred_check
          %p727 = pneg %p225
        $region34: #{_lambda_.1} parent=11 // pred_check_branch
          %729 = sbr.rel (%p727) target = $region36
        $region35: #{_lambda_.1} parent=11 // pred_region
          %731 = vsyncadd [#allocation16], 0
          %s732 = sshll.u32 %s7, 4
          %s733 = int_to_ptr.hbm [resolvable:$true] %s732
          %s734 = sshll.u32 [#allocation17], 4
          %s735 = int_to_ptr.vmem [resolvable:$true] %s734
          %740 = dma.hbm_to_vmem [thread:$0]  %s733, 128, %s735, [#allocation16], 64, 64, 4
        $region36: #{_lambda_.1} parent=11 // pred_fallthru
          _
        // Predicated region
        $region37: #{_lambda_.1} parent=11 // pred_check
          %p741 = pneg %p246
        $region38: #{_lambda_.1} parent=11 // pred_check_branch
          %743 = sbr.rel (%p741) target = $region40
        $region39: #{_lambda_.1} parent=11 // pred_region
          %745 = vsyncadd [#allocation19], 0
          %s747 = sshll.u32 %s8, 4
          %s748 = int_to_ptr.hbm [resolvable:$true] %s747
          %s749 = sshll.u32 [#allocation18], 4
          %s750 = int_to_ptr.vmem [resolvable:$true] %s749
          %752 = dma.hbm_to_vmem [thread:$0]  %s748, 16, %s750, [#allocation19]
        $region40: #{_lambda_.1} parent=11 // pred_fallthru
          _
        // Predicated region
        $region41: #{_lambda_.1} parent=11 // pred_check
          %p753 = pneg %p267
        $region42: #{_lambda_.1} parent=11 // pred_check_branch
          %755 = sbr.rel (%p753) target = $region44
        $region43: #{_lambda_.1} parent=11 // pred_region
          %757 = vsyncadd [#allocation19], 0
          %s759 = sshll.u32 %s9, 4
          %s760 = int_to_ptr.hbm [resolvable:$true] %s759
          %s761 = sshll.u32 [#allocation20], 4
          %s762 = int_to_ptr.vmem [resolvable:$true] %s761
          %764 = dma.hbm_to_vmem [thread:$0]  %s760, 16, %s762, [#allocation19]
        $region44: #{_lambda_.1} parent=11 // pred_fallthru
          _
        // Predicated region
        $region45: #{_lambda_.1} parent=11 // pred_check
          %p765 = pneg %p288
        $region46: #{_lambda_.1} parent=11 // pred_check_branch
          %767 = sbr.rel (%p765) target = $region48
        $region47: #{_lambda_.1} parent=11 // pred_region
          %769 = vsyncadd [#allocation22], 0
          %s770 = sshll.u32 %s10, 4
          %s771 = int_to_ptr.hbm [resolvable:$true] %s770
          %s772 = sshll.u32 [#allocation21], 4
          %s773 = int_to_ptr.vmem [resolvable:$true] %s772
          %778 = dma.hbm_to_vmem [thread:$0]  %s771, 256, %s773, [#allocation22], 128, 128, 8
        $region48: #{_lambda_.1} parent=11 // pred_fallthru
          _
        // Predicated region
        $region49: #{_lambda_.1} parent=11 // pred_check
          %p779 = pneg %p309
        $region50: #{_lambda_.1} parent=11 // pred_check_branch
          %781 = sbr.rel (%p779) target = $region52
        $region51: #{_lambda_.1} parent=11 // pred_region
          %783 = vsyncadd [#allocation22], 0
          %s785 = sshll.u32 %s11, 4
          %s786 = int_to_ptr.hbm [resolvable:$true] %s785
          %s787 = sshll.u32 [#allocation23], 4
          %s788 = int_to_ptr.vmem [resolvable:$true] %s787
          %790 = dma.hbm_to_vmem [thread:$0]  %s786, 16, %s788, [#allocation22]
        $region52: #{_lambda_.1} parent=11 // pred_fallthru
          _
        // Predicated region
        $region53: #{_lambda_.1} parent=11 // pred_check
          %p791 = pneg %p330
        $region54: #{_lambda_.1} parent=11 // pred_check_branch
          %793 = sbr.rel (%p791) target = $region56
        $region55: #{_lambda_.1} parent=11 // pred_region
          _
        $region56: #{_lambda_.1} parent=11 // pred_fallthru
          _
        // Predicated region
        $region57: #{_lambda_.1} parent=11 // pred_check
          %p794 = pneg %p351
        $region58: #{_lambda_.1} parent=11 // pred_check_branch
          %796 = sbr.rel (%p794) target = $region60
        $region59: #{_lambda_.1} parent=11 // pred_region
          %798 = vsyncadd [#allocation25], 0
          %s800 = sshll.u32 %s13, 4
          %s801 = int_to_ptr.hbm [resolvable:$true] %s800
          %s802 = sshll.u32 [#allocation24], 4
          %s803 = int_to_ptr.vmem [resolvable:$true] %s802
          %805 = dma.hbm_to_vmem [thread:$0]  %s801, 16, %s803, [#allocation25]
        $region60: #{_lambda_.1} parent=11 // pred_fallthru
          _
        // Predicated region
        $region61: #{_lambda_.1} parent=11 // pred_check
          %p806 = pneg %p372
        $region62: #{_lambda_.1} parent=11 // pred_check_branch
          %808 = sbr.rel (%p806) target = $region64
        $region63: #{_lambda_.1} parent=11 // pred_region
          %810 = vsyncadd [#allocation25], 0
          %s812 = sshll.u32 %s14, 4
          %s813 = int_to_ptr.hbm [resolvable:$true] %s812
          %s814 = sshll.u32 [#allocation26], 4
          %s815 = int_to_ptr.vmem [resolvable:$true] %s814
          %817 = dma.hbm_to_vmem [thread:$0]  %s813, 16, %s815, [#allocation25]
        $region64: #{_lambda_.1} parent=11 // pred_fallthru
          _
        // Predicated region
        $region65: #{_lambda_.1} parent=11 // pred_check
          %p818 = pneg %p393
        $region66: #{_lambda_.1} parent=11 // pred_check_branch
          %820 = sbr.rel (%p818) target = $region68
        $region67: #{_lambda_.1} parent=11 // pred_region
          _
        $region68: #{_lambda_.1} parent=11 // pred_fallthru
          _
        // Predicated region
        $region69: #{_lambda_.1} parent=11 // pred_check
          %p821 = pneg %p414
        $region70: #{_lambda_.1} parent=11 // pred_check_branch
          %823 = sbr.rel (%p821) target = $region72
        $region71: #{_lambda_.1} parent=11 // pred_region
          %825 = vsyncadd [#allocation28], 0
          %s827 = sshll.u32 %s16, 4
          %s828 = int_to_ptr.hbm [resolvable:$true] %s827
          %s829 = sshll.u32 [#allocation27], 4
          %s830 = int_to_ptr.vmem [resolvable:$true] %s829
          %832 = dma.hbm_to_vmem [thread:$0]  %s828, 16, %s830, [#allocation28]
        $region72: #{_lambda_.1} parent=11 // pred_fallthru
          _
        // Predicated region
        $region73: #{_lambda_.1} parent=11 // pred_check
          %p833 = pneg %p435
        $region74: #{_lambda_.1} parent=11 // pred_check_branch
          %835 = sbr.rel (%p833) target = $region76
        $region75: #{_lambda_.1} parent=11 // pred_region
          %837 = vsyncadd [#allocation28], 0
          %s839 = sshll.u32 %s17, 4
          %s840 = int_to_ptr.hbm [resolvable:$true] %s839
          %s841 = sshll.u32 [#allocation29], 4
          %s842 = int_to_ptr.vmem [resolvable:$true] %s841
          %844 = dma.hbm_to_vmem [thread:$0]  %s840, 16, %s842, [#allocation28]
        $region76: #{_lambda_.1} parent=11 // pred_fallthru
          _
        // Predicated region
        $region77: #{_lambda_.1} parent=11 // pred_check
          %p845 = pneg %p456
        $region78: #{_lambda_.1} parent=11 // pred_check_branch
          %847 = sbr.rel (%p845) target = $region80
        $region79: #{_lambda_.1} parent=11 // pred_region
          _
        $region80: #{_lambda_.1} parent=11 // pred_fallthru
          _
        // Predicated region
        $region81: #{_lambda_.1} parent=11 // pred_check
          %p848 = pneg %p477
        $region82: #{_lambda_.1} parent=11 // pred_check_branch
          %850 = sbr.rel (%p848) target = $region84
        $region83: #{_lambda_.1} parent=11 // pred_region
          %852 = vsyncadd [#allocation31], 0
          %s854 = sshll.u32 %s19, 4
          %s855 = int_to_ptr.hbm [resolvable:$true] %s854
          %s856 = sshll.u32 [#allocation30], 4
          %s857 = int_to_ptr.vmem [resolvable:$true] %s856
          %859 = dma.hbm_to_vmem [thread:$0]  %s855, 16, %s857, [#allocation31]
        $region84: #{_lambda_.1} parent=11 // pred_fallthru
          _
        // Predicated region
        $region85: #{_lambda_.1} parent=11 // pred_check
          %p860 = pneg %p498
        $region86: #{_lambda_.1} parent=11 // pred_check_branch
          %862 = sbr.rel (%p860) target = $region88
        $region87: #{_lambda_.1} parent=11 // pred_region
          %864 = vsyncadd [#allocation31], 0
          %s866 = sshll.u32 %s20, 4
          %s867 = int_to_ptr.hbm [resolvable:$true] %s866
          %s868 = sshll.u32 [#allocation32], 4
          %s869 = int_to_ptr.vmem [resolvable:$true] %s868
          %871 = dma.hbm_to_vmem [thread:$0]  %s867, 16, %s869, [#allocation31]
        $region88: #{_lambda_.1} parent=11 // pred_fallthru
          _
        // Predicated region
        $region89: #{_lambda_.1} parent=11 // pred_check
          %p872 = pneg %p519
        $region90: #{_lambda_.1} parent=11 // pred_check_branch
          %874 = sbr.rel (%p872) target = $region92
        $region91: #{_lambda_.1} parent=11 // pred_region
          _
        $region92: #{_lambda_.1} parent=11 // pred_fallthru
          _
        // Predicated region
        $region93: #{_lambda_.1} parent=11 // pred_check
          %p875 = pneg %p540
        $region94: #{_lambda_.1} parent=11 // pred_check_branch
          %877 = sbr.rel (%p875) target = $region96
        $region95: #{_lambda_.1} parent=11 // pred_region
          %879 = vsyncadd [#allocation34], 0
          %s881 = sshll.u32 %s22, 4
          %s882 = int_to_ptr.hbm [resolvable:$true] %s881
          %s883 = sshll.u32 [#allocation33], 4
          %s884 = int_to_ptr.vmem [resolvable:$true] %s883
          %886 = dma.hbm_to_vmem [thread:$0]  %s882, 16, %s884, [#allocation34]
        $region96: #{_lambda_.1} parent=11 // pred_fallthru
          _
        // Predicated region
        $region97: #{_lambda_.1} parent=11 // pred_check
          %p887 = pneg %p561
        $region98: #{_lambda_.1} parent=11 // pred_check_branch
          %889 = sbr.rel (%p887) target = $region100
        $region99: #{_lambda_.1} parent=11 // pred_region
          %891 = vsyncadd [#allocation34], 0
          %s893 = sshll.u32 %s23, 4
          %s894 = int_to_ptr.hbm [resolvable:$true] %s893
          %s895 = sshll.u32 [#allocation35], 4
          %s896 = int_to_ptr.vmem [resolvable:$true] %s895
          %898 = dma.hbm_to_vmem [thread:$0]  %s894, 16, %s896, [#allocation34]
        $region100: #{_lambda_.1} parent=11 // pred_fallthru
          _
        // Predicated region
        $region101: #{_lambda_.1} parent=11 // pred_check
          %p899 = pneg %p582
        $region102: #{_lambda_.1} parent=11 // pred_check_branch
          %901 = sbr.rel (%p899) target = $region104
        $region103: #{_lambda_.1} parent=11 // pred_region
          _
        $region104: #{_lambda_.1} parent=11 // pred_fallthru
          _
        // Predicated region
        $region105: #{_lambda_.1} parent=11 // pred_check
          %p902 = pneg %p603
        $region106: #{_lambda_.1} parent=11 // pred_check_branch
          %904 = sbr.rel (%p902) target = $region108
        $region107: #{_lambda_.1} parent=11 // pred_region
          %906 = vsyncadd [#allocation37], 0
          %s908 = sshll.u32 %s25, 4
          %s909 = int_to_ptr.hbm [resolvable:$true] %s908
          %s910 = sshll.u32 [#allocation36], 4
          %s911 = int_to_ptr.vmem [resolvable:$true] %s910
          %913 = dma.hbm_to_vmem [thread:$0]  %s909, 16, %s911, [#allocation37]
        $region108: #{_lambda_.1} parent=11 // pred_fallthru
          _
        // Predicated region
        $region109: #{_lambda_.1} parent=11 // pred_check
          %p914 = pneg %p624
        $region110: #{_lambda_.1} parent=11 // pred_check_branch
          %916 = sbr.rel (%p914) target = $region112
        $region111: #{_lambda_.1} parent=11 // pred_region
          _
        $region112: #{_lambda_.1} parent=11 // pred_fallthru
          _
      $region12: #{_lambda_.1} parent=5 // pred_fallthru
        _
      %p917 = scmp.lt.s32.totalorder %s47, 2
      // Predicated region
      $region113: #{_lambda_.1} parent=5 // pred_check
        %p918 = pneg %p917
      $region114: #{_lambda_.1} parent=5 // pred_check_branch
        %920 = sbr.rel (%p918) target = $region116
      $region115: #{_lambda_.1} parent=5 // pred_region
        // Predicated region
        $region117: #{_lambda_.1} parent=115 // pred_check
          %p921 = pneg %p67
        $region118: #{_lambda_.1} parent=115 // pred_check_branch
          %923 = sbr.rel (%p921) target = $region120
        $region119: #{_lambda_.1} parent=115 // pred_region
          %p924 = scmp.lt.s32.totalorder %s47, 1
          %s925 = scalar_select %p924, %s47, 1
          %s926 = smul.addr %s925, 16
          %s927 = smul.addr %s926, 4
          %s928 = scalar_lea.vmem %s0, %s927
        $region120: #{_lambda_.1} parent=115 // pred_fallthru
          _
        // Predicated region
        $region121: #{_lambda_.1} parent=115 // pred_check
          %p929 = pneg %p93
        $region122: #{_lambda_.1} parent=115 // pred_check_branch
          %931 = sbr.rel (%p929) target = $region124
        $region123: #{_lambda_.1} parent=115 // pred_region
          %p932 = scmp.lt.s32.totalorder %s47, 1
          %s933 = scalar_select %p932, %s47, 1
          %s934 = smul.addr %s933, 8
          %s935 = smul.addr %s934, 4
          %s936 = scalar_lea.vmem %s1, %s935
        $region124: #{_lambda_.1} parent=115 // pred_fallthru
          _
      $region116: #{_lambda_.1} parent=5 // pred_fallthru
        _
      %p937 = scmp.le.s32.totalorder 1, %s47
      %p938 = scmp.lt.s32.totalorder %s47, 3
      %p939 = pnand %p937, %p938
      %p940 = pneg %p939
      // Predicated region
      $region125: #{_lambda_.1} parent=5 // pred_check
        _
      $region126: #{_lambda_.1} parent=5 // pred_check_branch
        %942 = sbr.rel (%p939) target = $region128
      $region127: #{_lambda_.1} parent=5 // pred_region
        %s943 = ssub.s32 %s47, 1
        // Predicated region
        $region129: #{_lambda_.1} parent=127 // pred_check
          %p944 = pneg %p120
        $region130: #{_lambda_.1} parent=127 // pred_check_branch
          %946 = sbr.rel (%p944) target = $region132
        $region131: #{_lambda_.1} parent=127 // pred_region
          %948 = dma.done [#allocation10], 16
        $region132: #{_lambda_.1} parent=127 // pred_fallthru
          _
        // Predicated region
        $region133: #{_lambda_.1} parent=127 // pred_check
          %p949 = pneg %p141
        $region134: #{_lambda_.1} parent=127 // pred_check_branch
          %951 = sbr.rel (%p949) target = $region136
        $region135: #{_lambda_.1} parent=127 // pred_region
          %953 = dma.done [#allocation8], 128
        $region136: #{_lambda_.1} parent=127 // pred_fallthru
          _
        // Predicated region
        $region137: #{_lambda_.1} parent=127 // pred_check
          %p954 = pneg %p162
        $region138: #{_lambda_.1} parent=127 // pred_check_branch
          %956 = sbr.rel (%p954) target = $region140
        $region139: #{_lambda_.1} parent=127 // pred_region
          %958 = dma.done [#allocation13], 16
        $region140: #{_lambda_.1} parent=127 // pred_fallthru
          _
        // Predicated region
        $region141: #{_lambda_.1} parent=127 // pred_check
          %p959 = pneg %p183
        $region142: #{_lambda_.1} parent=127 // pred_check_branch
          %961 = sbr.rel (%p959) target = $region144
        $region143: #{_lambda_.1} parent=127 // pred_region
          %963 = dma.done [#allocation13], 16
        $region144: #{_lambda_.1} parent=127 // pred_fallthru
          _
        // Predicated region
        $region145: #{_lambda_.1} parent=127 // pred_check
          %p964 = pneg %p204
        $region146: #{_lambda_.1} parent=127 // pred_check_branch
          %966 = sbr.rel (%p964) target = $region148
        $region147: #{_lambda_.1} parent=127 // pred_region
          %968 = dma.done [#allocation16], 128
        $region148: #{_lambda_.1} parent=127 // pred_fallthru
          _
        // Predicated region
        $region149: #{_lambda_.1} parent=127 // pred_check
          %p969 = pneg %p225
        $region150: #{_lambda_.1} parent=127 // pred_check_branch
          %971 = sbr.rel (%p969) target = $region152
        $region151: #{_lambda_.1} parent=127 // pred_region
          %973 = dma.done [#allocation16], 128
        $region152: #{_lambda_.1} parent=127 // pred_fallthru
          _
        // Predicated region
        $region153: #{_lambda_.1} parent=127 // pred_check
          %p974 = pneg %p246
        $region154: #{_lambda_.1} parent=127 // pred_check_branch
          %976 = sbr.rel (%p974) target = $region156
        $region155: #{_lambda_.1} parent=127 // pred_region
          %978 = dma.done [#allocation19], 16
        $region156: #{_lambda_.1} parent=127 // pred_fallthru
          _
        // Predicated region
        $region157: #{_lambda_.1} parent=127 // pred_check
          %p979 = pneg %p267
        $region158: #{_lambda_.1} parent=127 // pred_check_branch
          %981 = sbr.rel (%p979) target = $region160
        $region159: #{_lambda_.1} parent=127 // pred_region
          %983 = dma.done [#allocation19], 16
        $region160: #{_lambda_.1} parent=127 // pred_fallthru
          _
        // Predicated region
        $region161: #{_lambda_.1} parent=127 // pred_check
          %p984 = pneg %p288
        $region162: #{_lambda_.1} parent=127 // pred_check_branch
          %986 = sbr.rel (%p984) target = $region164
        $region163: #{_lambda_.1} parent=127 // pred_region
          %988 = dma.done [#allocation22], 256
        $region164: #{_lambda_.1} parent=127 // pred_fallthru
          _
        // Predicated region
        $region165: #{_lambda_.1} parent=127 // pred_check
          %p989 = pneg %p309
        $region166: #{_lambda_.1} parent=127 // pred_check_branch
          %991 = sbr.rel (%p989) target = $region168
        $region167: #{_lambda_.1} parent=127 // pred_region
          %993 = dma.done [#allocation22], 16
        $region168: #{_lambda_.1} parent=127 // pred_fallthru
          _
        // Predicated region
        $region169: #{_lambda_.1} parent=127 // pred_check
          %p994 = pneg %p351
        $region170: #{_lambda_.1} parent=127 // pred_check_branch
          %996 = sbr.rel (%p994) target = $region172
        $region171: #{_lambda_.1} parent=127 // pred_region
          %998 = dma.done [#allocation25], 16
        $region172: #{_lambda_.1} parent=127 // pred_fallthru
          _
        // Predicated region
        $region173: #{_lambda_.1} parent=127 // pred_check
          %p999 = pneg %p372
        $region174: #{_lambda_.1} parent=127 // pred_check_branch
          %1001 = sbr.rel (%p999) target = $region176
        $region175: #{_lambda_.1} parent=127 // pred_region
          %1003 = dma.done [#allocation25], 16
        $region176: #{_lambda_.1} parent=127 // pred_fallthru
          _
        // Predicated region
        $region177: #{_lambda_.1} parent=127 // pred_check
          %p1004 = pneg %p414
        $region178: #{_lambda_.1} parent=127 // pred_check_branch
          %1006 = sbr.rel (%p1004) target = $region180
        $region179: #{_lambda_.1} parent=127 // pred_region
          %1008 = dma.done [#allocation28], 16
        $region180: #{_lambda_.1} parent=127 // pred_fallthru
          _
        // Predicated region
        $region181: #{_lambda_.1} parent=127 // pred_check
          %p1009 = pneg %p435
        $region182: #{_lambda_.1} parent=127 // pred_check_branch
          %1011 = sbr.rel (%p1009) target = $region184
        $region183: #{_lambda_.1} parent=127 // pred_region
          %1013 = dma.done [#allocation28], 16
        $region184: #{_lambda_.1} parent=127 // pred_fallthru
          _
        // Predicated region
        $region185: #{_lambda_.1} parent=127 // pred_check
          %p1014 = pneg %p477
        $region186: #{_lambda_.1} parent=127 // pred_check_branch
          %1016 = sbr.rel (%p1014) target = $region188
        $region187: #{_lambda_.1} parent=127 // pred_region
          %1018 = dma.done [#allocation31], 16
        $region188: #{_lambda_.1} parent=127 // pred_fallthru
          _
        // Predicated region
        $region189: #{_lambda_.1} parent=127 // pred_check
          %p1019 = pneg %p498
        $region190: #{_lambda_.1} parent=127 // pred_check_branch
          %1021 = sbr.rel (%p1019) target = $region192
        $region191: #{_lambda_.1} parent=127 // pred_region
          %1023 = dma.done [#allocation31], 16
        $region192: #{_lambda_.1} parent=127 // pred_fallthru
          _
        // Predicated region
        $region193: #{_lambda_.1} parent=127 // pred_check
          %p1024 = pneg %p540
        $region194: #{_lambda_.1} parent=127 // pred_check_branch
          %1026 = sbr.rel (%p1024) target = $region196
        $region195: #{_lambda_.1} parent=127 // pred_region
          %1028 = dma.done [#allocation34], 16
        $region196: #{_lambda_.1} parent=127 // pred_fallthru
          _
        // Predicated region
        $region197: #{_lambda_.1} parent=127 // pred_check
          %p1029 = pneg %p561
        $region198: #{_lambda_.1} parent=127 // pred_check_branch
          %1031 = sbr.rel (%p1029) target = $region200
        $region199: #{_lambda_.1} parent=127 // pred_region
          %1033 = dma.done [#allocation34], 16
        $region200: #{_lambda_.1} parent=127 // pred_fallthru
          _
        // Predicated region
        $region201: #{_lambda_.1} parent=127 // pred_check
          %p1034 = pneg %p603
        $region202: #{_lambda_.1} parent=127 // pred_check_branch
          %1036 = sbr.rel (%p1034) target = $region204
        $region203: #{_lambda_.1} parent=127 // pred_region
          %1038 = dma.done [#allocation37], 16
        $region204: #{_lambda_.1} parent=127 // pred_fallthru
          _
        %1039 = sfence
        %p1040 = scmp.lt.s32.totalorder %s52, 1
        %s1041 = scalar_select %p1040, %s52, 1
        %s1042 = smul.addr %s1041, 16
        %s1043 = smul.addr %s1042, 4
        %s1044 = scalar_lea.vmem %s0, %s1043
        %p1045 = pneg %p73
        %p1046 = pneg %p70
        %p1047 = scmp.lt.s32.totalorder %s52, 1
        %s1048 = scalar_select %p1047, %s52, 1
        %s1049 = smul.addr %s1048, 8
        %s1050 = smul.addr %s1049, 4
        %s1051 = scalar_lea.vmem %s1, %s1050
        %p1052 = pneg %p99
        %p1053 = pneg %p96
        %p1054 = pneg %p120
        %p1055 = pneg %p117
        %p1056 = pneg %p141
        %p1057 = pneg %p138
        %p1058 = pneg %p162
        %p1059 = pneg %p159
        %p1060 = pneg %p183
        %p1061 = pneg %p180
        %p1062 = pneg %p204
        %p1063 = pneg %p201
        %p1064 = pneg %p225
        %p1065 = pneg %p222
        %p1066 = pneg %p246
        %p1067 = pneg %p243
        %p1068 = pneg %p267
        %p1069 = pneg %p264
        %p1070 = pneg %p288
        %p1071 = pneg %p285
        %p1072 = pneg %p309
        %p1073 = pneg %p306
        %p1074 = pneg %p330
        %p1075 = pneg %p327
        %p1076 = pneg %p351
        %p1077 = pneg %p348
        %p1078 = pneg %p372
        %p1079 = pneg %p369
        %p1080 = pneg %p393
        %p1081 = pneg %p390
        %p1082 = pneg %p414
        %p1083 = pneg %p411
        %p1084 = pneg %p435
        %p1085 = pneg %p432
        %p1086 = pneg %p456
        %p1087 = pneg %p453
        %p1088 = pneg %p477
        %p1089 = pneg %p474
        %p1090 = pneg %p498
        %p1091 = pneg %p495
        %p1092 = pneg %p519
        %p1093 = pneg %p516
        %p1094 = pneg %p540
        %p1095 = pneg %p537
        %p1096 = pneg %p561
        %p1097 = pneg %p558
        %p1098 = pneg %p582
        %p1099 = pneg %p579
        %p1100 = pneg %p603
        %p1101 = pneg %p600
        %p1102 = pneg %p624
        %p1103 = pneg %p621
        %p1104 = pneg %p650
        %p1105 = pneg %p647
        %s1106 = sand.u32 %s637, 1
        %s1107 = scalar_lea.sflag [#allocation9], %s1106
        %s1108 = sand.u32 %s637, 1
        %s1109 = smul.addr %s1108, 64
        %s1110 = scalar_lea.vmem [#allocation38], %s1109
        %p1111 = scmp.lt.s32.totalorder %s52, 1
        %s1112 = scalar_select %p1111, %s52, 1
        %s1113 = smul.addr %s1112, 16
        %s1114 = smul.addr %s1113, 4
        %s1115 = scalar_lea.vmem %s0, %s1114
        %p1116 = scmp.lt.s32.totalorder %s52, 1
        %s1117 = scalar_select %p1116, %s52, 1
        %s1118 = smul.addr %s1117, 8
        %s1119 = smul.addr %s1118, 4
        %s1120 = scalar_lea.vmem %s1, %s1119
        %v1122 = vld [vmem:[%s1115] sm:$0xf]
        %v1123 = vld [vmem:[%s1115 + $0x4] sm:$0xf]
        %v1124 = vld [vmem:[%s1115 + $0x8] sm:$0xf]
        %v1125 = vld [vmem:[%s1115 + $0xc] sm:$0xf]
        %v1126 = vld [vmem:[%s1115 + $0x10] sm:$0xf]
        %v1127 = vld [vmem:[%s1115 + $0x14] sm:$0xf]
        %v1128 = vld [vmem:[%s1115 + $0x18] sm:$0xf]
        %v1129 = vld [vmem:[%s1115 + $0x1c] sm:$0xf]
        %v1130 = vld [vmem:[%s1115 + $0x20] sm:$0xf]
        %v1131 = vld [vmem:[%s1115 + $0x24] sm:$0xf]
        %v1132 = vld [vmem:[%s1115 + $0x28] sm:$0xf]
        %v1133 = vld [vmem:[%s1115 + $0x2c] sm:$0xf]
        %v1134 = vld [vmem:[%s1115 + $0x30] sm:$0xf]
        %v1135 = vld [vmem:[%s1115 + $0x34] sm:$0xf]
        %v1136 = vld [vmem:[%s1115 + $0x38] sm:$0xf]
        %v1137 = vld [vmem:[%s1115 + $0x3c] sm:$0xf]
        %v1138 = vld [vmem:[#allocation11] sm:$0xf]
        %v1139 = vld [vmem:[#allocation11 + $0x4] sm:$0xf]
        %v1156 = vunpack.c.l.b16 %v1122
        %v1157 = vunpack.c.l.b16 %v1123
        %v1158 = vunpack.c.l.b16 %v1124
        %v1159 = vunpack.c.l.b16 %v1125
        %v1160 = vunpack.c.l.b16 %v1126
        %v1161 = vunpack.c.l.b16 %v1127
        %v1162 = vunpack.c.l.b16 %v1128
        %v1163 = vunpack.c.l.b16 %v1129
        %v1164 = vunpack.c.l.b16 %v1130
        %v1165 = vunpack.c.l.b16 %v1131
        %v1166 = vunpack.c.l.b16 %v1132
        %v1167 = vunpack.c.l.b16 %v1133
        %v1168 = vunpack.c.l.b16 %v1134
        %v1169 = vunpack.c.l.b16 %v1135
        %v1170 = vunpack.c.l.b16 %v1136
        %v1171 = vunpack.c.l.b16 %v1137
        %v1172 = vpack.c.b16 %v1157, %v1156
        %v1173 = vpack.c.b16 %v1159, %v1158
        %v1174 = vpack.c.b16 %v1161, %v1160
        %v1175 = vpack.c.b16 %v1163, %v1162
        %v1176 = vpack.c.b16 %v1165, %v1164
        %v1177 = vpack.c.b16 %v1167, %v1166
        %v1178 = vpack.c.b16 %v1169, %v1168
        %v1179 = vpack.c.b16 %v1171, %v1170
        %v1182 = vunpack.c.l.b16 %v1138
        %v1183 = vunpack.c.l.b16 %v1139
        %v1184 = vpack.c.b16 %v1183, %v1182
        %vm1186 = vcmask 130048
        %v1188 = vsel %vm1186, %v1172, 0
        %v1191 = vsel %vm1186, %v1173, 0
        %v1194 = vsel %vm1186, %v1174, 0
        %v1197 = vsel %vm1186, %v1175, 0
        %v1200 = vsel %vm1186, %v1176, 0
        %v1203 = vsel %vm1186, %v1177, 0
        %v1206 = vsel %vm1186, %v1178, 0
        %v1209 = vsel %vm1186, %v1179, 0
        %1211 = vmatpush.bf16.msra.mxu0 0
        %1212 = vmatpush.bf16.msra.mxu0 0
        %1213 = vmatpush.bf16.msra.mxu0 0
        %1214 = vmatpush.bf16.msra.mxu0 0
        %1215 = vmatpush.bf16.msra.mxu0 0
        %1216 = vmatpush.bf16.msra.mxu0 0
        %1217 = vmatpush.bf16.msra.mxu0 0
        %1218 = vmatpush.bf16.msra.mxu0 %v1184
        %1219 = vmatmul.bf16.gmra.mxu0 %v1188
        %v1220 = vpop.f32.mrf.mxu0
        %v1221 = vadd.f32 0.0, %v1220
        %v1222 = vpop.f32.mrf.mxu0
        %v1223 = vadd.f32 0.0, %v1222
        %1224 = vmatmul.bf16.gmra.mxu0 %v1191
        %v1225 = vpop.f32.mrf.mxu0
        %v1226 = vadd.f32 0.0, %v1225
        %v1227 = vpop.f32.mrf.mxu0
        %v1228 = vadd.f32 0.0, %v1227
        %1229 = vmatmul.bf16.gmra.mxu0 %v1194
        %v1230 = vpop.f32.mrf.mxu0
        %v1231 = vadd.f32 0.0, %v1230
        %v1232 = vpop.f32.mrf.mxu0
        %v1233 = vadd.f32 0.0, %v1232
        %1234 = vmatmul.bf16.gmra.mxu0 %v1197
        %v1235 = vpop.f32.mrf.mxu0
        %v1236 = vadd.f32 0.0, %v1235
        %v1237 = vpop.f32.mrf.mxu0
        %v1238 = vadd.f32 0.0, %v1237
        %1239 = vmatmul.bf16.gmra.mxu0 %v1200
        %v1240 = vpop.f32.mrf.mxu0
        %v1241 = vadd.f32 0.0, %v1240
        %v1242 = vpop.f32.mrf.mxu0
        %v1243 = vadd.f32 0.0, %v1242
        %1244 = vmatmul.bf16.gmra.mxu0 %v1203
        %v1245 = vpop.f32.mrf.mxu0
        %v1246 = vadd.f32 0.0, %v1245
        %v1247 = vpop.f32.mrf.mxu0
        %v1248 = vadd.f32 0.0, %v1247
        %1249 = vmatmul.bf16.gmra.mxu0 %v1206
        %v1250 = vpop.f32.mrf.mxu0
        %v1251 = vadd.f32 0.0, %v1250
        %v1252 = vpop.f32.mrf.mxu0
        %v1253 = vadd.f32 0.0, %v1252
        %1254 = vmatmul.bf16.gmra.mxu0 %v1209
        %v1255 = vpop.f32.mrf.mxu0
        %v1256 = vadd.f32 0.0, %v1255
        %v1257 = vpop.f32.mrf.mxu0
        %v1258 = vadd.f32 0.0, %v1257
        %1259 = vdwg.mxu0
        %v1260 = vld [vmem:[#allocation12] sm:$0x1]
        %v1262 = vperm.slane %v1260, 0
        %v1264 = vmul.f32 %v1221, %v1262
        %v1265 = vmul.f32 %v1223, %v1262
        %v1266 = vmul.f32 %v1226, %v1262
        %v1267 = vmul.f32 %v1228, %v1262
        %v1268 = vmul.f32 %v1231, %v1262
        %v1269 = vmul.f32 %v1233, %v1262
        %v1270 = vmul.f32 %v1236, %v1262
        %v1271 = vmul.f32 %v1238, %v1262
        %v1272 = vmul.f32 %v1241, %v1262
        %v1273 = vmul.f32 %v1243, %v1262
        %v1274 = vmul.f32 %v1246, %v1262
        %v1275 = vmul.f32 %v1248, %v1262
        %v1276 = vmul.f32 %v1251, %v1262
        %v1277 = vmul.f32 %v1253, %v1262
        %v1278 = vmul.f32 %v1256, %v1262
        %v1279 = vmul.f32 %v1258, %v1262
        %v1280 = vld [vmem:[#allocation14] sm:$0x1]
        %v1282 = vperm.slane %v1280, 0
        %v1284 = vadd.f32 %v1264, %v1282
        %v1285 = vadd.f32 %v1265, %v1282
        %v1286 = vadd.f32 %v1266, %v1282
        %v1287 = vadd.f32 %v1267, %v1282
        %v1288 = vadd.f32 %v1268, %v1282
        %v1289 = vadd.f32 %v1269, %v1282
        %v1290 = vadd.f32 %v1270, %v1282
        %v1291 = vadd.f32 %v1271, %v1282
        %v1292 = vadd.f32 %v1272, %v1282
        %v1293 = vadd.f32 %v1273, %v1282
        %v1294 = vadd.f32 %v1274, %v1282
        %v1295 = vadd.f32 %v1275, %v1282
        %v1296 = vadd.f32 %v1276, %v1282
        %v1297 = vadd.f32 %v1277, %v1282
        %v1298 = vadd.f32 %v1278, %v1282
        %v1299 = vadd.f32 %v1279, %v1282
        %v1300 = vmax.f32 %v1284, 0.0
        %v1301 = vmax.f32 %v1285, 0.0
        %v1302 = vmax.f32 %v1286, 0.0
        %v1303 = vmax.f32 %v1287, 0.0
        %v1304 = vmax.f32 %v1288, 0.0
        %v1305 = vmax.f32 %v1289, 0.0
        %v1306 = vmax.f32 %v1290, 0.0
        %v1307 = vmax.f32 %v1291, 0.0
        %v1308 = vmax.f32 %v1292, 0.0
        %v1309 = vmax.f32 %v1293, 0.0
        %v1310 = vmax.f32 %v1294, 0.0
        %v1311 = vmax.f32 %v1295, 0.0
        %v1312 = vmax.f32 %v1296, 0.0
        %v1313 = vmax.f32 %v1297, 0.0
        %v1314 = vmax.f32 %v1298, 0.0
        %v1315 = vmax.f32 %v1299, 0.0
        %v1316 = vadd.f32 %v1300, %v1308
        %v1317 = vadd.f32 %v1301, %v1309
        %v1318 = vadd.f32 %v1302, %v1310
        %v1319 = vadd.f32 %v1303, %v1311
        %v1320 = vadd.f32 %v1304, %v1312
        %v1321 = vadd.f32 %v1305, %v1313
        %v1322 = vadd.f32 %v1306, %v1314
        %v1323 = vadd.f32 %v1307, %v1315
        %v1324 = vxor.u32 %v1300, 2147483648
        %v1325 = vxor.u32 %v1301, 2147483648
        %v1326 = vxor.u32 %v1302, 2147483648
        %v1327 = vxor.u32 %v1303, 2147483648
        %v1328 = vxor.u32 %v1304, 2147483648
        %v1329 = vxor.u32 %v1305, 2147483648
        %v1330 = vxor.u32 %v1306, 2147483648
        %v1331 = vxor.u32 %v1307, 2147483648
        %v1332 = vmul.f32 %v1324, 1.442695
        %v1333 = vpow.pop %v1332
        %v1334 = vmul.f32 %v1325, 1.442695
        %v1335 = vpow.pop %v1334
        %v1336 = vmul.f32 %v1326, 1.442695
        %v1337 = vpow.pop %v1336
        %v1338 = vmul.f32 %v1327, 1.442695
        %v1339 = vpow.pop %v1338
        %v1340 = vmul.f32 %v1328, 1.442695
        %v1341 = vpow.pop %v1340
        %v1342 = vmul.f32 %v1329, 1.442695
        %v1343 = vpow.pop %v1342
        %v1344 = vmul.f32 %v1330, 1.442695
        %v1345 = vpow.pop %v1344
        %v1346 = vmul.f32 %v1331, 1.442695
        %v1347 = vpow.pop %v1346
        %v1348 = vadd.f32 %v1333, 1.0
        %v1349 = vadd.f32 %v1335, 1.0
        %v1350 = vadd.f32 %v1337, 1.0
        %v1351 = vadd.f32 %v1339, 1.0
        %v1352 = vadd.f32 %v1341, 1.0
        %v1353 = vadd.f32 %v1343, 1.0
        %v1354 = vadd.f32 %v1345, 1.0
        %v1355 = vadd.f32 %v1347, 1.0
        %v1356 = vrcp.pop %v1348
        %v1357 = vmul.f32 %v1348, %v1356
        %v1358 = vsub.f32 1.0, %v1357
        %v1359 = vmul.f32 %v1356, %v1358
        %v1360 = vadd.f32 %v1356, %v1359
        %vm1361 = vweird.f32 %v1348
        %vm1362 = vweird.f32 %v1356
        %vm1363 = vmor %vm1361, %vm1362
        %v1364 = vsel %vm1363, %v1356, %v1360
        %v1365 = vand.u32 2147483647, %v1348
        %vm1366 = vcmp.eq.f32.partialorder %v1365, 8.507059e+37
        %v1367 = vand.u32 %v1348, 2147483648
        %v1368 = vor.u32 1.1754944e-38, %v1367
        %v1369 = vsel %vm1366, %v1368, %v1364
        %v1370 = vmul.f32 1.0, %v1369
        %v1371 = vrcp.pop %v1349
        %v1372 = vmul.f32 %v1349, %v1371
        %v1373 = vsub.f32 1.0, %v1372
        %v1374 = vmul.f32 %v1371, %v1373
        %v1375 = vadd.f32 %v1371, %v1374
        %vm1376 = vweird.f32 %v1349
        %vm1377 = vweird.f32 %v1371
        %vm1378 = vmor %vm1376, %vm1377
        %v1379 = vsel %vm1378, %v1371, %v1375
        %v1380 = vand.u32 2147483647, %v1349
        %vm1381 = vcmp.eq.f32.partialorder %v1380, 8.507059e+37
        %v1382 = vand.u32 %v1349, 2147483648
        %v1383 = vor.u32 1.1754944e-38, %v1382
        %v1384 = vsel %vm1381, %v1383, %v1379
        %v1385 = vmul.f32 1.0, %v1384
        %v1386 = vrcp.pop %v1350
        %v1387 = vmul.f32 %v1350, %v1386
        %v1388 = vsub.f32 1.0, %v1387
        %v1389 = vmul.f32 %v1386, %v1388
        %v1390 = vadd.f32 %v1386, %v1389
        %vm1391 = vweird.f32 %v1350
        %vm1392 = vweird.f32 %v1386
        %vm1393 = vmor %vm1391, %vm1392
        %v1394 = vsel %vm1393, %v1386, %v1390
        %v1395 = vand.u32 2147483647, %v1350
        %vm1396 = vcmp.eq.f32.partialorder %v1395, 8.507059e+37
        %v1397 = vand.u32 %v1350, 2147483648
        %v1398 = vor.u32 1.1754944e-38, %v1397
        %v1399 = vsel %vm1396, %v1398, %v1394
        %v1400 = vmul.f32 1.0, %v1399
        %v1401 = vrcp.pop %v1351
        %v1402 = vmul.f32 %v1351, %v1401
        %v1403 = vsub.f32 1.0, %v1402
        %v1404 = vmul.f32 %v1401, %v1403
        %v1405 = vadd.f32 %v1401, %v1404
        %vm1406 = vweird.f32 %v1351
        %vm1407 = vweird.f32 %v1401
        %vm1408 = vmor %vm1406, %vm1407
        %v1409 = vsel %vm1408, %v1401, %v1405
        %v1410 = vand.u32 2147483647, %v1351
        %vm1411 = vcmp.eq.f32.partialorder %v1410, 8.507059e+37
        %v1412 = vand.u32 %v1351, 2147483648
        %v1413 = vor.u32 1.1754944e-38, %v1412
        %v1414 = vsel %vm1411, %v1413, %v1409
        %v1415 = vmul.f32 1.0, %v1414
        %v1416 = vrcp.pop %v1352
        %v1417 = vmul.f32 %v1352, %v1416
        %v1418 = vsub.f32 1.0, %v1417
        %v1419 = vmul.f32 %v1416, %v1418
        %v1420 = vadd.f32 %v1416, %v1419
        %vm1421 = vweird.f32 %v1352
        %vm1422 = vweird.f32 %v1416
        %vm1423 = vmor %vm1421, %vm1422
        %v1424 = vsel %vm1423, %v1416, %v1420
        %v1425 = vand.u32 2147483647, %v1352
        %vm1426 = vcmp.eq.f32.partialorder %v1425, 8.507059e+37
        %v1427 = vand.u32 %v1352, 2147483648
        %v1428 = vor.u32 1.1754944e-38, %v1427
        %v1429 = vsel %vm1426, %v1428, %v1424
        %v1430 = vmul.f32 1.0, %v1429
        %v1431 = vrcp.pop %v1353
        %v1432 = vmul.f32 %v1353, %v1431
        %v1433 = vsub.f32 1.0, %v1432
        %v1434 = vmul.f32 %v1431, %v1433
        %v1435 = vadd.f32 %v1431, %v1434
        %vm1436 = vweird.f32 %v1353
        %vm1437 = vweird.f32 %v1431
        %vm1438 = vmor %vm1436, %vm1437
        %v1439 = vsel %vm1438, %v1431, %v1435
        %v1440 = vand.u32 2147483647, %v1353
        %vm1441 = vcmp.eq.f32.partialorder %v1440, 8.507059e+37
        %v1442 = vand.u32 %v1353, 2147483648
        %v1443 = vor.u32 1.1754944e-38, %v1442
        %v1444 = vsel %vm1441, %v1443, %v1439
        %v1445 = vmul.f32 1.0, %v1444
        %v1446 = vrcp.pop %v1354
        %v1447 = vmul.f32 %v1354, %v1446
        %v1448 = vsub.f32 1.0, %v1447
        %v1449 = vmul.f32 %v1446, %v1448
        %v1450 = vadd.f32 %v1446, %v1449
        %vm1451 = vweird.f32 %v1354
        %vm1452 = vweird.f32 %v1446
        %vm1453 = vmor %vm1451, %vm1452
        %v1454 = vsel %vm1453, %v1446, %v1450
        %v1455 = vand.u32 2147483647, %v1354
        %vm1456 = vcmp.eq.f32.partialorder %v1455, 8.507059e+37
        %v1457 = vand.u32 %v1354, 2147483648
        %v1458 = vor.u32 1.1754944e-38, %v1457
        %v1459 = vsel %vm1456, %v1458, %v1454
        %v1460 = vmul.f32 1.0, %v1459
        %v1461 = vrcp.pop %v1355
        %v1462 = vmul.f32 %v1355, %v1461
        %v1463 = vsub.f32 1.0, %v1462
        %v1464 = vmul.f32 %v1461, %v1463
        %v1465 = vadd.f32 %v1461, %v1464
        %vm1466 = vweird.f32 %v1355
        %vm1467 = vweird.f32 %v1461
        %vm1468 = vmor %vm1466, %vm1467
        %v1469 = vsel %vm1468, %v1461, %v1465
        %v1470 = vand.u32 2147483647, %v1355
        %vm1471 = vcmp.eq.f32.partialorder %v1470, 8.507059e+37
        %v1472 = vand.u32 %v1355, 2147483648
        %v1473 = vor.u32 1.1754944e-38, %v1472
        %v1474 = vsel %vm1471, %v1473, %v1469
        %v1475 = vmul.f32 1.0, %v1474
        %v1476 = vmul.f32 %v1370, %v1316
        %v1477 = vmul.f32 %v1385, %v1317
        %v1478 = vmul.f32 %v1400, %v1318
        %v1479 = vmul.f32 %v1415, %v1319
        %v1480 = vmul.f32 %v1430, %v1320
        %v1481 = vmul.f32 %v1445, %v1321
        %v1482 = vmul.f32 %v1460, %v1322
        %v1483 = vmul.f32 %v1475, %v1323
        %v1484 = vadd.f32 %v1476, %v1300
        %v1485 = vadd.f32 %v1477, %v1301
        %v1486 = vadd.f32 %v1478, %v1302
        %v1487 = vadd.f32 %v1479, %v1303
        %v1488 = vadd.f32 %v1480, %v1304
        %v1489 = vadd.f32 %v1481, %v1305
        %v1490 = vadd.f32 %v1482, %v1306
        %v1491 = vadd.f32 %v1483, %v1307
        %v1492 = vxor.u32 %v1308, 2147483648
        %v1493 = vxor.u32 %v1309, 2147483648
        %v1494 = vxor.u32 %v1310, 2147483648
        %v1495 = vxor.u32 %v1311, 2147483648
        %v1496 = vxor.u32 %v1312, 2147483648
        %v1497 = vxor.u32 %v1313, 2147483648
        %v1498 = vxor.u32 %v1314, 2147483648
        %v1499 = vxor.u32 %v1315, 2147483648
        %v1500 = vmul.f32 %v1492, 1.442695
        %v1501 = vpow.pop %v1500
        %v1502 = vmul.f32 %v1493, 1.442695
        %v1503 = vpow.pop %v1502
        %v1504 = vmul.f32 %v1494, 1.442695
        %v1505 = vpow.pop %v1504
        %v1506 = vmul.f32 %v1495, 1.442695
        %v1507 = vpow.pop %v1506
        %v1508 = vmul.f32 %v1496, 1.442695
        %v1509 = vpow.pop %v1508
        %v1510 = vmul.f32 %v1497, 1.442695
        %v1511 = vpow.pop %v1510
        %v1512 = vmul.f32 %v1498, 1.442695
        %v1513 = vpow.pop %v1512
        %v1514 = vmul.f32 %v1499, 1.442695
        %v1515 = vpow.pop %v1514
        %v1516 = vadd.f32 %v1501, 1.0
        %v1517 = vadd.f32 %v1503, 1.0
        %v1518 = vadd.f32 %v1505, 1.0
        %v1519 = vadd.f32 %v1507, 1.0
        %v1520 = vadd.f32 %v1509, 1.0
        %v1521 = vadd.f32 %v1511, 1.0
        %v1522 = vadd.f32 %v1513, 1.0
        %v1523 = vadd.f32 %v1515, 1.0
        %v1524 = vrcp.pop %v1516
        %v1525 = vmul.f32 %v1516, %v1524
        %v1526 = vsub.f32 1.0, %v1525
        %v1527 = vmul.f32 %v1524, %v1526
        %v1528 = vadd.f32 %v1524, %v1527
        %vm1529 = vweird.f32 %v1516
        %vm1530 = vweird.f32 %v1524
        %vm1531 = vmor %vm1529, %vm1530
        %v1532 = vsel %vm1531, %v1524, %v1528
        %v1533 = vand.u32 2147483647, %v1516
        %vm1534 = vcmp.eq.f32.partialorder %v1533, 8.507059e+37
        %v1535 = vand.u32 %v1516, 2147483648
        %v1536 = vor.u32 1.1754944e-38, %v1535
        %v1537 = vsel %vm1534, %v1536, %v1532
        %v1538 = vmul.f32 1.0, %v1537
        %v1539 = vrcp.pop %v1517
        %v1540 = vmul.f32 %v1517, %v1539
        %v1541 = vsub.f32 1.0, %v1540
        %v1542 = vmul.f32 %v1539, %v1541
        %v1543 = vadd.f32 %v1539, %v1542
        %vm1544 = vweird.f32 %v1517
        %vm1545 = vweird.f32 %v1539
        %vm1546 = vmor %vm1544, %vm1545
        %v1547 = vsel %vm1546, %v1539, %v1543
        %v1548 = vand.u32 2147483647, %v1517
        %vm1549 = vcmp.eq.f32.partialorder %v1548, 8.507059e+37
        %v1550 = vand.u32 %v1517, 2147483648
        %v1551 = vor.u32 1.1754944e-38, %v1550
        %v1552 = vsel %vm1549, %v1551, %v1547
        %v1553 = vmul.f32 1.0, %v1552
        %v1554 = vrcp.pop %v1518
        %v1555 = vmul.f32 %v1518, %v1554
        %v1556 = vsub.f32 1.0, %v1555
        %v1557 = vmul.f32 %v1554, %v1556
        %v1558 = vadd.f32 %v1554, %v1557
        %vm1559 = vweird.f32 %v1518
        %vm1560 = vweird.f32 %v1554
        %vm1561 = vmor %vm1559, %vm1560
        %v1562 = vsel %vm1561, %v1554, %v1558
        %v1563 = vand.u32 2147483647, %v1518
        %vm1564 = vcmp.eq.f32.partialorder %v1563, 8.507059e+37
        %v1565 = vand.u32 %v1518, 2147483648
        %v1566 = vor.u32 1.1754944e-38, %v1565
        %v1567 = vsel %vm1564, %v1566, %v1562
        %v1568 = vmul.f32 1.0, %v1567
        %v1569 = vrcp.pop %v1519
        %v1570 = vmul.f32 %v1519, %v1569
        %v1571 = vsub.f32 1.0, %v1570
        %v1572 = vmul.f32 %v1569, %v1571
        %v1573 = vadd.f32 %v1569, %v1572
        %vm1574 = vweird.f32 %v1519
        %vm1575 = vweird.f32 %v1569
        %vm1576 = vmor %vm1574, %vm1575
        %v1577 = vsel %vm1576, %v1569, %v1573
        %v1578 = vand.u32 2147483647, %v1519
        %vm1579 = vcmp.eq.f32.partialorder %v1578, 8.507059e+37
        %v1580 = vand.u32 %v1519, 2147483648
        %v1581 = vor.u32 1.1754944e-38, %v1580
        %v1582 = vsel %vm1579, %v1581, %v1577
        %v1583 = vmul.f32 1.0, %v1582
        %v1584 = vrcp.pop %v1520
        %v1585 = vmul.f32 %v1520, %v1584
        %v1586 = vsub.f32 1.0, %v1585
        %v1587 = vmul.f32 %v1584, %v1586
        %v1588 = vadd.f32 %v1584, %v1587
        %vm1589 = vweird.f32 %v1520
        %vm1590 = vweird.f32 %v1584
        %vm1591 = vmor %vm1589, %vm1590
        %v1592 = vsel %vm1591, %v1584, %v1588
        %v1593 = vand.u32 2147483647, %v1520
        %vm1594 = vcmp.eq.f32.partialorder %v1593, 8.507059e+37
        %v1595 = vand.u32 %v1520, 2147483648
        %v1596 = vor.u32 1.1754944e-38, %v1595
        %v1597 = vsel %vm1594, %v1596, %v1592
        %v1598 = vmul.f32 1.0, %v1597
        %v1599 = vrcp.pop %v1521
        %v1600 = vmul.f32 %v1521, %v1599
        %v1601 = vsub.f32 1.0, %v1600
        %v1602 = vmul.f32 %v1599, %v1601
        %v1603 = vadd.f32 %v1599, %v1602
        %vm1604 = vweird.f32 %v1521
        %vm1605 = vweird.f32 %v1599
        %vm1606 = vmor %vm1604, %vm1605
        %v1607 = vsel %vm1606, %v1599, %v1603
        %v1608 = vand.u32 2147483647, %v1521
        %vm1609 = vcmp.eq.f32.partialorder %v1608, 8.507059e+37
        %v1610 = vand.u32 %v1521, 2147483648
        %v1611 = vor.u32 1.1754944e-38, %v1610
        %v1612 = vsel %vm1609, %v1611, %v1607
        %v1613 = vmul.f32 1.0, %v1612
        %v1614 = vrcp.pop %v1522
        %v1615 = vmul.f32 %v1522, %v1614
        %v1616 = vsub.f32 1.0, %v1615
        %v1617 = vmul.f32 %v1614, %v1616
        %v1618 = vadd.f32 %v1614, %v1617
        %vm1619 = vweird.f32 %v1522
        %vm1620 = vweird.f32 %v1614
        %vm1621 = vmor %vm1619, %vm1620
        %v1622 = vsel %vm1621, %v1614, %v1618
        %v1623 = vand.u32 2147483647, %v1522
        %vm1624 = vcmp.eq.f32.partialorder %v1623, 8.507059e+37
        %v1625 = vand.u32 %v1522, 2147483648
        %v1626 = vor.u32 1.1754944e-38, %v1625
        %v1627 = vsel %vm1624, %v1626, %v1622
        %v1628 = vmul.f32 1.0, %v1627
        %v1629 = vrcp.pop %v1523
        %v1630 = vmul.f32 %v1523, %v1629
        %v1631 = vsub.f32 1.0, %v1630
        %v1632 = vmul.f32 %v1629, %v1631
        %v1633 = vadd.f32 %v1629, %v1632
        %vm1634 = vweird.f32 %v1523
        %vm1635 = vweird.f32 %v1629
        %vm1636 = vmor %vm1634, %vm1635
        %v1637 = vsel %vm1636, %v1629, %v1633
        %v1638 = vand.u32 2147483647, %v1523
        %vm1639 = vcmp.eq.f32.partialorder %v1638, 8.507059e+37
        %v1640 = vand.u32 %v1523, 2147483648
        %v1641 = vor.u32 1.1754944e-38, %v1640
        %v1642 = vsel %vm1639, %v1641, %v1637
        %v1643 = vmul.f32 1.0, %v1642
        %v1644 = vmul.f32 %v1538, %v1316
        %v1645 = vmul.f32 %v1553, %v1317
        %v1646 = vmul.f32 %v1568, %v1318
        %v1647 = vmul.f32 %v1583, %v1319
        %v1648 = vmul.f32 %v1598, %v1320
        %v1649 = vmul.f32 %v1613, %v1321
        %v1650 = vmul.f32 %v1628, %v1322
        %v1651 = vmul.f32 %v1643, %v1323
        %v1652 = vadd.f32 %v1644, %v1308
        %v1653 = vadd.f32 %v1645, %v1309
        %v1654 = vadd.f32 %v1646, %v1310
        %v1655 = vadd.f32 %v1647, %v1311
        %v1656 = vadd.f32 %v1648, %v1312
        %v1657 = vadd.f32 %v1649, %v1313
        %v1658 = vadd.f32 %v1650, %v1314
        %v1659 = vadd.f32 %v1651, %v1315
        %v1660 = vpack.c.bf16 %v1485, %v1484
        %v1661 = vpack.c.bf16 %v1487, %v1486
        %v1662 = vpack.c.bf16 %v1489, %v1488
        %v1663 = vpack.c.bf16 %v1491, %v1490
        %v1664 = vld [vmem:[#allocation15] sm:$0xf]
        %v1665 = vld [vmem:[#allocation15 + $0x4] sm:$0xf]
        %v1666 = vpack.c.bf16 %v1653, %v1652
        %v1667 = vpack.c.bf16 %v1655, %v1654
        %v1668 = vpack.c.bf16 %v1657, %v1656
        %v1669 = vpack.c.bf16 %v1659, %v1658
        %v1670 = vld [vmem:[#allocation17] sm:$0xf]
        %v1671 = vld [vmem:[#allocation17 + $0x4] sm:$0xf]
        %v1674 = vunpack.c.l.b16 %v1670
        %v1675 = vunpack.c.l.b16 %v1671
        %v1676 = vpack.c.b16 %v1675, %v1674
        %v1679 = vsel %vm1186, %v1666, 0
        %v1682 = vsel %vm1186, %v1667, 0
        %v1685 = vsel %vm1186, %v1668, 0
        %v1688 = vsel %vm1186, %v1669, 0
        %1690 = vmatpush.bf16.msra.mxu0 0
        %1691 = vmatpush.bf16.msra.mxu0 0
        %1692 = vmatpush.bf16.msra.mxu0 0
        %1693 = vmatpush.bf16.msra.mxu0 0
        %1694 = vmatpush.bf16.msra.mxu0 0
        %1695 = vmatpush.bf16.msra.mxu0 0
        %1696 = vmatpush.bf16.msra.mxu0 0
        %1697 = vmatpush.bf16.msra.mxu0 %v1676
        %1698 = vmatmul.bf16.gmra.mxu0 %v1679
        %v1699 = vpop.f32.mrf.mxu0
        %v1700 = vadd.f32 0.0, %v1699
        %v1701 = vpop.f32.mrf.mxu0
        %v1702 = vadd.f32 0.0, %v1701
        %1703 = vmatmul.bf16.gmra.mxu0 %v1682
        %v1704 = vpop.f32.mrf.mxu0
        %v1705 = vadd.f32 0.0, %v1704
        %v1706 = vpop.f32.mrf.mxu0
        %v1707 = vadd.f32 0.0, %v1706
        %1708 = vmatmul.bf16.gmra.mxu0 %v1685
        %v1709 = vpop.f32.mrf.mxu0
        %v1710 = vadd.f32 0.0, %v1709
        %v1711 = vpop.f32.mrf.mxu0
        %v1712 = vadd.f32 0.0, %v1711
        %1713 = vmatmul.bf16.gmra.mxu0 %v1688
        %v1714 = vpop.f32.mrf.mxu0
        %v1715 = vadd.f32 0.0, %v1714
        %v1716 = vpop.f32.mrf.mxu0
        %v1717 = vadd.f32 0.0, %v1716
        %1718 = vdwg.mxu0
        %v1721 = vunpack.c.l.b16 %v1664
        %v1722 = vunpack.c.l.b16 %v1665
        %v1723 = vpack.c.b16 %v1722, %v1721
        %v1726 = vsel %vm1186, %v1660, 0
        %v1729 = vsel %vm1186, %v1661, 0
        %v1732 = vsel %vm1186, %v1662, 0
        %v1735 = vsel %vm1186, %v1663, 0
        %1737 = vmatpush.bf16.msra.mxu0 0
        %1738 = vmatpush.bf16.msra.mxu0 0
        %1739 = vmatpush.bf16.msra.mxu0 0
        %1740 = vmatpush.bf16.msra.mxu0 0
        %1741 = vmatpush.bf16.msra.mxu0 0
        %1742 = vmatpush.bf16.msra.mxu0 0
        %1743 = vmatpush.bf16.msra.mxu0 0
        %1744 = vmatpush.bf16.msra.mxu0 %v1723
        %1745 = vmatmul.bf16.gmra.mxu0 %v1726
        %v1746 = vpop.f32.mrf.mxu0
        %v1747 = vadd.f32 %v1700, %v1746
        %v1748 = vpop.f32.mrf.mxu0
        %v1749 = vadd.f32 %v1702, %v1748
        %1750 = vmatmul.bf16.gmra.mxu0 %v1729
        %v1751 = vpop.f32.mrf.mxu0
        %v1752 = vadd.f32 %v1705, %v1751
        %v1753 = vpop.f32.mrf.mxu0
        %v1754 = vadd.f32 %v1707, %v1753
        %1755 = vmatmul.bf16.gmra.mxu0 %v1732
        %v1756 = vpop.f32.mrf.mxu0
        %v1757 = vadd.f32 %v1710, %v1756
        %v1758 = vpop.f32.mrf.mxu0
        %v1759 = vadd.f32 %v1712, %v1758
        %1760 = vmatmul.bf16.gmra.mxu0 %v1735
        %v1761 = vpop.f32.mrf.mxu0
        %v1762 = vadd.f32 %v1715, %v1761
        %v1763 = vpop.f32.mrf.mxu0
        %v1764 = vadd.f32 %v1717, %v1763
        %1765 = vdwg.mxu0
        %v1766 = vld [vmem:[#allocation18] sm:$0x1]
        %v1768 = vperm.slane %v1766, 0
        %v1770 = vmul.f32 %v1747, %v1768
        %v1771 = vmul.f32 %v1749, %v1768
        %v1772 = vmul.f32 %v1752, %v1768
        %v1773 = vmul.f32 %v1754, %v1768
        %v1774 = vmul.f32 %v1757, %v1768
        %v1775 = vmul.f32 %v1759, %v1768
        %v1776 = vmul.f32 %v1762, %v1768
        %v1777 = vmul.f32 %v1764, %v1768
        %v1778 = vld [vmem:[#allocation20] sm:$0x1]
        %v1780 = vperm.slane %v1778, 0
        %v1782 = vadd.f32 %v1770, %v1780
        %v1783 = vadd.f32 %v1771, %v1780
        %v1784 = vadd.f32 %v1772, %v1780
        %v1785 = vadd.f32 %v1773, %v1780
        %v1786 = vadd.f32 %v1774, %v1780
        %v1787 = vadd.f32 %v1775, %v1780
        %v1788 = vadd.f32 %v1776, %v1780
        %v1789 = vadd.f32 %v1777, %v1780
        %v1790 = vmax.f32 %v1782, 0.0
        %v1791 = vmax.f32 %v1783, 0.0
        %v1792 = vmax.f32 %v1784, 0.0
        %v1793 = vmax.f32 %v1785, 0.0
        %v1794 = vmax.f32 %v1786, 0.0
        %v1795 = vmax.f32 %v1787, 0.0
        %v1796 = vmax.f32 %v1788, 0.0
        %v1797 = vmax.f32 %v1789, 0.0
        %v1798 = vsel %vm1186, %v1790, 0.0
        %v1799 = vsel %vm1186, %v1791, 0.0
        %v1800 = vadd.f32 %v1798, %v1799
        %v1801 = vsel %vm1186, %v1792, 0.0
        %v1802 = vadd.f32 %v1800, %v1801
        %v1803 = vsel %vm1186, %v1793, 0.0
        %v1804 = vadd.f32 %v1802, %v1803
        %v1805 = vsel %vm1186, %v1794, 0.0
        %v1806 = vadd.f32 %v1804, %v1805
        %v1807 = vsel %vm1186, %v1795, 0.0
        %v1808 = vadd.f32 %v1806, %v1807
        %v1809 = vsel %vm1186, %v1796, 0.0
        %v1810 = vadd.f32 %v1808, %v1809
        %v1811 = vsel %vm1186, %v1797, 0.0
        %v1812 = vadd.f32 %v1810, %v1811
        %v1813 = vrot.slane %v1812, 4
        %v1814 = vadd.f32 %v1812, %v1813
        %v1815 = vrot.slane %v1814, 2
        %v1816 = vadd.f32 %v1814, %v1815
        %v1817 = vrot.slane %v1816, 1
        %v1818 = vadd.f32 %v1816, %v1817
        %v1819 = vrcp.pop 64.0
        %v1820 = vmul.f32 64.0, %v1819
        %v1821 = vsub.f32 1.0, %v1820
        %v1822 = vmul.f32 %v1819, %v1821
        %v1823 = vadd.f32 %v1819, %v1822
        %vm1824 = vweird.f32 %v1819
        %v1825 = vsel %vm1824, %v1819, %v1823
        %v1826 = vmul.f32 %v1818, %v1825
        %v1827 = vsel %vm1186, %v1790, -inf
        %v1828 = vsel %vm1186, %v1791, -inf
        %v1829 = vsel %vm1186, %v1792, -inf
        %v1830 = vsel %vm1186, %v1793, -inf
        %v1831 = vsel %vm1186, %v1794, -inf
        %v1832 = vmax.f32 %v1827, %v1831
        %v1833 = vsel %vm1186, %v1795, -inf
        %v1834 = vmax.f32 %v1828, %v1833
        %v1835 = vsel %vm1186, %v1796, -inf
        %v1836 = vmax.f32 %v1829, %v1835
        %v1837 = vsel %vm1186, %v1797, -inf
        %v1838 = vmax.f32 %v1830, %v1837
        %v1839 = vmax.f32 %v1832, %v1834
        %v1840 = vmax.f32 %v1836, %v1838
        %v1841 = vmax.f32 %v1839, %v1840
        %v1842 = vrot.slane %v1841, 4
        %v1843 = vmax.f32 %v1841, %v1842
        %v1844 = vrot.slane %v1843, 2
        %v1845 = vmax.f32 %v1843, %v1844
        %v1846 = vrot.slane %v1845, 1
        %v1847 = vmax.f32 %v1845, %v1846
        %vm1848 = vcmask 1040384
        %v1849 = vsel %vm1848, %v1826, %v1847
        %v1850 = vld [vmem:[#allocation21] sm:$0xff]
        %v1851 = vld [vmem:[#allocation21 + $0x8] sm:$0xff]
        %v1853 = vsel %vm1186, %v1849, 0
        %1855 = vmatpush.msra.mxu0 0.0
        %1856 = vmatpush.msra.mxu0 0.0
        %1857 = vmatpush.msra.mxu0 0.0
        %1858 = vmatpush.msra.mxu0 0.0
        %1859 = vmatpush.msra.mxu0 0.0
        %1860 = vmatpush.msra.mxu0 0.0
        %1861 = vmatpush.msra.mxu0 0.0
        %1862 = vmatpush.msra.mxu0 0.0
        %1863 = vmatpush.msra.mxu0 0.0
        %1864 = vmatpush.msra.mxu0 0.0
        %1865 = vmatpush.msra.mxu0 0.0
        %1866 = vmatpush.msra.mxu0 0.0
        %1867 = vmatpush.msra.mxu0 0.0
        %1868 = vmatpush.msra.mxu0 0.0
        %1869 = vmatpush.msra.mxu0 %v1851
        %1870 = vmatpush.msra.mxu0 %v1850
        %1871 = vmatmul.f32.gmra.mxu0 %v1853
        %v1872 = vpop.f32.mrf.mxu0
        %v1873 = vadd.f32 0.0, %v1872
        %1874 = vdwg.mxu0
        %v1875 = vmax.f32 %v1873, 0.0
        %v1876 = vld [vmem:[#allocation23] sm:$0x1]
        %vm1877 = vcmask 7168
        %v1879 = vsel %vm1877, %v1875, 0
        %v1882 = vsel %vm1848, %v1876, 0
        %1884 = vmatpush.msra.mxu0 0.0
        %1885 = vmatpush.msra.mxu0 0.0
        %1886 = vmatpush.msra.mxu0 0.0
        %1887 = vmatpush.msra.mxu0 0.0
        %1888 = vmatpush.msra.mxu0 0.0
        %1889 = vmatpush.msra.mxu0 0.0
        %1890 = vmatpush.msra.mxu0 0.0
        %1891 = vmatpush.msra.mxu0 0.0
        %1892 = vmatpush.msra.mxu0 0.0
        %1893 = vmatpush.msra.mxu0 0.0
        %1894 = vmatpush.msra.mxu0 0.0
        %1895 = vmatpush.msra.mxu0 0.0
        %1896 = vmatpush.msra.mxu0 0.0
        %1897 = vmatpush.msra.mxu0 0.0
        %1898 = vmatpush.msra.mxu0 0.0
        %1899 = vmatpush.msra.mxu0 %v1882
        %1900 = vmatmul.f32.gmra.mxu0 %v1879
        %v1901 = vpop.f32.mrf.mxu0
        %v1902 = vadd.f32 0.0, %v1901
        %1903 = vdwg.mxu0
        %v1905 = vrot.slane %v1902, 1
        %v1907 = vadd.f32 %v1902, %v1905
        %v1908 = vxor.u32 %v1907, 2147483648
        %v1909 = vmul.f32 %v1908, 1.442695
        %v1910 = vpow.pop %v1909
        %v1911 = vadd.f32 %v1910, 1.0
        %v1912 = vrcp.pop %v1911
        %v1913 = vmul.f32 %v1911, %v1912
        %v1914 = vsub.f32 1.0, %v1913
        %v1915 = vmul.f32 %v1912, %v1914
        %v1916 = vadd.f32 %v1912, %v1915
        %vm1917 = vweird.f32 %v1911
        %vm1918 = vweird.f32 %v1912
        %vm1919 = vmor %vm1917, %vm1918
        %v1920 = vsel %vm1919, %v1912, %v1916
        %v1921 = vand.u32 2147483647, %v1911
        %vm1922 = vcmp.eq.f32.partialorder %v1921, 8.507059e+37
        %v1923 = vand.u32 %v1911, 2147483648
        %v1924 = vor.u32 1.1754944e-38, %v1923
        %v1925 = vsel %vm1922, %v1924, %v1920
        %v1926 = vmul.f32 1.0, %v1925
        %v1927 = vperm.slane %v1926, 0
        %v1928 = vmul.f32 %v1790, %v1927
        %v1929 = vmul.f32 %v1791, %v1927
        %v1930 = vmul.f32 %v1792, %v1927
        %v1931 = vmul.f32 %v1793, %v1927
        %v1932 = vmul.f32 %v1794, %v1927
        %v1933 = vmul.f32 %v1795, %v1927
        %v1934 = vmul.f32 %v1796, %v1927
        %v1935 = vmul.f32 %v1797, %v1927
        %vm1936 = vcmask 73728
        %1937 = vst.msk [vmem:[#allocation6] sm:$0x1] %vm1936, 0.0
        %1938 = vst.msk [vmem:[#allocation6 + $0x10] sm:$0x1] %vm1936, 0.0
        %1939 = vst.msk [vmem:[#allocation6 + $0x9] sm:$0x1] %vm1936, 0.0
        %1940 = vst.msk [vmem:[#allocation6 + $0x19] sm:$0x1] %vm1936, 0.0
        %1941 = vst.msk [vmem:[#allocation6 + $0x1] sm:$0xff] %vm1877, 0.0
        %1942 = vst.msk [vmem:[#allocation6 + $0x11] sm:$0xff] %vm1877, 0.0
        %vm1943 = vcmask 80968
        %1944 = vst.msk [vmem:[#allocation6 + $0x1] sm:$0xff] %vm1943, 0.0
        %1945 = vst.msk [vmem:[#allocation6 + $0x11] sm:$0xff] %vm1943, 0.0
        %v1946 = vsel %vm1186, %v1928, 0.0
        %1947 = vadd.xlane.f32.xlu0 %v1946
        %v1948 = vpop.xlane.xlu0 %1947
        %v1949 = vsel %vm1186, %v1929, 0.0
        %1950 = vadd.xlane.f32.xlu0 %v1949
        %v1951 = vpop.xlane.xlu0 %1950
        %v1952 = vsel %vm1186, %v1930, 0.0
        %1953 = vadd.xlane.f32.xlu0 %v1952
        %v1954 = vpop.xlane.xlu0 %1953
        %v1955 = vsel %vm1186, %v1931, 0.0
        %1956 = vadd.xlane.f32.xlu0 %v1955
        %v1957 = vpop.xlane.xlu0 %1956
        %v1958 = vsel %vm1186, %v1932, 0.0
        %1959 = vadd.xlane.f32.xlu0 %v1958
        %v1960 = vpop.xlane.xlu0 %1959
        %v1961 = vsel %vm1186, %v1933, 0.0
        %1962 = vadd.xlane.f32.xlu0 %v1961
        %v1963 = vpop.xlane.xlu0 %1962
        %v1964 = vsel %vm1186, %v1934, 0.0
        %1965 = vadd.xlane.f32.xlu0 %v1964
        %v1966 = vpop.xlane.xlu0 %1965
        %v1967 = vsel %vm1186, %v1935, 0.0
        %1968 = vadd.xlane.f32.xlu0 %v1967
        %v1969 = vpop.xlane.xlu0 %1968
        %v1970 = vrcp.pop 16.0
        %v1971 = vmul.f32 16.0, %v1970
        %v1972 = vsub.f32 1.0, %v1971
        %v1973 = vmul.f32 %v1970, %v1972
        %v1974 = vadd.f32 %v1970, %v1973
        %vm1975 = vweird.f32 %v1970
        %v1976 = vsel %vm1975, %v1970, %v1974
        %v1977 = vmul.f32 %v1948, %v1976
        %v1978 = vmul.f32 %v1951, %v1976
        %v1979 = vmul.f32 %v1954, %v1976
        %v1980 = vmul.f32 %v1957, %v1976
        %v1981 = vmul.f32 %v1960, %v1976
        %v1982 = vmul.f32 %v1963, %v1976
        %v1983 = vmul.f32 %v1966, %v1976
        %v1984 = vmul.f32 %v1969, %v1976
        %v1993 = vlaneseq
        %v1994 = vand.u32 %v1993, 127
        %v1995 = vadd.s32 %v1994, 4294967295
        %v1996 = vperm.slane %v1977, %v1995
        %v1997 = vperm.slane %v1978, %v1995
        %v1998 = vperm.slane %v1979, %v1995
        %v1999 = vperm.slane %v1980, %v1995
        %v2000 = vperm.slane %v1981, %v1995
        %v2001 = vperm.slane %v1982, %v1995
        %v2002 = vperm.slane %v1983, %v1995
        %v2003 = vperm.slane %v1984, %v1995
        %vm2004 = vcmask 1041409
        %v2005 = vsel %vm2004, %v1997, %v1996
        %vm2006 = vcmask 1042434
        %v2007 = vsel %vm2006, %v1998, %v2005
        %vm2008 = vcmask 1043459
        %v2009 = vsel %vm2008, %v1999, %v2007
        %vm2010 = vcmask 1044484
        %v2011 = vsel %vm2010, %v2000, %v2009
        %vm2012 = vcmask 1045509
        %v2013 = vsel %vm2012, %v2001, %v2011
        %vm2014 = vcmask 1046534
        %v2015 = vsel %vm2014, %v2002, %v2013
        %vm2016 = vcmask 1047559
        %v2017 = vsel %vm2016, %v2003, %v2015
        %vm2019 = vcmask 72712
        %2020 = vst.msk [vmem:[#allocation6 + $0x1] sm:$0xff] %vm2019, %v2017
        %v2021 = vsel %vm1186, %v1928, -inf
        %2022 = vmax.xlane.f32.xlu0 %v2021
        %v2023 = vpop.xlane.xlu0 %2022
        %v2024 = vsel %vm1186, %v1929, -inf
        %2025 = vmax.xlane.f32.xlu0 %v2024
        %v2026 = vpop.xlane.xlu0 %2025
        %v2027 = vsel %vm1186, %v1930, -inf
        %2028 = vmax.xlane.f32.xlu0 %v2027
        %v2029 = vpop.xlane.xlu0 %2028
        %v2030 = vsel %vm1186, %v1931, -inf
        %2031 = vmax.xlane.f32.xlu0 %v2030
        %v2032 = vpop.xlane.xlu0 %2031
        %v2033 = vsel %vm1186, %v1932, -inf
        %2034 = vmax.xlane.f32.xlu0 %v2033
        %v2035 = vpop.xlane.xlu0 %2034
        %v2036 = vsel %vm1186, %v1933, -inf
        %2037 = vmax.xlane.f32.xlu0 %v2036
        %v2038 = vpop.xlane.xlu0 %2037
        %v2039 = vsel %vm1186, %v1934, -inf
        %2040 = vmax.xlane.f32.xlu0 %v2039
        %v2041 = vpop.xlane.xlu0 %2040
        %v2042 = vsel %vm1186, %v1935, -inf
        %2043 = vmax.xlane.f32.xlu0 %v2042
        %v2044 = vpop.xlane.xlu0 %2043
        %v2053 = vperm.slane %v2023, %v1995
        %v2054 = vperm.slane %v2026, %v1995
        %v2055 = vperm.slane %v2029, %v1995
        %v2056 = vperm.slane %v2032, %v1995
        %v2057 = vperm.slane %v2035, %v1995
        %v2058 = vperm.slane %v2038, %v1995
        %v2059 = vperm.slane %v2041, %v1995
        %v2060 = vperm.slane %v2044, %v1995
        %v2061 = vsel %vm2004, %v2054, %v2053
        %v2062 = vsel %vm2006, %v2055, %v2061
        %v2063 = vsel %vm2008, %v2056, %v2062
        %v2064 = vsel %vm2010, %v2057, %v2063
        %v2065 = vsel %vm2012, %v2058, %v2064
        %v2066 = vsel %vm2014, %v2059, %v2065
        %v2067 = vsel %vm2016, %v2060, %v2066
        %s2069 = scalar_lea.vmem [#allocation6], 16
        %2070 = vst.msk [vmem:[%s2069 + $0x1] sm:$0xff] %vm2019, %v2067
        %v2071 = vld [vmem:[#allocation6] sm:$0xff]
        %v2072 = vld [vmem:[#allocation6 + $0x8] sm:$0x3]
        %v2073 = vld [vmem:[#allocation6 + $0x10] sm:$0xff]
        %v2074 = vld [vmem:[#allocation6 + $0x18] sm:$0x3]
        %s2075 = sld [smem:[#allocation7]]
        %v2076 = vstv %s2075
        %v2077 = vmul.f32 %v2076, %v2071
        %v2078 = vadd.f32 %v2077, 0.0
        %s2079 = sld [smem:[#allocation7 + $0x1]]
        %v2080 = vstv %s2079
        %v2081 = vmul.f32 %v2080, %v2071
        %2083 = vrot.lane.b32.xlu0 %v2081, 127
        %v2084 = vpop.permute.xlu0 %2083
        %v2086 = vadd.f32 %v2078, %v2084
        %s2087 = sld [smem:[#allocation7 + $0x2]]
        %v2088 = vstv %s2087
        %v2089 = vmul.f32 %v2088, %v2071
        %2091 = vrot.lane.b32.xlu0 %v2089, 126
        %v2092 = vpop.permute.xlu0 %2091
        %v2094 = vadd.f32 %v2086, %v2092
        %s2095 = sld [smem:[#allocation7 + $0x3]]
        %v2096 = vstv %s2095
        %v2097 = vmul.f32 %v2096, %v2071
        %v2098 = vmul.f32 %v2096, %v2072
        %vm2101 = vcmask 1046528
        %v2102 = vrot.slane %v2097, 1
        %v2103 = vrot.slane %v2098, 1
        %v2104 = vsel %vm2101, %v2102, %v2103
        %v2106 = vadd.f32 %v2094, %v2104
        %s2107 = sld [smem:[#allocation7 + $0x4]]
        %v2108 = vstv %s2107
        %v2109 = vmul.f32 %v2108, %v2071
        %v2110 = vmul.f32 %v2108, %v2072
        %v2113 = vrot.slane %v2109, 1
        %v2114 = vrot.slane %v2110, 1
        %v2115 = vsel %vm2101, %v2113, %v2114
        %2116 = vrot.lane.b32.xlu0 %v2115, 127
        %v2117 = vpop.permute.xlu0 %2116
        %v2119 = vadd.f32 %v2106, %v2117
        %s2120 = sld [smem:[#allocation7 + $0x5]]
        %v2121 = vstv %s2120
        %v2122 = vmul.f32 %v2121, %v2071
        %v2123 = vmul.f32 %v2121, %v2072
        %v2126 = vrot.slane %v2122, 1
        %v2127 = vrot.slane %v2123, 1
        %v2128 = vsel %vm2101, %v2126, %v2127
        %2129 = vrot.lane.b32.xlu0 %v2128, 126
        %v2130 = vpop.permute.xlu0 %2129
        %v2132 = vadd.f32 %v2119, %v2130
        %s2133 = sld [smem:[#allocation7 + $0x6]]
        %v2134 = vstv %s2133
        %v2135 = vmul.f32 %v2134, %v2071
        %v2136 = vmul.f32 %v2134, %v2072
        %vm2139 = vcmask 1045504
        %v2140 = vrot.slane %v2135, 2
        %v2141 = vrot.slane %v2136, 2
        %v2142 = vsel %vm2139, %v2140, %v2141
        %v2144 = vadd.f32 %v2132, %v2142
        %s2145 = sld [smem:[#allocation7 + $0x7]]
        %v2146 = vstv %s2145
        %v2147 = vmul.f32 %v2146, %v2071
        %v2148 = vmul.f32 %v2146, %v2072
        %v2151 = vrot.slane %v2147, 2
        %v2152 = vrot.slane %v2148, 2
        %v2153 = vsel %vm2139, %v2151, %v2152
        %2154 = vrot.lane.b32.xlu0 %v2153, 127
        %v2155 = vpop.permute.xlu0 %2154
        %v2157 = vadd.f32 %v2144, %v2155
        %s2158 = sld [smem:[#allocation7 + $0x8]]
        %v2159 = vstv %s2158
        %v2160 = vmul.f32 %v2159, %v2071
        %v2161 = vmul.f32 %v2159, %v2072
        %v2164 = vrot.slane %v2160, 2
        %v2165 = vrot.slane %v2161, 2
        %v2166 = vsel %vm2139, %v2164, %v2165
        %2167 = vrot.lane.b32.xlu0 %v2166, 126
        %v2168 = vpop.permute.xlu0 %2167
        %v2170 = vadd.f32 %v2157, %v2168
        %s2171 = sld [smem:[#allocation7 + $0x9]]
        %v2172 = vstv %s2171
        %v2173 = vmul.f32 %v2172, %v2073
        %v2174 = vadd.f32 %v2170, %v2173
        %s2175 = sld [smem:[#allocation7 + $0xa]]
        %v2176 = vstv %s2175
        %v2177 = vmul.f32 %v2176, %v2073
        %2179 = vrot.lane.b32.xlu0 %v2177, 127
        %v2180 = vpop.permute.xlu0 %2179
        %v2182 = vadd.f32 %v2174, %v2180
        %s2183 = sld [smem:[#allocation7 + $0xb]]
        %v2184 = vstv %s2183
        %v2185 = vmul.f32 %v2184, %v2073
        %2187 = vrot.lane.b32.xlu0 %v2185, 126
        %v2188 = vpop.permute.xlu0 %2187
        %v2190 = vadd.f32 %v2182, %v2188
        %s2191 = sld [smem:[#allocation7 + $0xc]]
        %v2192 = vstv %s2191
        %v2193 = vmul.f32 %v2192, %v2073
        %v2194 = vmul.f32 %v2192, %v2074
        %v2197 = vrot.slane %v2193, 1
        %v2198 = vrot.slane %v2194, 1
        %v2199 = vsel %vm2101, %v2197, %v2198
        %v2201 = vadd.f32 %v2190, %v2199
        %s2202 = sld [smem:[#allocation7 + $0xd]]
        %v2203 = vstv %s2202
        %v2204 = vmul.f32 %v2203, %v2073
        %v2205 = vmul.f32 %v2203, %v2074
        %v2208 = vrot.slane %v2204, 1
        %v2209 = vrot.slane %v2205, 1
        %v2210 = vsel %vm2101, %v2208, %v2209
        %2211 = vrot.lane.b32.xlu0 %v2210, 127
        %v2212 = vpop.permute.xlu0 %2211
        %v2214 = vadd.f32 %v2201, %v2212
        %s2215 = sld [smem:[#allocation7 + $0xe]]
        %v2216 = vstv %s2215
        %v2217 = vmul.f32 %v2216, %v2073
        %v2218 = vmul.f32 %v2216, %v2074
        %v2221 = vrot.slane %v2217, 1
        %v2222 = vrot.slane %v2218, 1
        %v2223 = vsel %vm2101, %v2221, %v2222
        %2224 = vrot.lane.b32.xlu0 %v2223, 126
        %v2225 = vpop.permute.xlu0 %2224
        %v2227 = vadd.f32 %v2214, %v2225
        %s2228 = sld [smem:[#allocation7 + $0xf]]
        %v2229 = vstv %s2228
        %v2230 = vmul.f32 %v2229, %v2073
        %v2231 = vmul.f32 %v2229, %v2074
        %v2234 = vrot.slane %v2230, 2
        %v2235 = vrot.slane %v2231, 2
        %v2236 = vsel %vm2139, %v2234, %v2235
        %v2238 = vadd.f32 %v2227, %v2236
        %s2239 = sld [smem:[#allocation7 + $0x10]]
        %v2240 = vstv %s2239
        %v2241 = vmul.f32 %v2240, %v2073
        %v2242 = vmul.f32 %v2240, %v2074
        %v2245 = vrot.slane %v2241, 2
        %v2246 = vrot.slane %v2242, 2
        %v2247 = vsel %vm2139, %v2245, %v2246
        %2248 = vrot.lane.b32.xlu0 %v2247, 127
        %v2249 = vpop.permute.xlu0 %2248
        %v2251 = vadd.f32 %v2238, %v2249
        %s2252 = sld [smem:[#allocation7 + $0x11]]
        %v2253 = vstv %s2252
        %v2254 = vmul.f32 %v2253, %v2073
        %v2255 = vmul.f32 %v2253, %v2074
        %v2258 = vrot.slane %v2254, 2
        %v2259 = vrot.slane %v2255, 2
        %v2260 = vsel %vm2139, %v2258, %v2259
        %2261 = vrot.lane.b32.xlu0 %v2260, 126
        %v2262 = vpop.permute.xlu0 %2261
        %v2264 = vadd.f32 %v2251, %v2262
        %v2265 = vxor.u32 %v2264, 2147483648
        %v2266 = vmul.f32 %v2265, 1.442695
        %v2267 = vpow.pop %v2266
        %v2268 = vadd.f32 %v2267, 1.0
        %v2269 = vrcp.pop %v2268
        %v2270 = vmul.f32 %v2268, %v2269
        %v2271 = vsub.f32 1.0, %v2270
        %v2272 = vmul.f32 %v2269, %v2271
        %v2273 = vadd.f32 %v2269, %v2272
        %vm2274 = vweird.f32 %v2268
        %vm2275 = vweird.f32 %v2269
        %vm2276 = vmor %vm2274, %vm2275
        %v2277 = vsel %vm2276, %v2269, %v2273
        %v2278 = vand.u32 2147483647, %v2268
        %vm2279 = vcmp.eq.f32.partialorder %v2278, 8.507059e+37
        %v2280 = vand.u32 %v2268, 2147483648
        %v2281 = vor.u32 1.1754944e-38, %v2280
        %v2282 = vsel %vm2279, %v2281, %v2277
        %v2283 = vmul.f32 1.0, %v2282
        %v2284 = vperm.slane %v2283, 0
        %v2285 = vlaneseq
        %v2286 = vshrl.u32 %v2285, 7
        %2288 = vset.pattern.permute.xlu0 %v2286
        %2289 = vperm.xlu0 %2288, %v2284
        %v2290 = vpop.permute.xlu0 %2289
        %v2291 = vperm.slane %v2283, 1
        %v2292 = vlaneseq
        %v2293 = vshrl.u32 %v2292, 7
        %2295 = vset.pattern.permute.xlu0 %v2293
        %2296 = vperm.xlu0 %2295, %v2291
        %v2297 = vpop.permute.xlu0 %2296
        %v2298 = vperm.slane %v2283, 2
        %v2299 = vlaneseq
        %v2300 = vshrl.u32 %v2299, 7
        %2302 = vset.pattern.permute.xlu0 %v2300
        %2303 = vperm.xlu0 %2302, %v2298
        %v2304 = vpop.permute.xlu0 %2303
        %v2305 = vperm.slane %v2283, 3
        %v2306 = vlaneseq
        %v2307 = vshrl.u32 %v2306, 7
        %2309 = vset.pattern.permute.xlu0 %v2307
        %2310 = vperm.xlu0 %2309, %v2305
        %v2311 = vpop.permute.xlu0 %2310
        %v2312 = vperm.slane %v2283, 4
        %v2313 = vlaneseq
        %v2314 = vshrl.u32 %v2313, 7
        %2316 = vset.pattern.permute.xlu0 %v2314
        %2317 = vperm.xlu0 %2316, %v2312
        %v2318 = vpop.permute.xlu0 %2317
        %v2319 = vperm.slane %v2283, 5
        %v2320 = vlaneseq
        %v2321 = vshrl.u32 %v2320, 7
        %2323 = vset.pattern.permute.xlu0 %v2321
        %2324 = vperm.xlu0 %2323, %v2319
        %v2325 = vpop.permute.xlu0 %2324
        %v2326 = vperm.slane %v2283, 6
        %v2327 = vlaneseq
        %v2328 = vshrl.u32 %v2327, 7
        %2330 = vset.pattern.permute.xlu0 %v2328
        %2331 = vperm.xlu0 %2330, %v2326
        %v2332 = vpop.permute.xlu0 %2331
        %v2333 = vperm.slane %v2283, 7
        %v2334 = vlaneseq
        %v2335 = vshrl.u32 %v2334, 7
        %2337 = vset.pattern.permute.xlu0 %v2335
        %2338 = vperm.xlu0 %2337, %v2333
        %v2339 = vpop.permute.xlu0 %2338
        %v2340 = vmul.f32 %v1928, %v2290
        %v2341 = vmul.f32 %v1929, %v2297
        %v2342 = vmul.f32 %v1930, %v2304
        %v2343 = vmul.f32 %v1931, %v2311
        %v2344 = vmul.f32 %v1932, %v2318
        %v2345 = vmul.f32 %v1933, %v2325
        %v2346 = vmul.f32 %v1934, %v2332
        %v2347 = vmul.f32 %v1935, %v2339
        %vm2348 = vcmask 125952
        %2349 = vst.msk [vmem:[#allocation2] sm:$0xf] %vm2348, 0
        %vm2350 = vcmask 124928
        %2351 = vst.msk [vmem:[#allocation2 + $0x4] sm:$0x7] %vm2350, 0
        %2352 = vst.msk [vmem:[#allocation2 + $0x8] sm:$0xf] %vm2348, 0
        %2353 = vst.msk [vmem:[#allocation2 + $0xc] sm:$0x7] %vm2350, 0
        %2354 = vst.msk [vmem:[#allocation2 + $0x10] sm:$0xf] %vm2348, 0
        %2355 = vst.msk [vmem:[#allocation2 + $0x14] sm:$0x7] %vm2350, 0
        %s2356 = scalar_lea.vmem [#allocation2], 88
        %2357 = vst.msk [vmem:[%s2356] sm:$0xf] %vm2348, 0
        %2358 = vst.msk [vmem:[%s2356 + $0x4] sm:$0x7] %vm2350, 0
        %2359 = vst.msk [vmem:[%s2356 + $0x8] sm:$0xf] %vm2348, 0
        %2360 = vst.msk [vmem:[%s2356 + $0xc] sm:$0x7] %vm2350, 0
        %2361 = vst.msk [vmem:[%s2356 + $0x10] sm:$0xf] %vm2348, 0
        %2362 = vst.msk [vmem:[%s2356 + $0x14] sm:$0x7] %vm2350, 0
        %s2363 = scalar_lea.vmem [#allocation2], 24
        %vm2364 = vcmask 123904
        %vm2365 = vsmask.f32 1280
        %vm2366 = vmand %vm2364, %vm2365
        %v2367 = vld [vmem:[%s2363] sm:$0x3]
        %v2368 = vsel %vm2366, 0, %v2367
        %2369 = vst [vmem:[%s2363] sm:$0x3] %v2368
        %v2370 = vld [vmem:[%s2363 + $0x8] sm:$0x3]
        %v2371 = vsel %vm2366, 0, %v2370
        %2372 = vst [vmem:[%s2363 + $0x8] sm:$0x3] %v2371
        %v2373 = vld [vmem:[%s2363 + $0x10] sm:$0x3]
        %v2374 = vsel %vm2366, 0, %v2373
        %2375 = vst [vmem:[%s2363 + $0x10] sm:$0x3] %v2374
        %v2376 = vld [vmem:[%s2363 + $0x18] sm:$0x3]
        %v2377 = vsel %vm2366, 0, %v2376
        %2378 = vst [vmem:[%s2363 + $0x18] sm:$0x3] %v2377
        %v2379 = vld [vmem:[%s2363 + $0x20] sm:$0x3]
        %v2380 = vsel %vm2366, 0, %v2379
        %2381 = vst [vmem:[%s2363 + $0x20] sm:$0x3] %v2380
        %v2382 = vld [vmem:[%s2363 + $0x28] sm:$0x3]
        %v2383 = vsel %vm2366, 0, %v2382
        %2384 = vst [vmem:[%s2363 + $0x28] sm:$0x3] %v2383
        %v2385 = vld [vmem:[%s2363 + $0x30] sm:$0x3]
        %v2386 = vsel %vm2366, 0, %v2385
        %2387 = vst [vmem:[%s2363 + $0x30] sm:$0x3] %v2386
        %v2388 = vld [vmem:[%s2363 + $0x38] sm:$0x3]
        %v2389 = vsel %vm2366, 0, %v2388
        %2390 = vst [vmem:[%s2363 + $0x38] sm:$0x3] %v2389
        %vm2391 = vcmask 124929
        %vm2392 = vsmask.f32 7942
        %vm2393 = vmand %vm2391, %vm2392
        %v2394 = vld [vmem:[%s2363 + $0x4] sm:$0x6]
        %v2395 = vsel %vm2393, 0, %v2394
        %2396 = vst [vmem:[%s2363 + $0x4] sm:$0x6] %v2395
        %v2397 = vld [vmem:[%s2363 + $0xc] sm:$0x6]
        %v2398 = vsel %vm2393, 0, %v2397
        %2399 = vst [vmem:[%s2363 + $0xc] sm:$0x6] %v2398
        %v2400 = vld [vmem:[%s2363 + $0x14] sm:$0x6]
        %v2401 = vsel %vm2393, 0, %v2400
        %2402 = vst [vmem:[%s2363 + $0x14] sm:$0x6] %v2401
        %v2403 = vld [vmem:[%s2363 + $0x1c] sm:$0x6]
        %v2404 = vsel %vm2393, 0, %v2403
        %2405 = vst [vmem:[%s2363 + $0x1c] sm:$0x6] %v2404
        %v2406 = vld [vmem:[%s2363 + $0x24] sm:$0x6]
        %v2407 = vsel %vm2393, 0, %v2406
        %2408 = vst [vmem:[%s2363 + $0x24] sm:$0x6] %v2407
        %v2409 = vld [vmem:[%s2363 + $0x2c] sm:$0x6]
        %v2410 = vsel %vm2393, 0, %v2409
        %2411 = vst [vmem:[%s2363 + $0x2c] sm:$0x6] %v2410
        %v2412 = vld [vmem:[%s2363 + $0x34] sm:$0x6]
        %v2413 = vsel %vm2393, 0, %v2412
        %2414 = vst [vmem:[%s2363 + $0x34] sm:$0x6] %v2413
        %v2415 = vld [vmem:[%s2363 + $0x3c] sm:$0x6]
        %v2416 = vsel %vm2393, 0, %v2415
        %2417 = vst [vmem:[%s2363 + $0x3c] sm:$0x6] %v2416
        %v2418 = vld [vmem:[%s1120] sm:$0xf]
        %v2419 = vld [vmem:[%s1120 + $0x4] sm:$0xf]
        %v2420 = vld [vmem:[%s1120 + $0x8] sm:$0xf]
        %v2421 = vld [vmem:[%s1120 + $0xc] sm:$0xf]
        %v2422 = vld [vmem:[%s1120 + $0x10] sm:$0xf]
        %v2423 = vld [vmem:[%s1120 + $0x14] sm:$0xf]
        %v2424 = vld [vmem:[%s1120 + $0x18] sm:$0xf]
        %v2425 = vld [vmem:[%s1120 + $0x1c] sm:$0xf]
        %v2427 = vshrl.u32 %v2418, 16
        %v2429 = vrot.slane %v2427, 6
        %v2430 = vshll.u32 %v2418, 16
        %v2432 = vrot.slane %v2430, 7
        %v2433 = vor.u32 %v2429, %v2432
        %v2434 = vrot.slane %v2433, 4
        %v2436 = vshrl.u32 %v2419, 16
        %v2438 = vrot.slane %v2436, 6
        %v2439 = vshll.u32 %v2419, 16
        %v2441 = vrot.slane %v2439, 7
        %v2442 = vor.u32 %v2438, %v2441
        %v2443 = vrot.slane %v2442, 4
        %v2445 = vshrl.u32 %v2420, 16
        %v2447 = vrot.slane %v2445, 6
        %v2448 = vshll.u32 %v2420, 16
        %v2450 = vrot.slane %v2448, 7
        %v2451 = vor.u32 %v2447, %v2450
        %v2452 = vrot.slane %v2451, 4
        %v2454 = vshrl.u32 %v2421, 16
        %v2456 = vrot.slane %v2454, 6
        %v2457 = vshll.u32 %v2421, 16
        %v2459 = vrot.slane %v2457, 7
        %v2460 = vor.u32 %v2456, %v2459
        %v2461 = vrot.slane %v2460, 4
        %v2463 = vshrl.u32 %v2422, 16
        %v2465 = vrot.slane %v2463, 6
        %v2466 = vshll.u32 %v2422, 16
        %v2468 = vrot.slane %v2466, 7
        %v2469 = vor.u32 %v2465, %v2468
        %v2470 = vrot.slane %v2469, 4
        %v2472 = vshrl.u32 %v2423, 16
        %v2474 = vrot.slane %v2472, 6
        %v2475 = vshll.u32 %v2423, 16
        %v2477 = vrot.slane %v2475, 7
        %v2478 = vor.u32 %v2474, %v2477
        %v2479 = vrot.slane %v2478, 4
        %v2481 = vshrl.u32 %v2424, 16
        %v2483 = vrot.slane %v2481, 6
        %v2484 = vshll.u32 %v2424, 16
        %v2486 = vrot.slane %v2484, 7
        %v2487 = vor.u32 %v2483, %v2486
        %v2488 = vrot.slane %v2487, 4
        %v2490 = vshrl.u32 %v2425, 16
        %v2492 = vrot.slane %v2490, 6
        %v2493 = vshll.u32 %v2425, 16
        %v2495 = vrot.slane %v2493, 7
        %v2496 = vor.u32 %v2492, %v2495
        %v2497 = vrot.slane %v2496, 4
        %vm2514 = vcmask 125953
        %vm2515 = vmand %vm2514, %vm2392
        %v2516 = vld [vmem:[%s2363] sm:$0xe]
        %v2517 = vsel %vm2515, %v2433, %v2516
        %2518 = vst [vmem:[%s2363] sm:$0xe] %v2517
        %v2519 = vld [vmem:[%s2363 + $0x4] sm:$0x3]
        %v2520 = vsel %vm2366, %v2434, %v2519
        %2521 = vst [vmem:[%s2363 + $0x4] sm:$0x3] %v2520
        %v2522 = vld [vmem:[%s2363 + $0x8] sm:$0xe]
        %v2523 = vsel %vm2515, %v2442, %v2522
        %2524 = vst [vmem:[%s2363 + $0x8] sm:$0xe] %v2523
        %v2525 = vld [vmem:[%s2363 + $0xc] sm:$0x3]
        %v2526 = vsel %vm2366, %v2443, %v2525
        %2527 = vst [vmem:[%s2363 + $0xc] sm:$0x3] %v2526
        %v2528 = vld [vmem:[%s2363 + $0x10] sm:$0xe]
        %v2529 = vsel %vm2515, %v2451, %v2528
        %2530 = vst [vmem:[%s2363 + $0x10] sm:$0xe] %v2529
        %v2531 = vld [vmem:[%s2363 + $0x14] sm:$0x3]
        %v2532 = vsel %vm2366, %v2452, %v2531
        %2533 = vst [vmem:[%s2363 + $0x14] sm:$0x3] %v2532
        %v2534 = vld [vmem:[%s2363 + $0x18] sm:$0xe]
        %v2535 = vsel %vm2515, %v2460, %v2534
        %2536 = vst [vmem:[%s2363 + $0x18] sm:$0xe] %v2535
        %v2537 = vld [vmem:[%s2363 + $0x1c] sm:$0x3]
        %v2538 = vsel %vm2366, %v2461, %v2537
        %2539 = vst [vmem:[%s2363 + $0x1c] sm:$0x3] %v2538
        %v2540 = vld [vmem:[%s2363 + $0x20] sm:$0xe]
        %v2541 = vsel %vm2515, %v2469, %v2540
        %2542 = vst [vmem:[%s2363 + $0x20] sm:$0xe] %v2541
        %v2543 = vld [vmem:[%s2363 + $0x24] sm:$0x3]
        %v2544 = vsel %vm2366, %v2470, %v2543
        %2545 = vst [vmem:[%s2363 + $0x24] sm:$0x3] %v2544
        %v2546 = vld [vmem:[%s2363 + $0x28] sm:$0xe]
        %v2547 = vsel %vm2515, %v2478, %v2546
        %2548 = vst [vmem:[%s2363 + $0x28] sm:$0xe] %v2547
        %v2549 = vld [vmem:[%s2363 + $0x2c] sm:$0x3]
        %v2550 = vsel %vm2366, %v2479, %v2549
        %2551 = vst [vmem:[%s2363 + $0x2c] sm:$0x3] %v2550
        %v2552 = vld [vmem:[%s2363 + $0x30] sm:$0xe]
        %v2553 = vsel %vm2515, %v2487, %v2552
        %2554 = vst [vmem:[%s2363 + $0x30] sm:$0xe] %v2553
        %v2555 = vld [vmem:[%s2363 + $0x34] sm:$0x3]
        %v2556 = vsel %vm2366, %v2488, %v2555
        %2557 = vst [vmem:[%s2363 + $0x34] sm:$0x3] %v2556
        %v2558 = vld [vmem:[%s2363 + $0x38] sm:$0xe]
        %v2559 = vsel %vm2515, %v2496, %v2558
        %2560 = vst [vmem:[%s2363 + $0x38] sm:$0xe] %v2559
        %v2561 = vld [vmem:[%s2363 + $0x3c] sm:$0x3]
        %v2562 = vsel %vm2366, %v2497, %v2561
        %2563 = vst [vmem:[%s2363 + $0x3c] sm:$0x3] %v2562
        %s2564 = scalar_lea.vmem [#allocation2], 16
        %v2565 = vld [vmem:[%s2564] sm:$0xe]
        %v2566 = vld [vmem:[%s2564 + $0x4] sm:$0x1]
        %v2567 = vld [vmem:[%s2564 + $0x8] sm:$0xe]
        %v2568 = vld [vmem:[%s2564 + $0xc] sm:$0x1]
        %v2569 = vld [vmem:[%s2564 + $0x10] sm:$0xe]
        %v2570 = vld [vmem:[%s2564 + $0x14] sm:$0x1]
        %v2571 = vld [vmem:[%s2564 + $0x18] sm:$0xe]
        %v2572 = vld [vmem:[%s2564 + $0x1c] sm:$0x1]
        %v2573 = vld [vmem:[%s2564 + $0x20] sm:$0xe]
        %v2574 = vld [vmem:[%s2564 + $0x24] sm:$0x1]
        %v2575 = vld [vmem:[%s2564 + $0x28] sm:$0xe]
        %v2576 = vld [vmem:[%s2564 + $0x2c] sm:$0x1]
        %v2577 = vld [vmem:[%s2564 + $0x30] sm:$0xe]
        %v2578 = vld [vmem:[%s2564 + $0x34] sm:$0x1]
        %v2579 = vld [vmem:[%s2564 + $0x38] sm:$0xe]
        %v2580 = vld [vmem:[%s2564 + $0x3c] sm:$0x1]
        %vm2597 = vcmask 1042432
        %vm2598 = vcmask 1046532
        %vm2599 = vmor %vm2597, %vm2598
        %v2600 = vrot.slane %v2565, 5
        %v2601 = vrot.slane %v2600, 4
        %v2602 = vrot.slane %v2566, 5
        %v2603 = vsel %vm2599, %v2601, %v2602
        %v2604 = vrot.slane %v2567, 5
        %v2605 = vrot.slane %v2604, 4
        %v2606 = vrot.slane %v2568, 5
        %v2607 = vsel %vm2599, %v2605, %v2606
        %v2608 = vrot.slane %v2569, 5
        %v2609 = vrot.slane %v2608, 4
        %v2610 = vrot.slane %v2570, 5
        %v2611 = vsel %vm2599, %v2609, %v2610
        %v2612 = vrot.slane %v2571, 5
        %v2613 = vrot.slane %v2612, 4
        %v2614 = vrot.slane %v2572, 5
        %v2615 = vsel %vm2599, %v2613, %v2614
        %v2616 = vrot.slane %v2573, 5
        %v2617 = vrot.slane %v2616, 4
        %v2618 = vrot.slane %v2574, 5
        %v2619 = vsel %vm2599, %v2617, %v2618
        %v2620 = vrot.slane %v2575, 5
        %v2621 = vrot.slane %v2620, 4
        %v2622 = vrot.slane %v2576, 5
        %v2623 = vsel %vm2599, %v2621, %v2622
        %v2624 = vrot.slane %v2577, 5
        %v2625 = vrot.slane %v2624, 4
        %v2626 = vrot.slane %v2578, 5
        %v2627 = vsel %vm2599, %v2625, %v2626
        %v2628 = vrot.slane %v2579, 5
        %v2629 = vrot.slane %v2628, 4
        %v2630 = vrot.slane %v2580, 5
        %v2631 = vsel %vm2599, %v2629, %v2630
        %2640 = vst.msk [vmem:[#allocation5] sm:$0xf] %vm2348, %v2603
        %2641 = vst.msk [vmem:[#allocation5 + $0x10] sm:$0xf] %vm2348, %v2607
        %2642 = vst.msk [vmem:[#allocation5 + $0x20] sm:$0xf] %vm2348, %v2611
        %2643 = vst.msk [vmem:[#allocation5 + $0x30] sm:$0xf] %vm2348, %v2615
        %2644 = vst.msk [vmem:[#allocation5 + $0x40] sm:$0xf] %vm2348, %v2619
        %2645 = vst.msk [vmem:[#allocation5 + $0x50] sm:$0xf] %vm2348, %v2623
        %2646 = vst.msk [vmem:[#allocation5 + $0x60] sm:$0xf] %vm2348, %v2627
        %2647 = vst.msk [vmem:[#allocation5 + $0x70] sm:$0xf] %vm2348, %v2631
        %v2648 = vld [vmem:[%s2564] sm:$0xe]
        %v2649 = vld [vmem:[%s2564 + $0x4] sm:$0x3]
        %v2650 = vld [vmem:[%s2564 + $0x8] sm:$0xe]
        %v2651 = vld [vmem:[%s2564 + $0xc] sm:$0x3]
        %v2652 = vld [vmem:[%s2564 + $0x10] sm:$0xe]
        %v2653 = vld [vmem:[%s2564 + $0x14] sm:$0x3]
        %v2654 = vld [vmem:[%s2564 + $0x18] sm:$0xe]
        %v2655 = vld [vmem:[%s2564 + $0x1c] sm:$0x3]
        %v2656 = vld [vmem:[%s2564 + $0x20] sm:$0xe]
        %v2657 = vld [vmem:[%s2564 + $0x24] sm:$0x3]
        %v2658 = vld [vmem:[%s2564 + $0x28] sm:$0xe]
        %v2659 = vld [vmem:[%s2564 + $0x2c] sm:$0x3]
        %v2660 = vld [vmem:[%s2564 + $0x30] sm:$0xe]
        %v2661 = vld [vmem:[%s2564 + $0x34] sm:$0x3]
        %v2662 = vld [vmem:[%s2564 + $0x38] sm:$0xe]
        %v2663 = vld [vmem:[%s2564 + $0x3c] sm:$0x3]
        %vm2664 = vsmask.f32 2304
        %vm2665 = vsmask.f32 6416
        %vm2666 = vmor %vm2664, %vm2665
        %v2668 = vshrl.u32 %v2648, 16
        %v2670 = vrot.slane %v2668, 5
        %v2671 = vshll.u32 %v2648, 16
        %v2673 = vrot.slane %v2671, 6
        %v2674 = vor.u32 %v2670, %v2673
        %v2675 = vrot.slane %v2674, 4
        %v2677 = vshrl.u32 %v2649, 16
        %v2679 = vrot.slane %v2677, 5
        %v2680 = vshll.u32 %v2649, 16
        %v2682 = vrot.slane %v2680, 6
        %v2683 = vor.u32 %v2679, %v2682
        %v2684 = vsel %vm2666, %v2675, %v2683
        %v2686 = vshrl.u32 %v2650, 16
        %v2688 = vrot.slane %v2686, 5
        %v2689 = vshll.u32 %v2650, 16
        %v2691 = vrot.slane %v2689, 6
        %v2692 = vor.u32 %v2688, %v2691
        %v2693 = vrot.slane %v2692, 4
        %v2695 = vshrl.u32 %v2651, 16
        %v2697 = vrot.slane %v2695, 5
        %v2698 = vshll.u32 %v2651, 16
        %v2700 = vrot.slane %v2698, 6
        %v2701 = vor.u32 %v2697, %v2700
        %v2702 = vsel %vm2666, %v2693, %v2701
        %v2704 = vshrl.u32 %v2652, 16
        %v2706 = vrot.slane %v2704, 5
        %v2707 = vshll.u32 %v2652, 16
        %v2709 = vrot.slane %v2707, 6
        %v2710 = vor.u32 %v2706, %v2709
        %v2711 = vrot.slane %v2710, 4
        %v2713 = vshrl.u32 %v2653, 16
        %v2715 = vrot.slane %v2713, 5
        %v2716 = vshll.u32 %v2653, 16
        %v2718 = vrot.slane %v2716, 6
        %v2719 = vor.u32 %v2715, %v2718
        %v2720 = vsel %vm2666, %v2711, %v2719
        %v2722 = vshrl.u32 %v2654, 16
        %v2724 = vrot.slane %v2722, 5
        %v2725 = vshll.u32 %v2654, 16
        %v2727 = vrot.slane %v2725, 6
        %v2728 = vor.u32 %v2724, %v2727
        %v2729 = vrot.slane %v2728, 4
        %v2731 = vshrl.u32 %v2655, 16
        %v2733 = vrot.slane %v2731, 5
        %v2734 = vshll.u32 %v2655, 16
        %v2736 = vrot.slane %v2734, 6
        %v2737 = vor.u32 %v2733, %v2736
        %v2738 = vsel %vm2666, %v2729, %v2737
        %v2740 = vshrl.u32 %v2656, 16
        %v2742 = vrot.slane %v2740, 5
        %v2743 = vshll.u32 %v2656, 16
        %v2745 = vrot.slane %v2743, 6
        %v2746 = vor.u32 %v2742, %v2745
        %v2747 = vrot.slane %v2746, 4
        %v2749 = vshrl.u32 %v2657, 16
        %v2751 = vrot.slane %v2749, 5
        %v2752 = vshll.u32 %v2657, 16
        %v2754 = vrot.slane %v2752, 6
        %v2755 = vor.u32 %v2751, %v2754
        %v2756 = vsel %vm2666, %v2747, %v2755
        %v2758 = vshrl.u32 %v2658, 16
        %v2760 = vrot.slane %v2758, 5
        %v2761 = vshll.u32 %v2658, 16
        %v2763 = vrot.slane %v2761, 6
        %v2764 = vor.u32 %v2760, %v2763
        %v2765 = vrot.slane %v2764, 4
        %v2767 = vshrl.u32 %v2659, 16
        %v2769 = vrot.slane %v2767, 5
        %v2770 = vshll.u32 %v2659, 16
        %v2772 = vrot.slane %v2770, 6
        %v2773 = vor.u32 %v2769, %v2772
        %v2774 = vsel %vm2666, %v2765, %v2773
        %v2776 = vshrl.u32 %v2660, 16
        %v2778 = vrot.slane %v2776, 5
        %v2779 = vshll.u32 %v2660, 16
        %v2781 = vrot.slane %v2779, 6
        %v2782 = vor.u32 %v2778, %v2781
        %v2783 = vrot.slane %v2782, 4
        %v2785 = vshrl.u32 %v2661, 16
        %v2787 = vrot.slane %v2785, 5
        %v2788 = vshll.u32 %v2661, 16
        %v2790 = vrot.slane %v2788, 6
        %v2791 = vor.u32 %v2787, %v2790
        %v2792 = vsel %vm2666, %v2783, %v2791
        %v2794 = vshrl.u32 %v2662, 16
        %v2796 = vrot.slane %v2794, 5
        %v2797 = vshll.u32 %v2662, 16
        %v2799 = vrot.slane %v2797, 6
        %v2800 = vor.u32 %v2796, %v2799
        %v2801 = vrot.slane %v2800, 4
        %v2803 = vshrl.u32 %v2663, 16
        %v2805 = vrot.slane %v2803, 5
        %v2806 = vshll.u32 %v2663, 16
        %v2808 = vrot.slane %v2806, 6
        %v2809 = vor.u32 %v2805, %v2808
        %v2810 = vsel %vm2666, %v2801, %v2809
        %2811 = vrot.lane.b32.xlu0 %v2684, 16
        %v2812 = vpop.permute.xlu0 %2811
        %2813 = vrot.lane.b32.xlu0 %v2702, 16
        %v2814 = vpop.permute.xlu0 %2813
        %2815 = vrot.lane.b32.xlu0 %v2720, 16
        %v2816 = vpop.permute.xlu0 %2815
        %2817 = vrot.lane.b32.xlu0 %v2738, 16
        %v2818 = vpop.permute.xlu0 %2817
        %2819 = vrot.lane.b32.xlu0 %v2756, 16
        %v2820 = vpop.permute.xlu0 %2819
        %2821 = vrot.lane.b32.xlu0 %v2774, 16
        %v2822 = vpop.permute.xlu0 %2821
        %2823 = vrot.lane.b32.xlu0 %v2792, 16
        %v2824 = vpop.permute.xlu0 %2823
        %2825 = vrot.lane.b32.xlu0 %v2810, 16
        %v2826 = vpop.permute.xlu0 %2825
        %vm2835 = vcmask 257152
        %2836 = vst.msk [vmem:[#allocation5] sm:$0xf] %vm2835, %v2812
        %2837 = vst.msk [vmem:[#allocation5 + $0x10] sm:$0xf] %vm2835, %v2814
        %2838 = vst.msk [vmem:[#allocation5 + $0x20] sm:$0xf] %vm2835, %v2816
        %2839 = vst.msk [vmem:[#allocation5 + $0x30] sm:$0xf] %vm2835, %v2818
        %2840 = vst.msk [vmem:[#allocation5 + $0x40] sm:$0xf] %vm2835, %v2820
        %2841 = vst.msk [vmem:[#allocation5 + $0x50] sm:$0xf] %vm2835, %v2822
        %2842 = vst.msk [vmem:[#allocation5 + $0x60] sm:$0xf] %vm2835, %v2824
        %2843 = vst.msk [vmem:[#allocation5 + $0x70] sm:$0xf] %vm2835, %v2826
        %v2844 = vld [vmem:[%s2564] sm:$0xc]
        %v2845 = vld [vmem:[%s2564 + $0x4] sm:$0x3]
        %v2846 = vld [vmem:[%s2564 + $0x8] sm:$0xc]
        %v2847 = vld [vmem:[%s2564 + $0xc] sm:$0x3]
        %v2848 = vld [vmem:[%s2564 + $0x10] sm:$0xc]
        %v2849 = vld [vmem:[%s2564 + $0x14] sm:$0x3]
        %v2850 = vld [vmem:[%s2564 + $0x18] sm:$0xc]
        %v2851 = vld [vmem:[%s2564 + $0x1c] sm:$0x3]
        %v2852 = vld [vmem:[%s2564 + $0x20] sm:$0xc]
        %v2853 = vld [vmem:[%s2564 + $0x24] sm:$0x3]
        %v2854 = vld [vmem:[%s2564 + $0x28] sm:$0xc]
        %v2855 = vld [vmem:[%s2564 + $0x2c] sm:$0x3]
        %v2856 = vld [vmem:[%s2564 + $0x30] sm:$0xc]
        %v2857 = vld [vmem:[%s2564 + $0x34] sm:$0x3]
        %v2858 = vld [vmem:[%s2564 + $0x38] sm:$0xc]
        %v2859 = vld [vmem:[%s2564 + $0x3c] sm:$0x3]
        %vm2876 = vcmask 1041408
        %vm2877 = vcmask 1045508
        %vm2878 = vmor %vm2876, %vm2877
        %v2879 = vrot.slane %v2844, 6
        %v2880 = vrot.slane %v2879, 4
        %v2881 = vrot.slane %v2845, 6
        %v2882 = vsel %vm2878, %v2880, %v2881
        %v2883 = vrot.slane %v2846, 6
        %v2884 = vrot.slane %v2883, 4
        %v2885 = vrot.slane %v2847, 6
        %v2886 = vsel %vm2878, %v2884, %v2885
        %v2887 = vrot.slane %v2848, 6
        %v2888 = vrot.slane %v2887, 4
        %v2889 = vrot.slane %v2849, 6
        %v2890 = vsel %vm2878, %v2888, %v2889
        %v2891 = vrot.slane %v2850, 6
        %v2892 = vrot.slane %v2891, 4
        %v2893 = vrot.slane %v2851, 6
        %v2894 = vsel %vm2878, %v2892, %v2893
        %v2895 = vrot.slane %v2852, 6
        %v2896 = vrot.slane %v2895, 4
        %v2897 = vrot.slane %v2853, 6
        %v2898 = vsel %vm2878, %v2896, %v2897
        %v2899 = vrot.slane %v2854, 6
        %v2900 = vrot.slane %v2899, 4
        %v2901 = vrot.slane %v2855, 6
        %v2902 = vsel %vm2878, %v2900, %v2901
        %v2903 = vrot.slane %v2856, 6
        %v2904 = vrot.slane %v2903, 4
        %v2905 = vrot.slane %v2857, 6
        %v2906 = vsel %vm2878, %v2904, %v2905
        %v2907 = vrot.slane %v2858, 6
        %v2908 = vrot.slane %v2907, 4
        %v2909 = vrot.slane %v2859, 6
        %v2910 = vsel %vm2878, %v2908, %v2909
        %2911 = vrot.lane.b32.xlu0 %v2882, 32
        %v2912 = vpop.permute.xlu0 %2911
        %2913 = vrot.lane.b32.xlu0 %v2886, 32
        %v2914 = vpop.permute.xlu0 %2913
        %2915 = vrot.lane.b32.xlu0 %v2890, 32
        %v2916 = vpop.permute.xlu0 %2915
        %2917 = vrot.lane.b32.xlu0 %v2894, 32
        %v2918 = vpop.permute.xlu0 %2917
        %2919 = vrot.lane.b32.xlu0 %v2898, 32
        %v2920 = vpop.permute.xlu0 %2919
        %2921 = vrot.lane.b32.xlu0 %v2902, 32
        %v2922 = vpop.permute.xlu0 %2921
        %2923 = vrot.lane.b32.xlu0 %v2906, 32
        %v2924 = vpop.permute.xlu0 %2923
        %2925 = vrot.lane.b32.xlu0 %v2910, 32
        %v2926 = vpop.permute.xlu0 %2925
        %vm2935 = vcmask 388352
        %2936 = vst.msk [vmem:[#allocation5] sm:$0xf] %vm2935, %v2912
        %2937 = vst.msk [vmem:[#allocation5 + $0x10] sm:$0xf] %vm2935, %v2914
        %2938 = vst.msk [vmem:[#allocation5 + $0x20] sm:$0xf] %vm2935, %v2916
        %2939 = vst.msk [vmem:[#allocation5 + $0x30] sm:$0xf] %vm2935, %v2918
        %2940 = vst.msk [vmem:[#allocation5 + $0x40] sm:$0xf] %vm2935, %v2920
        %2941 = vst.msk [vmem:[#allocation5 + $0x50] sm:$0xf] %vm2935, %v2922
        %2942 = vst.msk [vmem:[#allocation5 + $0x60] sm:$0xf] %vm2935, %v2924
        %2943 = vst.msk [vmem:[#allocation5 + $0x70] sm:$0xf] %vm2935, %v2926
        %v2944 = vld [vmem:[%s2363] sm:$0xe]
        %v2945 = vld [vmem:[%s2363 + $0x4] sm:$0x1]
        %v2946 = vld [vmem:[%s2363 + $0x8] sm:$0xe]
        %v2947 = vld [vmem:[%s2363 + $0xc] sm:$0x1]
        %v2948 = vld [vmem:[%s2363 + $0x10] sm:$0xe]
        %v2949 = vld [vmem:[%s2363 + $0x14] sm:$0x1]
        %v2950 = vld [vmem:[%s2363 + $0x18] sm:$0xe]
        %v2951 = vld [vmem:[%s2363 + $0x1c] sm:$0x1]
        %v2952 = vld [vmem:[%s2363 + $0x20] sm:$0xe]
        %v2953 = vld [vmem:[%s2363 + $0x24] sm:$0x1]
        %v2954 = vld [vmem:[%s2363 + $0x28] sm:$0xe]
        %v2955 = vld [vmem:[%s2363 + $0x2c] sm:$0x1]
        %v2956 = vld [vmem:[%s2363 + $0x30] sm:$0xe]
        %v2957 = vld [vmem:[%s2363 + $0x34] sm:$0x1]
        %v2958 = vld [vmem:[%s2363 + $0x38] sm:$0xe]
        %v2959 = vld [vmem:[%s2363 + $0x3c] sm:$0x1]
        %v2976 = vrot.slane %v2944, 5
        %v2977 = vrot.slane %v2976, 4
        %v2978 = vrot.slane %v2945, 5
        %v2979 = vsel %vm2599, %v2977, %v2978
        %v2980 = vrot.slane %v2946, 5
        %v2981 = vrot.slane %v2980, 4
        %v2982 = vrot.slane %v2947, 5
        %v2983 = vsel %vm2599, %v2981, %v2982
        %v2984 = vrot.slane %v2948, 5
        %v2985 = vrot.slane %v2984, 4
        %v2986 = vrot.slane %v2949, 5
        %v2987 = vsel %vm2599, %v2985, %v2986
        %v2988 = vrot.slane %v2950, 5
        %v2989 = vrot.slane %v2988, 4
        %v2990 = vrot.slane %v2951, 5
        %v2991 = vsel %vm2599, %v2989, %v2990
        %v2992 = vrot.slane %v2952, 5
        %v2993 = vrot.slane %v2992, 4
        %v2994 = vrot.slane %v2953, 5
        %v2995 = vsel %vm2599, %v2993, %v2994
        %v2996 = vrot.slane %v2954, 5
        %v2997 = vrot.slane %v2996, 4
        %v2998 = vrot.slane %v2955, 5
        %v2999 = vsel %vm2599, %v2997, %v2998
        %v3000 = vrot.slane %v2956, 5
        %v3001 = vrot.slane %v3000, 4
        %v3002 = vrot.slane %v2957, 5
        %v3003 = vsel %vm2599, %v3001, %v3002
        %v3004 = vrot.slane %v2958, 5
        %v3005 = vrot.slane %v3004, 4
        %v3006 = vrot.slane %v2959, 5
        %v3007 = vsel %vm2599, %v3005, %v3006
        %3008 = vrot.lane.b32.xlu0 %v2979, 48
        %v3009 = vpop.permute.xlu0 %3008
        %3010 = vrot.lane.b32.xlu0 %v2983, 48
        %v3011 = vpop.permute.xlu0 %3010
        %3012 = vrot.lane.b32.xlu0 %v2987, 48
        %v3013 = vpop.permute.xlu0 %3012
        %3014 = vrot.lane.b32.xlu0 %v2991, 48
        %v3015 = vpop.permute.xlu0 %3014
        %3016 = vrot.lane.b32.xlu0 %v2995, 48
        %v3017 = vpop.permute.xlu0 %3016
        %3018 = vrot.lane.b32.xlu0 %v2999, 48
        %v3019 = vpop.permute.xlu0 %3018
        %3020 = vrot.lane.b32.xlu0 %v3003, 48
        %v3021 = vpop.permute.xlu0 %3020
        %3022 = vrot.lane.b32.xlu0 %v3007, 48
        %v3023 = vpop.permute.xlu0 %3022
        %vm3032 = vcmask 519552
        %3033 = vst.msk [vmem:[#allocation5] sm:$0xf] %vm3032, %v3009
        %3034 = vst.msk [vmem:[#allocation5 + $0x10] sm:$0xf] %vm3032, %v3011
        %3035 = vst.msk [vmem:[#allocation5 + $0x20] sm:$0xf] %vm3032, %v3013
        %3036 = vst.msk [vmem:[#allocation5 + $0x30] sm:$0xf] %vm3032, %v3015
        %3037 = vst.msk [vmem:[#allocation5 + $0x40] sm:$0xf] %vm3032, %v3017
        %3038 = vst.msk [vmem:[#allocation5 + $0x50] sm:$0xf] %vm3032, %v3019
        %3039 = vst.msk [vmem:[#allocation5 + $0x60] sm:$0xf] %vm3032, %v3021
        %3040 = vst.msk [vmem:[#allocation5 + $0x70] sm:$0xf] %vm3032, %v3023
        %v3041 = vld [vmem:[%s2363] sm:$0xe]
        %v3042 = vld [vmem:[%s2363 + $0x4] sm:$0x3]
        %v3043 = vld [vmem:[%s2363 + $0x8] sm:$0xe]
        %v3044 = vld [vmem:[%s2363 + $0xc] sm:$0x3]
        %v3045 = vld [vmem:[%s2363 + $0x10] sm:$0xe]
        %v3046 = vld [vmem:[%s2363 + $0x14] sm:$0x3]
        %v3047 = vld [vmem:[%s2363 + $0x18] sm:$0xe]
        %v3048 = vld [vmem:[%s2363 + $0x1c] sm:$0x3]
        %v3049 = vld [vmem:[%s2363 + $0x20] sm:$0xe]
        %v3050 = vld [vmem:[%s2363 + $0x24] sm:$0x3]
        %v3051 = vld [vmem:[%s2363 + $0x28] sm:$0xe]
        %v3052 = vld [vmem:[%s2363 + $0x2c] sm:$0x3]
        %v3053 = vld [vmem:[%s2363 + $0x30] sm:$0xe]
        %v3054 = vld [vmem:[%s2363 + $0x34] sm:$0x3]
        %v3055 = vld [vmem:[%s2363 + $0x38] sm:$0xe]
        %v3056 = vld [vmem:[%s2363 + $0x3c] sm:$0x3]
        %v3058 = vshrl.u32 %v3041, 16
        %v3060 = vrot.slane %v3058, 5
        %v3061 = vshll.u32 %v3041, 16
        %v3063 = vrot.slane %v3061, 6
        %v3064 = vor.u32 %v3060, %v3063
        %v3065 = vrot.slane %v3064, 4
        %v3067 = vshrl.u32 %v3042, 16
        %v3069 = vrot.slane %v3067, 5
        %v3070 = vshll.u32 %v3042, 16
        %v3072 = vrot.slane %v3070, 6
        %v3073 = vor.u32 %v3069, %v3072
        %v3074 = vsel %vm2666, %v3065, %v3073
        %v3076 = vshrl.u32 %v3043, 16
        %v3078 = vrot.slane %v3076, 5
        %v3079 = vshll.u32 %v3043, 16
        %v3081 = vrot.slane %v3079, 6
        %v3082 = vor.u32 %v3078, %v3081
        %v3083 = vrot.slane %v3082, 4
        %v3085 = vshrl.u32 %v3044, 16
        %v3087 = vrot.slane %v3085, 5
        %v3088 = vshll.u32 %v3044, 16
        %v3090 = vrot.slane %v3088, 6
        %v3091 = vor.u32 %v3087, %v3090
        %v3092 = vsel %vm2666, %v3083, %v3091
        %v3094 = vshrl.u32 %v3045, 16
        %v3096 = vrot.slane %v3094, 5
        %v3097 = vshll.u32 %v3045, 16
        %v3099 = vrot.slane %v3097, 6
        %v3100 = vor.u32 %v3096, %v3099
        %v3101 = vrot.slane %v3100, 4
        %v3103 = vshrl.u32 %v3046, 16
        %v3105 = vrot.slane %v3103, 5
        %v3106 = vshll.u32 %v3046, 16
        %v3108 = vrot.slane %v3106, 6
        %v3109 = vor.u32 %v3105, %v3108
        %v3110 = vsel %vm2666, %v3101, %v3109
        %v3112 = vshrl.u32 %v3047, 16
        %v3114 = vrot.slane %v3112, 5
        %v3115 = vshll.u32 %v3047, 16
        %v3117 = vrot.slane %v3115, 6
        %v3118 = vor.u32 %v3114, %v3117
        %v3119 = vrot.slane %v3118, 4
        %v3121 = vshrl.u32 %v3048, 16
        %v3123 = vrot.slane %v3121, 5
        %v3124 = vshll.u32 %v3048, 16
        %v3126 = vrot.slane %v3124, 6
        %v3127 = vor.u32 %v3123, %v3126
        %v3128 = vsel %vm2666, %v3119, %v3127
        %v3130 = vshrl.u32 %v3049, 16
        %v3132 = vrot.slane %v3130, 5
        %v3133 = vshll.u32 %v3049, 16
        %v3135 = vrot.slane %v3133, 6
        %v3136 = vor.u32 %v3132, %v3135
        %v3137 = vrot.slane %v3136, 4
        %v3139 = vshrl.u32 %v3050, 16
        %v3141 = vrot.slane %v3139, 5
        %v3142 = vshll.u32 %v3050, 16
        %v3144 = vrot.slane %v3142, 6
        %v3145 = vor.u32 %v3141, %v3144
        %v3146 = vsel %vm2666, %v3137, %v3145
        %v3148 = vshrl.u32 %v3051, 16
        %v3150 = vrot.slane %v3148, 5
        %v3151 = vshll.u32 %v3051, 16
        %v3153 = vrot.slane %v3151, 6
        %v3154 = vor.u32 %v3150, %v3153
        %v3155 = vrot.slane %v3154, 4
        %v3157 = vshrl.u32 %v3052, 16
        %v3159 = vrot.slane %v3157, 5
        %v3160 = vshll.u32 %v3052, 16
        %v3162 = vrot.slane %v3160, 6
        %v3163 = vor.u32 %v3159, %v3162
        %v3164 = vsel %vm2666, %v3155, %v3163
        %v3166 = vshrl.u32 %v3053, 16
        %v3168 = vrot.slane %v3166, 5
        %v3169 = vshll.u32 %v3053, 16
        %v3171 = vrot.slane %v3169, 6
        %v3172 = vor.u32 %v3168, %v3171
        %v3173 = vrot.slane %v3172, 4
        %v3175 = vshrl.u32 %v3054, 16
        %v3177 = vrot.slane %v3175, 5
        %v3178 = vshll.u32 %v3054, 16
        %v3180 = vrot.slane %v3178, 6
        %v3181 = vor.u32 %v3177, %v3180
        %v3182 = vsel %vm2666, %v3173, %v3181
        %v3184 = vshrl.u32 %v3055, 16
        %v3186 = vrot.slane %v3184, 5
        %v3187 = vshll.u32 %v3055, 16
        %v3189 = vrot.slane %v3187, 6
        %v3190 = vor.u32 %v3186, %v3189
        %v3191 = vrot.slane %v3190, 4
        %v3193 = vshrl.u32 %v3056, 16
        %v3195 = vrot.slane %v3193, 5
        %v3196 = vshll.u32 %v3056, 16
        %v3198 = vrot.slane %v3196, 6
        %v3199 = vor.u32 %v3195, %v3198
        %v3200 = vsel %vm2666, %v3191, %v3199
        %3201 = vrot.lane.b32.xlu0 %v3074, 64
        %v3202 = vpop.permute.xlu0 %3201
        %3203 = vrot.lane.b32.xlu0 %v3092, 64
        %v3204 = vpop.permute.xlu0 %3203
        %3205 = vrot.lane.b32.xlu0 %v3110, 64
        %v3206 = vpop.permute.xlu0 %3205
        %3207 = vrot.lane.b32.xlu0 %v3128, 64
        %v3208 = vpop.permute.xlu0 %3207
        %3209 = vrot.lane.b32.xlu0 %v3146, 64
        %v3210 = vpop.permute.xlu0 %3209
        %3211 = vrot.lane.b32.xlu0 %v3164, 64
        %v3212 = vpop.permute.xlu0 %3211
        %3213 = vrot.lane.b32.xlu0 %v3182, 64
        %v3214 = vpop.permute.xlu0 %3213
        %3215 = vrot.lane.b32.xlu0 %v3200, 64
        %v3216 = vpop.permute.xlu0 %3215
        %vm3225 = vcmask 650752
        %3226 = vst.msk [vmem:[#allocation5] sm:$0xf] %vm3225, %v3202
        %3227 = vst.msk [vmem:[#allocation5 + $0x10] sm:$0xf] %vm3225, %v3204
        %3228 = vst.msk [vmem:[#allocation5 + $0x20] sm:$0xf] %vm3225, %v3206
        %3229 = vst.msk [vmem:[#allocation5 + $0x30] sm:$0xf] %vm3225, %v3208
        %3230 = vst.msk [vmem:[#allocation5 + $0x40] sm:$0xf] %vm3225, %v3210
        %3231 = vst.msk [vmem:[#allocation5 + $0x50] sm:$0xf] %vm3225, %v3212
        %3232 = vst.msk [vmem:[#allocation5 + $0x60] sm:$0xf] %vm3225, %v3214
        %3233 = vst.msk [vmem:[#allocation5 + $0x70] sm:$0xf] %vm3225, %v3216
        %v3234 = vld [vmem:[%s2363] sm:$0xc]
        %v3235 = vld [vmem:[%s2363 + $0x4] sm:$0x3]
        %v3236 = vld [vmem:[%s2363 + $0x8] sm:$0xc]
        %v3237 = vld [vmem:[%s2363 + $0xc] sm:$0x3]
        %v3238 = vld [vmem:[%s2363 + $0x10] sm:$0xc]
        %v3239 = vld [vmem:[%s2363 + $0x14] sm:$0x3]
        %v3240 = vld [vmem:[%s2363 + $0x18] sm:$0xc]
        %v3241 = vld [vmem:[%s2363 + $0x1c] sm:$0x3]
        %v3242 = vld [vmem:[%s2363 + $0x20] sm:$0xc]
        %v3243 = vld [vmem:[%s2363 + $0x24] sm:$0x3]
        %v3244 = vld [vmem:[%s2363 + $0x28] sm:$0xc]
        %v3245 = vld [vmem:[%s2363 + $0x2c] sm:$0x3]
        %v3246 = vld [vmem:[%s2363 + $0x30] sm:$0xc]
        %v3247 = vld [vmem:[%s2363 + $0x34] sm:$0x3]
        %v3248 = vld [vmem:[%s2363 + $0x38] sm:$0xc]
        %v3249 = vld [vmem:[%s2363 + $0x3c] sm:$0x3]
        %v3266 = vrot.slane %v3234, 6
        %v3267 = vrot.slane %v3266, 4
        %v3268 = vrot.slane %v3235, 6
        %v3269 = vsel %vm2878, %v3267, %v3268
        %v3270 = vrot.slane %v3236, 6
        %v3271 = vrot.slane %v3270, 4
        %v3272 = vrot.slane %v3237, 6
        %v3273 = vsel %vm2878, %v3271, %v3272
        %v3274 = vrot.slane %v3238, 6
        %v3275 = vrot.slane %v3274, 4
        %v3276 = vrot.slane %v3239, 6
        %v3277 = vsel %vm2878, %v3275, %v3276
        %v3278 = vrot.slane %v3240, 6
        %v3279 = vrot.slane %v3278, 4
        %v3280 = vrot.slane %v3241, 6
        %v3281 = vsel %vm2878, %v3279, %v3280
        %v3282 = vrot.slane %v3242, 6
        %v3283 = vrot.slane %v3282, 4
        %v3284 = vrot.slane %v3243, 6
        %v3285 = vsel %vm2878, %v3283, %v3284
        %v3286 = vrot.slane %v3244, 6
        %v3287 = vrot.slane %v3286, 4
        %v3288 = vrot.slane %v3245, 6
        %v3289 = vsel %vm2878, %v3287, %v3288
        %v3290 = vrot.slane %v3246, 6
        %v3291 = vrot.slane %v3290, 4
        %v3292 = vrot.slane %v3247, 6
        %v3293 = vsel %vm2878, %v3291, %v3292
        %v3294 = vrot.slane %v3248, 6
        %v3295 = vrot.slane %v3294, 4
        %v3296 = vrot.slane %v3249, 6
        %v3297 = vsel %vm2878, %v3295, %v3296
        %3298 = vrot.lane.b32.xlu0 %v3269, 80
        %v3299 = vpop.permute.xlu0 %3298
        %3300 = vrot.lane.b32.xlu0 %v3273, 80
        %v3301 = vpop.permute.xlu0 %3300
        %3302 = vrot.lane.b32.xlu0 %v3277, 80
        %v3303 = vpop.permute.xlu0 %3302
        %3304 = vrot.lane.b32.xlu0 %v3281, 80
        %v3305 = vpop.permute.xlu0 %3304
        %3306 = vrot.lane.b32.xlu0 %v3285, 80
        %v3307 = vpop.permute.xlu0 %3306
        %3308 = vrot.lane.b32.xlu0 %v3289, 80
        %v3309 = vpop.permute.xlu0 %3308
        %3310 = vrot.lane.b32.xlu0 %v3293, 80
        %v3311 = vpop.permute.xlu0 %3310
        %3312 = vrot.lane.b32.xlu0 %v3297, 80
        %v3313 = vpop.permute.xlu0 %3312
        %vm3322 = vcmask 781952
        %3323 = vst.msk [vmem:[#allocation5] sm:$0xf] %vm3322, %v3299
        %3324 = vst.msk [vmem:[#allocation5 + $0x10] sm:$0xf] %vm3322, %v3301
        %3325 = vst.msk [vmem:[#allocation5 + $0x20] sm:$0xf] %vm3322, %v3303
        %3326 = vst.msk [vmem:[#allocation5 + $0x30] sm:$0xf] %vm3322, %v3305
        %3327 = vst.msk [vmem:[#allocation5 + $0x40] sm:$0xf] %vm3322, %v3307
        %3328 = vst.msk [vmem:[#allocation5 + $0x50] sm:$0xf] %vm3322, %v3309
        %3329 = vst.msk [vmem:[#allocation5 + $0x60] sm:$0xf] %vm3322, %v3311
        %3330 = vst.msk [vmem:[#allocation5 + $0x70] sm:$0xf] %vm3322, %v3313
        %s3331 = scalar_lea.vmem [#allocation2], 32
        %v3332 = vld [vmem:[%s3331] sm:$0xe]
        %v3333 = vld [vmem:[%s3331 + $0x4] sm:$0x1]
        %v3334 = vld [vmem:[%s3331 + $0x8] sm:$0xe]
        %v3335 = vld [vmem:[%s3331 + $0xc] sm:$0x1]
        %v3336 = vld [vmem:[%s3331 + $0x10] sm:$0xe]
        %v3337 = vld [vmem:[%s3331 + $0x14] sm:$0x1]
        %v3338 = vld [vmem:[%s3331 + $0x18] sm:$0xe]
        %v3339 = vld [vmem:[%s3331 + $0x1c] sm:$0x1]
        %v3340 = vld [vmem:[%s3331 + $0x20] sm:$0xe]
        %v3341 = vld [vmem:[%s3331 + $0x24] sm:$0x1]
        %v3342 = vld [vmem:[%s3331 + $0x28] sm:$0xe]
        %v3343 = vld [vmem:[%s3331 + $0x2c] sm:$0x1]
        %v3344 = vld [vmem:[%s3331 + $0x30] sm:$0xe]
        %v3345 = vld [vmem:[%s3331 + $0x34] sm:$0x1]
        %v3346 = vld [vmem:[%s3331 + $0x38] sm:$0xe]
        %v3347 = vld [vmem:[%s3331 + $0x3c] sm:$0x1]
        %v3364 = vrot.slane %v3332, 5
        %v3365 = vrot.slane %v3364, 4
        %v3366 = vrot.slane %v3333, 5
        %v3367 = vsel %vm2599, %v3365, %v3366
        %v3368 = vrot.slane %v3334, 5
        %v3369 = vrot.slane %v3368, 4
        %v3370 = vrot.slane %v3335, 5
        %v3371 = vsel %vm2599, %v3369, %v3370
        %v3372 = vrot.slane %v3336, 5
        %v3373 = vrot.slane %v3372, 4
        %v3374 = vrot.slane %v3337, 5
        %v3375 = vsel %vm2599, %v3373, %v3374
        %v3376 = vrot.slane %v3338, 5
        %v3377 = vrot.slane %v3376, 4
        %v3378 = vrot.slane %v3339, 5
        %v3379 = vsel %vm2599, %v3377, %v3378
        %v3380 = vrot.slane %v3340, 5
        %v3381 = vrot.slane %v3380, 4
        %v3382 = vrot.slane %v3341, 5
        %v3383 = vsel %vm2599, %v3381, %v3382
        %v3384 = vrot.slane %v3342, 5
        %v3385 = vrot.slane %v3384, 4
        %v3386 = vrot.slane %v3343, 5
        %v3387 = vsel %vm2599, %v3385, %v3386
        %v3388 = vrot.slane %v3344, 5
        %v3389 = vrot.slane %v3388, 4
        %v3390 = vrot.slane %v3345, 5
        %v3391 = vsel %vm2599, %v3389, %v3390
        %v3392 = vrot.slane %v3346, 5
        %v3393 = vrot.slane %v3392, 4
        %v3394 = vrot.slane %v3347, 5
        %v3395 = vsel %vm2599, %v3393, %v3394
        %3396 = vrot.lane.b32.xlu0 %v3367, 96
        %v3397 = vpop.permute.xlu0 %3396
        %3398 = vrot.lane.b32.xlu0 %v3371, 96
        %v3399 = vpop.permute.xlu0 %3398
        %3400 = vrot.lane.b32.xlu0 %v3375, 96
        %v3401 = vpop.permute.xlu0 %3400
        %3402 = vrot.lane.b32.xlu0 %v3379, 96
        %v3403 = vpop.permute.xlu0 %3402
        %3404 = vrot.lane.b32.xlu0 %v3383, 96
        %v3405 = vpop.permute.xlu0 %3404
        %3406 = vrot.lane.b32.xlu0 %v3387, 96
        %v3407 = vpop.permute.xlu0 %3406
        %3408 = vrot.lane.b32.xlu0 %v3391, 96
        %v3409 = vpop.permute.xlu0 %3408
        %3410 = vrot.lane.b32.xlu0 %v3395, 96
        %v3411 = vpop.permute.xlu0 %3410
        %vm3420 = vcmask 913152
        %3421 = vst.msk [vmem:[#allocation5] sm:$0xf] %vm3420, %v3397
        %3422 = vst.msk [vmem:[#allocation5 + $0x10] sm:$0xf] %vm3420, %v3399
        %3423 = vst.msk [vmem:[#allocation5 + $0x20] sm:$0xf] %vm3420, %v3401
        %3424 = vst.msk [vmem:[#allocation5 + $0x30] sm:$0xf] %vm3420, %v3403
        %3425 = vst.msk [vmem:[#allocation5 + $0x40] sm:$0xf] %vm3420, %v3405
        %3426 = vst.msk [vmem:[#allocation5 + $0x50] sm:$0xf] %vm3420, %v3407
        %3427 = vst.msk [vmem:[#allocation5 + $0x60] sm:$0xf] %vm3420, %v3409
        %3428 = vst.msk [vmem:[#allocation5 + $0x70] sm:$0xf] %vm3420, %v3411
        %v3429 = vld [vmem:[%s3331] sm:$0xe]
        %v3430 = vld [vmem:[%s3331 + $0x4] sm:$0x3]
        %v3431 = vld [vmem:[%s3331 + $0x8] sm:$0xe]
        %v3432 = vld [vmem:[%s3331 + $0xc] sm:$0x3]
        %v3433 = vld [vmem:[%s3331 + $0x10] sm:$0xe]
        %v3434 = vld [vmem:[%s3331 + $0x14] sm:$0x3]
        %v3435 = vld [vmem:[%s3331 + $0x18] sm:$0xe]
        %v3436 = vld [vmem:[%s3331 + $0x1c] sm:$0x3]
        %v3437 = vld [vmem:[%s3331 + $0x20] sm:$0xe]
        %v3438 = vld [vmem:[%s3331 + $0x24] sm:$0x3]
        %v3439 = vld [vmem:[%s3331 + $0x28] sm:$0xe]
        %v3440 = vld [vmem:[%s3331 + $0x2c] sm:$0x3]
        %v3441 = vld [vmem:[%s3331 + $0x30] sm:$0xe]
        %v3442 = vld [vmem:[%s3331 + $0x34] sm:$0x3]
        %v3443 = vld [vmem:[%s3331 + $0x38] sm:$0xe]
        %v3444 = vld [vmem:[%s3331 + $0x3c] sm:$0x3]
        %v3446 = vshrl.u32 %v3429, 16
        %v3448 = vrot.slane %v3446, 5
        %v3449 = vshll.u32 %v3429, 16
        %v3451 = vrot.slane %v3449, 6
        %v3452 = vor.u32 %v3448, %v3451
        %v3453 = vrot.slane %v3452, 4
        %v3455 = vshrl.u32 %v3430, 16
        %v3457 = vrot.slane %v3455, 5
        %v3458 = vshll.u32 %v3430, 16
        %v3460 = vrot.slane %v3458, 6
        %v3461 = vor.u32 %v3457, %v3460
        %v3462 = vsel %vm2666, %v3453, %v3461
        %v3464 = vshrl.u32 %v3431, 16
        %v3466 = vrot.slane %v3464, 5
        %v3467 = vshll.u32 %v3431, 16
        %v3469 = vrot.slane %v3467, 6
        %v3470 = vor.u32 %v3466, %v3469
        %v3471 = vrot.slane %v3470, 4
        %v3473 = vshrl.u32 %v3432, 16
        %v3475 = vrot.slane %v3473, 5
        %v3476 = vshll.u32 %v3432, 16
        %v3478 = vrot.slane %v3476, 6
        %v3479 = vor.u32 %v3475, %v3478
        %v3480 = vsel %vm2666, %v3471, %v3479
        %v3482 = vshrl.u32 %v3433, 16
        %v3484 = vrot.slane %v3482, 5
        %v3485 = vshll.u32 %v3433, 16
        %v3487 = vrot.slane %v3485, 6
        %v3488 = vor.u32 %v3484, %v3487
        %v3489 = vrot.slane %v3488, 4
        %v3491 = vshrl.u32 %v3434, 16
        %v3493 = vrot.slane %v3491, 5
        %v3494 = vshll.u32 %v3434, 16
        %v3496 = vrot.slane %v3494, 6
        %v3497 = vor.u32 %v3493, %v3496
        %v3498 = vsel %vm2666, %v3489, %v3497
        %v3500 = vshrl.u32 %v3435, 16
        %v3502 = vrot.slane %v3500, 5
        %v3503 = vshll.u32 %v3435, 16
        %v3505 = vrot.slane %v3503, 6
        %v3506 = vor.u32 %v3502, %v3505
        %v3507 = vrot.slane %v3506, 4
        %v3509 = vshrl.u32 %v3436, 16
        %v3511 = vrot.slane %v3509, 5
        %v3512 = vshll.u32 %v3436, 16
        %v3514 = vrot.slane %v3512, 6
        %v3515 = vor.u32 %v3511, %v3514
        %v3516 = vsel %vm2666, %v3507, %v3515
        %v3518 = vshrl.u32 %v3437, 16
        %v3520 = vrot.slane %v3518, 5
        %v3521 = vshll.u32 %v3437, 16
        %v3523 = vrot.slane %v3521, 6
        %v3524 = vor.u32 %v3520, %v3523
        %v3525 = vrot.slane %v3524, 4
        %v3527 = vshrl.u32 %v3438, 16
        %v3529 = vrot.slane %v3527, 5
        %v3530 = vshll.u32 %v3438, 16
        %v3532 = vrot.slane %v3530, 6
        %v3533 = vor.u32 %v3529, %v3532
        %v3534 = vsel %vm2666, %v3525, %v3533
        %v3536 = vshrl.u32 %v3439, 16
        %v3538 = vrot.slane %v3536, 5
        %v3539 = vshll.u32 %v3439, 16
        %v3541 = vrot.slane %v3539, 6
        %v3542 = vor.u32 %v3538, %v3541
        %v3543 = vrot.slane %v3542, 4
        %v3545 = vshrl.u32 %v3440, 16
        %v3547 = vrot.slane %v3545, 5
        %v3548 = vshll.u32 %v3440, 16
        %v3550 = vrot.slane %v3548, 6
        %v3551 = vor.u32 %v3547, %v3550
        %v3552 = vsel %vm2666, %v3543, %v3551
        %v3554 = vshrl.u32 %v3441, 16
        %v3556 = vrot.slane %v3554, 5
        %v3557 = vshll.u32 %v3441, 16
        %v3559 = vrot.slane %v3557, 6
        %v3560 = vor.u32 %v3556, %v3559
        %v3561 = vrot.slane %v3560, 4
        %v3563 = vshrl.u32 %v3442, 16
        %v3565 = vrot.slane %v3563, 5
        %v3566 = vshll.u32 %v3442, 16
        %v3568 = vrot.slane %v3566, 6
        %v3569 = vor.u32 %v3565, %v3568
        %v3570 = vsel %vm2666, %v3561, %v3569
        %v3572 = vshrl.u32 %v3443, 16
        %v3574 = vrot.slane %v3572, 5
        %v3575 = vshll.u32 %v3443, 16
        %v3577 = vrot.slane %v3575, 6
        %v3578 = vor.u32 %v3574, %v3577
        %v3579 = vrot.slane %v3578, 4
        %v3581 = vshrl.u32 %v3444, 16
        %v3583 = vrot.slane %v3581, 5
        %v3584 = vshll.u32 %v3444, 16
        %v3586 = vrot.slane %v3584, 6
        %v3587 = vor.u32 %v3583, %v3586
        %v3588 = vsel %vm2666, %v3579, %v3587
        %3589 = vrot.lane.b32.xlu0 %v3462, 112
        %v3590 = vpop.permute.xlu0 %3589
        %3591 = vrot.lane.b32.xlu0 %v3480, 112
        %v3592 = vpop.permute.xlu0 %3591
        %3593 = vrot.lane.b32.xlu0 %v3498, 112
        %v3594 = vpop.permute.xlu0 %3593
        %3595 = vrot.lane.b32.xlu0 %v3516, 112
        %v3596 = vpop.permute.xlu0 %3595
        %3597 = vrot.lane.b32.xlu0 %v3534, 112
        %v3598 = vpop.permute.xlu0 %3597
        %3599 = vrot.lane.b32.xlu0 %v3552, 112
        %v3600 = vpop.permute.xlu0 %3599
        %3601 = vrot.lane.b32.xlu0 %v3570, 112
        %v3602 = vpop.permute.xlu0 %3601
        %3603 = vrot.lane.b32.xlu0 %v3588, 112
        %v3604 = vpop.permute.xlu0 %3603
        %vm3613 = vcmask 1044352
        %3614 = vst.msk [vmem:[#allocation5] sm:$0xf] %vm3613, %v3590
        %3615 = vst.msk [vmem:[#allocation5 + $0x10] sm:$0xf] %vm3613, %v3592
        %3616 = vst.msk [vmem:[#allocation5 + $0x20] sm:$0xf] %vm3613, %v3594
        %3617 = vst.msk [vmem:[#allocation5 + $0x30] sm:$0xf] %vm3613, %v3596
        %3618 = vst.msk [vmem:[#allocation5 + $0x40] sm:$0xf] %vm3613, %v3598
        %3619 = vst.msk [vmem:[#allocation5 + $0x50] sm:$0xf] %vm3613, %v3600
        %3620 = vst.msk [vmem:[#allocation5 + $0x60] sm:$0xf] %vm3613, %v3602
        %3621 = vst.msk [vmem:[#allocation5 + $0x70] sm:$0xf] %vm3613, %v3604
        %v3622 = vld [vmem:[%s3331] sm:$0xc]
        %v3623 = vld [vmem:[%s3331 + $0x4] sm:$0x3]
        %v3624 = vld [vmem:[%s3331 + $0x8] sm:$0xc]
        %v3625 = vld [vmem:[%s3331 + $0xc] sm:$0x3]
        %v3626 = vld [vmem:[%s3331 + $0x10] sm:$0xc]
        %v3627 = vld [vmem:[%s3331 + $0x14] sm:$0x3]
        %v3628 = vld [vmem:[%s3331 + $0x18] sm:$0xc]
        %v3629 = vld [vmem:[%s3331 + $0x1c] sm:$0x3]
        %v3630 = vld [vmem:[%s3331 + $0x20] sm:$0xc]
        %v3631 = vld [vmem:[%s3331 + $0x24] sm:$0x3]
        %v3632 = vld [vmem:[%s3331 + $0x28] sm:$0xc]
        %v3633 = vld [vmem:[%s3331 + $0x2c] sm:$0x3]
        %v3634 = vld [vmem:[%s3331 + $0x30] sm:$0xc]
        %v3635 = vld [vmem:[%s3331 + $0x34] sm:$0x3]
        %v3636 = vld [vmem:[%s3331 + $0x38] sm:$0xc]
        %v3637 = vld [vmem:[%s3331 + $0x3c] sm:$0x3]
        %v3654 = vrot.slane %v3622, 6
        %v3655 = vrot.slane %v3654, 4
        %v3656 = vrot.slane %v3623, 6
        %v3657 = vsel %vm2878, %v3655, %v3656
        %v3658 = vrot.slane %v3624, 6
        %v3659 = vrot.slane %v3658, 4
        %v3660 = vrot.slane %v3625, 6
        %v3661 = vsel %vm2878, %v3659, %v3660
        %v3662 = vrot.slane %v3626, 6
        %v3663 = vrot.slane %v3662, 4
        %v3664 = vrot.slane %v3627, 6
        %v3665 = vsel %vm2878, %v3663, %v3664
        %v3666 = vrot.slane %v3628, 6
        %v3667 = vrot.slane %v3666, 4
        %v3668 = vrot.slane %v3629, 6
        %v3669 = vsel %vm2878, %v3667, %v3668
        %v3670 = vrot.slane %v3630, 6
        %v3671 = vrot.slane %v3670, 4
        %v3672 = vrot.slane %v3631, 6
        %v3673 = vsel %vm2878, %v3671, %v3672
        %v3674 = vrot.slane %v3632, 6
        %v3675 = vrot.slane %v3674, 4
        %v3676 = vrot.slane %v3633, 6
        %v3677 = vsel %vm2878, %v3675, %v3676
        %v3678 = vrot.slane %v3634, 6
        %v3679 = vrot.slane %v3678, 4
        %v3680 = vrot.slane %v3635, 6
        %v3681 = vsel %vm2878, %v3679, %v3680
        %v3682 = vrot.slane %v3636, 6
        %v3683 = vrot.slane %v3682, 4
        %v3684 = vrot.slane %v3637, 6
        %v3685 = vsel %vm2878, %v3683, %v3684
        %3694 = vst.msk [vmem:[#allocation5 + $0x4] sm:$0xf] %vm2348, %v3657
        %3695 = vst.msk [vmem:[#allocation5 + $0x14] sm:$0xf] %vm2348, %v3661
        %3696 = vst.msk [vmem:[#allocation5 + $0x24] sm:$0xf] %vm2348, %v3665
        %3697 = vst.msk [vmem:[#allocation5 + $0x34] sm:$0xf] %vm2348, %v3669
        %3698 = vst.msk [vmem:[#allocation5 + $0x44] sm:$0xf] %vm2348, %v3673
        %3699 = vst.msk [vmem:[#allocation5 + $0x54] sm:$0xf] %vm2348, %v3677
        %3700 = vst.msk [vmem:[#allocation5 + $0x64] sm:$0xf] %vm2348, %v3681
        %3701 = vst.msk [vmem:[#allocation5 + $0x74] sm:$0xf] %vm2348, %v3685
        %s3702 = scalar_lea.vmem [#allocation2], 8
        %v3703 = vld [vmem:[%s3702] sm:$0xf]
        %v3704 = vld [vmem:[%s3702 + $0x4] sm:$0x1]
        %v3705 = vld [vmem:[%s3702 + $0x8] sm:$0xf]
        %v3706 = vld [vmem:[%s3702 + $0xc] sm:$0x1]
        %v3707 = vld [vmem:[%s3702 + $0x10] sm:$0xf]
        %v3708 = vld [vmem:[%s3702 + $0x14] sm:$0x1]
        %v3709 = vld [vmem:[%s3702 + $0x18] sm:$0xf]
        %v3710 = vld [vmem:[%s3702 + $0x1c] sm:$0x1]
        %v3711 = vld [vmem:[%s3702 + $0x20] sm:$0xf]
        %v3712 = vld [vmem:[%s3702 + $0x24] sm:$0x1]
        %v3713 = vld [vmem:[%s3702 + $0x28] sm:$0xf]
        %v3714 = vld [vmem:[%s3702 + $0x2c] sm:$0x1]
        %v3715 = vld [vmem:[%s3702 + $0x30] sm:$0xf]
        %v3716 = vld [vmem:[%s3702 + $0x34] sm:$0x1]
        %v3717 = vld [vmem:[%s3702 + $0x38] sm:$0xf]
        %v3718 = vld [vmem:[%s3702 + $0x3c] sm:$0x1]
        %vm3719 = vsmask.f32 3328
        %vm3720 = vsmask.f32 7440
        %vm3721 = vmor %vm3719, %vm3720
        %v3723 = vshrl.u32 %v3703, 16
        %v3725 = vrot.slane %v3723, 4
        %v3726 = vshll.u32 %v3703, 16
        %v3728 = vrot.slane %v3726, 5
        %v3729 = vor.u32 %v3725, %v3728
        %v3730 = vrot.slane %v3729, 4
        %v3732 = vshll.u32 %v3704, 16
        %v3734 = vrot.slane %v3732, 5
        %v3735 = vsel %vm3721, %v3730, %v3734
        %v3737 = vshrl.u32 %v3705, 16
        %v3739 = vrot.slane %v3737, 4
        %v3740 = vshll.u32 %v3705, 16
        %v3742 = vrot.slane %v3740, 5
        %v3743 = vor.u32 %v3739, %v3742
        %v3744 = vrot.slane %v3743, 4
        %v3746 = vshll.u32 %v3706, 16
        %v3748 = vrot.slane %v3746, 5
        %v3749 = vsel %vm3721, %v3744, %v3748
        %v3751 = vshrl.u32 %v3707, 16
        %v3753 = vrot.slane %v3751, 4
        %v3754 = vshll.u32 %v3707, 16
        %v3756 = vrot.slane %v3754, 5
        %v3757 = vor.u32 %v3753, %v3756
        %v3758 = vrot.slane %v3757, 4
        %v3760 = vshll.u32 %v3708, 16
        %v3762 = vrot.slane %v3760, 5
        %v3763 = vsel %vm3721, %v3758, %v3762
        %v3765 = vshrl.u32 %v3709, 16
        %v3767 = vrot.slane %v3765, 4
        %v3768 = vshll.u32 %v3709, 16
        %v3770 = vrot.slane %v3768, 5
        %v3771 = vor.u32 %v3767, %v3770
        %v3772 = vrot.slane %v3771, 4
        %v3774 = vshll.u32 %v3710, 16
        %v3776 = vrot.slane %v3774, 5
        %v3777 = vsel %vm3721, %v3772, %v3776
        %v3779 = vshrl.u32 %v3711, 16
        %v3781 = vrot.slane %v3779, 4
        %v3782 = vshll.u32 %v3711, 16
        %v3784 = vrot.slane %v3782, 5
        %v3785 = vor.u32 %v3781, %v3784
        %v3786 = vrot.slane %v3785, 4
        %v3788 = vshll.u32 %v3712, 16
        %v3790 = vrot.slane %v3788, 5
        %v3791 = vsel %vm3721, %v3786, %v3790
        %v3793 = vshrl.u32 %v3713, 16
        %v3795 = vrot.slane %v3793, 4
        %v3796 = vshll.u32 %v3713, 16
        %v3798 = vrot.slane %v3796, 5
        %v3799 = vor.u32 %v3795, %v3798
        %v3800 = vrot.slane %v3799, 4
        %v3802 = vshll.u32 %v3714, 16
        %v3804 = vrot.slane %v3802, 5
        %v3805 = vsel %vm3721, %v3800, %v3804
        %v3807 = vshrl.u32 %v3715, 16
        %v3809 = vrot.slane %v3807, 4
        %v3810 = vshll.u32 %v3715, 16
        %v3812 = vrot.slane %v3810, 5
        %v3813 = vor.u32 %v3809, %v3812
        %v3814 = vrot.slane %v3813, 4
        %v3816 = vshll.u32 %v3716, 16
        %v3818 = vrot.slane %v3816, 5
        %v3819 = vsel %vm3721, %v3814, %v3818
        %v3821 = vshrl.u32 %v3717, 16
        %v3823 = vrot.slane %v3821, 4
        %v3824 = vshll.u32 %v3717, 16
        %v3826 = vrot.slane %v3824, 5
        %v3827 = vor.u32 %v3823, %v3826
        %v3828 = vrot.slane %v3827, 4
        %v3830 = vshll.u32 %v3718, 16
        %v3832 = vrot.slane %v3830, 5
        %v3833 = vsel %vm3721, %v3828, %v3832
        %3834 = vrot.lane.b32.xlu0 %v3735, 16
        %v3835 = vpop.permute.xlu0 %3834
        %3836 = vrot.lane.b32.xlu0 %v3749, 16
        %v3837 = vpop.permute.xlu0 %3836
        %3838 = vrot.lane.b32.xlu0 %v3763, 16
        %v3839 = vpop.permute.xlu0 %3838
        %3840 = vrot.lane.b32.xlu0 %v3777, 16
        %v3841 = vpop.permute.xlu0 %3840
        %3842 = vrot.lane.b32.xlu0 %v3791, 16
        %v3843 = vpop.permute.xlu0 %3842
        %3844 = vrot.lane.b32.xlu0 %v3805, 16
        %v3845 = vpop.permute.xlu0 %3844
        %3846 = vrot.lane.b32.xlu0 %v3819, 16
        %v3847 = vpop.permute.xlu0 %3846
        %3848 = vrot.lane.b32.xlu0 %v3833, 16
        %v3849 = vpop.permute.xlu0 %3848
        %3858 = vst.msk [vmem:[#allocation5 + $0x4] sm:$0xf] %vm2835, %v3835
        %3859 = vst.msk [vmem:[#allocation5 + $0x14] sm:$0xf] %vm2835, %v3837
        %3860 = vst.msk [vmem:[#allocation5 + $0x24] sm:$0xf] %vm2835, %v3839
        %3861 = vst.msk [vmem:[#allocation5 + $0x34] sm:$0xf] %vm2835, %v3841
        %3862 = vst.msk [vmem:[#allocation5 + $0x44] sm:$0xf] %vm2835, %v3843
        %3863 = vst.msk [vmem:[#allocation5 + $0x54] sm:$0xf] %vm2835, %v3845
        %3864 = vst.msk [vmem:[#allocation5 + $0x64] sm:$0xf] %vm2835, %v3847
        %3865 = vst.msk [vmem:[#allocation5 + $0x74] sm:$0xf] %vm2835, %v3849
        %v3866 = vld [vmem:[%s3702] sm:$0xe]
        %v3867 = vld [vmem:[%s3702 + $0x4] sm:$0x3]
        %v3868 = vld [vmem:[%s3702 + $0x8] sm:$0xe]
        %v3869 = vld [vmem:[%s3702 + $0xc] sm:$0x3]
        %v3870 = vld [vmem:[%s3702 + $0x10] sm:$0xe]
        %v3871 = vld [vmem:[%s3702 + $0x14] sm:$0x3]
        %v3872 = vld [vmem:[%s3702 + $0x18] sm:$0xe]
        %v3873 = vld [vmem:[%s3702 + $0x1c] sm:$0x3]
        %v3874 = vld [vmem:[%s3702 + $0x20] sm:$0xe]
        %v3875 = vld [vmem:[%s3702 + $0x24] sm:$0x3]
        %v3876 = vld [vmem:[%s3702 + $0x28] sm:$0xe]
        %v3877 = vld [vmem:[%s3702 + $0x2c] sm:$0x3]
        %v3878 = vld [vmem:[%s3702 + $0x30] sm:$0xe]
        %v3879 = vld [vmem:[%s3702 + $0x34] sm:$0x3]
        %v3880 = vld [vmem:[%s3702 + $0x38] sm:$0xe]
        %v3881 = vld [vmem:[%s3702 + $0x3c] sm:$0x3]
        %v3883 = vshrl.u32 %v3866, 16
        %v3885 = vrot.slane %v3883, 5
        %v3886 = vshll.u32 %v3866, 16
        %v3888 = vrot.slane %v3886, 6
        %v3889 = vor.u32 %v3885, %v3888
        %v3890 = vrot.slane %v3889, 4
        %v3892 = vshrl.u32 %v3867, 16
        %v3894 = vrot.slane %v3892, 5
        %v3895 = vshll.u32 %v3867, 16
        %v3897 = vrot.slane %v3895, 6
        %v3898 = vor.u32 %v3894, %v3897
        %v3899 = vsel %vm2666, %v3890, %v3898
        %v3901 = vshrl.u32 %v3868, 16
        %v3903 = vrot.slane %v3901, 5
        %v3904 = vshll.u32 %v3868, 16
        %v3906 = vrot.slane %v3904, 6
        %v3907 = vor.u32 %v3903, %v3906
        %v3908 = vrot.slane %v3907, 4
        %v3910 = vshrl.u32 %v3869, 16
        %v3912 = vrot.slane %v3910, 5
        %v3913 = vshll.u32 %v3869, 16
        %v3915 = vrot.slane %v3913, 6
        %v3916 = vor.u32 %v3912, %v3915
        %v3917 = vsel %vm2666, %v3908, %v3916
        %v3919 = vshrl.u32 %v3870, 16
        %v3921 = vrot.slane %v3919, 5
        %v3922 = vshll.u32 %v3870, 16
        %v3924 = vrot.slane %v3922, 6
        %v3925 = vor.u32 %v3921, %v3924
        %v3926 = vrot.slane %v3925, 4
        %v3928 = vshrl.u32 %v3871, 16
        %v3930 = vrot.slane %v3928, 5
        %v3931 = vshll.u32 %v3871, 16
        %v3933 = vrot.slane %v3931, 6
        %v3934 = vor.u32 %v3930, %v3933
        %v3935 = vsel %vm2666, %v3926, %v3934
        %v3937 = vshrl.u32 %v3872, 16
        %v3939 = vrot.slane %v3937, 5
        %v3940 = vshll.u32 %v3872, 16
        %v3942 = vrot.slane %v3940, 6
        %v3943 = vor.u32 %v3939, %v3942
        %v3944 = vrot.slane %v3943, 4
        %v3946 = vshrl.u32 %v3873, 16
        %v3948 = vrot.slane %v3946, 5
        %v3949 = vshll.u32 %v3873, 16
        %v3951 = vrot.slane %v3949, 6
        %v3952 = vor.u32 %v3948, %v3951
        %v3953 = vsel %vm2666, %v3944, %v3952
        %v3955 = vshrl.u32 %v3874, 16
        %v3957 = vrot.slane %v3955, 5
        %v3958 = vshll.u32 %v3874, 16
        %v3960 = vrot.slane %v3958, 6
        %v3961 = vor.u32 %v3957, %v3960
        %v3962 = vrot.slane %v3961, 4
        %v3964 = vshrl.u32 %v3875, 16
        %v3966 = vrot.slane %v3964, 5
        %v3967 = vshll.u32 %v3875, 16
        %v3969 = vrot.slane %v3967, 6
        %v3970 = vor.u32 %v3966, %v3969
        %v3971 = vsel %vm2666, %v3962, %v3970
        %v3973 = vshrl.u32 %v3876, 16
        %v3975 = vrot.slane %v3973, 5
        %v3976 = vshll.u32 %v3876, 16
        %v3978 = vrot.slane %v3976, 6
        %v3979 = vor.u32 %v3975, %v3978
        %v3980 = vrot.slane %v3979, 4
        %v3982 = vshrl.u32 %v3877, 16
        %v3984 = vrot.slane %v3982, 5
        %v3985 = vshll.u32 %v3877, 16
        %v3987 = vrot.slane %v3985, 6
        %v3988 = vor.u32 %v3984, %v3987
        %v3989 = vsel %vm2666, %v3980, %v3988
        %v3991 = vshrl.u32 %v3878, 16
        %v3993 = vrot.slane %v3991, 5
        %v3994 = vshll.u32 %v3878, 16
        %v3996 = vrot.slane %v3994, 6
        %v3997 = vor.u32 %v3993, %v3996
        %v3998 = vrot.slane %v3997, 4
        %v4000 = vshrl.u32 %v3879, 16
        %v4002 = vrot.slane %v4000, 5
        %v4003 = vshll.u32 %v3879, 16
        %v4005 = vrot.slane %v4003, 6
        %v4006 = vor.u32 %v4002, %v4005
        %v4007 = vsel %vm2666, %v3998, %v4006
        %v4009 = vshrl.u32 %v3880, 16
        %v4011 = vrot.slane %v4009, 5
        %v4012 = vshll.u32 %v3880, 16
        %v4014 = vrot.slane %v4012, 6
        %v4015 = vor.u32 %v4011, %v4014
        %v4016 = vrot.slane %v4015, 4
        %v4018 = vshrl.u32 %v3881, 16
        %v4020 = vrot.slane %v4018, 5
        %v4021 = vshll.u32 %v3881, 16
        %v4023 = vrot.slane %v4021, 6
        %v4024 = vor.u32 %v4020, %v4023
        %v4025 = vsel %vm2666, %v4016, %v4024
        %4026 = vrot.lane.b32.xlu0 %v3899, 32
        %v4027 = vpop.permute.xlu0 %4026
        %4028 = vrot.lane.b32.xlu0 %v3917, 32
        %v4029 = vpop.permute.xlu0 %4028
        %4030 = vrot.lane.b32.xlu0 %v3935, 32
        %v4031 = vpop.permute.xlu0 %4030
        %4032 = vrot.lane.b32.xlu0 %v3953, 32
        %v4033 = vpop.permute.xlu0 %4032
        %4034 = vrot.lane.b32.xlu0 %v3971, 32
        %v4035 = vpop.permute.xlu0 %4034
        %4036 = vrot.lane.b32.xlu0 %v3989, 32
        %v4037 = vpop.permute.xlu0 %4036
        %4038 = vrot.lane.b32.xlu0 %v4007, 32
        %v4039 = vpop.permute.xlu0 %4038
        %4040 = vrot.lane.b32.xlu0 %v4025, 32
        %v4041 = vpop.permute.xlu0 %4040
        %4050 = vst.msk [vmem:[#allocation5 + $0x4] sm:$0xf] %vm2935, %v4027
        %4051 = vst.msk [vmem:[#allocation5 + $0x14] sm:$0xf] %vm2935, %v4029
        %4052 = vst.msk [vmem:[#allocation5 + $0x24] sm:$0xf] %vm2935, %v4031
        %4053 = vst.msk [vmem:[#allocation5 + $0x34] sm:$0xf] %vm2935, %v4033
        %4054 = vst.msk [vmem:[#allocation5 + $0x44] sm:$0xf] %vm2935, %v4035
        %4055 = vst.msk [vmem:[#allocation5 + $0x54] sm:$0xf] %vm2935, %v4037
        %4056 = vst.msk [vmem:[#allocation5 + $0x64] sm:$0xf] %vm2935, %v4039
        %4057 = vst.msk [vmem:[#allocation5 + $0x74] sm:$0xf] %vm2935, %v4041
        %v4058 = vld [vmem:[%s3702] sm:$0xc]
        %v4059 = vld [vmem:[%s3702 + $0x4] sm:$0x7]
        %v4060 = vld [vmem:[%s3702 + $0x8] sm:$0xc]
        %v4061 = vld [vmem:[%s3702 + $0xc] sm:$0x7]
        %v4062 = vld [vmem:[%s3702 + $0x10] sm:$0xc]
        %v4063 = vld [vmem:[%s3702 + $0x14] sm:$0x7]
        %v4064 = vld [vmem:[%s3702 + $0x18] sm:$0xc]
        %v4065 = vld [vmem:[%s3702 + $0x1c] sm:$0x7]
        %v4066 = vld [vmem:[%s3702 + $0x20] sm:$0xc]
        %v4067 = vld [vmem:[%s3702 + $0x24] sm:$0x7]
        %v4068 = vld [vmem:[%s3702 + $0x28] sm:$0xc]
        %v4069 = vld [vmem:[%s3702 + $0x2c] sm:$0x7]
        %v4070 = vld [vmem:[%s3702 + $0x30] sm:$0xc]
        %v4071 = vld [vmem:[%s3702 + $0x34] sm:$0x7]
        %v4072 = vld [vmem:[%s3702 + $0x38] sm:$0xc]
        %v4073 = vld [vmem:[%s3702 + $0x3c] sm:$0x7]
        %vm4074 = vsmask.f32 5392
        %vm4075 = vmor %vm2365, %vm4074
        %v4077 = vshrl.u32 %v4058, 16
        %v4079 = vrot.slane %v4077, 6
        %v4080 = vshll.u32 %v4058, 16
        %v4082 = vrot.slane %v4080, 7
        %v4083 = vor.u32 %v4079, %v4082
        %v4084 = vrot.slane %v4083, 4
        %v4086 = vshrl.u32 %v4059, 16
        %v4088 = vrot.slane %v4086, 6
        %v4089 = vshll.u32 %v4059, 16
        %v4091 = vrot.slane %v4089, 7
        %v4092 = vor.u32 %v4088, %v4091
        %v4093 = vsel %vm4075, %v4084, %v4092
        %v4095 = vshrl.u32 %v4060, 16
        %v4097 = vrot.slane %v4095, 6
        %v4098 = vshll.u32 %v4060, 16
        %v4100 = vrot.slane %v4098, 7
        %v4101 = vor.u32 %v4097, %v4100
        %v4102 = vrot.slane %v4101, 4
        %v4104 = vshrl.u32 %v4061, 16
        %v4106 = vrot.slane %v4104, 6
        %v4107 = vshll.u32 %v4061, 16
        %v4109 = vrot.slane %v4107, 7
        %v4110 = vor.u32 %v4106, %v4109
        %v4111 = vsel %vm4075, %v4102, %v4110
        %v4113 = vshrl.u32 %v4062, 16
        %v4115 = vrot.slane %v4113, 6
        %v4116 = vshll.u32 %v4062, 16
        %v4118 = vrot.slane %v4116, 7
        %v4119 = vor.u32 %v4115, %v4118
        %v4120 = vrot.slane %v4119, 4
        %v4122 = vshrl.u32 %v4063, 16
        %v4124 = vrot.slane %v4122, 6
        %v4125 = vshll.u32 %v4063, 16
        %v4127 = vrot.slane %v4125, 7
        %v4128 = vor.u32 %v4124, %v4127
        %v4129 = vsel %vm4075, %v4120, %v4128
        %v4131 = vshrl.u32 %v4064, 16
        %v4133 = vrot.slane %v4131, 6
        %v4134 = vshll.u32 %v4064, 16
        %v4136 = vrot.slane %v4134, 7
        %v4137 = vor.u32 %v4133, %v4136
        %v4138 = vrot.slane %v4137, 4
        %v4140 = vshrl.u32 %v4065, 16
        %v4142 = vrot.slane %v4140, 6
        %v4143 = vshll.u32 %v4065, 16
        %v4145 = vrot.slane %v4143, 7
        %v4146 = vor.u32 %v4142, %v4145
        %v4147 = vsel %vm4075, %v4138, %v4146
        %v4149 = vshrl.u32 %v4066, 16
        %v4151 = vrot.slane %v4149, 6
        %v4152 = vshll.u32 %v4066, 16
        %v4154 = vrot.slane %v4152, 7
        %v4155 = vor.u32 %v4151, %v4154
        %v4156 = vrot.slane %v4155, 4
        %v4158 = vshrl.u32 %v4067, 16
        %v4160 = vrot.slane %v4158, 6
        %v4161 = vshll.u32 %v4067, 16
        %v4163 = vrot.slane %v4161, 7
        %v4164 = vor.u32 %v4160, %v4163
        %v4165 = vsel %vm4075, %v4156, %v4164
        %v4167 = vshrl.u32 %v4068, 16
        %v4169 = vrot.slane %v4167, 6
        %v4170 = vshll.u32 %v4068, 16
        %v4172 = vrot.slane %v4170, 7
        %v4173 = vor.u32 %v4169, %v4172
        %v4174 = vrot.slane %v4173, 4
        %v4176 = vshrl.u32 %v4069, 16
        %v4178 = vrot.slane %v4176, 6
        %v4179 = vshll.u32 %v4069, 16
        %v4181 = vrot.slane %v4179, 7
        %v4182 = vor.u32 %v4178, %v4181
        %v4183 = vsel %vm4075, %v4174, %v4182
        %v4185 = vshrl.u32 %v4070, 16
        %v4187 = vrot.slane %v4185, 6
        %v4188 = vshll.u32 %v4070, 16
        %v4190 = vrot.slane %v4188, 7
        %v4191 = vor.u32 %v4187, %v4190
        %v4192 = vrot.slane %v4191, 4
        %v4194 = vshrl.u32 %v4071, 16
        %v4196 = vrot.slane %v4194, 6
        %v4197 = vshll.u32 %v4071, 16
        %v4199 = vrot.slane %v4197, 7
        %v4200 = vor.u32 %v4196, %v4199
        %v4201 = vsel %vm4075, %v4192, %v4200
        %v4203 = vshrl.u32 %v4072, 16
        %v4205 = vrot.slane %v4203, 6
        %v4206 = vshll.u32 %v4072, 16
        %v4208 = vrot.slane %v4206, 7
        %v4209 = vor.u32 %v4205, %v4208
        %v4210 = vrot.slane %v4209, 4
        %v4212 = vshrl.u32 %v4073, 16
        %v4214 = vrot.slane %v4212, 6
        %v4215 = vshll.u32 %v4073, 16
        %v4217 = vrot.slane %v4215, 7
        %v4218 = vor.u32 %v4214, %v4217
        %v4219 = vsel %vm4075, %v4210, %v4218
        %4220 = vrot.lane.b32.xlu0 %v4093, 48
        %v4221 = vpop.permute.xlu0 %4220
        %4222 = vrot.lane.b32.xlu0 %v4111, 48
        %v4223 = vpop.permute.xlu0 %4222
        %4224 = vrot.lane.b32.xlu0 %v4129, 48
        %v4225 = vpop.permute.xlu0 %4224
        %4226 = vrot.lane.b32.xlu0 %v4147, 48
        %v4227 = vpop.permute.xlu0 %4226
        %4228 = vrot.lane.b32.xlu0 %v4165, 48
        %v4229 = vpop.permute.xlu0 %4228
        %4230 = vrot.lane.b32.xlu0 %v4183, 48
        %v4231 = vpop.permute.xlu0 %4230
        %4232 = vrot.lane.b32.xlu0 %v4201, 48
        %v4233 = vpop.permute.xlu0 %4232
        %4234 = vrot.lane.b32.xlu0 %v4219, 48
        %v4235 = vpop.permute.xlu0 %4234
        %4244 = vst.msk [vmem:[#allocation5 + $0x4] sm:$0xf] %vm3032, %v4221
        %4245 = vst.msk [vmem:[#allocation5 + $0x14] sm:$0xf] %vm3032, %v4223
        %4246 = vst.msk [vmem:[#allocation5 + $0x24] sm:$0xf] %vm3032, %v4225
        %4247 = vst.msk [vmem:[#allocation5 + $0x34] sm:$0xf] %vm3032, %v4227
        %4248 = vst.msk [vmem:[#allocation5 + $0x44] sm:$0xf] %vm3032, %v4229
        %4249 = vst.msk [vmem:[#allocation5 + $0x54] sm:$0xf] %vm3032, %v4231
        %4250 = vst.msk [vmem:[#allocation5 + $0x64] sm:$0xf] %vm3032, %v4233
        %4251 = vst.msk [vmem:[#allocation5 + $0x74] sm:$0xf] %vm3032, %v4235
        %v4252 = vld [vmem:[%s2363] sm:$0xf]
        %v4253 = vld [vmem:[%s2363 + $0x4] sm:$0x1]
        %v4254 = vld [vmem:[%s2363 + $0x8] sm:$0xf]
        %v4255 = vld [vmem:[%s2363 + $0xc] sm:$0x1]
        %v4256 = vld [vmem:[%s2363 + $0x10] sm:$0xf]
        %v4257 = vld [vmem:[%s2363 + $0x14] sm:$0x1]
        %v4258 = vld [vmem:[%s2363 + $0x18] sm:$0xf]
        %v4259 = vld [vmem:[%s2363 + $0x1c] sm:$0x1]
        %v4260 = vld [vmem:[%s2363 + $0x20] sm:$0xf]
        %v4261 = vld [vmem:[%s2363 + $0x24] sm:$0x1]
        %v4262 = vld [vmem:[%s2363 + $0x28] sm:$0xf]
        %v4263 = vld [vmem:[%s2363 + $0x2c] sm:$0x1]
        %v4264 = vld [vmem:[%s2363 + $0x30] sm:$0xf]
        %v4265 = vld [vmem:[%s2363 + $0x34] sm:$0x1]
        %v4266 = vld [vmem:[%s2363 + $0x38] sm:$0xf]
        %v4267 = vld [vmem:[%s2363 + $0x3c] sm:$0x1]
        %v4269 = vshrl.u32 %v4252, 16
        %v4271 = vrot.slane %v4269, 4
        %v4272 = vshll.u32 %v4252, 16
        %v4274 = vrot.slane %v4272, 5
        %v4275 = vor.u32 %v4271, %v4274
        %v4276 = vrot.slane %v4275, 4
        %v4278 = vshll.u32 %v4253, 16
        %v4280 = vrot.slane %v4278, 5
        %v4281 = vsel %vm3721, %v4276, %v4280
        %v4283 = vshrl.u32 %v4254, 16
        %v4285 = vrot.slane %v4283, 4
        %v4286 = vshll.u32 %v4254, 16
        %v4288 = vrot.slane %v4286, 5
        %v4289 = vor.u32 %v4285, %v4288
        %v4290 = vrot.slane %v4289, 4
        %v4292 = vshll.u32 %v4255, 16
        %v4294 = vrot.slane %v4292, 5
        %v4295 = vsel %vm3721, %v4290, %v4294
        %v4297 = vshrl.u32 %v4256, 16
        %v4299 = vrot.slane %v4297, 4
        %v4300 = vshll.u32 %v4256, 16
        %v4302 = vrot.slane %v4300, 5
        %v4303 = vor.u32 %v4299, %v4302
        %v4304 = vrot.slane %v4303, 4
        %v4306 = vshll.u32 %v4257, 16
        %v4308 = vrot.slane %v4306, 5
        %v4309 = vsel %vm3721, %v4304, %v4308
        %v4311 = vshrl.u32 %v4258, 16
        %v4313 = vrot.slane %v4311, 4
        %v4314 = vshll.u32 %v4258, 16
        %v4316 = vrot.slane %v4314, 5
        %v4317 = vor.u32 %v4313, %v4316
        %v4318 = vrot.slane %v4317, 4
        %v4320 = vshll.u32 %v4259, 16
        %v4322 = vrot.slane %v4320, 5
        %v4323 = vsel %vm3721, %v4318, %v4322
        %v4325 = vshrl.u32 %v4260, 16
        %v4327 = vrot.slane %v4325, 4
        %v4328 = vshll.u32 %v4260, 16
        %v4330 = vrot.slane %v4328, 5
        %v4331 = vor.u32 %v4327, %v4330
        %v4332 = vrot.slane %v4331, 4
        %v4334 = vshll.u32 %v4261, 16
        %v4336 = vrot.slane %v4334, 5
        %v4337 = vsel %vm3721, %v4332, %v4336
        %v4339 = vshrl.u32 %v4262, 16
        %v4341 = vrot.slane %v4339, 4
        %v4342 = vshll.u32 %v4262, 16
        %v4344 = vrot.slane %v4342, 5
        %v4345 = vor.u32 %v4341, %v4344
        %v4346 = vrot.slane %v4345, 4
        %v4348 = vshll.u32 %v4263, 16
        %v4350 = vrot.slane %v4348, 5
        %v4351 = vsel %vm3721, %v4346, %v4350
        %v4353 = vshrl.u32 %v4264, 16
        %v4355 = vrot.slane %v4353, 4
        %v4356 = vshll.u32 %v4264, 16
        %v4358 = vrot.slane %v4356, 5
        %v4359 = vor.u32 %v4355, %v4358
        %v4360 = vrot.slane %v4359, 4
        %v4362 = vshll.u32 %v4265, 16
        %v4364 = vrot.slane %v4362, 5
        %v4365 = vsel %vm3721, %v4360, %v4364
        %v4367 = vshrl.u32 %v4266, 16
        %v4369 = vrot.slane %v4367, 4
        %v4370 = vshll.u32 %v4266, 16
        %v4372 = vrot.slane %v4370, 5
        %v4373 = vor.u32 %v4369, %v4372
        %v4374 = vrot.slane %v4373, 4
        %v4376 = vshll.u32 %v4267, 16
        %v4378 = vrot.slane %v4376, 5
        %v4379 = vsel %vm3721, %v4374, %v4378
        %4380 = vrot.lane.b32.xlu0 %v4281, 64
        %v4381 = vpop.permute.xlu0 %4380
        %4382 = vrot.lane.b32.xlu0 %v4295, 64
        %v4383 = vpop.permute.xlu0 %4382
        %4384 = vrot.lane.b32.xlu0 %v4309, 64
        %v4385 = vpop.permute.xlu0 %4384
        %4386 = vrot.lane.b32.xlu0 %v4323, 64
        %v4387 = vpop.permute.xlu0 %4386
        %4388 = vrot.lane.b32.xlu0 %v4337, 64
        %v4389 = vpop.permute.xlu0 %4388
        %4390 = vrot.lane.b32.xlu0 %v4351, 64
        %v4391 = vpop.permute.xlu0 %4390
        %4392 = vrot.lane.b32.xlu0 %v4365, 64
        %v4393 = vpop.permute.xlu0 %4392
        %4394 = vrot.lane.b32.xlu0 %v4379, 64
        %v4395 = vpop.permute.xlu0 %4394
        %4404 = vst.msk [vmem:[#allocation5 + $0x4] sm:$0xf] %vm3225, %v4381
        %4405 = vst.msk [vmem:[#allocation5 + $0x14] sm:$0xf] %vm3225, %v4383
        %4406 = vst.msk [vmem:[#allocation5 + $0x24] sm:$0xf] %vm3225, %v4385
        %4407 = vst.msk [vmem:[#allocation5 + $0x34] sm:$0xf] %vm3225, %v4387
        %4408 = vst.msk [vmem:[#allocation5 + $0x44] sm:$0xf] %vm3225, %v4389
        %4409 = vst.msk [vmem:[#allocation5 + $0x54] sm:$0xf] %vm3225, %v4391
        %4410 = vst.msk [vmem:[#allocation5 + $0x64] sm:$0xf] %vm3225, %v4393
        %4411 = vst.msk [vmem:[#allocation5 + $0x74] sm:$0xf] %vm3225, %v4395
        %v4412 = vld [vmem:[%s2363] sm:$0xe]
        %v4413 = vld [vmem:[%s2363 + $0x4] sm:$0x3]
        %v4414 = vld [vmem:[%s2363 + $0x8] sm:$0xe]
        %v4415 = vld [vmem:[%s2363 + $0xc] sm:$0x3]
        %v4416 = vld [vmem:[%s2363 + $0x10] sm:$0xe]
        %v4417 = vld [vmem:[%s2363 + $0x14] sm:$0x3]
        %v4418 = vld [vmem:[%s2363 + $0x18] sm:$0xe]
        %v4419 = vld [vmem:[%s2363 + $0x1c] sm:$0x3]
        %v4420 = vld [vmem:[%s2363 + $0x20] sm:$0xe]
        %v4421 = vld [vmem:[%s2363 + $0x24] sm:$0x3]
        %v4422 = vld [vmem:[%s2363 + $0x28] sm:$0xe]
        %v4423 = vld [vmem:[%s2363 + $0x2c] sm:$0x3]
        %v4424 = vld [vmem:[%s2363 + $0x30] sm:$0xe]
        %v4425 = vld [vmem:[%s2363 + $0x34] sm:$0x3]
        %v4426 = vld [vmem:[%s2363 + $0x38] sm:$0xe]
        %v4427 = vld [vmem:[%s2363 + $0x3c] sm:$0x3]
        %v4429 = vshrl.u32 %v4412, 16
        %v4431 = vrot.slane %v4429, 5
        %v4432 = vshll.u32 %v4412, 16
        %v4434 = vrot.slane %v4432, 6
        %v4435 = vor.u32 %v4431, %v4434
        %v4436 = vrot.slane %v4435, 4
        %v4438 = vshrl.u32 %v4413, 16
        %v4440 = vrot.slane %v4438, 5
        %v4441 = vshll.u32 %v4413, 16
        %v4443 = vrot.slane %v4441, 6
        %v4444 = vor.u32 %v4440, %v4443
        %v4445 = vsel %vm2666, %v4436, %v4444
        %v4447 = vshrl.u32 %v4414, 16
        %v4449 = vrot.slane %v4447, 5
        %v4450 = vshll.u32 %v4414, 16
        %v4452 = vrot.slane %v4450, 6
        %v4453 = vor.u32 %v4449, %v4452
        %v4454 = vrot.slane %v4453, 4
        %v4456 = vshrl.u32 %v4415, 16
        %v4458 = vrot.slane %v4456, 5
        %v4459 = vshll.u32 %v4415, 16
        %v4461 = vrot.slane %v4459, 6
        %v4462 = vor.u32 %v4458, %v4461
        %v4463 = vsel %vm2666, %v4454, %v4462
        %v4465 = vshrl.u32 %v4416, 16
        %v4467 = vrot.slane %v4465, 5
        %v4468 = vshll.u32 %v4416, 16
        %v4470 = vrot.slane %v4468, 6
        %v4471 = vor.u32 %v4467, %v4470
        %v4472 = vrot.slane %v4471, 4
        %v4474 = vshrl.u32 %v4417, 16
        %v4476 = vrot.slane %v4474, 5
        %v4477 = vshll.u32 %v4417, 16
        %v4479 = vrot.slane %v4477, 6
        %v4480 = vor.u32 %v4476, %v4479
        %v4481 = vsel %vm2666, %v4472, %v4480
        %v4483 = vshrl.u32 %v4418, 16
        %v4485 = vrot.slane %v4483, 5
        %v4486 = vshll.u32 %v4418, 16
        %v4488 = vrot.slane %v4486, 6
        %v4489 = vor.u32 %v4485, %v4488
        %v4490 = vrot.slane %v4489, 4
        %v4492 = vshrl.u32 %v4419, 16
        %v4494 = vrot.slane %v4492, 5
        %v4495 = vshll.u32 %v4419, 16
        %v4497 = vrot.slane %v4495, 6
        %v4498 = vor.u32 %v4494, %v4497
        %v4499 = vsel %vm2666, %v4490, %v4498
        %v4501 = vshrl.u32 %v4420, 16
        %v4503 = vrot.slane %v4501, 5
        %v4504 = vshll.u32 %v4420, 16
        %v4506 = vrot.slane %v4504, 6
        %v4507 = vor.u32 %v4503, %v4506
        %v4508 = vrot.slane %v4507, 4
        %v4510 = vshrl.u32 %v4421, 16
        %v4512 = vrot.slane %v4510, 5
        %v4513 = vshll.u32 %v4421, 16
        %v4515 = vrot.slane %v4513, 6
        %v4516 = vor.u32 %v4512, %v4515
        %v4517 = vsel %vm2666, %v4508, %v4516
        %v4519 = vshrl.u32 %v4422, 16
        %v4521 = vrot.slane %v4519, 5
        %v4522 = vshll.u32 %v4422, 16
        %v4524 = vrot.slane %v4522, 6
        %v4525 = vor.u32 %v4521, %v4524
        %v4526 = vrot.slane %v4525, 4
        %v4528 = vshrl.u32 %v4423, 16
        %v4530 = vrot.slane %v4528, 5
        %v4531 = vshll.u32 %v4423, 16
        %v4533 = vrot.slane %v4531, 6
        %v4534 = vor.u32 %v4530, %v4533
        %v4535 = vsel %vm2666, %v4526, %v4534
        %v4537 = vshrl.u32 %v4424, 16
        %v4539 = vrot.slane %v4537, 5
        %v4540 = vshll.u32 %v4424, 16
        %v4542 = vrot.slane %v4540, 6
        %v4543 = vor.u32 %v4539, %v4542
        %v4544 = vrot.slane %v4543, 4
        %v4546 = vshrl.u32 %v4425, 16
        %v4548 = vrot.slane %v4546, 5
        %v4549 = vshll.u32 %v4425, 16
        %v4551 = vrot.slane %v4549, 6
        %v4552 = vor.u32 %v4548, %v4551
        %v4553 = vsel %vm2666, %v4544, %v4552
        %v4555 = vshrl.u32 %v4426, 16
        %v4557 = vrot.slane %v4555, 5
        %v4558 = vshll.u32 %v4426, 16
        %v4560 = vrot.slane %v4558, 6
        %v4561 = vor.u32 %v4557, %v4560
        %v4562 = vrot.slane %v4561, 4
        %v4564 = vshrl.u32 %v4427, 16
        %v4566 = vrot.slane %v4564, 5
        %v4567 = vshll.u32 %v4427, 16
        %v4569 = vrot.slane %v4567, 6
        %v4570 = vor.u32 %v4566, %v4569
        %v4571 = vsel %vm2666, %v4562, %v4570
        %4572 = vrot.lane.b32.xlu0 %v4445, 80
        %v4573 = vpop.permute.xlu0 %4572
        %4574 = vrot.lane.b32.xlu0 %v4463, 80
        %v4575 = vpop.permute.xlu0 %4574
        %4576 = vrot.lane.b32.xlu0 %v4481, 80
        %v4577 = vpop.permute.xlu0 %4576
        %4578 = vrot.lane.b32.xlu0 %v4499, 80
        %v4579 = vpop.permute.xlu0 %4578
        %4580 = vrot.lane.b32.xlu0 %v4517, 80
        %v4581 = vpop.permute.xlu0 %4580
        %4582 = vrot.lane.b32.xlu0 %v4535, 80
        %v4583 = vpop.permute.xlu0 %4582
        %4584 = vrot.lane.b32.xlu0 %v4553, 80
        %v4585 = vpop.permute.xlu0 %4584
        %4586 = vrot.lane.b32.xlu0 %v4571, 80
        %v4587 = vpop.permute.xlu0 %4586
        %4596 = vst.msk [vmem:[#allocation5 + $0x4] sm:$0xf] %vm3322, %v4573
        %4597 = vst.msk [vmem:[#allocation5 + $0x14] sm:$0xf] %vm3322, %v4575
        %4598 = vst.msk [vmem:[#allocation5 + $0x24] sm:$0xf] %vm3322, %v4577
        %4599 = vst.msk [vmem:[#allocation5 + $0x34] sm:$0xf] %vm3322, %v4579
        %4600 = vst.msk [vmem:[#allocation5 + $0x44] sm:$0xf] %vm3322, %v4581
        %4601 = vst.msk [vmem:[#allocation5 + $0x54] sm:$0xf] %vm3322, %v4583
        %4602 = vst.msk [vmem:[#allocation5 + $0x64] sm:$0xf] %vm3322, %v4585
        %4603 = vst.msk [vmem:[#allocation5 + $0x74] sm:$0xf] %vm3322, %v4587
        %v4604 = vld [vmem:[%s2363] sm:$0xc]
        %v4605 = vld [vmem:[%s2363 + $0x4] sm:$0x7]
        %v4606 = vld [vmem:[%s2363 + $0x8] sm:$0xc]
        %v4607 = vld [vmem:[%s2363 + $0xc] sm:$0x7]
        %v4608 = vld [vmem:[%s2363 + $0x10] sm:$0xc]
        %v4609 = vld [vmem:[%s2363 + $0x14] sm:$0x7]
        %v4610 = vld [vmem:[%s2363 + $0x18] sm:$0xc]
        %v4611 = vld [vmem:[%s2363 + $0x1c] sm:$0x7]
        %v4612 = vld [vmem:[%s2363 + $0x20] sm:$0xc]
        %v4613 = vld [vmem:[%s2363 + $0x24] sm:$0x7]
        %v4614 = vld [vmem:[%s2363 + $0x28] sm:$0xc]
        %v4615 = vld [vmem:[%s2363 + $0x2c] sm:$0x7]
        %v4616 = vld [vmem:[%s2363 + $0x30] sm:$0xc]
        %v4617 = vld [vmem:[%s2363 + $0x34] sm:$0x7]
        %v4618 = vld [vmem:[%s2363 + $0x38] sm:$0xc]
        %v4619 = vld [vmem:[%s2363 + $0x3c] sm:$0x7]
        %v4621 = vshrl.u32 %v4604, 16
        %v4623 = vrot.slane %v4621, 6
        %v4624 = vshll.u32 %v4604, 16
        %v4626 = vrot.slane %v4624, 7
        %v4627 = vor.u32 %v4623, %v4626
        %v4628 = vrot.slane %v4627, 4
        %v4630 = vshrl.u32 %v4605, 16
        %v4632 = vrot.slane %v4630, 6
        %v4633 = vshll.u32 %v4605, 16
        %v4635 = vrot.slane %v4633, 7
        %v4636 = vor.u32 %v4632, %v4635
        %v4637 = vsel %vm4075, %v4628, %v4636
        %v4639 = vshrl.u32 %v4606, 16
        %v4641 = vrot.slane %v4639, 6
        %v4642 = vshll.u32 %v4606, 16
        %v4644 = vrot.slane %v4642, 7
        %v4645 = vor.u32 %v4641, %v4644
        %v4646 = vrot.slane %v4645, 4
        %v4648 = vshrl.u32 %v4607, 16
        %v4650 = vrot.slane %v4648, 6
        %v4651 = vshll.u32 %v4607, 16
        %v4653 = vrot.slane %v4651, 7
        %v4654 = vor.u32 %v4650, %v4653
        %v4655 = vsel %vm4075, %v4646, %v4654
        %v4657 = vshrl.u32 %v4608, 16
        %v4659 = vrot.slane %v4657, 6
        %v4660 = vshll.u32 %v4608, 16
        %v4662 = vrot.slane %v4660, 7
        %v4663 = vor.u32 %v4659, %v4662
        %v4664 = vrot.slane %v4663, 4
        %v4666 = vshrl.u32 %v4609, 16
        %v4668 = vrot.slane %v4666, 6
        %v4669 = vshll.u32 %v4609, 16
        %v4671 = vrot.slane %v4669, 7
        %v4672 = vor.u32 %v4668, %v4671
        %v4673 = vsel %vm4075, %v4664, %v4672
        %v4675 = vshrl.u32 %v4610, 16
        %v4677 = vrot.slane %v4675, 6
        %v4678 = vshll.u32 %v4610, 16
        %v4680 = vrot.slane %v4678, 7
        %v4681 = vor.u32 %v4677, %v4680
        %v4682 = vrot.slane %v4681, 4
        %v4684 = vshrl.u32 %v4611, 16
        %v4686 = vrot.slane %v4684, 6
        %v4687 = vshll.u32 %v4611, 16
        %v4689 = vrot.slane %v4687, 7
        %v4690 = vor.u32 %v4686, %v4689
        %v4691 = vsel %vm4075, %v4682, %v4690
        %v4693 = vshrl.u32 %v4612, 16
        %v4695 = vrot.slane %v4693, 6
        %v4696 = vshll.u32 %v4612, 16
        %v4698 = vrot.slane %v4696, 7
        %v4699 = vor.u32 %v4695, %v4698
        %v4700 = vrot.slane %v4699, 4
        %v4702 = vshrl.u32 %v4613, 16
        %v4704 = vrot.slane %v4702, 6
        %v4705 = vshll.u32 %v4613, 16
        %v4707 = vrot.slane %v4705, 7
        %v4708 = vor.u32 %v4704, %v4707
        %v4709 = vsel %vm4075, %v4700, %v4708
        %v4711 = vshrl.u32 %v4614, 16
        %v4713 = vrot.slane %v4711, 6
        %v4714 = vshll.u32 %v4614, 16
        %v4716 = vrot.slane %v4714, 7
        %v4717 = vor.u32 %v4713, %v4716
        %v4718 = vrot.slane %v4717, 4
        %v4720 = vshrl.u32 %v4615, 16
        %v4722 = vrot.slane %v4720, 6
        %v4723 = vshll.u32 %v4615, 16
        %v4725 = vrot.slane %v4723, 7
        %v4726 = vor.u32 %v4722, %v4725
        %v4727 = vsel %vm4075, %v4718, %v4726
        %v4729 = vshrl.u32 %v4616, 16
        %v4731 = vrot.slane %v4729, 6
        %v4732 = vshll.u32 %v4616, 16
        %v4734 = vrot.slane %v4732, 7
        %v4735 = vor.u32 %v4731, %v4734
        %v4736 = vrot.slane %v4735, 4
        %v4738 = vshrl.u32 %v4617, 16
        %v4740 = vrot.slane %v4738, 6
        %v4741 = vshll.u32 %v4617, 16
        %v4743 = vrot.slane %v4741, 7
        %v4744 = vor.u32 %v4740, %v4743
        %v4745 = vsel %vm4075, %v4736, %v4744
        %v4747 = vshrl.u32 %v4618, 16
        %v4749 = vrot.slane %v4747, 6
        %v4750 = vshll.u32 %v4618, 16
        %v4752 = vrot.slane %v4750, 7
        %v4753 = vor.u32 %v4749, %v4752
        %v4754 = vrot.slane %v4753, 4
        %v4756 = vshrl.u32 %v4619, 16
        %v4758 = vrot.slane %v4756, 6
        %v4759 = vshll.u32 %v4619, 16
        %v4761 = vrot.slane %v4759, 7
        %v4762 = vor.u32 %v4758, %v4761
        %v4763 = vsel %vm4075, %v4754, %v4762
        %4764 = vrot.lane.b32.xlu0 %v4637, 96
        %v4765 = vpop.permute.xlu0 %4764
        %4766 = vrot.lane.b32.xlu0 %v4655, 96
        %v4767 = vpop.permute.xlu0 %4766
        %4768 = vrot.lane.b32.xlu0 %v4673, 96
        %v4769 = vpop.permute.xlu0 %4768
        %4770 = vrot.lane.b32.xlu0 %v4691, 96
        %v4771 = vpop.permute.xlu0 %4770
        %4772 = vrot.lane.b32.xlu0 %v4709, 96
        %v4773 = vpop.permute.xlu0 %4772
        %4774 = vrot.lane.b32.xlu0 %v4727, 96
        %v4775 = vpop.permute.xlu0 %4774
        %4776 = vrot.lane.b32.xlu0 %v4745, 96
        %v4777 = vpop.permute.xlu0 %4776
        %4778 = vrot.lane.b32.xlu0 %v4763, 96
        %v4779 = vpop.permute.xlu0 %4778
        %4788 = vst.msk [vmem:[#allocation5 + $0x4] sm:$0xf] %vm3420, %v4765
        %4789 = vst.msk [vmem:[#allocation5 + $0x14] sm:$0xf] %vm3420, %v4767
        %4790 = vst.msk [vmem:[#allocation5 + $0x24] sm:$0xf] %vm3420, %v4769
        %4791 = vst.msk [vmem:[#allocation5 + $0x34] sm:$0xf] %vm3420, %v4771
        %4792 = vst.msk [vmem:[#allocation5 + $0x44] sm:$0xf] %vm3420, %v4773
        %4793 = vst.msk [vmem:[#allocation5 + $0x54] sm:$0xf] %vm3420, %v4775
        %4794 = vst.msk [vmem:[#allocation5 + $0x64] sm:$0xf] %vm3420, %v4777
        %4795 = vst.msk [vmem:[#allocation5 + $0x74] sm:$0xf] %vm3420, %v4779
        %s4796 = scalar_lea.vmem [#allocation2], 40
        %v4797 = vld [vmem:[%s4796] sm:$0xf]
        %v4798 = vld [vmem:[%s4796 + $0x4] sm:$0x1]
        %v4799 = vld [vmem:[%s4796 + $0x8] sm:$0xf]
        %v4800 = vld [vmem:[%s4796 + $0xc] sm:$0x1]
        %v4801 = vld [vmem:[%s4796 + $0x10] sm:$0xf]
        %v4802 = vld [vmem:[%s4796 + $0x14] sm:$0x1]
        %v4803 = vld [vmem:[%s4796 + $0x18] sm:$0xf]
        %v4804 = vld [vmem:[%s4796 + $0x1c] sm:$0x1]
        %v4805 = vld [vmem:[%s4796 + $0x20] sm:$0xf]
        %v4806 = vld [vmem:[%s4796 + $0x24] sm:$0x1]
        %v4807 = vld [vmem:[%s4796 + $0x28] sm:$0xf]
        %v4808 = vld [vmem:[%s4796 + $0x2c] sm:$0x1]
        %v4809 = vld [vmem:[%s4796 + $0x30] sm:$0xf]
        %v4810 = vld [vmem:[%s4796 + $0x34] sm:$0x1]
        %v4811 = vld [vmem:[%s4796 + $0x38] sm:$0xf]
        %v4812 = vld [vmem:[%s4796 + $0x3c] sm:$0x1]
        %v4814 = vshrl.u32 %v4797, 16
        %v4816 = vrot.slane %v4814, 4
        %v4817 = vshll.u32 %v4797, 16
        %v4819 = vrot.slane %v4817, 5
        %v4820 = vor.u32 %v4816, %v4819
        %v4821 = vrot.slane %v4820, 4
        %v4823 = vshll.u32 %v4798, 16
        %v4825 = vrot.slane %v4823, 5
        %v4826 = vsel %vm3721, %v4821, %v4825
        %v4828 = vshrl.u32 %v4799, 16
        %v4830 = vrot.slane %v4828, 4
        %v4831 = vshll.u32 %v4799, 16
        %v4833 = vrot.slane %v4831, 5
        %v4834 = vor.u32 %v4830, %v4833
        %v4835 = vrot.slane %v4834, 4
        %v4837 = vshll.u32 %v4800, 16
        %v4839 = vrot.slane %v4837, 5
        %v4840 = vsel %vm3721, %v4835, %v4839
        %v4842 = vshrl.u32 %v4801, 16
        %v4844 = vrot.slane %v4842, 4
        %v4845 = vshll.u32 %v4801, 16
        %v4847 = vrot.slane %v4845, 5
        %v4848 = vor.u32 %v4844, %v4847
        %v4849 = vrot.slane %v4848, 4
        %v4851 = vshll.u32 %v4802, 16
        %v4853 = vrot.slane %v4851, 5
        %v4854 = vsel %vm3721, %v4849, %v4853
        %v4856 = vshrl.u32 %v4803, 16
        %v4858 = vrot.slane %v4856, 4
        %v4859 = vshll.u32 %v4803, 16
        %v4861 = vrot.slane %v4859, 5
        %v4862 = vor.u32 %v4858, %v4861
        %v4863 = vrot.slane %v4862, 4
        %v4865 = vshll.u32 %v4804, 16
        %v4867 = vrot.slane %v4865, 5
        %v4868 = vsel %vm3721, %v4863, %v4867
        %v4870 = vshrl.u32 %v4805, 16
        %v4872 = vrot.slane %v4870, 4
        %v4873 = vshll.u32 %v4805, 16
        %v4875 = vrot.slane %v4873, 5
        %v4876 = vor.u32 %v4872, %v4875
        %v4877 = vrot.slane %v4876, 4
        %v4879 = vshll.u32 %v4806, 16
        %v4881 = vrot.slane %v4879, 5
        %v4882 = vsel %vm3721, %v4877, %v4881
        %v4884 = vshrl.u32 %v4807, 16
        %v4886 = vrot.slane %v4884, 4
        %v4887 = vshll.u32 %v4807, 16
        %v4889 = vrot.slane %v4887, 5
        %v4890 = vor.u32 %v4886, %v4889
        %v4891 = vrot.slane %v4890, 4
        %v4893 = vshll.u32 %v4808, 16
        %v4895 = vrot.slane %v4893, 5
        %v4896 = vsel %vm3721, %v4891, %v4895
        %v4898 = vshrl.u32 %v4809, 16
        %v4900 = vrot.slane %v4898, 4
        %v4901 = vshll.u32 %v4809, 16
        %v4903 = vrot.slane %v4901, 5
        %v4904 = vor.u32 %v4900, %v4903
        %v4905 = vrot.slane %v4904, 4
        %v4907 = vshll.u32 %v4810, 16
        %v4909 = vrot.slane %v4907, 5
        %v4910 = vsel %vm3721, %v4905, %v4909
        %v4912 = vshrl.u32 %v4811, 16
        %v4914 = vrot.slane %v4912, 4
        %v4915 = vshll.u32 %v4811, 16
        %v4917 = vrot.slane %v4915, 5
        %v4918 = vor.u32 %v4914, %v4917
        %v4919 = vrot.slane %v4918, 4
        %v4921 = vshll.u32 %v4812, 16
        %v4923 = vrot.slane %v4921, 5
        %v4924 = vsel %vm3721, %v4919, %v4923
        %4925 = vrot.lane.b32.xlu0 %v4826, 112
        %v4926 = vpop.permute.xlu0 %4925
        %4927 = vrot.lane.b32.xlu0 %v4840, 112
        %v4928 = vpop.permute.xlu0 %4927
        %4929 = vrot.lane.b32.xlu0 %v4854, 112
        %v4930 = vpop.permute.xlu0 %4929
        %4931 = vrot.lane.b32.xlu0 %v4868, 112
        %v4932 = vpop.permute.xlu0 %4931
        %4933 = vrot.lane.b32.xlu0 %v4882, 112
        %v4934 = vpop.permute.xlu0 %4933
        %4935 = vrot.lane.b32.xlu0 %v4896, 112
        %v4936 = vpop.permute.xlu0 %4935
        %4937 = vrot.lane.b32.xlu0 %v4910, 112
        %v4938 = vpop.permute.xlu0 %4937
        %4939 = vrot.lane.b32.xlu0 %v4924, 112
        %v4940 = vpop.permute.xlu0 %4939
        %4949 = vst.msk [vmem:[#allocation5 + $0x4] sm:$0xf] %vm3613, %v4926
        %4950 = vst.msk [vmem:[#allocation5 + $0x14] sm:$0xf] %vm3613, %v4928
        %4951 = vst.msk [vmem:[#allocation5 + $0x24] sm:$0xf] %vm3613, %v4930
        %4952 = vst.msk [vmem:[#allocation5 + $0x34] sm:$0xf] %vm3613, %v4932
        %4953 = vst.msk [vmem:[#allocation5 + $0x44] sm:$0xf] %vm3613, %v4934
        %4954 = vst.msk [vmem:[#allocation5 + $0x54] sm:$0xf] %vm3613, %v4936
        %4955 = vst.msk [vmem:[#allocation5 + $0x64] sm:$0xf] %vm3613, %v4938
        %4956 = vst.msk [vmem:[#allocation5 + $0x74] sm:$0xf] %vm3613, %v4940
        %v4957 = vld [vmem:[%s4796] sm:$0xe]
        %v4958 = vld [vmem:[%s4796 + $0x4] sm:$0x3]
        %v4959 = vld [vmem:[%s4796 + $0x8] sm:$0xe]
        %v4960 = vld [vmem:[%s4796 + $0xc] sm:$0x3]
        %v4961 = vld [vmem:[%s4796 + $0x10] sm:$0xe]
        %v4962 = vld [vmem:[%s4796 + $0x14] sm:$0x3]
        %v4963 = vld [vmem:[%s4796 + $0x18] sm:$0xe]
        %v4964 = vld [vmem:[%s4796 + $0x1c] sm:$0x3]
        %v4965 = vld [vmem:[%s4796 + $0x20] sm:$0xe]
        %v4966 = vld [vmem:[%s4796 + $0x24] sm:$0x3]
        %v4967 = vld [vmem:[%s4796 + $0x28] sm:$0xe]
        %v4968 = vld [vmem:[%s4796 + $0x2c] sm:$0x3]
        %v4969 = vld [vmem:[%s4796 + $0x30] sm:$0xe]
        %v4970 = vld [vmem:[%s4796 + $0x34] sm:$0x3]
        %v4971 = vld [vmem:[%s4796 + $0x38] sm:$0xe]
        %v4972 = vld [vmem:[%s4796 + $0x3c] sm:$0x3]
        %v4974 = vshrl.u32 %v4957, 16
        %v4976 = vrot.slane %v4974, 5
        %v4977 = vshll.u32 %v4957, 16
        %v4979 = vrot.slane %v4977, 6
        %v4980 = vor.u32 %v4976, %v4979
        %v4981 = vrot.slane %v4980, 4
        %v4983 = vshrl.u32 %v4958, 16
        %v4985 = vrot.slane %v4983, 5
        %v4986 = vshll.u32 %v4958, 16
        %v4988 = vrot.slane %v4986, 6
        %v4989 = vor.u32 %v4985, %v4988
        %v4990 = vsel %vm2666, %v4981, %v4989
        %v4992 = vshrl.u32 %v4959, 16
        %v4994 = vrot.slane %v4992, 5
        %v4995 = vshll.u32 %v4959, 16
        %v4997 = vrot.slane %v4995, 6
        %v4998 = vor.u32 %v4994, %v4997
        %v4999 = vrot.slane %v4998, 4
        %v5001 = vshrl.u32 %v4960, 16
        %v5003 = vrot.slane %v5001, 5
        %v5004 = vshll.u32 %v4960, 16
        %v5006 = vrot.slane %v5004, 6
        %v5007 = vor.u32 %v5003, %v5006
        %v5008 = vsel %vm2666, %v4999, %v5007
        %v5010 = vshrl.u32 %v4961, 16
        %v5012 = vrot.slane %v5010, 5
        %v5013 = vshll.u32 %v4961, 16
        %v5015 = vrot.slane %v5013, 6
        %v5016 = vor.u32 %v5012, %v5015
        %v5017 = vrot.slane %v5016, 4
        %v5019 = vshrl.u32 %v4962, 16
        %v5021 = vrot.slane %v5019, 5
        %v5022 = vshll.u32 %v4962, 16
        %v5024 = vrot.slane %v5022, 6
        %v5025 = vor.u32 %v5021, %v5024
        %v5026 = vsel %vm2666, %v5017, %v5025
        %v5028 = vshrl.u32 %v4963, 16
        %v5030 = vrot.slane %v5028, 5
        %v5031 = vshll.u32 %v4963, 16
        %v5033 = vrot.slane %v5031, 6
        %v5034 = vor.u32 %v5030, %v5033
        %v5035 = vrot.slane %v5034, 4
        %v5037 = vshrl.u32 %v4964, 16
        %v5039 = vrot.slane %v5037, 5
        %v5040 = vshll.u32 %v4964, 16
        %v5042 = vrot.slane %v5040, 6
        %v5043 = vor.u32 %v5039, %v5042
        %v5044 = vsel %vm2666, %v5035, %v5043
        %v5046 = vshrl.u32 %v4965, 16
        %v5048 = vrot.slane %v5046, 5
        %v5049 = vshll.u32 %v4965, 16
        %v5051 = vrot.slane %v5049, 6
        %v5052 = vor.u32 %v5048, %v5051
        %v5053 = vrot.slane %v5052, 4
        %v5055 = vshrl.u32 %v4966, 16
        %v5057 = vrot.slane %v5055, 5
        %v5058 = vshll.u32 %v4966, 16
        %v5060 = vrot.slane %v5058, 6
        %v5061 = vor.u32 %v5057, %v5060
        %v5062 = vsel %vm2666, %v5053, %v5061
        %v5064 = vshrl.u32 %v4967, 16
        %v5066 = vrot.slane %v5064, 5
        %v5067 = vshll.u32 %v4967, 16
        %v5069 = vrot.slane %v5067, 6
        %v5070 = vor.u32 %v5066, %v5069
        %v5071 = vrot.slane %v5070, 4
        %v5073 = vshrl.u32 %v4968, 16
        %v5075 = vrot.slane %v5073, 5
        %v5076 = vshll.u32 %v4968, 16
        %v5078 = vrot.slane %v5076, 6
        %v5079 = vor.u32 %v5075, %v5078
        %v5080 = vsel %vm2666, %v5071, %v5079
        %v5082 = vshrl.u32 %v4969, 16
        %v5084 = vrot.slane %v5082, 5
        %v5085 = vshll.u32 %v4969, 16
        %v5087 = vrot.slane %v5085, 6
        %v5088 = vor.u32 %v5084, %v5087
        %v5089 = vrot.slane %v5088, 4
        %v5091 = vshrl.u32 %v4970, 16
        %v5093 = vrot.slane %v5091, 5
        %v5094 = vshll.u32 %v4970, 16
        %v5096 = vrot.slane %v5094, 6
        %v5097 = vor.u32 %v5093, %v5096
        %v5098 = vsel %vm2666, %v5089, %v5097
        %v5100 = vshrl.u32 %v4971, 16
        %v5102 = vrot.slane %v5100, 5
        %v5103 = vshll.u32 %v4971, 16
        %v5105 = vrot.slane %v5103, 6
        %v5106 = vor.u32 %v5102, %v5105
        %v5107 = vrot.slane %v5106, 4
        %v5109 = vshrl.u32 %v4972, 16
        %v5111 = vrot.slane %v5109, 5
        %v5112 = vshll.u32 %v4972, 16
        %v5114 = vrot.slane %v5112, 6
        %v5115 = vor.u32 %v5111, %v5114
        %v5116 = vsel %vm2666, %v5107, %v5115
        %5125 = vst.msk [vmem:[#allocation5 + $0x8] sm:$0xf] %vm2348, %v4990
        %5126 = vst.msk [vmem:[#allocation5 + $0x18] sm:$0xf] %vm2348, %v5008
        %5127 = vst.msk [vmem:[#allocation5 + $0x28] sm:$0xf] %vm2348, %v5026
        %5128 = vst.msk [vmem:[#allocation5 + $0x38] sm:$0xf] %vm2348, %v5044
        %5129 = vst.msk [vmem:[#allocation5 + $0x48] sm:$0xf] %vm2348, %v5062
        %5130 = vst.msk [vmem:[#allocation5 + $0x58] sm:$0xf] %vm2348, %v5080
        %5131 = vst.msk [vmem:[#allocation5 + $0x68] sm:$0xf] %vm2348, %v5098
        %5132 = vst.msk [vmem:[#allocation5 + $0x78] sm:$0xf] %vm2348, %v5116
        %v5133 = vld [vmem:[%s4796] sm:$0xc]
        %v5134 = vld [vmem:[%s4796 + $0x4] sm:$0x7]
        %v5135 = vld [vmem:[%s4796 + $0x8] sm:$0xc]
        %v5136 = vld [vmem:[%s4796 + $0xc] sm:$0x7]
        %v5137 = vld [vmem:[%s4796 + $0x10] sm:$0xc]
        %v5138 = vld [vmem:[%s4796 + $0x14] sm:$0x7]
        %v5139 = vld [vmem:[%s4796 + $0x18] sm:$0xc]
        %v5140 = vld [vmem:[%s4796 + $0x1c] sm:$0x7]
        %v5141 = vld [vmem:[%s4796 + $0x20] sm:$0xc]
        %v5142 = vld [vmem:[%s4796 + $0x24] sm:$0x7]
        %v5143 = vld [vmem:[%s4796 + $0x28] sm:$0xc]
        %v5144 = vld [vmem:[%s4796 + $0x2c] sm:$0x7]
        %v5145 = vld [vmem:[%s4796 + $0x30] sm:$0xc]
        %v5146 = vld [vmem:[%s4796 + $0x34] sm:$0x7]
        %v5147 = vld [vmem:[%s4796 + $0x38] sm:$0xc]
        %v5148 = vld [vmem:[%s4796 + $0x3c] sm:$0x7]
        %v5150 = vshrl.u32 %v5133, 16
        %v5152 = vrot.slane %v5150, 6
        %v5153 = vshll.u32 %v5133, 16
        %v5155 = vrot.slane %v5153, 7
        %v5156 = vor.u32 %v5152, %v5155
        %v5157 = vrot.slane %v5156, 4
        %v5159 = vshrl.u32 %v5134, 16
        %v5161 = vrot.slane %v5159, 6
        %v5162 = vshll.u32 %v5134, 16
        %v5164 = vrot.slane %v5162, 7
        %v5165 = vor.u32 %v5161, %v5164
        %v5166 = vsel %vm4075, %v5157, %v5165
        %v5168 = vshrl.u32 %v5135, 16
        %v5170 = vrot.slane %v5168, 6
        %v5171 = vshll.u32 %v5135, 16
        %v5173 = vrot.slane %v5171, 7
        %v5174 = vor.u32 %v5170, %v5173
        %v5175 = vrot.slane %v5174, 4
        %v5177 = vshrl.u32 %v5136, 16
        %v5179 = vrot.slane %v5177, 6
        %v5180 = vshll.u32 %v5136, 16
        %v5182 = vrot.slane %v5180, 7
        %v5183 = vor.u32 %v5179, %v5182
        %v5184 = vsel %vm4075, %v5175, %v5183
        %v5186 = vshrl.u32 %v5137, 16
        %v5188 = vrot.slane %v5186, 6
        %v5189 = vshll.u32 %v5137, 16
        %v5191 = vrot.slane %v5189, 7
        %v5192 = vor.u32 %v5188, %v5191
        %v5193 = vrot.slane %v5192, 4
        %v5195 = vshrl.u32 %v5138, 16
        %v5197 = vrot.slane %v5195, 6
        %v5198 = vshll.u32 %v5138, 16
        %v5200 = vrot.slane %v5198, 7
        %v5201 = vor.u32 %v5197, %v5200
        %v5202 = vsel %vm4075, %v5193, %v5201
        %v5204 = vshrl.u32 %v5139, 16
        %v5206 = vrot.slane %v5204, 6
        %v5207 = vshll.u32 %v5139, 16
        %v5209 = vrot.slane %v5207, 7
        %v5210 = vor.u32 %v5206, %v5209
        %v5211 = vrot.slane %v5210, 4
        %v5213 = vshrl.u32 %v5140, 16
        %v5215 = vrot.slane %v5213, 6
        %v5216 = vshll.u32 %v5140, 16
        %v5218 = vrot.slane %v5216, 7
        %v5219 = vor.u32 %v5215, %v5218
        %v5220 = vsel %vm4075, %v5211, %v5219
        %v5222 = vshrl.u32 %v5141, 16
        %v5224 = vrot.slane %v5222, 6
        %v5225 = vshll.u32 %v5141, 16
        %v5227 = vrot.slane %v5225, 7
        %v5228 = vor.u32 %v5224, %v5227
        %v5229 = vrot.slane %v5228, 4
        %v5231 = vshrl.u32 %v5142, 16
        %v5233 = vrot.slane %v5231, 6
        %v5234 = vshll.u32 %v5142, 16
        %v5236 = vrot.slane %v5234, 7
        %v5237 = vor.u32 %v5233, %v5236
        %v5238 = vsel %vm4075, %v5229, %v5237
        %v5240 = vshrl.u32 %v5143, 16
        %v5242 = vrot.slane %v5240, 6
        %v5243 = vshll.u32 %v5143, 16
        %v5245 = vrot.slane %v5243, 7
        %v5246 = vor.u32 %v5242, %v5245
        %v5247 = vrot.slane %v5246, 4
        %v5249 = vshrl.u32 %v5144, 16
        %v5251 = vrot.slane %v5249, 6
        %v5252 = vshll.u32 %v5144, 16
        %v5254 = vrot.slane %v5252, 7
        %v5255 = vor.u32 %v5251, %v5254
        %v5256 = vsel %vm4075, %v5247, %v5255
        %v5258 = vshrl.u32 %v5145, 16
        %v5260 = vrot.slane %v5258, 6
        %v5261 = vshll.u32 %v5145, 16
        %v5263 = vrot.slane %v5261, 7
        %v5264 = vor.u32 %v5260, %v5263
        %v5265 = vrot.slane %v5264, 4
        %v5267 = vshrl.u32 %v5146, 16
        %v5269 = vrot.slane %v5267, 6
        %v5270 = vshll.u32 %v5146, 16
        %v5272 = vrot.slane %v5270, 7
        %v5273 = vor.u32 %v5269, %v5272
        %v5274 = vsel %vm4075, %v5265, %v5273
        %v5276 = vshrl.u32 %v5147, 16
        %v5278 = vrot.slane %v5276, 6
        %v5279 = vshll.u32 %v5147, 16
        %v5281 = vrot.slane %v5279, 7
        %v5282 = vor.u32 %v5278, %v5281
        %v5283 = vrot.slane %v5282, 4
        %v5285 = vshrl.u32 %v5148, 16
        %v5287 = vrot.slane %v5285, 6
        %v5288 = vshll.u32 %v5148, 16
        %v5290 = vrot.slane %v5288, 7
        %v5291 = vor.u32 %v5287, %v5290
        %v5292 = vsel %vm4075, %v5283, %v5291
        %5293 = vrot.lane.b32.xlu0 %v5166, 16
        %v5294 = vpop.permute.xlu0 %5293
        %5295 = vrot.lane.b32.xlu0 %v5184, 16
        %v5296 = vpop.permute.xlu0 %5295
        %5297 = vrot.lane.b32.xlu0 %v5202, 16
        %v5298 = vpop.permute.xlu0 %5297
        %5299 = vrot.lane.b32.xlu0 %v5220, 16
        %v5300 = vpop.permute.xlu0 %5299
        %5301 = vrot.lane.b32.xlu0 %v5238, 16
        %v5302 = vpop.permute.xlu0 %5301
        %5303 = vrot.lane.b32.xlu0 %v5256, 16
        %v5304 = vpop.permute.xlu0 %5303
        %5305 = vrot.lane.b32.xlu0 %v5274, 16
        %v5306 = vpop.permute.xlu0 %5305
        %5307 = vrot.lane.b32.xlu0 %v5292, 16
        %v5308 = vpop.permute.xlu0 %5307
        %5317 = vst.msk [vmem:[#allocation5 + $0x8] sm:$0xf] %vm2835, %v5294
        %5318 = vst.msk [vmem:[#allocation5 + $0x18] sm:$0xf] %vm2835, %v5296
        %5319 = vst.msk [vmem:[#allocation5 + $0x28] sm:$0xf] %vm2835, %v5298
        %5320 = vst.msk [vmem:[#allocation5 + $0x38] sm:$0xf] %vm2835, %v5300
        %5321 = vst.msk [vmem:[#allocation5 + $0x48] sm:$0xf] %vm2835, %v5302
        %5322 = vst.msk [vmem:[#allocation5 + $0x58] sm:$0xf] %vm2835, %v5304
        %5323 = vst.msk [vmem:[#allocation5 + $0x68] sm:$0xf] %vm2835, %v5306
        %5324 = vst.msk [vmem:[#allocation5 + $0x78] sm:$0xf] %vm2835, %v5308
        %v5325 = vld [vmem:[#allocation2] sm:$0xf]
        %v5326 = vld [vmem:[#allocation2 + $0x8] sm:$0xf]
        %v5327 = vld [vmem:[#allocation2 + $0x10] sm:$0xf]
        %v5328 = vld [vmem:[#allocation2 + $0x18] sm:$0xf]
        %v5329 = vld [vmem:[#allocation2 + $0x20] sm:$0xf]
        %v5330 = vld [vmem:[#allocation2 + $0x28] sm:$0xf]
        %v5331 = vld [vmem:[#allocation2 + $0x30] sm:$0xf]
        %v5332 = vld [vmem:[#allocation2 + $0x38] sm:$0xf]
        %5341 = vrot.lane.b32.xlu0 %v5325, 32
        %v5342 = vpop.permute.xlu0 %5341
        %5343 = vrot.lane.b32.xlu0 %v5326, 32
        %v5344 = vpop.permute.xlu0 %5343
        %5345 = vrot.lane.b32.xlu0 %v5327, 32
        %v5346 = vpop.permute.xlu0 %5345
        %5347 = vrot.lane.b32.xlu0 %v5328, 32
        %v5348 = vpop.permute.xlu0 %5347
        %5349 = vrot.lane.b32.xlu0 %v5329, 32
        %v5350 = vpop.permute.xlu0 %5349
        %5351 = vrot.lane.b32.xlu0 %v5330, 32
        %v5352 = vpop.permute.xlu0 %5351
        %5353 = vrot.lane.b32.xlu0 %v5331, 32
        %v5354 = vpop.permute.xlu0 %5353
        %5355 = vrot.lane.b32.xlu0 %v5332, 32
        %v5356 = vpop.permute.xlu0 %5355
        %5365 = vst.msk [vmem:[#allocation5 + $0x8] sm:$0xf] %vm2935, %v5342
        %5366 = vst.msk [vmem:[#allocation5 + $0x18] sm:$0xf] %vm2935, %v5344
        %5367 = vst.msk [vmem:[#allocation5 + $0x28] sm:$0xf] %vm2935, %v5346
        %5368 = vst.msk [vmem:[#allocation5 + $0x38] sm:$0xf] %vm2935, %v5348
        %5369 = vst.msk [vmem:[#allocation5 + $0x48] sm:$0xf] %vm2935, %v5350
        %5370 = vst.msk [vmem:[#allocation5 + $0x58] sm:$0xf] %vm2935, %v5352
        %5371 = vst.msk [vmem:[#allocation5 + $0x68] sm:$0xf] %vm2935, %v5354
        %5372 = vst.msk [vmem:[#allocation5 + $0x78] sm:$0xf] %vm2935, %v5356
        %v5373 = vld [vmem:[#allocation2] sm:$0xe]
        %v5374 = vld [vmem:[#allocation2 + $0x4] sm:$0x3]
        %v5375 = vld [vmem:[#allocation2 + $0x8] sm:$0xe]
        %v5376 = vld [vmem:[#allocation2 + $0xc] sm:$0x3]
        %v5377 = vld [vmem:[#allocation2 + $0x10] sm:$0xe]
        %v5378 = vld [vmem:[#allocation2 + $0x14] sm:$0x3]
        %v5379 = vld [vmem:[#allocation2 + $0x18] sm:$0xe]
        %v5380 = vld [vmem:[#allocation2 + $0x1c] sm:$0x3]
        %v5381 = vld [vmem:[#allocation2 + $0x20] sm:$0xe]
        %v5382 = vld [vmem:[#allocation2 + $0x24] sm:$0x3]
        %v5383 = vld [vmem:[#allocation2 + $0x28] sm:$0xe]
        %v5384 = vld [vmem:[#allocation2 + $0x2c] sm:$0x3]
        %v5385 = vld [vmem:[#allocation2 + $0x30] sm:$0xe]
        %v5386 = vld [vmem:[#allocation2 + $0x34] sm:$0x3]
        %v5387 = vld [vmem:[#allocation2 + $0x38] sm:$0xe]
        %v5388 = vld [vmem:[#allocation2 + $0x3c] sm:$0x3]
        %v5390 = vshrl.u32 %v5373, 16
        %v5392 = vrot.slane %v5390, 5
        %v5393 = vshll.u32 %v5373, 16
        %v5395 = vrot.slane %v5393, 6
        %v5396 = vor.u32 %v5392, %v5395
        %v5397 = vrot.slane %v5396, 4
        %v5399 = vshrl.u32 %v5374, 16
        %v5401 = vrot.slane %v5399, 5
        %v5402 = vshll.u32 %v5374, 16
        %v5404 = vrot.slane %v5402, 6
        %v5405 = vor.u32 %v5401, %v5404
        %v5406 = vsel %vm2666, %v5397, %v5405
        %v5408 = vshrl.u32 %v5375, 16
        %v5410 = vrot.slane %v5408, 5
        %v5411 = vshll.u32 %v5375, 16
        %v5413 = vrot.slane %v5411, 6
        %v5414 = vor.u32 %v5410, %v5413
        %v5415 = vrot.slane %v5414, 4
        %v5417 = vshrl.u32 %v5376, 16
        %v5419 = vrot.slane %v5417, 5
        %v5420 = vshll.u32 %v5376, 16
        %v5422 = vrot.slane %v5420, 6
        %v5423 = vor.u32 %v5419, %v5422
        %v5424 = vsel %vm2666, %v5415, %v5423
        %v5426 = vshrl.u32 %v5377, 16
        %v5428 = vrot.slane %v5426, 5
        %v5429 = vshll.u32 %v5377, 16
        %v5431 = vrot.slane %v5429, 6
        %v5432 = vor.u32 %v5428, %v5431
        %v5433 = vrot.slane %v5432, 4
        %v5435 = vshrl.u32 %v5378, 16
        %v5437 = vrot.slane %v5435, 5
        %v5438 = vshll.u32 %v5378, 16
        %v5440 = vrot.slane %v5438, 6
        %v5441 = vor.u32 %v5437, %v5440
        %v5442 = vsel %vm2666, %v5433, %v5441
        %v5444 = vshrl.u32 %v5379, 16
        %v5446 = vrot.slane %v5444, 5
        %v5447 = vshll.u32 %v5379, 16
        %v5449 = vrot.slane %v5447, 6
        %v5450 = vor.u32 %v5446, %v5449
        %v5451 = vrot.slane %v5450, 4
        %v5453 = vshrl.u32 %v5380, 16
        %v5455 = vrot.slane %v5453, 5
        %v5456 = vshll.u32 %v5380, 16
        %v5458 = vrot.slane %v5456, 6
        %v5459 = vor.u32 %v5455, %v5458
        %v5460 = vsel %vm2666, %v5451, %v5459
        %v5462 = vshrl.u32 %v5381, 16
        %v5464 = vrot.slane %v5462, 5
        %v5465 = vshll.u32 %v5381, 16
        %v5467 = vrot.slane %v5465, 6
        %v5468 = vor.u32 %v5464, %v5467
        %v5469 = vrot.slane %v5468, 4
        %v5471 = vshrl.u32 %v5382, 16
        %v5473 = vrot.slane %v5471, 5
        %v5474 = vshll.u32 %v5382, 16
        %v5476 = vrot.slane %v5474, 6
        %v5477 = vor.u32 %v5473, %v5476
        %v5478 = vsel %vm2666, %v5469, %v5477
        %v5480 = vshrl.u32 %v5383, 16
        %v5482 = vrot.slane %v5480, 5
        %v5483 = vshll.u32 %v5383, 16
        %v5485 = vrot.slane %v5483, 6
        %v5486 = vor.u32 %v5482, %v5485
        %v5487 = vrot.slane %v5486, 4
        %v5489 = vshrl.u32 %v5384, 16
        %v5491 = vrot.slane %v5489, 5
        %v5492 = vshll.u32 %v5384, 16
        %v5494 = vrot.slane %v5492, 6
        %v5495 = vor.u32 %v5491, %v5494
        %v5496 = vsel %vm2666, %v5487, %v5495
        %v5498 = vshrl.u32 %v5385, 16
        %v5500 = vrot.slane %v5498, 5
        %v5501 = vshll.u32 %v5385, 16
        %v5503 = vrot.slane %v5501, 6
        %v5504 = vor.u32 %v5500, %v5503
        %v5505 = vrot.slane %v5504, 4
        %v5507 = vshrl.u32 %v5386, 16
        %v5509 = vrot.slane %v5507, 5
        %v5510 = vshll.u32 %v5386, 16
        %v5512 = vrot.slane %v5510, 6
        %v5513 = vor.u32 %v5509, %v5512
        %v5514 = vsel %vm2666, %v5505, %v5513
        %v5516 = vshrl.u32 %v5387, 16
        %v5518 = vrot.slane %v5516, 5
        %v5519 = vshll.u32 %v5387, 16
        %v5521 = vrot.slane %v5519, 6
        %v5522 = vor.u32 %v5518, %v5521
        %v5523 = vrot.slane %v5522, 4
        %v5525 = vshrl.u32 %v5388, 16
        %v5527 = vrot.slane %v5525, 5
        %v5528 = vshll.u32 %v5388, 16
        %v5530 = vrot.slane %v5528, 6
        %v5531 = vor.u32 %v5527, %v5530
        %v5532 = vsel %vm2666, %v5523, %v5531
        %5533 = vrot.lane.b32.xlu0 %v5406, 48
        %v5534 = vpop.permute.xlu0 %5533
        %5535 = vrot.lane.b32.xlu0 %v5424, 48
        %v5536 = vpop.permute.xlu0 %5535
        %5537 = vrot.lane.b32.xlu0 %v5442, 48
        %v5538 = vpop.permute.xlu0 %5537
        %5539 = vrot.lane.b32.xlu0 %v5460, 48
        %v5540 = vpop.permute.xlu0 %5539
        %5541 = vrot.lane.b32.xlu0 %v5478, 48
        %v5542 = vpop.permute.xlu0 %5541
        %5543 = vrot.lane.b32.xlu0 %v5496, 48
        %v5544 = vpop.permute.xlu0 %5543
        %5545 = vrot.lane.b32.xlu0 %v5514, 48
        %v5546 = vpop.permute.xlu0 %5545
        %5547 = vrot.lane.b32.xlu0 %v5532, 48
        %v5548 = vpop.permute.xlu0 %5547
        %5557 = vst.msk [vmem:[#allocation5 + $0x8] sm:$0xf] %vm3032, %v5534
        %5558 = vst.msk [vmem:[#allocation5 + $0x18] sm:$0xf] %vm3032, %v5536
        %5559 = vst.msk [vmem:[#allocation5 + $0x28] sm:$0xf] %vm3032, %v5538
        %5560 = vst.msk [vmem:[#allocation5 + $0x38] sm:$0xf] %vm3032, %v5540
        %5561 = vst.msk [vmem:[#allocation5 + $0x48] sm:$0xf] %vm3032, %v5542
        %5562 = vst.msk [vmem:[#allocation5 + $0x58] sm:$0xf] %vm3032, %v5544
        %5563 = vst.msk [vmem:[#allocation5 + $0x68] sm:$0xf] %vm3032, %v5546
        %5564 = vst.msk [vmem:[#allocation5 + $0x78] sm:$0xf] %vm3032, %v5548
        %v5565 = vld [vmem:[#allocation2] sm:$0x8]
        %v5566 = vld [vmem:[#allocation2 + $0x4] sm:$0x7]
        %v5567 = vld [vmem:[#allocation2 + $0x8] sm:$0x8]
        %v5568 = vld [vmem:[#allocation2 + $0xc] sm:$0x7]
        %v5569 = vld [vmem:[#allocation2 + $0x10] sm:$0x8]
        %v5570 = vld [vmem:[#allocation2 + $0x14] sm:$0x7]
        %v5571 = vld [vmem:[#allocation2 + $0x18] sm:$0x8]
        %v5572 = vld [vmem:[#allocation2 + $0x1c] sm:$0x7]
        %v5573 = vld [vmem:[#allocation2 + $0x20] sm:$0x8]
        %v5574 = vld [vmem:[#allocation2 + $0x24] sm:$0x7]
        %v5575 = vld [vmem:[#allocation2 + $0x28] sm:$0x8]
        %v5576 = vld [vmem:[#allocation2 + $0x2c] sm:$0x7]
        %v5577 = vld [vmem:[#allocation2 + $0x30] sm:$0x8]
        %v5578 = vld [vmem:[#allocation2 + $0x34] sm:$0x7]
        %v5579 = vld [vmem:[#allocation2 + $0x38] sm:$0x8]
        %v5580 = vld [vmem:[#allocation2 + $0x3c] sm:$0x7]
        %vm5597 = vcmask 1040384
        %vm5598 = vcmask 1044484
        %vm5599 = vmor %vm5597, %vm5598
        %v5600 = vrot.slane %v5565, 7
        %v5601 = vrot.slane %v5600, 4
        %v5602 = vrot.slane %v5566, 7
        %v5603 = vsel %vm5599, %v5601, %v5602
        %v5604 = vrot.slane %v5567, 7
        %v5605 = vrot.slane %v5604, 4
        %v5606 = vrot.slane %v5568, 7
        %v5607 = vsel %vm5599, %v5605, %v5606
        %v5608 = vrot.slane %v5569, 7
        %v5609 = vrot.slane %v5608, 4
        %v5610 = vrot.slane %v5570, 7
        %v5611 = vsel %vm5599, %v5609, %v5610
        %v5612 = vrot.slane %v5571, 7
        %v5613 = vrot.slane %v5612, 4
        %v5614 = vrot.slane %v5572, 7
        %v5615 = vsel %vm5599, %v5613, %v5614
        %v5616 = vrot.slane %v5573, 7
        %v5617 = vrot.slane %v5616, 4
        %v5618 = vrot.slane %v5574, 7
        %v5619 = vsel %vm5599, %v5617, %v5618
        %v5620 = vrot.slane %v5575, 7
        %v5621 = vrot.slane %v5620, 4
        %v5622 = vrot.slane %v5576, 7
        %v5623 = vsel %vm5599, %v5621, %v5622
        %v5624 = vrot.slane %v5577, 7
        %v5625 = vrot.slane %v5624, 4
        %v5626 = vrot.slane %v5578, 7
        %v5627 = vsel %vm5599, %v5625, %v5626
        %v5628 = vrot.slane %v5579, 7
        %v5629 = vrot.slane %v5628, 4
        %v5630 = vrot.slane %v5580, 7
        %v5631 = vsel %vm5599, %v5629, %v5630
        %5632 = vrot.lane.b32.xlu0 %v5603, 64
        %v5633 = vpop.permute.xlu0 %5632
        %5634 = vrot.lane.b32.xlu0 %v5607, 64
        %v5635 = vpop.permute.xlu0 %5634
        %5636 = vrot.lane.b32.xlu0 %v5611, 64
        %v5637 = vpop.permute.xlu0 %5636
        %5638 = vrot.lane.b32.xlu0 %v5615, 64
        %v5639 = vpop.permute.xlu0 %5638
        %5640 = vrot.lane.b32.xlu0 %v5619, 64
        %v5641 = vpop.permute.xlu0 %5640
        %5642 = vrot.lane.b32.xlu0 %v5623, 64
        %v5643 = vpop.permute.xlu0 %5642
        %5644 = vrot.lane.b32.xlu0 %v5627, 64
        %v5645 = vpop.permute.xlu0 %5644
        %5646 = vrot.lane.b32.xlu0 %v5631, 64
        %v5647 = vpop.permute.xlu0 %5646
        %5656 = vst.msk [vmem:[#allocation5 + $0x8] sm:$0xf] %vm3225, %v5633
        %5657 = vst.msk [vmem:[#allocation5 + $0x18] sm:$0xf] %vm3225, %v5635
        %5658 = vst.msk [vmem:[#allocation5 + $0x28] sm:$0xf] %vm3225, %v5637
        %5659 = vst.msk [vmem:[#allocation5 + $0x38] sm:$0xf] %vm3225, %v5639
        %5660 = vst.msk [vmem:[#allocation5 + $0x48] sm:$0xf] %vm3225, %v5641
        %5661 = vst.msk [vmem:[#allocation5 + $0x58] sm:$0xf] %vm3225, %v5643
        %5662 = vst.msk [vmem:[#allocation5 + $0x68] sm:$0xf] %vm3225, %v5645
        %5663 = vst.msk [vmem:[#allocation5 + $0x78] sm:$0xf] %vm3225, %v5647
        %v5664 = vld [vmem:[%s2363] sm:$0xf]
        %v5665 = vld [vmem:[%s2363 + $0x8] sm:$0xf]
        %v5666 = vld [vmem:[%s2363 + $0x10] sm:$0xf]
        %v5667 = vld [vmem:[%s2363 + $0x18] sm:$0xf]
        %v5668 = vld [vmem:[%s2363 + $0x20] sm:$0xf]
        %v5669 = vld [vmem:[%s2363 + $0x28] sm:$0xf]
        %v5670 = vld [vmem:[%s2363 + $0x30] sm:$0xf]
        %v5671 = vld [vmem:[%s2363 + $0x38] sm:$0xf]
        %5680 = vrot.lane.b32.xlu0 %v5664, 80
        %v5681 = vpop.permute.xlu0 %5680
        %5682 = vrot.lane.b32.xlu0 %v5665, 80
        %v5683 = vpop.permute.xlu0 %5682
        %5684 = vrot.lane.b32.xlu0 %v5666, 80
        %v5685 = vpop.permute.xlu0 %5684
        %5686 = vrot.lane.b32.xlu0 %v5667, 80
        %v5687 = vpop.permute.xlu0 %5686
        %5688 = vrot.lane.b32.xlu0 %v5668, 80
        %v5689 = vpop.permute.xlu0 %5688
        %5690 = vrot.lane.b32.xlu0 %v5669, 80
        %v5691 = vpop.permute.xlu0 %5690
        %5692 = vrot.lane.b32.xlu0 %v5670, 80
        %v5693 = vpop.permute.xlu0 %5692
        %5694 = vrot.lane.b32.xlu0 %v5671, 80
        %v5695 = vpop.permute.xlu0 %5694
        %5704 = vst.msk [vmem:[#allocation5 + $0x8] sm:$0xf] %vm3322, %v5681
        %5705 = vst.msk [vmem:[#allocation5 + $0x18] sm:$0xf] %vm3322, %v5683
        %5706 = vst.msk [vmem:[#allocation5 + $0x28] sm:$0xf] %vm3322, %v5685
        %5707 = vst.msk [vmem:[#allocation5 + $0x38] sm:$0xf] %vm3322, %v5687
        %5708 = vst.msk [vmem:[#allocation5 + $0x48] sm:$0xf] %vm3322, %v5689
        %5709 = vst.msk [vmem:[#allocation5 + $0x58] sm:$0xf] %vm3322, %v5691
        %5710 = vst.msk [vmem:[#allocation5 + $0x68] sm:$0xf] %vm3322, %v5693
        %5711 = vst.msk [vmem:[#allocation5 + $0x78] sm:$0xf] %vm3322, %v5695
        %v5712 = vld [vmem:[%s2363] sm:$0xe]
        %v5713 = vld [vmem:[%s2363 + $0x4] sm:$0x3]
        %v5714 = vld [vmem:[%s2363 + $0x8] sm:$0xe]
        %v5715 = vld [vmem:[%s2363 + $0xc] sm:$0x3]
        %v5716 = vld [vmem:[%s2363 + $0x10] sm:$0xe]
        %v5717 = vld [vmem:[%s2363 + $0x14] sm:$0x3]
        %v5718 = vld [vmem:[%s2363 + $0x18] sm:$0xe]
        %v5719 = vld [vmem:[%s2363 + $0x1c] sm:$0x3]
        %v5720 = vld [vmem:[%s2363 + $0x20] sm:$0xe]
        %v5721 = vld [vmem:[%s2363 + $0x24] sm:$0x3]
        %v5722 = vld [vmem:[%s2363 + $0x28] sm:$0xe]
        %v5723 = vld [vmem:[%s2363 + $0x2c] sm:$0x3]
        %v5724 = vld [vmem:[%s2363 + $0x30] sm:$0xe]
        %v5725 = vld [vmem:[%s2363 + $0x34] sm:$0x3]
        %v5726 = vld [vmem:[%s2363 + $0x38] sm:$0xe]
        %v5727 = vld [vmem:[%s2363 + $0x3c] sm:$0x3]
        %v5729 = vshrl.u32 %v5712, 16
        %v5731 = vrot.slane %v5729, 5
        %v5732 = vshll.u32 %v5712, 16
        %v5734 = vrot.slane %v5732, 6
        %v5735 = vor.u32 %v5731, %v5734
        %v5736 = vrot.slane %v5735, 4
        %v5738 = vshrl.u32 %v5713, 16
        %v5740 = vrot.slane %v5738, 5
        %v5741 = vshll.u32 %v5713, 16
        %v5743 = vrot.slane %v5741, 6
        %v5744 = vor.u32 %v5740, %v5743
        %v5745 = vsel %vm2666, %v5736, %v5744
        %v5747 = vshrl.u32 %v5714, 16
        %v5749 = vrot.slane %v5747, 5
        %v5750 = vshll.u32 %v5714, 16
        %v5752 = vrot.slane %v5750, 6
        %v5753 = vor.u32 %v5749, %v5752
        %v5754 = vrot.slane %v5753, 4
        %v5756 = vshrl.u32 %v5715, 16
        %v5758 = vrot.slane %v5756, 5
        %v5759 = vshll.u32 %v5715, 16
        %v5761 = vrot.slane %v5759, 6
        %v5762 = vor.u32 %v5758, %v5761
        %v5763 = vsel %vm2666, %v5754, %v5762
        %v5765 = vshrl.u32 %v5716, 16
        %v5767 = vrot.slane %v5765, 5
        %v5768 = vshll.u32 %v5716, 16
        %v5770 = vrot.slane %v5768, 6
        %v5771 = vor.u32 %v5767, %v5770
        %v5772 = vrot.slane %v5771, 4
        %v5774 = vshrl.u32 %v5717, 16
        %v5776 = vrot.slane %v5774, 5
        %v5777 = vshll.u32 %v5717, 16
        %v5779 = vrot.slane %v5777, 6
        %v5780 = vor.u32 %v5776, %v5779
        %v5781 = vsel %vm2666, %v5772, %v5780
        %v5783 = vshrl.u32 %v5718, 16
        %v5785 = vrot.slane %v5783, 5
        %v5786 = vshll.u32 %v5718, 16
        %v5788 = vrot.slane %v5786, 6
        %v5789 = vor.u32 %v5785, %v5788
        %v5790 = vrot.slane %v5789, 4
        %v5792 = vshrl.u32 %v5719, 16
        %v5794 = vrot.slane %v5792, 5
        %v5795 = vshll.u32 %v5719, 16
        %v5797 = vrot.slane %v5795, 6
        %v5798 = vor.u32 %v5794, %v5797
        %v5799 = vsel %vm2666, %v5790, %v5798
        %v5801 = vshrl.u32 %v5720, 16
        %v5803 = vrot.slane %v5801, 5
        %v5804 = vshll.u32 %v5720, 16
        %v5806 = vrot.slane %v5804, 6
        %v5807 = vor.u32 %v5803, %v5806
        %v5808 = vrot.slane %v5807, 4
        %v5810 = vshrl.u32 %v5721, 16
        %v5812 = vrot.slane %v5810, 5
        %v5813 = vshll.u32 %v5721, 16
        %v5815 = vrot.slane %v5813, 6
        %v5816 = vor.u32 %v5812, %v5815
        %v5817 = vsel %vm2666, %v5808, %v5816
        %v5819 = vshrl.u32 %v5722, 16
        %v5821 = vrot.slane %v5819, 5
        %v5822 = vshll.u32 %v5722, 16
        %v5824 = vrot.slane %v5822, 6
        %v5825 = vor.u32 %v5821, %v5824
        %v5826 = vrot.slane %v5825, 4
        %v5828 = vshrl.u32 %v5723, 16
        %v5830 = vrot.slane %v5828, 5
        %v5831 = vshll.u32 %v5723, 16
        %v5833 = vrot.slane %v5831, 6
        %v5834 = vor.u32 %v5830, %v5833
        %v5835 = vsel %vm2666, %v5826, %v5834
        %v5837 = vshrl.u32 %v5724, 16
        %v5839 = vrot.slane %v5837, 5
        %v5840 = vshll.u32 %v5724, 16
        %v5842 = vrot.slane %v5840, 6
        %v5843 = vor.u32 %v5839, %v5842
        %v5844 = vrot.slane %v5843, 4
        %v5846 = vshrl.u32 %v5725, 16
        %v5848 = vrot.slane %v5846, 5
        %v5849 = vshll.u32 %v5725, 16
        %v5851 = vrot.slane %v5849, 6
        %v5852 = vor.u32 %v5848, %v5851
        %v5853 = vsel %vm2666, %v5844, %v5852
        %v5855 = vshrl.u32 %v5726, 16
        %v5857 = vrot.slane %v5855, 5
        %v5858 = vshll.u32 %v5726, 16
        %v5860 = vrot.slane %v5858, 6
        %v5861 = vor.u32 %v5857, %v5860
        %v5862 = vrot.slane %v5861, 4
        %v5864 = vshrl.u32 %v5727, 16
        %v5866 = vrot.slane %v5864, 5
        %v5867 = vshll.u32 %v5727, 16
        %v5869 = vrot.slane %v5867, 6
        %v5870 = vor.u32 %v5866, %v5869
        %v5871 = vsel %vm2666, %v5862, %v5870
        %5872 = vrot.lane.b32.xlu0 %v5745, 96
        %v5873 = vpop.permute.xlu0 %5872
        %5874 = vrot.lane.b32.xlu0 %v5763, 96
        %v5875 = vpop.permute.xlu0 %5874
        %5876 = vrot.lane.b32.xlu0 %v5781, 96
        %v5877 = vpop.permute.xlu0 %5876
        %5878 = vrot.lane.b32.xlu0 %v5799, 96
        %v5879 = vpop.permute.xlu0 %5878
        %5880 = vrot.lane.b32.xlu0 %v5817, 96
        %v5881 = vpop.permute.xlu0 %5880
        %5882 = vrot.lane.b32.xlu0 %v5835, 96
        %v5883 = vpop.permute.xlu0 %5882
        %5884 = vrot.lane.b32.xlu0 %v5853, 96
        %v5885 = vpop.permute.xlu0 %5884
        %5886 = vrot.lane.b32.xlu0 %v5871, 96
        %v5887 = vpop.permute.xlu0 %5886
        %5896 = vst.msk [vmem:[#allocation5 + $0x8] sm:$0xf] %vm3420, %v5873
        %5897 = vst.msk [vmem:[#allocation5 + $0x18] sm:$0xf] %vm3420, %v5875
        %5898 = vst.msk [vmem:[#allocation5 + $0x28] sm:$0xf] %vm3420, %v5877
        %5899 = vst.msk [vmem:[#allocation5 + $0x38] sm:$0xf] %vm3420, %v5879
        %5900 = vst.msk [vmem:[#allocation5 + $0x48] sm:$0xf] %vm3420, %v5881
        %5901 = vst.msk [vmem:[#allocation5 + $0x58] sm:$0xf] %vm3420, %v5883
        %5902 = vst.msk [vmem:[#allocation5 + $0x68] sm:$0xf] %vm3420, %v5885
        %5903 = vst.msk [vmem:[#allocation5 + $0x78] sm:$0xf] %vm3420, %v5887
        %v5904 = vld [vmem:[%s2363] sm:$0x8]
        %v5905 = vld [vmem:[%s2363 + $0x4] sm:$0x7]
        %v5906 = vld [vmem:[%s2363 + $0x8] sm:$0x8]
        %v5907 = vld [vmem:[%s2363 + $0xc] sm:$0x7]
        %v5908 = vld [vmem:[%s2363 + $0x10] sm:$0x8]
        %v5909 = vld [vmem:[%s2363 + $0x14] sm:$0x7]
        %v5910 = vld [vmem:[%s2363 + $0x18] sm:$0x8]
        %v5911 = vld [vmem:[%s2363 + $0x1c] sm:$0x7]
        %v5912 = vld [vmem:[%s2363 + $0x20] sm:$0x8]
        %v5913 = vld [vmem:[%s2363 + $0x24] sm:$0x7]
        %v5914 = vld [vmem:[%s2363 + $0x28] sm:$0x8]
        %v5915 = vld [vmem:[%s2363 + $0x2c] sm:$0x7]
        %v5916 = vld [vmem:[%s2363 + $0x30] sm:$0x8]
        %v5917 = vld [vmem:[%s2363 + $0x34] sm:$0x7]
        %v5918 = vld [vmem:[%s2363 + $0x38] sm:$0x8]
        %v5919 = vld [vmem:[%s2363 + $0x3c] sm:$0x7]
        %v5936 = vrot.slane %v5904, 7
        %v5937 = vrot.slane %v5936, 4
        %v5938 = vrot.slane %v5905, 7
        %v5939 = vsel %vm5599, %v5937, %v5938
        %v5940 = vrot.slane %v5906, 7
        %v5941 = vrot.slane %v5940, 4
        %v5942 = vrot.slane %v5907, 7
        %v5943 = vsel %vm5599, %v5941, %v5942
        %v5944 = vrot.slane %v5908, 7
        %v5945 = vrot.slane %v5944, 4
        %v5946 = vrot.slane %v5909, 7
        %v5947 = vsel %vm5599, %v5945, %v5946
        %v5948 = vrot.slane %v5910, 7
        %v5949 = vrot.slane %v5948, 4
        %v5950 = vrot.slane %v5911, 7
        %v5951 = vsel %vm5599, %v5949, %v5950
        %v5952 = vrot.slane %v5912, 7
        %v5953 = vrot.slane %v5952, 4
        %v5954 = vrot.slane %v5913, 7
        %v5955 = vsel %vm5599, %v5953, %v5954
        %v5956 = vrot.slane %v5914, 7
        %v5957 = vrot.slane %v5956, 4
        %v5958 = vrot.slane %v5915, 7
        %v5959 = vsel %vm5599, %v5957, %v5958
        %v5960 = vrot.slane %v5916, 7
        %v5961 = vrot.slane %v5960, 4
        %v5962 = vrot.slane %v5917, 7
        %v5963 = vsel %vm5599, %v5961, %v5962
        %v5964 = vrot.slane %v5918, 7
        %v5965 = vrot.slane %v5964, 4
        %v5966 = vrot.slane %v5919, 7
        %v5967 = vsel %vm5599, %v5965, %v5966
        %5968 = vrot.lane.b32.xlu0 %v5939, 112
        %v5969 = vpop.permute.xlu0 %5968
        %5970 = vrot.lane.b32.xlu0 %v5943, 112
        %v5971 = vpop.permute.xlu0 %5970
        %5972 = vrot.lane.b32.xlu0 %v5947, 112
        %v5973 = vpop.permute.xlu0 %5972
        %5974 = vrot.lane.b32.xlu0 %v5951, 112
        %v5975 = vpop.permute.xlu0 %5974
        %5976 = vrot.lane.b32.xlu0 %v5955, 112
        %v5977 = vpop.permute.xlu0 %5976
        %5978 = vrot.lane.b32.xlu0 %v5959, 112
        %v5979 = vpop.permute.xlu0 %5978
        %5980 = vrot.lane.b32.xlu0 %v5963, 112
        %v5981 = vpop.permute.xlu0 %5980
        %5982 = vrot.lane.b32.xlu0 %v5967, 112
        %v5983 = vpop.permute.xlu0 %5982
        %5992 = vst.msk [vmem:[#allocation5 + $0x8] sm:$0xf] %vm3613, %v5969
        %5993 = vst.msk [vmem:[#allocation5 + $0x18] sm:$0xf] %vm3613, %v5971
        %5994 = vst.msk [vmem:[#allocation5 + $0x28] sm:$0xf] %vm3613, %v5973
        %5995 = vst.msk [vmem:[#allocation5 + $0x38] sm:$0xf] %vm3613, %v5975
        %5996 = vst.msk [vmem:[#allocation5 + $0x48] sm:$0xf] %vm3613, %v5977
        %5997 = vst.msk [vmem:[#allocation5 + $0x58] sm:$0xf] %vm3613, %v5979
        %5998 = vst.msk [vmem:[#allocation5 + $0x68] sm:$0xf] %vm3613, %v5981
        %5999 = vst.msk [vmem:[#allocation5 + $0x78] sm:$0xf] %vm3613, %v5983
        %s6000 = scalar_lea.vmem [#allocation2], 48
        %v6001 = vld [vmem:[%s6000] sm:$0xf]
        %v6002 = vld [vmem:[%s6000 + $0x8] sm:$0xf]
        %v6003 = vld [vmem:[%s6000 + $0x10] sm:$0xf]
        %v6004 = vld [vmem:[%s6000 + $0x18] sm:$0xf]
        %v6005 = vld [vmem:[%s6000 + $0x20] sm:$0xf]
        %v6006 = vld [vmem:[%s6000 + $0x28] sm:$0xf]
        %v6007 = vld [vmem:[%s6000 + $0x30] sm:$0xf]
        %v6008 = vld [vmem:[%s6000 + $0x38] sm:$0xf]
        %6009 = vst.msk [vmem:[#allocation5 + $0xc] sm:$0xf] %vm2348, %v6001
        %6010 = vst.msk [vmem:[#allocation5 + $0x1c] sm:$0xf] %vm2348, %v6002
        %6011 = vst.msk [vmem:[#allocation5 + $0x2c] sm:$0xf] %vm2348, %v6003
        %6012 = vst.msk [vmem:[#allocation5 + $0x3c] sm:$0xf] %vm2348, %v6004
        %6013 = vst.msk [vmem:[#allocation5 + $0x4c] sm:$0xf] %vm2348, %v6005
        %6014 = vst.msk [vmem:[#allocation5 + $0x5c] sm:$0xf] %vm2348, %v6006
        %6015 = vst.msk [vmem:[#allocation5 + $0x6c] sm:$0xf] %vm2348, %v6007
        %6016 = vst.msk [vmem:[#allocation5 + $0x7c] sm:$0xf] %vm2348, %v6008
        %v6017 = vld [vmem:[%s6000] sm:$0xe]
        %v6018 = vld [vmem:[%s6000 + $0x4] sm:$0x3]
        %v6019 = vld [vmem:[%s6000 + $0x8] sm:$0xe]
        %v6020 = vld [vmem:[%s6000 + $0xc] sm:$0x3]
        %v6021 = vld [vmem:[%s6000 + $0x10] sm:$0xe]
        %v6022 = vld [vmem:[%s6000 + $0x14] sm:$0x3]
        %v6023 = vld [vmem:[%s6000 + $0x18] sm:$0xe]
        %v6024 = vld [vmem:[%s6000 + $0x1c] sm:$0x3]
        %v6025 = vld [vmem:[%s6000 + $0x20] sm:$0xe]
        %v6026 = vld [vmem:[%s6000 + $0x24] sm:$0x3]
        %v6027 = vld [vmem:[%s6000 + $0x28] sm:$0xe]
        %v6028 = vld [vmem:[%s6000 + $0x2c] sm:$0x3]
        %v6029 = vld [vmem:[%s6000 + $0x30] sm:$0xe]
        %v6030 = vld [vmem:[%s6000 + $0x34] sm:$0x3]
        %v6031 = vld [vmem:[%s6000 + $0x38] sm:$0xe]
        %v6032 = vld [vmem:[%s6000 + $0x3c] sm:$0x3]
        %v6034 = vshrl.u32 %v6017, 16
        %v6036 = vrot.slane %v6034, 5
        %v6037 = vshll.u32 %v6017, 16
        %v6039 = vrot.slane %v6037, 6
        %v6040 = vor.u32 %v6036, %v6039
        %v6041 = vrot.slane %v6040, 4
        %v6043 = vshrl.u32 %v6018, 16
        %v6045 = vrot.slane %v6043, 5
        %v6046 = vshll.u32 %v6018, 16
        %v6048 = vrot.slane %v6046, 6
        %v6049 = vor.u32 %v6045, %v6048
        %v6050 = vsel %vm2666, %v6041, %v6049
        %v6052 = vshrl.u32 %v6019, 16
        %v6054 = vrot.slane %v6052, 5
        %v6055 = vshll.u32 %v6019, 16
        %v6057 = vrot.slane %v6055, 6
        %v6058 = vor.u32 %v6054, %v6057
        %v6059 = vrot.slane %v6058, 4
        %v6061 = vshrl.u32 %v6020, 16
        %v6063 = vrot.slane %v6061, 5
        %v6064 = vshll.u32 %v6020, 16
        %v6066 = vrot.slane %v6064, 6
        %v6067 = vor.u32 %v6063, %v6066
        %v6068 = vsel %vm2666, %v6059, %v6067
        %v6070 = vshrl.u32 %v6021, 16
        %v6072 = vrot.slane %v6070, 5
        %v6073 = vshll.u32 %v6021, 16
        %v6075 = vrot.slane %v6073, 6
        %v6076 = vor.u32 %v6072, %v6075
        %v6077 = vrot.slane %v6076, 4
        %v6079 = vshrl.u32 %v6022, 16
        %v6081 = vrot.slane %v6079, 5
        %v6082 = vshll.u32 %v6022, 16
        %v6084 = vrot.slane %v6082, 6
        %v6085 = vor.u32 %v6081, %v6084
        %v6086 = vsel %vm2666, %v6077, %v6085
        %v6088 = vshrl.u32 %v6023, 16
        %v6090 = vrot.slane %v6088, 5
        %v6091 = vshll.u32 %v6023, 16
        %v6093 = vrot.slane %v6091, 6
        %v6094 = vor.u32 %v6090, %v6093
        %v6095 = vrot.slane %v6094, 4
        %v6097 = vshrl.u32 %v6024, 16
        %v6099 = vrot.slane %v6097, 5
        %v6100 = vshll.u32 %v6024, 16
        %v6102 = vrot.slane %v6100, 6
        %v6103 = vor.u32 %v6099, %v6102
        %v6104 = vsel %vm2666, %v6095, %v6103
        %v6106 = vshrl.u32 %v6025, 16
        %v6108 = vrot.slane %v6106, 5
        %v6109 = vshll.u32 %v6025, 16
        %v6111 = vrot.slane %v6109, 6
        %v6112 = vor.u32 %v6108, %v6111
        %v6113 = vrot.slane %v6112, 4
        %v6115 = vshrl.u32 %v6026, 16
        %v6117 = vrot.slane %v6115, 5
        %v6118 = vshll.u32 %v6026, 16
        %v6120 = vrot.slane %v6118, 6
        %v6121 = vor.u32 %v6117, %v6120
        %v6122 = vsel %vm2666, %v6113, %v6121
        %v6124 = vshrl.u32 %v6027, 16
        %v6126 = vrot.slane %v6124, 5
        %v6127 = vshll.u32 %v6027, 16
        %v6129 = vrot.slane %v6127, 6
        %v6130 = vor.u32 %v6126, %v6129
        %v6131 = vrot.slane %v6130, 4
        %v6133 = vshrl.u32 %v6028, 16
        %v6135 = vrot.slane %v6133, 5
        %v6136 = vshll.u32 %v6028, 16
        %v6138 = vrot.slane %v6136, 6
        %v6139 = vor.u32 %v6135, %v6138
        %v6140 = vsel %vm2666, %v6131, %v6139
        %v6142 = vshrl.u32 %v6029, 16
        %v6144 = vrot.slane %v6142, 5
        %v6145 = vshll.u32 %v6029, 16
        %v6147 = vrot.slane %v6145, 6
        %v6148 = vor.u32 %v6144, %v6147
        %v6149 = vrot.slane %v6148, 4
        %v6151 = vshrl.u32 %v6030, 16
        %v6153 = vrot.slane %v6151, 5
        %v6154 = vshll.u32 %v6030, 16
        %v6156 = vrot.slane %v6154, 6
        %v6157 = vor.u32 %v6153, %v6156
        %v6158 = vsel %vm2666, %v6149, %v6157
        %v6160 = vshrl.u32 %v6031, 16
        %v6162 = vrot.slane %v6160, 5
        %v6163 = vshll.u32 %v6031, 16
        %v6165 = vrot.slane %v6163, 6
        %v6166 = vor.u32 %v6162, %v6165
        %v6167 = vrot.slane %v6166, 4
        %v6169 = vshrl.u32 %v6032, 16
        %v6171 = vrot.slane %v6169, 5
        %v6172 = vshll.u32 %v6032, 16
        %v6174 = vrot.slane %v6172, 6
        %v6175 = vor.u32 %v6171, %v6174
        %v6176 = vsel %vm2666, %v6167, %v6175
        %6177 = vrot.lane.b32.xlu0 %v6050, 16
        %v6178 = vpop.permute.xlu0 %6177
        %6179 = vrot.lane.b32.xlu0 %v6068, 16
        %v6180 = vpop.permute.xlu0 %6179
        %6181 = vrot.lane.b32.xlu0 %v6086, 16
        %v6182 = vpop.permute.xlu0 %6181
        %6183 = vrot.lane.b32.xlu0 %v6104, 16
        %v6184 = vpop.permute.xlu0 %6183
        %6185 = vrot.lane.b32.xlu0 %v6122, 16
        %v6186 = vpop.permute.xlu0 %6185
        %6187 = vrot.lane.b32.xlu0 %v6140, 16
        %v6188 = vpop.permute.xlu0 %6187
        %6189 = vrot.lane.b32.xlu0 %v6158, 16
        %v6190 = vpop.permute.xlu0 %6189
        %6191 = vrot.lane.b32.xlu0 %v6176, 16
        %v6192 = vpop.permute.xlu0 %6191
        %6201 = vst.msk [vmem:[#allocation5 + $0xc] sm:$0xf] %vm2835, %v6178
        %6202 = vst.msk [vmem:[#allocation5 + $0x1c] sm:$0xf] %vm2835, %v6180
        %6203 = vst.msk [vmem:[#allocation5 + $0x2c] sm:$0xf] %vm2835, %v6182
        %6204 = vst.msk [vmem:[#allocation5 + $0x3c] sm:$0xf] %vm2835, %v6184
        %6205 = vst.msk [vmem:[#allocation5 + $0x4c] sm:$0xf] %vm2835, %v6186
        %6206 = vst.msk [vmem:[#allocation5 + $0x5c] sm:$0xf] %vm2835, %v6188
        %6207 = vst.msk [vmem:[#allocation5 + $0x6c] sm:$0xf] %vm2835, %v6190
        %6208 = vst.msk [vmem:[#allocation5 + $0x7c] sm:$0xf] %vm2835, %v6192
        %v6209 = vld [vmem:[%s6000] sm:$0x8]
        %v6210 = vld [vmem:[%s6000 + $0x4] sm:$0x7]
        %v6211 = vld [vmem:[%s6000 + $0x8] sm:$0x8]
        %v6212 = vld [vmem:[%s6000 + $0xc] sm:$0x7]
        %v6213 = vld [vmem:[%s6000 + $0x10] sm:$0x8]
        %v6214 = vld [vmem:[%s6000 + $0x14] sm:$0x7]
        %v6215 = vld [vmem:[%s6000 + $0x18] sm:$0x8]
        %v6216 = vld [vmem:[%s6000 + $0x1c] sm:$0x7]
        %v6217 = vld [vmem:[%s6000 + $0x20] sm:$0x8]
        %v6218 = vld [vmem:[%s6000 + $0x24] sm:$0x7]
        %v6219 = vld [vmem:[%s6000 + $0x28] sm:$0x8]
        %v6220 = vld [vmem:[%s6000 + $0x2c] sm:$0x7]
        %v6221 = vld [vmem:[%s6000 + $0x30] sm:$0x8]
        %v6222 = vld [vmem:[%s6000 + $0x34] sm:$0x7]
        %v6223 = vld [vmem:[%s6000 + $0x38] sm:$0x8]
        %v6224 = vld [vmem:[%s6000 + $0x3c] sm:$0x7]
        %v6241 = vrot.slane %v6209, 7
        %v6242 = vrot.slane %v6241, 4
        %v6243 = vrot.slane %v6210, 7
        %v6244 = vsel %vm5599, %v6242, %v6243
        %v6245 = vrot.slane %v6211, 7
        %v6246 = vrot.slane %v6245, 4
        %v6247 = vrot.slane %v6212, 7
        %v6248 = vsel %vm5599, %v6246, %v6247
        %v6249 = vrot.slane %v6213, 7
        %v6250 = vrot.slane %v6249, 4
        %v6251 = vrot.slane %v6214, 7
        %v6252 = vsel %vm5599, %v6250, %v6251
        %v6253 = vrot.slane %v6215, 7
        %v6254 = vrot.slane %v6253, 4
        %v6255 = vrot.slane %v6216, 7
        %v6256 = vsel %vm5599, %v6254, %v6255
        %v6257 = vrot.slane %v6217, 7
        %v6258 = vrot.slane %v6257, 4
        %v6259 = vrot.slane %v6218, 7
        %v6260 = vsel %vm5599, %v6258, %v6259
        %v6261 = vrot.slane %v6219, 7
        %v6262 = vrot.slane %v6261, 4
        %v6263 = vrot.slane %v6220, 7
        %v6264 = vsel %vm5599, %v6262, %v6263
        %v6265 = vrot.slane %v6221, 7
        %v6266 = vrot.slane %v6265, 4
        %v6267 = vrot.slane %v6222, 7
        %v6268 = vsel %vm5599, %v6266, %v6267
        %v6269 = vrot.slane %v6223, 7
        %v6270 = vrot.slane %v6269, 4
        %v6271 = vrot.slane %v6224, 7
        %v6272 = vsel %vm5599, %v6270, %v6271
        %6273 = vrot.lane.b32.xlu0 %v6244, 32
        %v6274 = vpop.permute.xlu0 %6273
        %6275 = vrot.lane.b32.xlu0 %v6248, 32
        %v6276 = vpop.permute.xlu0 %6275
        %6277 = vrot.lane.b32.xlu0 %v6252, 32
        %v6278 = vpop.permute.xlu0 %6277
        %6279 = vrot.lane.b32.xlu0 %v6256, 32
        %v6280 = vpop.permute.xlu0 %6279
        %6281 = vrot.lane.b32.xlu0 %v6260, 32
        %v6282 = vpop.permute.xlu0 %6281
        %6283 = vrot.lane.b32.xlu0 %v6264, 32
        %v6284 = vpop.permute.xlu0 %6283
        %6285 = vrot.lane.b32.xlu0 %v6268, 32
        %v6286 = vpop.permute.xlu0 %6285
        %6287 = vrot.lane.b32.xlu0 %v6272, 32
        %v6288 = vpop.permute.xlu0 %6287
        %6297 = vst.msk [vmem:[#allocation5 + $0xc] sm:$0xf] %vm2935, %v6274
        %6298 = vst.msk [vmem:[#allocation5 + $0x1c] sm:$0xf] %vm2935, %v6276
        %6299 = vst.msk [vmem:[#allocation5 + $0x2c] sm:$0xf] %vm2935, %v6278
        %6300 = vst.msk [vmem:[#allocation5 + $0x3c] sm:$0xf] %vm2935, %v6280
        %6301 = vst.msk [vmem:[#allocation5 + $0x4c] sm:$0xf] %vm2935, %v6282
        %6302 = vst.msk [vmem:[#allocation5 + $0x5c] sm:$0xf] %vm2935, %v6284
        %6303 = vst.msk [vmem:[#allocation5 + $0x6c] sm:$0xf] %vm2935, %v6286
        %6304 = vst.msk [vmem:[#allocation5 + $0x7c] sm:$0xf] %vm2935, %v6288
        %v6305 = vld [vmem:[#allocation5] sm:$0xff]
        %v6306 = vld [vmem:[#allocation5 + $0x8] sm:$0xff]
        %v6307 = vld [vmem:[#allocation5 + $0x10] sm:$0xff]
        %v6308 = vld [vmem:[#allocation5 + $0x18] sm:$0xff]
        %v6309 = vld [vmem:[#allocation5 + $0x20] sm:$0xff]
        %v6310 = vld [vmem:[#allocation5 + $0x28] sm:$0xff]
        %v6311 = vld [vmem:[#allocation5 + $0x30] sm:$0xff]
        %v6312 = vld [vmem:[#allocation5 + $0x38] sm:$0xff]
        %v6313 = vld [vmem:[#allocation5 + $0x40] sm:$0xff]
        %v6314 = vld [vmem:[#allocation5 + $0x48] sm:$0xff]
        %v6315 = vld [vmem:[#allocation5 + $0x50] sm:$0xff]
        %v6316 = vld [vmem:[#allocation5 + $0x58] sm:$0xff]
        %v6317 = vld [vmem:[#allocation5 + $0x60] sm:$0xff]
        %v6318 = vld [vmem:[#allocation5 + $0x68] sm:$0xff]
        %v6319 = vld [vmem:[#allocation5 + $0x70] sm:$0xff]
        %v6320 = vld [vmem:[#allocation5 + $0x78] sm:$0xff]
        %v6321 = vld [vmem:[%s12] sm:$0xf]
        %v6322 = vld [vmem:[%s12 + $0x4] sm:$0xf]
        %v6323 = vld [vmem:[%s12 + $0x8] sm:$0xf]
        %v6324 = vld [vmem:[%s12 + $0xc] sm:$0xf]
        %v6325 = vld [vmem:[%s12 + $0x10] sm:$0xf]
        %v6326 = vld [vmem:[%s12 + $0x14] sm:$0xf]
        %v6327 = vld [vmem:[%s12 + $0x18] sm:$0xf]
        %v6328 = vld [vmem:[%s12 + $0x1c] sm:$0xf]
        %v6329 = vld [vmem:[%s12 + $0x20] sm:$0xf]
        %v6330 = vld [vmem:[%s12 + $0x24] sm:$0xf]
        %v6331 = vld [vmem:[%s12 + $0x28] sm:$0xf]
        %v6332 = vld [vmem:[%s12 + $0x2c] sm:$0xf]
        %v6333 = vld [vmem:[%s12 + $0x30] sm:$0xf]
        %v6334 = vld [vmem:[%s12 + $0x34] sm:$0xf]
        %v6335 = vld [vmem:[%s12 + $0x38] sm:$0xf]
        %v6336 = vld [vmem:[%s12 + $0x3c] sm:$0xf]
        %v6337 = vld [vmem:[%s12 + $0x40] sm:$0xf]
        %v6338 = vld [vmem:[%s12 + $0x44] sm:$0xf]
        %v6339 = vld [vmem:[%s12 + $0x48] sm:$0xf]
        %v6340 = vld [vmem:[%s12 + $0x4c] sm:$0xf]
        %v6341 = vld [vmem:[%s12 + $0x50] sm:$0xf]
        %v6342 = vld [vmem:[%s12 + $0x54] sm:$0xf]
        %v6343 = vld [vmem:[%s12 + $0x58] sm:$0xf]
        %v6344 = vld [vmem:[%s12 + $0x5c] sm:$0xf]
        %v6345 = vld [vmem:[%s12 + $0x60] sm:$0xf]
        %v6346 = vld [vmem:[%s12 + $0x64] sm:$0xf]
        %v6347 = vld [vmem:[%s12 + $0x68] sm:$0xf]
        %v6348 = vld [vmem:[%s12 + $0x6c] sm:$0xf]
        %v6349 = vld [vmem:[%s12 + $0x70] sm:$0xf]
        %v6350 = vld [vmem:[%s12 + $0x74] sm:$0xf]
        %v6351 = vld [vmem:[%s12 + $0x78] sm:$0xf]
        %v6352 = vld [vmem:[%s12 + $0x7c] sm:$0xf]
        %v6353 = vld [vmem:[%s12 + $0x80] sm:$0xf]
        %v6354 = vld [vmem:[%s12 + $0x84] sm:$0xf]
        %v6355 = vld [vmem:[%s12 + $0x88] sm:$0xf]
        %v6356 = vld [vmem:[%s12 + $0x8c] sm:$0xf]
        %v6357 = vld [vmem:[%s12 + $0x90] sm:$0xf]
        %v6358 = vld [vmem:[%s12 + $0x94] sm:$0xf]
        %v6359 = vld [vmem:[%s12 + $0x98] sm:$0xf]
        %v6360 = vld [vmem:[%s12 + $0x9c] sm:$0xf]
        %v6361 = vld [vmem:[%s12 + $0xa0] sm:$0xf]
        %v6362 = vld [vmem:[%s12 + $0xa4] sm:$0xf]
        %v6363 = vld [vmem:[%s12 + $0xa8] sm:$0xf]
        %v6364 = vld [vmem:[%s12 + $0xac] sm:$0xf]
        %v6365 = vld [vmem:[%s12 + $0xb0] sm:$0xf]
        %v6366 = vld [vmem:[%s12 + $0xb4] sm:$0xf]
        %v6367 = vld [vmem:[%s12 + $0xb8] sm:$0xf]
        %v6368 = vld [vmem:[%s12 + $0xbc] sm:$0xf]
        %v6369 = vld [vmem:[%s12 + $0xc0] sm:$0xf]
        %v6370 = vld [vmem:[%s12 + $0xc4] sm:$0xf]
        %v6371 = vld [vmem:[%s12 + $0xc8] sm:$0xf]
        %v6372 = vld [vmem:[%s12 + $0xcc] sm:$0xf]
        %v6373 = vld [vmem:[%s12 + $0xd0] sm:$0xf]
        %v6374 = vld [vmem:[%s12 + $0xd4] sm:$0xf]
        %v6391 = vunpack.c.l.b16 %v6305
        %v6392 = vunpack.c.h.b16 %v6305
        %v6393 = vunpack.c.l.b16 %v6306
        %v6394 = vunpack.c.h.b16 %v6306
        %v6395 = vunpack.c.l.b16 %v6307
        %v6396 = vunpack.c.h.b16 %v6307
        %v6397 = vunpack.c.l.b16 %v6308
        %v6398 = vunpack.c.h.b16 %v6308
        %v6399 = vunpack.c.l.b16 %v6309
        %v6400 = vunpack.c.h.b16 %v6309
        %v6401 = vunpack.c.l.b16 %v6310
        %v6402 = vunpack.c.h.b16 %v6310
        %v6403 = vunpack.c.l.b16 %v6311
        %v6404 = vunpack.c.h.b16 %v6311
        %v6405 = vunpack.c.l.b16 %v6312
        %v6406 = vunpack.c.h.b16 %v6312
        %v6407 = vunpack.c.l.b16 %v6313
        %v6408 = vunpack.c.h.b16 %v6313
        %v6409 = vunpack.c.l.b16 %v6314
        %v6410 = vunpack.c.h.b16 %v6314
        %v6411 = vunpack.c.l.b16 %v6315
        %v6412 = vunpack.c.h.b16 %v6315
        %v6413 = vunpack.c.l.b16 %v6316
        %v6414 = vunpack.c.h.b16 %v6316
        %v6415 = vunpack.c.l.b16 %v6317
        %v6416 = vunpack.c.h.b16 %v6317
        %v6417 = vunpack.c.l.b16 %v6318
        %v6418 = vunpack.c.h.b16 %v6318
        %v6419 = vunpack.c.l.b16 %v6319
        %v6420 = vunpack.c.h.b16 %v6319
        %v6421 = vunpack.c.l.b16 %v6320
        %v6422 = vunpack.c.h.b16 %v6320
        %v6423 = vpack.c.b16 %v6395, %v6391
        %v6424 = vpack.c.b16 %v6396, %v6392
        %v6425 = vpack.c.b16 %v6397, %v6393
        %v6426 = vpack.c.b16 %v6398, %v6394
        %v6427 = vpack.c.b16 %v6403, %v6399
        %v6428 = vpack.c.b16 %v6404, %v6400
        %v6429 = vpack.c.b16 %v6405, %v6401
        %v6430 = vpack.c.b16 %v6406, %v6402
        %v6431 = vpack.c.b16 %v6411, %v6407
        %v6432 = vpack.c.b16 %v6412, %v6408
        %v6433 = vpack.c.b16 %v6413, %v6409
        %v6434 = vpack.c.b16 %v6414, %v6410
        %v6435 = vpack.c.b16 %v6419, %v6415
        %v6436 = vpack.c.b16 %v6420, %v6416
        %v6437 = vpack.c.b16 %v6421, %v6417
        %v6438 = vpack.c.b16 %v6422, %v6418
        %v6505 = vunpack.c.l.b16 %v6321
        %v6506 = vunpack.c.l.b16 %v6322
        %v6507 = vunpack.c.l.b16 %v6323
        %v6508 = vunpack.c.l.b16 %v6324
        %v6509 = vunpack.c.l.b16 %v6325
        %v6510 = vunpack.c.l.b16 %v6326
        %v6511 = vunpack.c.l.b16 %v6327
        %v6512 = vunpack.c.l.b16 %v6328
        %v6513 = vunpack.c.l.b16 %v6329
        %v6514 = vunpack.c.l.b16 %v6330
        %v6515 = vunpack.c.l.b16 %v6331
        %v6516 = vunpack.c.l.b16 %v6332
        %v6517 = vunpack.c.l.b16 %v6333
        %v6518 = vunpack.c.l.b16 %v6334
        %v6519 = vunpack.c.l.b16 %v6335
        %v6520 = vunpack.c.l.b16 %v6336
        %v6521 = vunpack.c.l.b16 %v6337
        %v6522 = vunpack.c.l.b16 %v6338
        %v6523 = vunpack.c.l.b16 %v6339
        %v6524 = vunpack.c.l.b16 %v6340
        %v6525 = vunpack.c.l.b16 %v6341
        %v6526 = vunpack.c.l.b16 %v6342
        %v6527 = vunpack.c.l.b16 %v6343
        %v6528 = vunpack.c.l.b16 %v6344
        %v6529 = vunpack.c.l.b16 %v6345
        %v6530 = vunpack.c.l.b16 %v6346
        %v6531 = vunpack.c.l.b16 %v6347
        %v6532 = vunpack.c.l.b16 %v6348
        %v6533 = vunpack.c.l.b16 %v6349
        %v6534 = vunpack.c.l.b16 %v6350
        %v6535 = vunpack.c.l.b16 %v6351
        %v6536 = vunpack.c.l.b16 %v6352
        %v6537 = vunpack.c.l.b16 %v6353
        %v6538 = vunpack.c.l.b16 %v6354
        %v6539 = vunpack.c.l.b16 %v6355
        %v6540 = vunpack.c.l.b16 %v6356
        %v6541 = vunpack.c.l.b16 %v6357
        %v6542 = vunpack.c.l.b16 %v6358
        %v6543 = vunpack.c.l.b16 %v6359
        %v6544 = vunpack.c.l.b16 %v6360
        %v6545 = vunpack.c.l.b16 %v6361
        %v6546 = vunpack.c.l.b16 %v6362
        %v6547 = vunpack.c.l.b16 %v6363
        %v6548 = vunpack.c.l.b16 %v6364
        %v6549 = vunpack.c.l.b16 %v6365
        %v6550 = vunpack.c.l.b16 %v6366
        %v6551 = vunpack.c.l.b16 %v6367
        %v6552 = vunpack.c.l.b16 %v6368
        %v6553 = vunpack.c.l.b16 %v6369
        %v6554 = vunpack.c.l.b16 %v6370
        %v6555 = vunpack.c.l.b16 %v6371
        %v6556 = vunpack.c.l.b16 %v6372
        %v6557 = vunpack.c.l.b16 %v6373
        %v6558 = vunpack.c.l.b16 %v6374
        %v6559 = vpack.c.b16 %v6506, %v6505
        %v6560 = vpack.c.b16 %v6508, %v6507
        %v6561 = vpack.c.b16 %v6510, %v6509
        %v6562 = vpack.c.b16 %v6512, %v6511
        %v6563 = vpack.c.b16 %v6514, %v6513
        %v6564 = vpack.c.b16 %v6516, %v6515
        %v6565 = vpack.c.b16 %v6518, %v6517
        %v6566 = vpack.c.b16 %v6520, %v6519
        %v6567 = vpack.c.b16 %v6522, %v6521
        %v6568 = vpack.c.b16 %v6524, %v6523
        %v6569 = vpack.c.b16 %v6526, %v6525
        %v6570 = vpack.c.b16 %v6528, %v6527
        %v6571 = vpack.c.b16 %v6530, %v6529
        %v6572 = vpack.c.b16 %v6532, %v6531
        %v6573 = vpack.c.b16 %v6534, %v6533
        %v6574 = vpack.c.b16 %v6536, %v6535
        %v6575 = vpack.c.b16 %v6538, %v6537
        %v6576 = vpack.c.b16 %v6540, %v6539
        %v6577 = vpack.c.b16 %v6542, %v6541
        %v6578 = vpack.c.b16 %v6544, %v6543
        %v6579 = vpack.c.b16 %v6546, %v6545
        %v6580 = vpack.c.b16 %v6548, %v6547
        %v6581 = vpack.c.b16 %v6550, %v6549
        %v6582 = vpack.c.b16 %v6552, %v6551
        %v6583 = vpack.c.b16 %v6554, %v6553
        %v6584 = vpack.c.b16 %v6556, %v6555
        %v6585 = vpack.c.b16 %v6558, %v6557
        %vm6613 = vcmask 392192
        %v6615 = vsel %vm6613, %v6426, 0
        %v6618 = vsel %vm6613, %v6430, 0
        %v6621 = vsel %vm6613, %v6434, 0
        %v6624 = vsel %vm6613, %v6438, 0
        %6626 = vmatpush.bf16.msra.mxu0 %v6566
        %6627 = vmatpush.bf16.msra.mxu0 %v6565
        %6628 = vmatpush.bf16.msra.mxu0 %v6564
        %6629 = vmatpush.bf16.msra.mxu0 %v6563
        %6630 = vmatpush.bf16.msra.mxu0 %v6562
        %6631 = vmatpush.bf16.msra.mxu0 %v6561
        %6632 = vmatpush.bf16.msra.mxu0 %v6560
        %6633 = vmatpush.bf16.msra.mxu0 %v6559
        %6634 = vmatmul.bf16.gmra.mxu0 %v6423
        %v6635 = vpop.f32.mrf.mxu0
        %v6636 = vadd.f32 0.0, %v6635
        %v6637 = vpop.f32.mrf.mxu0
        %v6638 = vadd.f32 0.0, %v6637
        %6639 = vmatmul.bf16.gmra.mxu0 %v6427
        %v6640 = vpop.f32.mrf.mxu0
        %v6641 = vadd.f32 0.0, %v6640
        %v6642 = vpop.f32.mrf.mxu0
        %v6643 = vadd.f32 0.0, %v6642
        %6644 = vmatmul.bf16.gmra.mxu0 %v6431
        %v6645 = vpop.f32.mrf.mxu0
        %v6646 = vadd.f32 0.0, %v6645
        %v6647 = vpop.f32.mrf.mxu0
        %v6648 = vadd.f32 0.0, %v6647
        %6649 = vmatmul.bf16.gmra.mxu0 %v6435
        %v6650 = vpop.f32.mrf.mxu0
        %v6651 = vadd.f32 0.0, %v6650
        %v6652 = vpop.f32.mrf.mxu0
        %v6653 = vadd.f32 0.0, %v6652
        %6654 = vdwg.mxu0
        %6655 = vmatpush.bf16.msra.mxu0 %v6574
        %6656 = vmatpush.bf16.msra.mxu0 %v6573
        %6657 = vmatpush.bf16.msra.mxu0 %v6572
        %6658 = vmatpush.bf16.msra.mxu0 %v6571
        %6659 = vmatpush.bf16.msra.mxu0 %v6570
        %6660 = vmatpush.bf16.msra.mxu0 %v6569
        %6661 = vmatpush.bf16.msra.mxu0 %v6568
        %6662 = vmatpush.bf16.msra.mxu0 %v6567
        %6663 = vmatmul.bf16.gmra.mxu0 %v6424
        %v6664 = vpop.f32.mrf.mxu0
        %v6665 = vadd.f32 %v6636, %v6664
        %v6666 = vpop.f32.mrf.mxu0
        %v6667 = vadd.f32 %v6638, %v6666
        %6668 = vmatmul.bf16.gmra.mxu0 %v6428
        %v6669 = vpop.f32.mrf.mxu0
        %v6670 = vadd.f32 %v6641, %v6669
        %v6671 = vpop.f32.mrf.mxu0
        %v6672 = vadd.f32 %v6643, %v6671
        %6673 = vmatmul.bf16.gmra.mxu0 %v6432
        %v6674 = vpop.f32.mrf.mxu0
        %v6675 = vadd.f32 %v6646, %v6674
        %v6676 = vpop.f32.mrf.mxu0
        %v6677 = vadd.f32 %v6648, %v6676
        %6678 = vmatmul.bf16.gmra.mxu0 %v6436
        %v6679 = vpop.f32.mrf.mxu0
        %v6680 = vadd.f32 %v6651, %v6679
        %v6681 = vpop.f32.mrf.mxu0
        %v6682 = vadd.f32 %v6653, %v6681
        %6683 = vdwg.mxu0
        %6684 = vmatpush.bf16.msra.mxu0 %v6582
        %6685 = vmatpush.bf16.msra.mxu0 %v6581
        %6686 = vmatpush.bf16.msra.mxu0 %v6580
        %6687 = vmatpush.bf16.msra.mxu0 %v6579
        %6688 = vmatpush.bf16.msra.mxu0 %v6578
        %6689 = vmatpush.bf16.msra.mxu0 %v6577
        %6690 = vmatpush.bf16.msra.mxu0 %v6576
        %6691 = vmatpush.bf16.msra.mxu0 %v6575
        %6692 = vmatmul.bf16.gmra.mxu0 %v6425
        %v6693 = vpop.f32.mrf.mxu0
        %v6694 = vadd.f32 %v6665, %v6693
        %v6695 = vpop.f32.mrf.mxu0
        %v6696 = vadd.f32 %v6667, %v6695
        %6697 = vmatmul.bf16.gmra.mxu0 %v6429
        %v6698 = vpop.f32.mrf.mxu0
        %v6699 = vadd.f32 %v6670, %v6698
        %v6700 = vpop.f32.mrf.mxu0
        %v6701 = vadd.f32 %v6672, %v6700
        %6702 = vmatmul.bf16.gmra.mxu0 %v6433
        %v6703 = vpop.f32.mrf.mxu0
        %v6704 = vadd.f32 %v6675, %v6703
        %v6705 = vpop.f32.mrf.mxu0
        %v6706 = vadd.f32 %v6677, %v6705
        %6707 = vmatmul.bf16.gmra.mxu0 %v6437
        %v6708 = vpop.f32.mrf.mxu0
        %v6709 = vadd.f32 %v6680, %v6708
        %v6710 = vpop.f32.mrf.mxu0
        %v6711 = vadd.f32 %v6682, %v6710
        %6712 = vdwg.mxu0
        %6713 = vmatpush.bf16.msra.mxu0 0
        %6714 = vmatpush.bf16.msra.mxu0 0
        %6715 = vmatpush.bf16.msra.mxu0 0
        %6716 = vmatpush.bf16.msra.mxu0 0
        %6717 = vmatpush.bf16.msra.mxu0 0
        %6718 = vmatpush.bf16.msra.mxu0 %v6585
        %6719 = vmatpush.bf16.msra.mxu0 %v6584
        %6720 = vmatpush.bf16.msra.mxu0 %v6583
        %6721 = vmatmul.bf16.gmra.mxu0 %v6615
        %v6722 = vpop.f32.mrf.mxu0
        %v6723 = vadd.f32 %v6694, %v6722
        %v6724 = vpop.f32.mrf.mxu0
        %v6725 = vadd.f32 %v6696, %v6724
        %6726 = vmatmul.bf16.gmra.mxu0 %v6618
        %v6727 = vpop.f32.mrf.mxu0
        %v6728 = vadd.f32 %v6699, %v6727
        %v6729 = vpop.f32.mrf.mxu0
        %v6730 = vadd.f32 %v6701, %v6729
        %6731 = vmatmul.bf16.gmra.mxu0 %v6621
        %v6732 = vpop.f32.mrf.mxu0
        %v6733 = vadd.f32 %v6704, %v6732
        %v6734 = vpop.f32.mrf.mxu0
        %v6735 = vadd.f32 %v6706, %v6734
        %6736 = vmatmul.bf16.gmra.mxu0 %v6624
        %v6737 = vpop.f32.mrf.mxu0
        %v6738 = vadd.f32 %v6709, %v6737
        %v6739 = vpop.f32.mrf.mxu0
        %v6740 = vadd.f32 %v6711, %v6739
        %6741 = vdwg.mxu0
        %v6742 = vld [vmem:[#allocation24] sm:$0x1]
        %v6744 = vperm.slane %v6742, 0
        %v6746 = vmul.f32 %v6723, %v6744
        %v6747 = vmul.f32 %v6725, %v6744
        %v6748 = vmul.f32 %v6728, %v6744
        %v6749 = vmul.f32 %v6730, %v6744
        %v6750 = vmul.f32 %v6733, %v6744
        %v6751 = vmul.f32 %v6735, %v6744
        %v6752 = vmul.f32 %v6738, %v6744
        %v6753 = vmul.f32 %v6740, %v6744
        %v6754 = vld [vmem:[#allocation26] sm:$0x1]
        %v6756 = vperm.slane %v6754, 0
        %v6758 = vadd.f32 %v6746, %v6756
        %v6759 = vadd.f32 %v6747, %v6756
        %v6760 = vadd.f32 %v6748, %v6756
        %v6761 = vadd.f32 %v6749, %v6756
        %v6762 = vadd.f32 %v6750, %v6756
        %v6763 = vadd.f32 %v6751, %v6756
        %v6764 = vadd.f32 %v6752, %v6756
        %v6765 = vadd.f32 %v6753, %v6756
        %v6766 = vmax.f32 %v6758, 0.0
        %v6767 = vmax.f32 %v6759, 0.0
        %v6768 = vmax.f32 %v6760, 0.0
        %v6769 = vmax.f32 %v6761, 0.0
        %v6770 = vmax.f32 %v6762, 0.0
        %v6771 = vmax.f32 %v6763, 0.0
        %v6772 = vmax.f32 %v6764, 0.0
        %v6773 = vmax.f32 %v6765, 0.0
        %vm6774 = vcmask 388096
        %6775 = vst.msk [vmem:[#allocation3] sm:$0xf] %vm6774, 0
        %vm6776 = vcmask 385024
        %6777 = vst.msk [vmem:[#allocation3 + $0x4] sm:$0x1] %vm6776, 0
        %s6778 = scalar_lea.vmem [#allocation3], 72
        %6779 = vst.msk [vmem:[%s6778] sm:$0xf] %vm6774, 0
        %6780 = vst.msk [vmem:[%s6778 + $0x4] sm:$0x1] %vm6776, 0
        %s6781 = scalar_lea.vmem [#allocation3], 8
        %vm6782 = vcmask 385024
        %vm6783 = vsmask.f32 256
        %vm6784 = vmand %vm6782, %vm6783
        %v6785 = vld [vmem:[%s6781] sm:$0x1]
        %v6786 = vsel %vm6784, 0, %v6785
        %6787 = vst [vmem:[%s6781] sm:$0x1] %v6786
        %v6788 = vld [vmem:[%s6781 + $0x8] sm:$0x1]
        %v6789 = vsel %vm6784, 0, %v6788
        %6790 = vst [vmem:[%s6781 + $0x8] sm:$0x1] %v6789
        %v6791 = vld [vmem:[%s6781 + $0x10] sm:$0x1]
        %v6792 = vsel %vm6784, 0, %v6791
        %6793 = vst [vmem:[%s6781 + $0x10] sm:$0x1] %v6792
        %v6794 = vld [vmem:[%s6781 + $0x18] sm:$0x1]
        %v6795 = vsel %vm6784, 0, %v6794
        %6796 = vst [vmem:[%s6781 + $0x18] sm:$0x1] %v6795
        %v6797 = vld [vmem:[%s6781 + $0x20] sm:$0x1]
        %v6798 = vsel %vm6784, 0, %v6797
        %6799 = vst [vmem:[%s6781 + $0x20] sm:$0x1] %v6798
        %v6800 = vld [vmem:[%s6781 + $0x28] sm:$0x1]
        %v6801 = vsel %vm6784, 0, %v6800
        %6802 = vst [vmem:[%s6781 + $0x28] sm:$0x1] %v6801
        %v6803 = vld [vmem:[%s6781 + $0x30] sm:$0x1]
        %v6804 = vsel %vm6784, 0, %v6803
        %6805 = vst [vmem:[%s6781 + $0x30] sm:$0x1] %v6804
        %v6806 = vld [vmem:[%s6781 + $0x38] sm:$0x1]
        %v6807 = vsel %vm6784, 0, %v6806
        %6808 = vst [vmem:[%s6781 + $0x38] sm:$0x1] %v6807
        %vm6809 = vsmask.f32 7938
        %vm6810 = vmand %vm6782, %vm6809
        %v6811 = vld [vmem:[%s6781 + $0x4] sm:$0x1]
        %v6812 = vsel %vm6810, 0, %v6811
        %6813 = vst [vmem:[%s6781 + $0x4] sm:$0x1] %v6812
        %v6814 = vld [vmem:[%s6781 + $0xc] sm:$0x1]
        %v6815 = vsel %vm6810, 0, %v6814
        %6816 = vst [vmem:[%s6781 + $0xc] sm:$0x1] %v6815
        %v6817 = vld [vmem:[%s6781 + $0x14] sm:$0x1]
        %v6818 = vsel %vm6810, 0, %v6817
        %6819 = vst [vmem:[%s6781 + $0x14] sm:$0x1] %v6818
        %v6820 = vld [vmem:[%s6781 + $0x1c] sm:$0x1]
        %v6821 = vsel %vm6810, 0, %v6820
        %6822 = vst [vmem:[%s6781 + $0x1c] sm:$0x1] %v6821
        %v6823 = vld [vmem:[%s6781 + $0x24] sm:$0x1]
        %v6824 = vsel %vm6810, 0, %v6823
        %6825 = vst [vmem:[%s6781 + $0x24] sm:$0x1] %v6824
        %v6826 = vld [vmem:[%s6781 + $0x2c] sm:$0x1]
        %v6827 = vsel %vm6810, 0, %v6826
        %6828 = vst [vmem:[%s6781 + $0x2c] sm:$0x1] %v6827
        %v6829 = vld [vmem:[%s6781 + $0x34] sm:$0x1]
        %v6830 = vsel %vm6810, 0, %v6829
        %6831 = vst [vmem:[%s6781 + $0x34] sm:$0x1] %v6830
        %v6832 = vld [vmem:[%s6781 + $0x3c] sm:$0x1]
        %v6833 = vsel %vm6810, 0, %v6832
        %6834 = vst [vmem:[%s6781 + $0x3c] sm:$0x1] %v6833
        %v6835 = vpack.c.bf16 %v6766, %v6766
        %v6836 = vpack.c.bf16 %v6767, %v6767
        %v6837 = vpack.c.bf16 %v6768, %v6768
        %v6838 = vpack.c.bf16 %v6769, %v6769
        %v6839 = vpack.c.bf16 %v6770, %v6770
        %v6840 = vpack.c.bf16 %v6771, %v6771
        %v6841 = vpack.c.bf16 %v6772, %v6772
        %v6842 = vpack.c.bf16 %v6773, %v6773
        %v6844 = vshrl.u32 %v6835, 16
        %v6846 = vrot.slane %v6844, 7
        %v6847 = vshll.u32 %v6835, 16
        %v6849 = vor.u32 %v6846, %v6847
        %v6850 = vrot.slane %v6846, 4
        %v6852 = vshrl.u32 %v6836, 16
        %v6854 = vrot.slane %v6852, 7
        %v6855 = vshll.u32 %v6836, 16
        %v6857 = vor.u32 %v6854, %v6855
        %v6858 = vrot.slane %v6854, 4
        %v6860 = vshrl.u32 %v6837, 16
        %v6862 = vrot.slane %v6860, 7
        %v6863 = vshll.u32 %v6837, 16
        %v6865 = vor.u32 %v6862, %v6863
        %v6866 = vrot.slane %v6862, 4
        %v6868 = vshrl.u32 %v6838, 16
        %v6870 = vrot.slane %v6868, 7
        %v6871 = vshll.u32 %v6838, 16
        %v6873 = vor.u32 %v6870, %v6871
        %v6874 = vrot.slane %v6870, 4
        %v6876 = vshrl.u32 %v6839, 16
        %v6878 = vrot.slane %v6876, 7
        %v6879 = vshll.u32 %v6839, 16
        %v6881 = vor.u32 %v6878, %v6879
        %v6882 = vrot.slane %v6878, 4
        %v6884 = vshrl.u32 %v6840, 16
        %v6886 = vrot.slane %v6884, 7
        %v6887 = vshll.u32 %v6840, 16
        %v6889 = vor.u32 %v6886, %v6887
        %v6890 = vrot.slane %v6886, 4
        %v6892 = vshrl.u32 %v6841, 16
        %v6894 = vrot.slane %v6892, 7
        %v6895 = vshll.u32 %v6841, 16
        %v6897 = vor.u32 %v6894, %v6895
        %v6898 = vrot.slane %v6894, 4
        %v6900 = vshrl.u32 %v6842, 16
        %v6902 = vrot.slane %v6900, 7
        %v6903 = vshll.u32 %v6842, 16
        %v6905 = vor.u32 %v6902, %v6903
        %v6906 = vrot.slane %v6902, 4
        %vm6923 = vcmask 388096
        %vm6924 = vmand %vm6923, %vm6809
        %v6925 = vld [vmem:[%s6781] sm:$0xf]
        %v6926 = vsel %vm6924, %v6849, %v6925
        %6927 = vst [vmem:[%s6781] sm:$0xf] %v6926
        %v6928 = vld [vmem:[%s6781 + $0x4] sm:$0x1]
        %v6929 = vsel %vm6784, %v6850, %v6928
        %6930 = vst [vmem:[%s6781 + $0x4] sm:$0x1] %v6929
        %v6931 = vld [vmem:[%s6781 + $0x8] sm:$0xf]
        %v6932 = vsel %vm6924, %v6857, %v6931
        %6933 = vst [vmem:[%s6781 + $0x8] sm:$0xf] %v6932
        %v6934 = vld [vmem:[%s6781 + $0xc] sm:$0x1]
        %v6935 = vsel %vm6784, %v6858, %v6934
        %6936 = vst [vmem:[%s6781 + $0xc] sm:$0x1] %v6935
        %v6937 = vld [vmem:[%s6781 + $0x10] sm:$0xf]
        %v6938 = vsel %vm6924, %v6865, %v6937
        %6939 = vst [vmem:[%s6781 + $0x10] sm:$0xf] %v6938
        %v6940 = vld [vmem:[%s6781 + $0x14] sm:$0x1]
        %v6941 = vsel %vm6784, %v6866, %v6940
        %6942 = vst [vmem:[%s6781 + $0x14] sm:$0x1] %v6941
        %v6943 = vld [vmem:[%s6781 + $0x18] sm:$0xf]
        %v6944 = vsel %vm6924, %v6873, %v6943
        %6945 = vst [vmem:[%s6781 + $0x18] sm:$0xf] %v6944
        %v6946 = vld [vmem:[%s6781 + $0x1c] sm:$0x1]
        %v6947 = vsel %vm6784, %v6874, %v6946
        %6948 = vst [vmem:[%s6781 + $0x1c] sm:$0x1] %v6947
        %v6949 = vld [vmem:[%s6781 + $0x20] sm:$0xf]
        %v6950 = vsel %vm6924, %v6881, %v6949
        %6951 = vst [vmem:[%s6781 + $0x20] sm:$0xf] %v6950
        %v6952 = vld [vmem:[%s6781 + $0x24] sm:$0x1]
        %v6953 = vsel %vm6784, %v6882, %v6952
        %6954 = vst [vmem:[%s6781 + $0x24] sm:$0x1] %v6953
        %v6955 = vld [vmem:[%s6781 + $0x28] sm:$0xf]
        %v6956 = vsel %vm6924, %v6889, %v6955
        %6957 = vst [vmem:[%s6781 + $0x28] sm:$0xf] %v6956
        %v6958 = vld [vmem:[%s6781 + $0x2c] sm:$0x1]
        %v6959 = vsel %vm6784, %v6890, %v6958
        %6960 = vst [vmem:[%s6781 + $0x2c] sm:$0x1] %v6959
        %v6961 = vld [vmem:[%s6781 + $0x30] sm:$0xf]
        %v6962 = vsel %vm6924, %v6897, %v6961
        %6963 = vst [vmem:[%s6781 + $0x30] sm:$0xf] %v6962
        %v6964 = vld [vmem:[%s6781 + $0x34] sm:$0x1]
        %v6965 = vsel %vm6784, %v6898, %v6964
        %6966 = vst [vmem:[%s6781 + $0x34] sm:$0x1] %v6965
        %v6967 = vld [vmem:[%s6781 + $0x38] sm:$0xf]
        %v6968 = vsel %vm6924, %v6905, %v6967
        %6969 = vst [vmem:[%s6781 + $0x38] sm:$0xf] %v6968
        %v6970 = vld [vmem:[%s6781 + $0x3c] sm:$0x1]
        %v6971 = vsel %vm6784, %v6906, %v6970
        %6972 = vst [vmem:[%s6781 + $0x3c] sm:$0x1] %v6971
        %v6973 = vld [vmem:[#allocation3] sm:$0xf]
        %v6974 = vld [vmem:[#allocation3 + $0x8] sm:$0xf]
        %v6975 = vld [vmem:[#allocation3 + $0x10] sm:$0xf]
        %v6976 = vld [vmem:[#allocation3 + $0x18] sm:$0xf]
        %v6977 = vld [vmem:[#allocation3 + $0x20] sm:$0xf]
        %v6978 = vld [vmem:[#allocation3 + $0x28] sm:$0xf]
        %v6979 = vld [vmem:[#allocation3 + $0x30] sm:$0xf]
        %v6980 = vld [vmem:[#allocation3 + $0x38] sm:$0xf]
        %6981 = vst.msk [vmem:[#allocation5] sm:$0xf] %vm6774, %v6973
        %6982 = vst.msk [vmem:[#allocation5 + $0x10] sm:$0xf] %vm6774, %v6974
        %6983 = vst.msk [vmem:[#allocation5 + $0x20] sm:$0xf] %vm6774, %v6975
        %6984 = vst.msk [vmem:[#allocation5 + $0x30] sm:$0xf] %vm6774, %v6976
        %6985 = vst.msk [vmem:[#allocation5 + $0x40] sm:$0xf] %vm6774, %v6977
        %6986 = vst.msk [vmem:[#allocation5 + $0x50] sm:$0xf] %vm6774, %v6978
        %6987 = vst.msk [vmem:[#allocation5 + $0x60] sm:$0xf] %vm6774, %v6979
        %6988 = vst.msk [vmem:[#allocation5 + $0x70] sm:$0xf] %vm6774, %v6980
        %v6989 = vld [vmem:[#allocation3] sm:$0xf]
        %v6990 = vld [vmem:[#allocation3 + $0x4] sm:$0x1]
        %v6991 = vld [vmem:[#allocation3 + $0x8] sm:$0xf]
        %v6992 = vld [vmem:[#allocation3 + $0xc] sm:$0x1]
        %v6993 = vld [vmem:[#allocation3 + $0x10] sm:$0xf]
        %v6994 = vld [vmem:[#allocation3 + $0x14] sm:$0x1]
        %v6995 = vld [vmem:[#allocation3 + $0x18] sm:$0xf]
        %v6996 = vld [vmem:[#allocation3 + $0x1c] sm:$0x1]
        %v6997 = vld [vmem:[#allocation3 + $0x20] sm:$0xf]
        %v6998 = vld [vmem:[#allocation3 + $0x24] sm:$0x1]
        %v6999 = vld [vmem:[#allocation3 + $0x28] sm:$0xf]
        %v7000 = vld [vmem:[#allocation3 + $0x2c] sm:$0x1]
        %v7001 = vld [vmem:[#allocation3 + $0x30] sm:$0xf]
        %v7002 = vld [vmem:[#allocation3 + $0x34] sm:$0x1]
        %v7003 = vld [vmem:[#allocation3 + $0x38] sm:$0xf]
        %v7004 = vld [vmem:[#allocation3 + $0x3c] sm:$0x1]
        %v7006 = vshrl.u32 %v6989, 16
        %v7008 = vrot.slane %v7006, 4
        %v7009 = vshll.u32 %v6989, 16
        %v7011 = vrot.slane %v7009, 5
        %v7012 = vor.u32 %v7008, %v7011
        %v7013 = vrot.slane %v7012, 4
        %v7015 = vshll.u32 %v6990, 16
        %v7017 = vrot.slane %v7015, 5
        %v7018 = vsel %vm3721, %v7013, %v7017
        %v7020 = vshrl.u32 %v6991, 16
        %v7022 = vrot.slane %v7020, 4
        %v7023 = vshll.u32 %v6991, 16
        %v7025 = vrot.slane %v7023, 5
        %v7026 = vor.u32 %v7022, %v7025
        %v7027 = vrot.slane %v7026, 4
        %v7029 = vshll.u32 %v6992, 16
        %v7031 = vrot.slane %v7029, 5
        %v7032 = vsel %vm3721, %v7027, %v7031
        %v7034 = vshrl.u32 %v6993, 16
        %v7036 = vrot.slane %v7034, 4
        %v7037 = vshll.u32 %v6993, 16
        %v7039 = vrot.slane %v7037, 5
        %v7040 = vor.u32 %v7036, %v7039
        %v7041 = vrot.slane %v7040, 4
        %v7043 = vshll.u32 %v6994, 16
        %v7045 = vrot.slane %v7043, 5
        %v7046 = vsel %vm3721, %v7041, %v7045
        %v7048 = vshrl.u32 %v6995, 16
        %v7050 = vrot.slane %v7048, 4
        %v7051 = vshll.u32 %v6995, 16
        %v7053 = vrot.slane %v7051, 5
        %v7054 = vor.u32 %v7050, %v7053
        %v7055 = vrot.slane %v7054, 4
        %v7057 = vshll.u32 %v6996, 16
        %v7059 = vrot.slane %v7057, 5
        %v7060 = vsel %vm3721, %v7055, %v7059
        %v7062 = vshrl.u32 %v6997, 16
        %v7064 = vrot.slane %v7062, 4
        %v7065 = vshll.u32 %v6997, 16
        %v7067 = vrot.slane %v7065, 5
        %v7068 = vor.u32 %v7064, %v7067
        %v7069 = vrot.slane %v7068, 4
        %v7071 = vshll.u32 %v6998, 16
        %v7073 = vrot.slane %v7071, 5
        %v7074 = vsel %vm3721, %v7069, %v7073
        %v7076 = vshrl.u32 %v6999, 16
        %v7078 = vrot.slane %v7076, 4
        %v7079 = vshll.u32 %v6999, 16
        %v7081 = vrot.slane %v7079, 5
        %v7082 = vor.u32 %v7078, %v7081
        %v7083 = vrot.slane %v7082, 4
        %v7085 = vshll.u32 %v7000, 16
        %v7087 = vrot.slane %v7085, 5
        %v7088 = vsel %vm3721, %v7083, %v7087
        %v7090 = vshrl.u32 %v7001, 16
        %v7092 = vrot.slane %v7090, 4
        %v7093 = vshll.u32 %v7001, 16
        %v7095 = vrot.slane %v7093, 5
        %v7096 = vor.u32 %v7092, %v7095
        %v7097 = vrot.slane %v7096, 4
        %v7099 = vshll.u32 %v7002, 16
        %v7101 = vrot.slane %v7099, 5
        %v7102 = vsel %vm3721, %v7097, %v7101
        %v7104 = vshrl.u32 %v7003, 16
        %v7106 = vrot.slane %v7104, 4
        %v7107 = vshll.u32 %v7003, 16
        %v7109 = vrot.slane %v7107, 5
        %v7110 = vor.u32 %v7106, %v7109
        %v7111 = vrot.slane %v7110, 4
        %v7113 = vshll.u32 %v7004, 16
        %v7115 = vrot.slane %v7113, 5
        %v7116 = vsel %vm3721, %v7111, %v7115
        %7117 = vrot.lane.b32.xlu0 %v7018, 48
        %v7118 = vpop.permute.xlu0 %7117
        %7119 = vrot.lane.b32.xlu0 %v7032, 48
        %v7120 = vpop.permute.xlu0 %7119
        %7121 = vrot.lane.b32.xlu0 %v7046, 48
        %v7122 = vpop.permute.xlu0 %7121
        %7123 = vrot.lane.b32.xlu0 %v7060, 48
        %v7124 = vpop.permute.xlu0 %7123
        %7125 = vrot.lane.b32.xlu0 %v7074, 48
        %v7126 = vpop.permute.xlu0 %7125
        %7127 = vrot.lane.b32.xlu0 %v7088, 48
        %v7128 = vpop.permute.xlu0 %7127
        %7129 = vrot.lane.b32.xlu0 %v7102, 48
        %v7130 = vpop.permute.xlu0 %7129
        %7131 = vrot.lane.b32.xlu0 %v7116, 48
        %v7132 = vpop.permute.xlu0 %7131
        %vm7141 = vcmask 781696
        %7142 = vst.msk [vmem:[#allocation5] sm:$0xf] %vm7141, %v7118
        %7143 = vst.msk [vmem:[#allocation5 + $0x10] sm:$0xf] %vm7141, %v7120
        %7144 = vst.msk [vmem:[#allocation5 + $0x20] sm:$0xf] %vm7141, %v7122
        %7145 = vst.msk [vmem:[#allocation5 + $0x30] sm:$0xf] %vm7141, %v7124
        %7146 = vst.msk [vmem:[#allocation5 + $0x40] sm:$0xf] %vm7141, %v7126
        %7147 = vst.msk [vmem:[#allocation5 + $0x50] sm:$0xf] %vm7141, %v7128
        %7148 = vst.msk [vmem:[#allocation5 + $0x60] sm:$0xf] %vm7141, %v7130
        %7149 = vst.msk [vmem:[#allocation5 + $0x70] sm:$0xf] %vm7141, %v7132
        %v7150 = vld [vmem:[#allocation3] sm:$0xe]
        %v7151 = vld [vmem:[#allocation3 + $0x4] sm:$0x1]
        %v7152 = vld [vmem:[#allocation3 + $0x8] sm:$0xe]
        %v7153 = vld [vmem:[#allocation3 + $0xc] sm:$0x1]
        %v7154 = vld [vmem:[#allocation3 + $0x10] sm:$0xe]
        %v7155 = vld [vmem:[#allocation3 + $0x14] sm:$0x1]
        %v7156 = vld [vmem:[#allocation3 + $0x18] sm:$0xe]
        %v7157 = vld [vmem:[#allocation3 + $0x1c] sm:$0x1]
        %v7158 = vld [vmem:[#allocation3 + $0x20] sm:$0xe]
        %v7159 = vld [vmem:[#allocation3 + $0x24] sm:$0x1]
        %v7160 = vld [vmem:[#allocation3 + $0x28] sm:$0xe]
        %v7161 = vld [vmem:[#allocation3 + $0x2c] sm:$0x1]
        %v7162 = vld [vmem:[#allocation3 + $0x30] sm:$0xe]
        %v7163 = vld [vmem:[#allocation3 + $0x34] sm:$0x1]
        %v7164 = vld [vmem:[#allocation3 + $0x38] sm:$0xe]
        %v7165 = vld [vmem:[#allocation3 + $0x3c] sm:$0x1]
        %v7182 = vrot.slane %v7150, 5
        %v7183 = vrot.slane %v7182, 4
        %v7184 = vrot.slane %v7151, 5
        %v7185 = vsel %vm2599, %v7183, %v7184
        %v7186 = vrot.slane %v7152, 5
        %v7187 = vrot.slane %v7186, 4
        %v7188 = vrot.slane %v7153, 5
        %v7189 = vsel %vm2599, %v7187, %v7188
        %v7190 = vrot.slane %v7154, 5
        %v7191 = vrot.slane %v7190, 4
        %v7192 = vrot.slane %v7155, 5
        %v7193 = vsel %vm2599, %v7191, %v7192
        %v7194 = vrot.slane %v7156, 5
        %v7195 = vrot.slane %v7194, 4
        %v7196 = vrot.slane %v7157, 5
        %v7197 = vsel %vm2599, %v7195, %v7196
        %v7198 = vrot.slane %v7158, 5
        %v7199 = vrot.slane %v7198, 4
        %v7200 = vrot.slane %v7159, 5
        %v7201 = vsel %vm2599, %v7199, %v7200
        %v7202 = vrot.slane %v7160, 5
        %v7203 = vrot.slane %v7202, 4
        %v7204 = vrot.slane %v7161, 5
        %v7205 = vsel %vm2599, %v7203, %v7204
        %v7206 = vrot.slane %v7162, 5
        %v7207 = vrot.slane %v7206, 4
        %v7208 = vrot.slane %v7163, 5
        %v7209 = vsel %vm2599, %v7207, %v7208
        %v7210 = vrot.slane %v7164, 5
        %v7211 = vrot.slane %v7210, 4
        %v7212 = vrot.slane %v7165, 5
        %v7213 = vsel %vm2599, %v7211, %v7212
        %7214 = vrot.lane.b32.xlu0 %v7185, 96
        %v7215 = vpop.permute.xlu0 %7214
        %7216 = vrot.lane.b32.xlu0 %v7189, 96
        %v7217 = vpop.permute.xlu0 %7216
        %7218 = vrot.lane.b32.xlu0 %v7193, 96
        %v7219 = vpop.permute.xlu0 %7218
        %7220 = vrot.lane.b32.xlu0 %v7197, 96
        %v7221 = vpop.permute.xlu0 %7220
        %7222 = vrot.lane.b32.xlu0 %v7201, 96
        %v7223 = vpop.permute.xlu0 %7222
        %7224 = vrot.lane.b32.xlu0 %v7205, 96
        %v7225 = vpop.permute.xlu0 %7224
        %7226 = vrot.lane.b32.xlu0 %v7209, 96
        %v7227 = vpop.permute.xlu0 %7226
        %7228 = vrot.lane.b32.xlu0 %v7213, 96
        %v7229 = vpop.permute.xlu0 %7228
        %v7230 = vrot.slane %v7215, 4
        %v7231 = vrot.slane %v7217, 4
        %v7232 = vrot.slane %v7219, 4
        %v7233 = vrot.slane %v7221, 4
        %v7234 = vrot.slane %v7223, 4
        %v7235 = vrot.slane %v7225, 4
        %v7236 = vrot.slane %v7227, 4
        %v7237 = vrot.slane %v7229, 4
        %vm7238 = vcmask 785408
        %v7239 = vsel %vm7238, %v7230, %v7215
        %v7240 = vsel %vm7238, %v7231, %v7217
        %v7241 = vsel %vm7238, %v7232, %v7219
        %v7242 = vsel %vm7238, %v7233, %v7221
        %v7243 = vsel %vm7238, %v7234, %v7223
        %v7244 = vsel %vm7238, %v7235, %v7225
        %v7245 = vsel %vm7238, %v7236, %v7227
        %v7246 = vsel %vm7238, %v7237, %v7229
        %vm7255 = vcmask 1044224
        %vm7256 = vcmask 130052
        %vm7257 = vmor %vm7256, %vm7255
        %7258 = vst.msk [vmem:[#allocation5] sm:$0xff] %vm7257, %v7239
        %7259 = vst.msk [vmem:[#allocation5 + $0x10] sm:$0xff] %vm7257, %v7240
        %7260 = vst.msk [vmem:[#allocation5 + $0x20] sm:$0xff] %vm7257, %v7241
        %7261 = vst.msk [vmem:[#allocation5 + $0x30] sm:$0xff] %vm7257, %v7242
        %7262 = vst.msk [vmem:[#allocation5 + $0x40] sm:$0xff] %vm7257, %v7243
        %7263 = vst.msk [vmem:[#allocation5 + $0x50] sm:$0xff] %vm7257, %v7244
        %7264 = vst.msk [vmem:[#allocation5 + $0x60] sm:$0xff] %vm7257, %v7245
        %7265 = vst.msk [vmem:[#allocation5 + $0x70] sm:$0xff] %vm7257, %v7246
        %v7266 = vld [vmem:[%s6781] sm:$0xf]
        %v7267 = vld [vmem:[%s6781 + $0x8] sm:$0xf]
        %v7268 = vld [vmem:[%s6781 + $0x10] sm:$0xf]
        %v7269 = vld [vmem:[%s6781 + $0x18] sm:$0xf]
        %v7270 = vld [vmem:[%s6781 + $0x20] sm:$0xf]
        %v7271 = vld [vmem:[%s6781 + $0x28] sm:$0xf]
        %v7272 = vld [vmem:[%s6781 + $0x30] sm:$0xf]
        %v7273 = vld [vmem:[%s6781 + $0x38] sm:$0xf]
        %7282 = vrot.lane.b32.xlu0 %v7266, 16
        %v7283 = vpop.permute.xlu0 %7282
        %7284 = vrot.lane.b32.xlu0 %v7267, 16
        %v7285 = vpop.permute.xlu0 %7284
        %7286 = vrot.lane.b32.xlu0 %v7268, 16
        %v7287 = vpop.permute.xlu0 %7286
        %7288 = vrot.lane.b32.xlu0 %v7269, 16
        %v7289 = vpop.permute.xlu0 %7288
        %7290 = vrot.lane.b32.xlu0 %v7270, 16
        %v7291 = vpop.permute.xlu0 %7290
        %7292 = vrot.lane.b32.xlu0 %v7271, 16
        %v7293 = vpop.permute.xlu0 %7292
        %7294 = vrot.lane.b32.xlu0 %v7272, 16
        %v7295 = vpop.permute.xlu0 %7294
        %7296 = vrot.lane.b32.xlu0 %v7273, 16
        %v7297 = vpop.permute.xlu0 %7296
        %vm7306 = vcmask 519296
        %7307 = vst.msk [vmem:[#allocation5 + $0x4] sm:$0xf] %vm7306, %v7283
        %7308 = vst.msk [vmem:[#allocation5 + $0x14] sm:$0xf] %vm7306, %v7285
        %7309 = vst.msk [vmem:[#allocation5 + $0x24] sm:$0xf] %vm7306, %v7287
        %7310 = vst.msk [vmem:[#allocation5 + $0x34] sm:$0xf] %vm7306, %v7289
        %7311 = vst.msk [vmem:[#allocation5 + $0x44] sm:$0xf] %vm7306, %v7291
        %7312 = vst.msk [vmem:[#allocation5 + $0x54] sm:$0xf] %vm7306, %v7293
        %7313 = vst.msk [vmem:[#allocation5 + $0x64] sm:$0xf] %vm7306, %v7295
        %7314 = vst.msk [vmem:[#allocation5 + $0x74] sm:$0xf] %vm7306, %v7297
        %v7315 = vld [vmem:[%s6781] sm:$0xf]
        %v7316 = vld [vmem:[%s6781 + $0x4] sm:$0x1]
        %v7317 = vld [vmem:[%s6781 + $0x8] sm:$0xf]
        %v7318 = vld [vmem:[%s6781 + $0xc] sm:$0x1]
        %v7319 = vld [vmem:[%s6781 + $0x10] sm:$0xf]
        %v7320 = vld [vmem:[%s6781 + $0x14] sm:$0x1]
        %v7321 = vld [vmem:[%s6781 + $0x18] sm:$0xf]
        %v7322 = vld [vmem:[%s6781 + $0x1c] sm:$0x1]
        %v7323 = vld [vmem:[%s6781 + $0x20] sm:$0xf]
        %v7324 = vld [vmem:[%s6781 + $0x24] sm:$0x1]
        %v7325 = vld [vmem:[%s6781 + $0x28] sm:$0xf]
        %v7326 = vld [vmem:[%s6781 + $0x2c] sm:$0x1]
        %v7327 = vld [vmem:[%s6781 + $0x30] sm:$0xf]
        %v7328 = vld [vmem:[%s6781 + $0x34] sm:$0x1]
        %v7329 = vld [vmem:[%s6781 + $0x38] sm:$0xf]
        %v7330 = vld [vmem:[%s6781 + $0x3c] sm:$0x1]
        %v7332 = vshrl.u32 %v7315, 16
        %v7334 = vrot.slane %v7332, 4
        %v7335 = vshll.u32 %v7315, 16
        %v7337 = vrot.slane %v7335, 5
        %v7338 = vor.u32 %v7334, %v7337
        %v7339 = vrot.slane %v7338, 4
        %v7341 = vshll.u32 %v7316, 16
        %v7343 = vrot.slane %v7341, 5
        %v7344 = vsel %vm3721, %v7339, %v7343
        %v7346 = vshrl.u32 %v7317, 16
        %v7348 = vrot.slane %v7346, 4
        %v7349 = vshll.u32 %v7317, 16
        %v7351 = vrot.slane %v7349, 5
        %v7352 = vor.u32 %v7348, %v7351
        %v7353 = vrot.slane %v7352, 4
        %v7355 = vshll.u32 %v7318, 16
        %v7357 = vrot.slane %v7355, 5
        %v7358 = vsel %vm3721, %v7353, %v7357
        %v7360 = vshrl.u32 %v7319, 16
        %v7362 = vrot.slane %v7360, 4
        %v7363 = vshll.u32 %v7319, 16
        %v7365 = vrot.slane %v7363, 5
        %v7366 = vor.u32 %v7362, %v7365
        %v7367 = vrot.slane %v7366, 4
        %v7369 = vshll.u32 %v7320, 16
        %v7371 = vrot.slane %v7369, 5
        %v7372 = vsel %vm3721, %v7367, %v7371
        %v7374 = vshrl.u32 %v7321, 16
        %v7376 = vrot.slane %v7374, 4
        %v7377 = vshll.u32 %v7321, 16
        %v7379 = vrot.slane %v7377, 5
        %v7380 = vor.u32 %v7376, %v7379
        %v7381 = vrot.slane %v7380, 4
        %v7383 = vshll.u32 %v7322, 16
        %v7385 = vrot.slane %v7383, 5
        %v7386 = vsel %vm3721, %v7381, %v7385
        %v7388 = vshrl.u32 %v7323, 16
        %v7390 = vrot.slane %v7388, 4
        %v7391 = vshll.u32 %v7323, 16
        %v7393 = vrot.slane %v7391, 5
        %v7394 = vor.u32 %v7390, %v7393
        %v7395 = vrot.slane %v7394, 4
        %v7397 = vshll.u32 %v7324, 16
        %v7399 = vrot.slane %v7397, 5
        %v7400 = vsel %vm3721, %v7395, %v7399
        %v7402 = vshrl.u32 %v7325, 16
        %v7404 = vrot.slane %v7402, 4
        %v7405 = vshll.u32 %v7325, 16
        %v7407 = vrot.slane %v7405, 5
        %v7408 = vor.u32 %v7404, %v7407
        %v7409 = vrot.slane %v7408, 4
        %v7411 = vshll.u32 %v7326, 16
        %v7413 = vrot.slane %v7411, 5
        %v7414 = vsel %vm3721, %v7409, %v7413
        %v7416 = vshrl.u32 %v7327, 16
        %v7418 = vrot.slane %v7416, 4
        %v7419 = vshll.u32 %v7327, 16
        %v7421 = vrot.slane %v7419, 5
        %v7422 = vor.u32 %v7418, %v7421
        %v7423 = vrot.slane %v7422, 4
        %v7425 = vshll.u32 %v7328, 16
        %v7427 = vrot.slane %v7425, 5
        %v7428 = vsel %vm3721, %v7423, %v7427
        %v7430 = vshrl.u32 %v7329, 16
        %v7432 = vrot.slane %v7430, 4
        %v7433 = vshll.u32 %v7329, 16
        %v7435 = vrot.slane %v7433, 5
        %v7436 = vor.u32 %v7432, %v7435
        %v7437 = vrot.slane %v7436, 4
        %v7439 = vshll.u32 %v7330, 16
        %v7441 = vrot.slane %v7439, 5
        %v7442 = vsel %vm3721, %v7437, %v7441
        %7443 = vrot.lane.b32.xlu0 %v7344, 64
        %v7444 = vpop.permute.xlu0 %7443
        %7445 = vrot.lane.b32.xlu0 %v7358, 64
        %v7446 = vpop.permute.xlu0 %7445
        %7447 = vrot.lane.b32.xlu0 %v7372, 64
        %v7448 = vpop.permute.xlu0 %7447
        %7449 = vrot.lane.b32.xlu0 %v7386, 64
        %v7450 = vpop.permute.xlu0 %7449
        %7451 = vrot.lane.b32.xlu0 %v7400, 64
        %v7452 = vpop.permute.xlu0 %7451
        %7453 = vrot.lane.b32.xlu0 %v7414, 64
        %v7454 = vpop.permute.xlu0 %7453
        %7455 = vrot.lane.b32.xlu0 %v7428, 64
        %v7456 = vpop.permute.xlu0 %7455
        %7457 = vrot.lane.b32.xlu0 %v7442, 64
        %v7458 = vpop.permute.xlu0 %7457
        %vm7467 = vcmask 912896
        %7468 = vst.msk [vmem:[#allocation5 + $0x4] sm:$0xf] %vm7467, %v7444
        %7469 = vst.msk [vmem:[#allocation5 + $0x14] sm:$0xf] %vm7467, %v7446
        %7470 = vst.msk [vmem:[#allocation5 + $0x24] sm:$0xf] %vm7467, %v7448
        %7471 = vst.msk [vmem:[#allocation5 + $0x34] sm:$0xf] %vm7467, %v7450
        %7472 = vst.msk [vmem:[#allocation5 + $0x44] sm:$0xf] %vm7467, %v7452
        %7473 = vst.msk [vmem:[#allocation5 + $0x54] sm:$0xf] %vm7467, %v7454
        %7474 = vst.msk [vmem:[#allocation5 + $0x64] sm:$0xf] %vm7467, %v7456
        %7475 = vst.msk [vmem:[#allocation5 + $0x74] sm:$0xf] %vm7467, %v7458
        %v7476 = vld [vmem:[%s6781] sm:$0xe]
        %v7477 = vld [vmem:[%s6781 + $0x4] sm:$0x1]
        %v7478 = vld [vmem:[%s6781 + $0x8] sm:$0xe]
        %v7479 = vld [vmem:[%s6781 + $0xc] sm:$0x1]
        %v7480 = vld [vmem:[%s6781 + $0x10] sm:$0xe]
        %v7481 = vld [vmem:[%s6781 + $0x14] sm:$0x1]
        %v7482 = vld [vmem:[%s6781 + $0x18] sm:$0xe]
        %v7483 = vld [vmem:[%s6781 + $0x1c] sm:$0x1]
        %v7484 = vld [vmem:[%s6781 + $0x20] sm:$0xe]
        %v7485 = vld [vmem:[%s6781 + $0x24] sm:$0x1]
        %v7486 = vld [vmem:[%s6781 + $0x28] sm:$0xe]
        %v7487 = vld [vmem:[%s6781 + $0x2c] sm:$0x1]
        %v7488 = vld [vmem:[%s6781 + $0x30] sm:$0xe]
        %v7489 = vld [vmem:[%s6781 + $0x34] sm:$0x1]
        %v7490 = vld [vmem:[%s6781 + $0x38] sm:$0xe]
        %v7491 = vld [vmem:[%s6781 + $0x3c] sm:$0x1]
        %v7508 = vrot.slane %v7476, 5
        %v7509 = vrot.slane %v7508, 4
        %v7510 = vrot.slane %v7477, 5
        %v7511 = vsel %vm2599, %v7509, %v7510
        %v7512 = vrot.slane %v7478, 5
        %v7513 = vrot.slane %v7512, 4
        %v7514 = vrot.slane %v7479, 5
        %v7515 = vsel %vm2599, %v7513, %v7514
        %v7516 = vrot.slane %v7480, 5
        %v7517 = vrot.slane %v7516, 4
        %v7518 = vrot.slane %v7481, 5
        %v7519 = vsel %vm2599, %v7517, %v7518
        %v7520 = vrot.slane %v7482, 5
        %v7521 = vrot.slane %v7520, 4
        %v7522 = vrot.slane %v7483, 5
        %v7523 = vsel %vm2599, %v7521, %v7522
        %v7524 = vrot.slane %v7484, 5
        %v7525 = vrot.slane %v7524, 4
        %v7526 = vrot.slane %v7485, 5
        %v7527 = vsel %vm2599, %v7525, %v7526
        %v7528 = vrot.slane %v7486, 5
        %v7529 = vrot.slane %v7528, 4
        %v7530 = vrot.slane %v7487, 5
        %v7531 = vsel %vm2599, %v7529, %v7530
        %v7532 = vrot.slane %v7488, 5
        %v7533 = vrot.slane %v7532, 4
        %v7534 = vrot.slane %v7489, 5
        %v7535 = vsel %vm2599, %v7533, %v7534
        %v7536 = vrot.slane %v7490, 5
        %v7537 = vrot.slane %v7536, 4
        %v7538 = vrot.slane %v7491, 5
        %v7539 = vsel %vm2599, %v7537, %v7538
        %7540 = vrot.lane.b32.xlu0 %v7511, 112
        %v7541 = vpop.permute.xlu0 %7540
        %7542 = vrot.lane.b32.xlu0 %v7515, 112
        %v7543 = vpop.permute.xlu0 %7542
        %7544 = vrot.lane.b32.xlu0 %v7519, 112
        %v7545 = vpop.permute.xlu0 %7544
        %7546 = vrot.lane.b32.xlu0 %v7523, 112
        %v7547 = vpop.permute.xlu0 %7546
        %7548 = vrot.lane.b32.xlu0 %v7527, 112
        %v7549 = vpop.permute.xlu0 %7548
        %7550 = vrot.lane.b32.xlu0 %v7531, 112
        %v7551 = vpop.permute.xlu0 %7550
        %7552 = vrot.lane.b32.xlu0 %v7535, 112
        %v7553 = vpop.permute.xlu0 %7552
        %7554 = vrot.lane.b32.xlu0 %v7539, 112
        %v7555 = vpop.permute.xlu0 %7554
        %v7556 = vrot.slane %v7541, 4
        %v7557 = vrot.slane %v7543, 4
        %v7558 = vrot.slane %v7545, 4
        %v7559 = vrot.slane %v7547, 4
        %v7560 = vrot.slane %v7549, 4
        %v7561 = vrot.slane %v7551, 4
        %v7562 = vrot.slane %v7553, 4
        %v7563 = vrot.slane %v7555, 4
        %vm7564 = vcmask 916480
        %v7565 = vsel %vm7564, %v7556, %v7541
        %v7566 = vsel %vm7564, %v7557, %v7543
        %v7567 = vsel %vm7564, %v7558, %v7545
        %v7568 = vsel %vm7564, %v7559, %v7547
        %v7569 = vsel %vm7564, %v7560, %v7549
        %v7570 = vsel %vm7564, %v7561, %v7551
        %v7571 = vsel %vm7564, %v7562, %v7553
        %v7572 = vsel %vm7564, %v7563, %v7555
        %vm7581 = vcmask 261124
        %vm7582 = vmor %vm7581, %vm3613
        %7583 = vst.msk [vmem:[#allocation5 + $0x4] sm:$0xff] %vm7582, %v7565
        %7584 = vst.msk [vmem:[#allocation5 + $0x14] sm:$0xff] %vm7582, %v7566
        %7585 = vst.msk [vmem:[#allocation5 + $0x24] sm:$0xff] %vm7582, %v7567
        %7586 = vst.msk [vmem:[#allocation5 + $0x34] sm:$0xff] %vm7582, %v7568
        %7587 = vst.msk [vmem:[#allocation5 + $0x44] sm:$0xff] %vm7582, %v7569
        %7588 = vst.msk [vmem:[#allocation5 + $0x54] sm:$0xff] %vm7582, %v7570
        %7589 = vst.msk [vmem:[#allocation5 + $0x64] sm:$0xff] %vm7582, %v7571
        %7590 = vst.msk [vmem:[#allocation5 + $0x74] sm:$0xff] %vm7582, %v7572
        %s7591 = scalar_lea.vmem [#allocation3], 16
        %v7592 = vld [vmem:[%s7591] sm:$0xf]
        %v7593 = vld [vmem:[%s7591 + $0x8] sm:$0xf]
        %v7594 = vld [vmem:[%s7591 + $0x10] sm:$0xf]
        %v7595 = vld [vmem:[%s7591 + $0x18] sm:$0xf]
        %v7596 = vld [vmem:[%s7591 + $0x20] sm:$0xf]
        %v7597 = vld [vmem:[%s7591 + $0x28] sm:$0xf]
        %v7598 = vld [vmem:[%s7591 + $0x30] sm:$0xf]
        %v7599 = vld [vmem:[%s7591 + $0x38] sm:$0xf]
        %7608 = vrot.lane.b32.xlu0 %v7592, 32
        %v7609 = vpop.permute.xlu0 %7608
        %7610 = vrot.lane.b32.xlu0 %v7593, 32
        %v7611 = vpop.permute.xlu0 %7610
        %7612 = vrot.lane.b32.xlu0 %v7594, 32
        %v7613 = vpop.permute.xlu0 %7612
        %7614 = vrot.lane.b32.xlu0 %v7595, 32
        %v7615 = vpop.permute.xlu0 %7614
        %7616 = vrot.lane.b32.xlu0 %v7596, 32
        %v7617 = vpop.permute.xlu0 %7616
        %7618 = vrot.lane.b32.xlu0 %v7597, 32
        %v7619 = vpop.permute.xlu0 %7618
        %7620 = vrot.lane.b32.xlu0 %v7598, 32
        %v7621 = vpop.permute.xlu0 %7620
        %7622 = vrot.lane.b32.xlu0 %v7599, 32
        %v7623 = vpop.permute.xlu0 %7622
        %vm7632 = vcmask 650496
        %7633 = vst.msk [vmem:[#allocation5 + $0x8] sm:$0xf] %vm7632, %v7609
        %7634 = vst.msk [vmem:[#allocation5 + $0x18] sm:$0xf] %vm7632, %v7611
        %7635 = vst.msk [vmem:[#allocation5 + $0x28] sm:$0xf] %vm7632, %v7613
        %7636 = vst.msk [vmem:[#allocation5 + $0x38] sm:$0xf] %vm7632, %v7615
        %7637 = vst.msk [vmem:[#allocation5 + $0x48] sm:$0xf] %vm7632, %v7617
        %7638 = vst.msk [vmem:[#allocation5 + $0x58] sm:$0xf] %vm7632, %v7619
        %7639 = vst.msk [vmem:[#allocation5 + $0x68] sm:$0xf] %vm7632, %v7621
        %7640 = vst.msk [vmem:[#allocation5 + $0x78] sm:$0xf] %vm7632, %v7623
        %v7641 = vld [vmem:[%s7591] sm:$0xf]
        %v7642 = vld [vmem:[%s7591 + $0x4] sm:$0x1]
        %v7643 = vld [vmem:[%s7591 + $0x8] sm:$0xf]
        %v7644 = vld [vmem:[%s7591 + $0xc] sm:$0x1]
        %v7645 = vld [vmem:[%s7591 + $0x10] sm:$0xf]
        %v7646 = vld [vmem:[%s7591 + $0x14] sm:$0x1]
        %v7647 = vld [vmem:[%s7591 + $0x18] sm:$0xf]
        %v7648 = vld [vmem:[%s7591 + $0x1c] sm:$0x1]
        %v7649 = vld [vmem:[%s7591 + $0x20] sm:$0xf]
        %v7650 = vld [vmem:[%s7591 + $0x24] sm:$0x1]
        %v7651 = vld [vmem:[%s7591 + $0x28] sm:$0xf]
        %v7652 = vld [vmem:[%s7591 + $0x2c] sm:$0x1]
        %v7653 = vld [vmem:[%s7591 + $0x30] sm:$0xf]
        %v7654 = vld [vmem:[%s7591 + $0x34] sm:$0x1]
        %v7655 = vld [vmem:[%s7591 + $0x38] sm:$0xf]
        %v7656 = vld [vmem:[%s7591 + $0x3c] sm:$0x1]
        %v7658 = vshrl.u32 %v7641, 16
        %v7660 = vrot.slane %v7658, 4
        %v7661 = vshll.u32 %v7641, 16
        %v7663 = vrot.slane %v7661, 5
        %v7664 = vor.u32 %v7660, %v7663
        %v7665 = vrot.slane %v7664, 4
        %v7667 = vshll.u32 %v7642, 16
        %v7669 = vrot.slane %v7667, 5
        %v7670 = vsel %vm3721, %v7665, %v7669
        %v7672 = vshrl.u32 %v7643, 16
        %v7674 = vrot.slane %v7672, 4
        %v7675 = vshll.u32 %v7643, 16
        %v7677 = vrot.slane %v7675, 5
        %v7678 = vor.u32 %v7674, %v7677
        %v7679 = vrot.slane %v7678, 4
        %v7681 = vshll.u32 %v7644, 16
        %v7683 = vrot.slane %v7681, 5
        %v7684 = vsel %vm3721, %v7679, %v7683
        %v7686 = vshrl.u32 %v7645, 16
        %v7688 = vrot.slane %v7686, 4
        %v7689 = vshll.u32 %v7645, 16
        %v7691 = vrot.slane %v7689, 5
        %v7692 = vor.u32 %v7688, %v7691
        %v7693 = vrot.slane %v7692, 4
        %v7695 = vshll.u32 %v7646, 16
        %v7697 = vrot.slane %v7695, 5
        %v7698 = vsel %vm3721, %v7693, %v7697
        %v7700 = vshrl.u32 %v7647, 16
        %v7702 = vrot.slane %v7700, 4
        %v7703 = vshll.u32 %v7647, 16
        %v7705 = vrot.slane %v7703, 5
        %v7706 = vor.u32 %v7702, %v7705
        %v7707 = vrot.slane %v7706, 4
        %v7709 = vshll.u32 %v7648, 16
        %v7711 = vrot.slane %v7709, 5
        %v7712 = vsel %vm3721, %v7707, %v7711
        %v7714 = vshrl.u32 %v7649, 16
        %v7716 = vrot.slane %v7714, 4
        %v7717 = vshll.u32 %v7649, 16
        %v7719 = vrot.slane %v7717, 5
        %v7720 = vor.u32 %v7716, %v7719
        %v7721 = vrot.slane %v7720, 4
        %v7723 = vshll.u32 %v7650, 16
        %v7725 = vrot.slane %v7723, 5
        %v7726 = vsel %vm3721, %v7721, %v7725
        %v7728 = vshrl.u32 %v7651, 16
        %v7730 = vrot.slane %v7728, 4
        %v7731 = vshll.u32 %v7651, 16
        %v7733 = vrot.slane %v7731, 5
        %v7734 = vor.u32 %v7730, %v7733
        %v7735 = vrot.slane %v7734, 4
        %v7737 = vshll.u32 %v7652, 16
        %v7739 = vrot.slane %v7737, 5
        %v7740 = vsel %vm3721, %v7735, %v7739
        %v7742 = vshrl.u32 %v7653, 16
        %v7744 = vrot.slane %v7742, 4
        %v7745 = vshll.u32 %v7653, 16
        %v7747 = vrot.slane %v7745, 5
        %v7748 = vor.u32 %v7744, %v7747
        %v7749 = vrot.slane %v7748, 4
        %v7751 = vshll.u32 %v7654, 16
        %v7753 = vrot.slane %v7751, 5
        %v7754 = vsel %vm3721, %v7749, %v7753
        %v7756 = vshrl.u32 %v7655, 16
        %v7758 = vrot.slane %v7756, 4
        %v7759 = vshll.u32 %v7655, 16
        %v7761 = vrot.slane %v7759, 5
        %v7762 = vor.u32 %v7758, %v7761
        %v7763 = vrot.slane %v7762, 4
        %v7765 = vshll.u32 %v7656, 16
        %v7767 = vrot.slane %v7765, 5
        %v7768 = vsel %vm3721, %v7763, %v7767
        %7769 = vrot.lane.b32.xlu0 %v7670, 80
        %v7770 = vpop.permute.xlu0 %7769
        %7771 = vrot.lane.b32.xlu0 %v7684, 80
        %v7772 = vpop.permute.xlu0 %7771
        %7773 = vrot.lane.b32.xlu0 %v7698, 80
        %v7774 = vpop.permute.xlu0 %7773
        %7775 = vrot.lane.b32.xlu0 %v7712, 80
        %v7776 = vpop.permute.xlu0 %7775
        %7777 = vrot.lane.b32.xlu0 %v7726, 80
        %v7778 = vpop.permute.xlu0 %7777
        %7779 = vrot.lane.b32.xlu0 %v7740, 80
        %v7780 = vpop.permute.xlu0 %7779
        %7781 = vrot.lane.b32.xlu0 %v7754, 80
        %v7782 = vpop.permute.xlu0 %7781
        %7783 = vrot.lane.b32.xlu0 %v7768, 80
        %v7784 = vpop.permute.xlu0 %7783
        %vm7793 = vcmask 1044096
        %7794 = vst.msk [vmem:[#allocation5 + $0x8] sm:$0xf] %vm7793, %v7770
        %7795 = vst.msk [vmem:[#allocation5 + $0x18] sm:$0xf] %vm7793, %v7772
        %7796 = vst.msk [vmem:[#allocation5 + $0x28] sm:$0xf] %vm7793, %v7774
        %7797 = vst.msk [vmem:[#allocation5 + $0x38] sm:$0xf] %vm7793, %v7776
        %7798 = vst.msk [vmem:[#allocation5 + $0x48] sm:$0xf] %vm7793, %v7778
        %7799 = vst.msk [vmem:[#allocation5 + $0x58] sm:$0xf] %vm7793, %v7780
        %7800 = vst.msk [vmem:[#allocation5 + $0x68] sm:$0xf] %vm7793, %v7782
        %7801 = vst.msk [vmem:[#allocation5 + $0x78] sm:$0xf] %vm7793, %v7784
        %v7802 = vld [vmem:[%s7591] sm:$0xe]
        %v7803 = vld [vmem:[%s7591 + $0x4] sm:$0x1]
        %v7804 = vld [vmem:[%s7591 + $0x8] sm:$0xe]
        %v7805 = vld [vmem:[%s7591 + $0xc] sm:$0x1]
        %v7806 = vld [vmem:[%s7591 + $0x10] sm:$0xe]
        %v7807 = vld [vmem:[%s7591 + $0x14] sm:$0x1]
        %v7808 = vld [vmem:[%s7591 + $0x18] sm:$0xe]
        %v7809 = vld [vmem:[%s7591 + $0x1c] sm:$0x1]
        %v7810 = vld [vmem:[%s7591 + $0x20] sm:$0xe]
        %v7811 = vld [vmem:[%s7591 + $0x24] sm:$0x1]
        %v7812 = vld [vmem:[%s7591 + $0x28] sm:$0xe]
        %v7813 = vld [vmem:[%s7591 + $0x2c] sm:$0x1]
        %v7814 = vld [vmem:[%s7591 + $0x30] sm:$0xe]
        %v7815 = vld [vmem:[%s7591 + $0x34] sm:$0x1]
        %v7816 = vld [vmem:[%s7591 + $0x38] sm:$0xe]
        %v7817 = vld [vmem:[%s7591 + $0x3c] sm:$0x1]
        %v7834 = vrot.slane %v7802, 5
        %v7835 = vrot.slane %v7834, 4
        %v7836 = vrot.slane %v7803, 5
        %v7837 = vsel %vm2599, %v7835, %v7836
        %v7838 = vrot.slane %v7804, 5
        %v7839 = vrot.slane %v7838, 4
        %v7840 = vrot.slane %v7805, 5
        %v7841 = vsel %vm2599, %v7839, %v7840
        %v7842 = vrot.slane %v7806, 5
        %v7843 = vrot.slane %v7842, 4
        %v7844 = vrot.slane %v7807, 5
        %v7845 = vsel %vm2599, %v7843, %v7844
        %v7846 = vrot.slane %v7808, 5
        %v7847 = vrot.slane %v7846, 4
        %v7848 = vrot.slane %v7809, 5
        %v7849 = vsel %vm2599, %v7847, %v7848
        %v7850 = vrot.slane %v7810, 5
        %v7851 = vrot.slane %v7850, 4
        %v7852 = vrot.slane %v7811, 5
        %v7853 = vsel %vm2599, %v7851, %v7852
        %v7854 = vrot.slane %v7812, 5
        %v7855 = vrot.slane %v7854, 4
        %v7856 = vrot.slane %v7813, 5
        %v7857 = vsel %vm2599, %v7855, %v7856
        %v7858 = vrot.slane %v7814, 5
        %v7859 = vrot.slane %v7858, 4
        %v7860 = vrot.slane %v7815, 5
        %v7861 = vsel %vm2599, %v7859, %v7860
        %v7862 = vrot.slane %v7816, 5
        %v7863 = vrot.slane %v7862, 4
        %v7864 = vrot.slane %v7817, 5
        %v7865 = vsel %vm2599, %v7863, %v7864
        %7874 = vst.msk [vmem:[#allocation5 + $0xc] sm:$0xf] %vm6774, %v7837
        %7875 = vst.msk [vmem:[#allocation5 + $0x1c] sm:$0xf] %vm6774, %v7841
        %7876 = vst.msk [vmem:[#allocation5 + $0x2c] sm:$0xf] %vm6774, %v7845
        %7877 = vst.msk [vmem:[#allocation5 + $0x3c] sm:$0xf] %vm6774, %v7849
        %7878 = vst.msk [vmem:[#allocation5 + $0x4c] sm:$0xf] %vm6774, %v7853
        %7879 = vst.msk [vmem:[#allocation5 + $0x5c] sm:$0xf] %vm6774, %v7857
        %7880 = vst.msk [vmem:[#allocation5 + $0x6c] sm:$0xf] %vm6774, %v7861
        %7881 = vst.msk [vmem:[#allocation5 + $0x7c] sm:$0xf] %vm6774, %v7865
        %v7882 = vld [vmem:[#allocation5] sm:$0xff]
        %v7883 = vld [vmem:[#allocation5 + $0x8] sm:$0xff]
        %v7884 = vld [vmem:[#allocation5 + $0x10] sm:$0xff]
        %v7885 = vld [vmem:[#allocation5 + $0x18] sm:$0xff]
        %v7886 = vld [vmem:[#allocation5 + $0x20] sm:$0xff]
        %v7887 = vld [vmem:[#allocation5 + $0x28] sm:$0xff]
        %v7888 = vld [vmem:[#allocation5 + $0x30] sm:$0xff]
        %v7889 = vld [vmem:[#allocation5 + $0x38] sm:$0xff]
        %v7890 = vld [vmem:[#allocation5 + $0x40] sm:$0xff]
        %v7891 = vld [vmem:[#allocation5 + $0x48] sm:$0xff]
        %v7892 = vld [vmem:[#allocation5 + $0x50] sm:$0xff]
        %v7893 = vld [vmem:[#allocation5 + $0x58] sm:$0xff]
        %v7894 = vld [vmem:[#allocation5 + $0x60] sm:$0xff]
        %v7895 = vld [vmem:[#allocation5 + $0x68] sm:$0xff]
        %v7896 = vld [vmem:[#allocation5 + $0x70] sm:$0xff]
        %v7897 = vld [vmem:[#allocation5 + $0x78] sm:$0xff]
        %v7898 = vld [vmem:[%s15] sm:$0xf]
        %v7899 = vld [vmem:[%s15 + $0x4] sm:$0xf]
        %v7900 = vld [vmem:[%s15 + $0x8] sm:$0xf]
        %v7901 = vld [vmem:[%s15 + $0xc] sm:$0xf]
        %v7902 = vld [vmem:[%s15 + $0x10] sm:$0xf]
        %v7903 = vld [vmem:[%s15 + $0x14] sm:$0xf]
        %v7904 = vld [vmem:[%s15 + $0x18] sm:$0xf]
        %v7905 = vld [vmem:[%s15 + $0x1c] sm:$0xf]
        %v7906 = vld [vmem:[%s15 + $0x20] sm:$0xf]
        %v7907 = vld [vmem:[%s15 + $0x24] sm:$0xf]
        %v7908 = vld [vmem:[%s15 + $0x28] sm:$0xf]
        %v7909 = vld [vmem:[%s15 + $0x2c] sm:$0xf]
        %v7910 = vld [vmem:[%s15 + $0x30] sm:$0xf]
        %v7911 = vld [vmem:[%s15 + $0x34] sm:$0xf]
        %v7912 = vld [vmem:[%s15 + $0x38] sm:$0xf]
        %v7913 = vld [vmem:[%s15 + $0x3c] sm:$0xf]
        %v7914 = vld [vmem:[%s15 + $0x40] sm:$0xf]
        %v7915 = vld [vmem:[%s15 + $0x44] sm:$0xf]
        %v7916 = vld [vmem:[%s15 + $0x48] sm:$0xf]
        %v7917 = vld [vmem:[%s15 + $0x4c] sm:$0xf]
        %v7918 = vld [vmem:[%s15 + $0x50] sm:$0xf]
        %v7919 = vld [vmem:[%s15 + $0x54] sm:$0xf]
        %v7920 = vld [vmem:[%s15 + $0x58] sm:$0xf]
        %v7921 = vld [vmem:[%s15 + $0x5c] sm:$0xf]
        %v7922 = vld [vmem:[%s15 + $0x60] sm:$0xf]
        %v7923 = vld [vmem:[%s15 + $0x64] sm:$0xf]
        %v7924 = vld [vmem:[%s15 + $0x68] sm:$0xf]
        %v7925 = vld [vmem:[%s15 + $0x6c] sm:$0xf]
        %v7926 = vld [vmem:[%s15 + $0x70] sm:$0xf]
        %v7927 = vld [vmem:[%s15 + $0x74] sm:$0xf]
        %v7928 = vld [vmem:[%s15 + $0x78] sm:$0xf]
        %v7929 = vld [vmem:[%s15 + $0x7c] sm:$0xf]
        %v7930 = vld [vmem:[%s15 + $0x80] sm:$0xf]
        %v7931 = vld [vmem:[%s15 + $0x84] sm:$0xf]
        %v7932 = vld [vmem:[%s15 + $0x88] sm:$0xf]
        %v7933 = vld [vmem:[%s15 + $0x8c] sm:$0xf]
        %v7934 = vld [vmem:[%s15 + $0x90] sm:$0xf]
        %v7935 = vld [vmem:[%s15 + $0x94] sm:$0xf]
        %v7936 = vld [vmem:[%s15 + $0x98] sm:$0xf]
        %v7937 = vld [vmem:[%s15 + $0x9c] sm:$0xf]
        %v7938 = vld [vmem:[%s15 + $0xa0] sm:$0xf]
        %v7939 = vld [vmem:[%s15 + $0xa4] sm:$0xf]
        %v7940 = vld [vmem:[%s15 + $0xa8] sm:$0xf]
        %v7941 = vld [vmem:[%s15 + $0xac] sm:$0xf]
        %v7942 = vld [vmem:[%s15 + $0xb0] sm:$0xf]
        %v7943 = vld [vmem:[%s15 + $0xb4] sm:$0xf]
        %v7944 = vld [vmem:[%s15 + $0xb8] sm:$0xf]
        %v7945 = vld [vmem:[%s15 + $0xbc] sm:$0xf]
        %v7946 = vld [vmem:[%s15 + $0xc0] sm:$0xf]
        %v7947 = vld [vmem:[%s15 + $0xc4] sm:$0xf]
        %v7948 = vld [vmem:[%s15 + $0xc8] sm:$0xf]
        %v7949 = vld [vmem:[%s15 + $0xcc] sm:$0xf]
        %v7950 = vld [vmem:[%s15 + $0xd0] sm:$0xf]
        %v7951 = vld [vmem:[%s15 + $0xd4] sm:$0xf]
        %v7968 = vunpack.c.l.b16 %v7882
        %v7969 = vunpack.c.h.b16 %v7882
        %v7970 = vunpack.c.l.b16 %v7883
        %v7971 = vunpack.c.h.b16 %v7883
        %v7972 = vunpack.c.l.b16 %v7884
        %v7973 = vunpack.c.h.b16 %v7884
        %v7974 = vunpack.c.l.b16 %v7885
        %v7975 = vunpack.c.h.b16 %v7885
        %v7976 = vunpack.c.l.b16 %v7886
        %v7977 = vunpack.c.h.b16 %v7886
        %v7978 = vunpack.c.l.b16 %v7887
        %v7979 = vunpack.c.h.b16 %v7887
        %v7980 = vunpack.c.l.b16 %v7888
        %v7981 = vunpack.c.h.b16 %v7888
        %v7982 = vunpack.c.l.b16 %v7889
        %v7983 = vunpack.c.h.b16 %v7889
        %v7984 = vunpack.c.l.b16 %v7890
        %v7985 = vunpack.c.h.b16 %v7890
        %v7986 = vunpack.c.l.b16 %v7891
        %v7987 = vunpack.c.h.b16 %v7891
        %v7988 = vunpack.c.l.b16 %v7892
        %v7989 = vunpack.c.h.b16 %v7892
        %v7990 = vunpack.c.l.b16 %v7893
        %v7991 = vunpack.c.h.b16 %v7893
        %v7992 = vunpack.c.l.b16 %v7894
        %v7993 = vunpack.c.h.b16 %v7894
        %v7994 = vunpack.c.l.b16 %v7895
        %v7995 = vunpack.c.h.b16 %v7895
        %v7996 = vunpack.c.l.b16 %v7896
        %v7997 = vunpack.c.h.b16 %v7896
        %v7998 = vunpack.c.l.b16 %v7897
        %v7999 = vunpack.c.h.b16 %v7897
        %v8000 = vpack.c.b16 %v7972, %v7968
        %v8001 = vpack.c.b16 %v7973, %v7969
        %v8002 = vpack.c.b16 %v7974, %v7970
        %v8003 = vpack.c.b16 %v7975, %v7971
        %v8004 = vpack.c.b16 %v7980, %v7976
        %v8005 = vpack.c.b16 %v7981, %v7977
        %v8006 = vpack.c.b16 %v7982, %v7978
        %v8007 = vpack.c.b16 %v7983, %v7979
        %v8008 = vpack.c.b16 %v7988, %v7984
        %v8009 = vpack.c.b16 %v7989, %v7985
        %v8010 = vpack.c.b16 %v7990, %v7986
        %v8011 = vpack.c.b16 %v7991, %v7987
        %v8012 = vpack.c.b16 %v7996, %v7992
        %v8013 = vpack.c.b16 %v7997, %v7993
        %v8014 = vpack.c.b16 %v7998, %v7994
        %v8015 = vpack.c.b16 %v7999, %v7995
        %v8082 = vunpack.c.l.b16 %v7898
        %v8083 = vunpack.c.l.b16 %v7899
        %v8084 = vunpack.c.l.b16 %v7900
        %v8085 = vunpack.c.l.b16 %v7901
        %v8086 = vunpack.c.l.b16 %v7902
        %v8087 = vunpack.c.l.b16 %v7903
        %v8088 = vunpack.c.l.b16 %v7904
        %v8089 = vunpack.c.l.b16 %v7905
        %v8090 = vunpack.c.l.b16 %v7906
        %v8091 = vunpack.c.l.b16 %v7907
        %v8092 = vunpack.c.l.b16 %v7908
        %v8093 = vunpack.c.l.b16 %v7909
        %v8094 = vunpack.c.l.b16 %v7910
        %v8095 = vunpack.c.l.b16 %v7911
        %v8096 = vunpack.c.l.b16 %v7912
        %v8097 = vunpack.c.l.b16 %v7913
        %v8098 = vunpack.c.l.b16 %v7914
        %v8099 = vunpack.c.l.b16 %v7915
        %v8100 = vunpack.c.l.b16 %v7916
        %v8101 = vunpack.c.l.b16 %v7917
        %v8102 = vunpack.c.l.b16 %v7918
        %v8103 = vunpack.c.l.b16 %v7919
        %v8104 = vunpack.c.l.b16 %v7920
        %v8105 = vunpack.c.l.b16 %v7921
        %v8106 = vunpack.c.l.b16 %v7922
        %v8107 = vunpack.c.l.b16 %v7923
        %v8108 = vunpack.c.l.b16 %v7924
        %v8109 = vunpack.c.l.b16 %v7925
        %v8110 = vunpack.c.l.b16 %v7926
        %v8111 = vunpack.c.l.b16 %v7927
        %v8112 = vunpack.c.l.b16 %v7928
        %v8113 = vunpack.c.l.b16 %v7929
        %v8114 = vunpack.c.l.b16 %v7930
        %v8115 = vunpack.c.l.b16 %v7931
        %v8116 = vunpack.c.l.b16 %v7932
        %v8117 = vunpack.c.l.b16 %v7933
        %v8118 = vunpack.c.l.b16 %v7934
        %v8119 = vunpack.c.l.b16 %v7935
        %v8120 = vunpack.c.l.b16 %v7936
        %v8121 = vunpack.c.l.b16 %v7937
        %v8122 = vunpack.c.l.b16 %v7938
        %v8123 = vunpack.c.l.b16 %v7939
        %v8124 = vunpack.c.l.b16 %v7940
        %v8125 = vunpack.c.l.b16 %v7941
        %v8126 = vunpack.c.l.b16 %v7942
        %v8127 = vunpack.c.l.b16 %v7943
        %v8128 = vunpack.c.l.b16 %v7944
        %v8129 = vunpack.c.l.b16 %v7945
        %v8130 = vunpack.c.l.b16 %v7946
        %v8131 = vunpack.c.l.b16 %v7947
        %v8132 = vunpack.c.l.b16 %v7948
        %v8133 = vunpack.c.l.b16 %v7949
        %v8134 = vunpack.c.l.b16 %v7950
        %v8135 = vunpack.c.l.b16 %v7951
        %v8136 = vpack.c.b16 %v8083, %v8082
        %v8137 = vpack.c.b16 %v8085, %v8084
        %v8138 = vpack.c.b16 %v8087, %v8086
        %v8139 = vpack.c.b16 %v8089, %v8088
        %v8140 = vpack.c.b16 %v8091, %v8090
        %v8141 = vpack.c.b16 %v8093, %v8092
        %v8142 = vpack.c.b16 %v8095, %v8094
        %v8143 = vpack.c.b16 %v8097, %v8096
        %v8144 = vpack.c.b16 %v8099, %v8098
        %v8145 = vpack.c.b16 %v8101, %v8100
        %v8146 = vpack.c.b16 %v8103, %v8102
        %v8147 = vpack.c.b16 %v8105, %v8104
        %v8148 = vpack.c.b16 %v8107, %v8106
        %v8149 = vpack.c.b16 %v8109, %v8108
        %v8150 = vpack.c.b16 %v8111, %v8110
        %v8151 = vpack.c.b16 %v8113, %v8112
        %v8152 = vpack.c.b16 %v8115, %v8114
        %v8153 = vpack.c.b16 %v8117, %v8116
        %v8154 = vpack.c.b16 %v8119, %v8118
        %v8155 = vpack.c.b16 %v8121, %v8120
        %v8156 = vpack.c.b16 %v8123, %v8122
        %v8157 = vpack.c.b16 %v8125, %v8124
        %v8158 = vpack.c.b16 %v8127, %v8126
        %v8159 = vpack.c.b16 %v8129, %v8128
        %v8160 = vpack.c.b16 %v8131, %v8130
        %v8161 = vpack.c.b16 %v8133, %v8132
        %v8162 = vpack.c.b16 %v8135, %v8134
        %v8191 = vsel %vm6613, %v8003, 0
        %v8194 = vsel %vm6613, %v8007, 0
        %v8197 = vsel %vm6613, %v8011, 0
        %v8200 = vsel %vm6613, %v8015, 0
        %8202 = vmatpush.bf16.msra.mxu0 %v8143
        %8203 = vmatpush.bf16.msra.mxu0 %v8142
        %8204 = vmatpush.bf16.msra.mxu0 %v8141
        %8205 = vmatpush.bf16.msra.mxu0 %v8140
        %8206 = vmatpush.bf16.msra.mxu0 %v8139
        %8207 = vmatpush.bf16.msra.mxu0 %v8138
        %8208 = vmatpush.bf16.msra.mxu0 %v8137
        %8209 = vmatpush.bf16.msra.mxu0 %v8136
        %8210 = vmatmul.bf16.gmra.mxu0 %v8000
        %v8211 = vpop.f32.mrf.mxu0
        %v8212 = vadd.f32 0.0, %v8211
        %v8213 = vpop.f32.mrf.mxu0
        %v8214 = vadd.f32 0.0, %v8213
        %8215 = vmatmul.bf16.gmra.mxu0 %v8004
        %v8216 = vpop.f32.mrf.mxu0
        %v8217 = vadd.f32 0.0, %v8216
        %v8218 = vpop.f32.mrf.mxu0
        %v8219 = vadd.f32 0.0, %v8218
        %8220 = vmatmul.bf16.gmra.mxu0 %v8008
        %v8221 = vpop.f32.mrf.mxu0
        %v8222 = vadd.f32 0.0, %v8221
        %v8223 = vpop.f32.mrf.mxu0
        %v8224 = vadd.f32 0.0, %v8223
        %8225 = vmatmul.bf16.gmra.mxu0 %v8012
        %v8226 = vpop.f32.mrf.mxu0
        %v8227 = vadd.f32 0.0, %v8226
        %v8228 = vpop.f32.mrf.mxu0
        %v8229 = vadd.f32 0.0, %v8228
        %8230 = vdwg.mxu0
        %8231 = vmatpush.bf16.msra.mxu0 %v8151
        %8232 = vmatpush.bf16.msra.mxu0 %v8150
        %8233 = vmatpush.bf16.msra.mxu0 %v8149
        %8234 = vmatpush.bf16.msra.mxu0 %v8148
        %8235 = vmatpush.bf16.msra.mxu0 %v8147
        %8236 = vmatpush.bf16.msra.mxu0 %v8146
        %8237 = vmatpush.bf16.msra.mxu0 %v8145
        %8238 = vmatpush.bf16.msra.mxu0 %v8144
        %8239 = vmatmul.bf16.gmra.mxu0 %v8001
        %v8240 = vpop.f32.mrf.mxu0
        %v8241 = vadd.f32 %v8212, %v8240
        %v8242 = vpop.f32.mrf.mxu0
        %v8243 = vadd.f32 %v8214, %v8242
        %8244 = vmatmul.bf16.gmra.mxu0 %v8005
        %v8245 = vpop.f32.mrf.mxu0
        %v8246 = vadd.f32 %v8217, %v8245
        %v8247 = vpop.f32.mrf.mxu0
        %v8248 = vadd.f32 %v8219, %v8247
        %8249 = vmatmul.bf16.gmra.mxu0 %v8009
        %v8250 = vpop.f32.mrf.mxu0
        %v8251 = vadd.f32 %v8222, %v8250
        %v8252 = vpop.f32.mrf.mxu0
        %v8253 = vadd.f32 %v8224, %v8252
        %8254 = vmatmul.bf16.gmra.mxu0 %v8013
        %v8255 = vpop.f32.mrf.mxu0
        %v8256 = vadd.f32 %v8227, %v8255
        %v8257 = vpop.f32.mrf.mxu0
        %v8258 = vadd.f32 %v8229, %v8257
        %8259 = vdwg.mxu0
        %8260 = vmatpush.bf16.msra.mxu0 %v8159
        %8261 = vmatpush.bf16.msra.mxu0 %v8158
        %8262 = vmatpush.bf16.msra.mxu0 %v8157
        %8263 = vmatpush.bf16.msra.mxu0 %v8156
        %8264 = vmatpush.bf16.msra.mxu0 %v8155
        %8265 = vmatpush.bf16.msra.mxu0 %v8154
        %8266 = vmatpush.bf16.msra.mxu0 %v8153
        %8267 = vmatpush.bf16.msra.mxu0 %v8152
        %8268 = vmatmul.bf16.gmra.mxu0 %v8002
        %v8269 = vpop.f32.mrf.mxu0
        %v8270 = vadd.f32 %v8241, %v8269
        %v8271 = vpop.f32.mrf.mxu0
        %v8272 = vadd.f32 %v8243, %v8271
        %8273 = vmatmul.bf16.gmra.mxu0 %v8006
        %v8274 = vpop.f32.mrf.mxu0
        %v8275 = vadd.f32 %v8246, %v8274
        %v8276 = vpop.f32.mrf.mxu0
        %v8277 = vadd.f32 %v8248, %v8276
        %8278 = vmatmul.bf16.gmra.mxu0 %v8010
        %v8279 = vpop.f32.mrf.mxu0
        %v8280 = vadd.f32 %v8251, %v8279
        %v8281 = vpop.f32.mrf.mxu0
        %v8282 = vadd.f32 %v8253, %v8281
        %8283 = vmatmul.bf16.gmra.mxu0 %v8014
        %v8284 = vpop.f32.mrf.mxu0
        %v8285 = vadd.f32 %v8256, %v8284
        %v8286 = vpop.f32.mrf.mxu0
        %v8287 = vadd.f32 %v8258, %v8286
        %8288 = vdwg.mxu0
        %8289 = vmatpush.bf16.msra.mxu0 0
        %8290 = vmatpush.bf16.msra.mxu0 0
        %8291 = vmatpush.bf16.msra.mxu0 0
        %8292 = vmatpush.bf16.msra.mxu0 0
        %8293 = vmatpush.bf16.msra.mxu0 0
        %8294 = vmatpush.bf16.msra.mxu0 %v8162
        %8295 = vmatpush.bf16.msra.mxu0 %v8161
        %8296 = vmatpush.bf16.msra.mxu0 %v8160
        %8297 = vmatmul.bf16.gmra.mxu0 %v8191
        %v8298 = vpop.f32.mrf.mxu0
        %v8299 = vadd.f32 %v8270, %v8298
        %v8300 = vpop.f32.mrf.mxu0
        %v8301 = vadd.f32 %v8272, %v8300
        %8302 = vmatmul.bf16.gmra.mxu0 %v8194
        %v8303 = vpop.f32.mrf.mxu0
        %v8304 = vadd.f32 %v8275, %v8303
        %v8305 = vpop.f32.mrf.mxu0
        %v8306 = vadd.f32 %v8277, %v8305
        %8307 = vmatmul.bf16.gmra.mxu0 %v8197
        %v8308 = vpop.f32.mrf.mxu0
        %v8309 = vadd.f32 %v8280, %v8308
        %v8310 = vpop.f32.mrf.mxu0
        %v8311 = vadd.f32 %v8282, %v8310
        %8312 = vmatmul.bf16.gmra.mxu0 %v8200
        %v8313 = vpop.f32.mrf.mxu0
        %v8314 = vadd.f32 %v8285, %v8313
        %v8315 = vpop.f32.mrf.mxu0
        %v8316 = vadd.f32 %v8287, %v8315
        %8317 = vdwg.mxu0
        %v8318 = vld [vmem:[#allocation27] sm:$0x1]
        %v8320 = vperm.slane %v8318, 0
        %v8322 = vmul.f32 %v8299, %v8320
        %v8323 = vmul.f32 %v8301, %v8320
        %v8324 = vmul.f32 %v8304, %v8320
        %v8325 = vmul.f32 %v8306, %v8320
        %v8326 = vmul.f32 %v8309, %v8320
        %v8327 = vmul.f32 %v8311, %v8320
        %v8328 = vmul.f32 %v8314, %v8320
        %v8329 = vmul.f32 %v8316, %v8320
        %v8330 = vld [vmem:[#allocation29] sm:$0x1]
        %v8332 = vperm.slane %v8330, 0
        %v8334 = vadd.f32 %v8322, %v8332
        %v8335 = vadd.f32 %v8323, %v8332
        %v8336 = vadd.f32 %v8324, %v8332
        %v8337 = vadd.f32 %v8325, %v8332
        %v8338 = vadd.f32 %v8326, %v8332
        %v8339 = vadd.f32 %v8327, %v8332
        %v8340 = vadd.f32 %v8328, %v8332
        %v8341 = vadd.f32 %v8329, %v8332
        %v8342 = vmax.f32 %v8334, 0.0
        %v8343 = vmax.f32 %v8335, 0.0
        %v8344 = vmax.f32 %v8336, 0.0
        %v8345 = vmax.f32 %v8337, 0.0
        %v8346 = vmax.f32 %v8338, 0.0
        %v8347 = vmax.f32 %v8339, 0.0
        %v8348 = vmax.f32 %v8340, 0.0
        %v8349 = vmax.f32 %v8341, 0.0
        %v8350 = vpack.c.bf16 %v8343, %v8342
        %v8351 = vpack.c.bf16 %v8345, %v8344
        %v8352 = vpack.c.bf16 %v8347, %v8346
        %v8353 = vpack.c.bf16 %v8349, %v8348
        %v8354 = vld [vmem:[%s18] sm:$0xf]
        %v8355 = vld [vmem:[%s18 + $0x4] sm:$0xf]
        %v8358 = vunpack.c.l.b16 %v8354
        %v8359 = vunpack.c.l.b16 %v8355
        %v8360 = vpack.c.b16 %v8359, %v8358
        %v8363 = vsel %vm1186, %v8350, 0
        %v8366 = vsel %vm1186, %v8351, 0
        %v8369 = vsel %vm1186, %v8352, 0
        %v8372 = vsel %vm1186, %v8353, 0
        %8374 = vmatpush.bf16.msra.mxu0 0
        %8375 = vmatpush.bf16.msra.mxu0 0
        %8376 = vmatpush.bf16.msra.mxu0 0
        %8377 = vmatpush.bf16.msra.mxu0 0
        %8378 = vmatpush.bf16.msra.mxu0 0
        %8379 = vmatpush.bf16.msra.mxu0 0
        %8380 = vmatpush.bf16.msra.mxu0 0
        %8381 = vmatpush.bf16.msra.mxu0 %v8360
        %8382 = vmatmul.bf16.gmra.mxu0 %v8363
        %v8383 = vpop.f32.mrf.mxu0
        %v8384 = vadd.f32 0.0, %v8383
        %v8385 = vpop.f32.mrf.mxu0
        %v8386 = vadd.f32 0.0, %v8385
        %8387 = vmatmul.bf16.gmra.mxu0 %v8366
        %v8388 = vpop.f32.mrf.mxu0
        %v8389 = vadd.f32 0.0, %v8388
        %v8390 = vpop.f32.mrf.mxu0
        %v8391 = vadd.f32 0.0, %v8390
        %8392 = vmatmul.bf16.gmra.mxu0 %v8369
        %v8393 = vpop.f32.mrf.mxu0
        %v8394 = vadd.f32 0.0, %v8393
        %v8395 = vpop.f32.mrf.mxu0
        %v8396 = vadd.f32 0.0, %v8395
        %8397 = vmatmul.bf16.gmra.mxu0 %v8372
        %v8398 = vpop.f32.mrf.mxu0
        %v8399 = vadd.f32 0.0, %v8398
        %v8400 = vpop.f32.mrf.mxu0
        %v8401 = vadd.f32 0.0, %v8400
        %8402 = vdwg.mxu0
        %v8403 = vld [vmem:[#allocation30] sm:$0x1]
        %v8405 = vperm.slane %v8403, 0
        %v8407 = vmul.f32 %v8384, %v8405
        %v8408 = vmul.f32 %v8386, %v8405
        %v8409 = vmul.f32 %v8389, %v8405
        %v8410 = vmul.f32 %v8391, %v8405
        %v8411 = vmul.f32 %v8394, %v8405
        %v8412 = vmul.f32 %v8396, %v8405
        %v8413 = vmul.f32 %v8399, %v8405
        %v8414 = vmul.f32 %v8401, %v8405
        %v8415 = vld [vmem:[#allocation32] sm:$0x1]
        %v8417 = vperm.slane %v8415, 0
        %v8419 = vadd.f32 %v8407, %v8417
        %v8420 = vadd.f32 %v8408, %v8417
        %v8421 = vadd.f32 %v8409, %v8417
        %v8422 = vadd.f32 %v8410, %v8417
        %v8423 = vadd.f32 %v8411, %v8417
        %v8424 = vadd.f32 %v8412, %v8417
        %v8425 = vadd.f32 %v8413, %v8417
        %v8426 = vadd.f32 %v8414, %v8417
        %v8427 = vmax.f32 %v8419, 0.0
        %v8428 = vmax.f32 %v8420, 0.0
        %v8429 = vmax.f32 %v8421, 0.0
        %v8430 = vmax.f32 %v8422, 0.0
        %v8431 = vmax.f32 %v8423, 0.0
        %v8432 = vmax.f32 %v8424, 0.0
        %v8433 = vmax.f32 %v8425, 0.0
        %v8434 = vmax.f32 %v8426, 0.0
        %vm8435 = vcmask 257024
        %8436 = vst.msk [vmem:[#allocation4] sm:$0xf] %vm8435, 0
        %vm8437 = vcmask 253952
        %8438 = vst.msk [vmem:[#allocation4 + $0x4] sm:$0x1] %vm8437, 0
        %s8439 = scalar_lea.vmem [#allocation4], 72
        %8440 = vst.msk [vmem:[%s8439] sm:$0xf] %vm8435, 0
        %8441 = vst.msk [vmem:[%s8439 + $0x4] sm:$0x1] %vm8437, 0
        %s8442 = scalar_lea.vmem [#allocation4], 8
        %vm8443 = vcmask 253952
        %vm8444 = vmand %vm8443, %vm6783
        %v8445 = vld [vmem:[%s8442] sm:$0x1]
        %v8446 = vsel %vm8444, 0, %v8445
        %8447 = vst [vmem:[%s8442] sm:$0x1] %v8446
        %v8448 = vld [vmem:[%s8442 + $0x8] sm:$0x1]
        %v8449 = vsel %vm8444, 0, %v8448
        %8450 = vst [vmem:[%s8442 + $0x8] sm:$0x1] %v8449
        %v8451 = vld [vmem:[%s8442 + $0x10] sm:$0x1]
        %v8452 = vsel %vm8444, 0, %v8451
        %8453 = vst [vmem:[%s8442 + $0x10] sm:$0x1] %v8452
        %v8454 = vld [vmem:[%s8442 + $0x18] sm:$0x1]
        %v8455 = vsel %vm8444, 0, %v8454
        %8456 = vst [vmem:[%s8442 + $0x18] sm:$0x1] %v8455
        %v8457 = vld [vmem:[%s8442 + $0x20] sm:$0x1]
        %v8458 = vsel %vm8444, 0, %v8457
        %8459 = vst [vmem:[%s8442 + $0x20] sm:$0x1] %v8458
        %v8460 = vld [vmem:[%s8442 + $0x28] sm:$0x1]
        %v8461 = vsel %vm8444, 0, %v8460
        %8462 = vst [vmem:[%s8442 + $0x28] sm:$0x1] %v8461
        %v8463 = vld [vmem:[%s8442 + $0x30] sm:$0x1]
        %v8464 = vsel %vm8444, 0, %v8463
        %8465 = vst [vmem:[%s8442 + $0x30] sm:$0x1] %v8464
        %v8466 = vld [vmem:[%s8442 + $0x38] sm:$0x1]
        %v8467 = vsel %vm8444, 0, %v8466
        %8468 = vst [vmem:[%s8442 + $0x38] sm:$0x1] %v8467
        %vm8469 = vmand %vm8443, %vm6809
        %v8470 = vld [vmem:[%s8442 + $0x4] sm:$0x1]
        %v8471 = vsel %vm8469, 0, %v8470
        %8472 = vst [vmem:[%s8442 + $0x4] sm:$0x1] %v8471
        %v8473 = vld [vmem:[%s8442 + $0xc] sm:$0x1]
        %v8474 = vsel %vm8469, 0, %v8473
        %8475 = vst [vmem:[%s8442 + $0xc] sm:$0x1] %v8474
        %v8476 = vld [vmem:[%s8442 + $0x14] sm:$0x1]
        %v8477 = vsel %vm8469, 0, %v8476
        %8478 = vst [vmem:[%s8442 + $0x14] sm:$0x1] %v8477
        %v8479 = vld [vmem:[%s8442 + $0x1c] sm:$0x1]
        %v8480 = vsel %vm8469, 0, %v8479
        %8481 = vst [vmem:[%s8442 + $0x1c] sm:$0x1] %v8480
        %v8482 = vld [vmem:[%s8442 + $0x24] sm:$0x1]
        %v8483 = vsel %vm8469, 0, %v8482
        %8484 = vst [vmem:[%s8442 + $0x24] sm:$0x1] %v8483
        %v8485 = vld [vmem:[%s8442 + $0x2c] sm:$0x1]
        %v8486 = vsel %vm8469, 0, %v8485
        %8487 = vst [vmem:[%s8442 + $0x2c] sm:$0x1] %v8486
        %v8488 = vld [vmem:[%s8442 + $0x34] sm:$0x1]
        %v8489 = vsel %vm8469, 0, %v8488
        %8490 = vst [vmem:[%s8442 + $0x34] sm:$0x1] %v8489
        %v8491 = vld [vmem:[%s8442 + $0x3c] sm:$0x1]
        %v8492 = vsel %vm8469, 0, %v8491
        %8493 = vst [vmem:[%s8442 + $0x3c] sm:$0x1] %v8492
        %v8494 = vpack.c.bf16 %v8427, %v8427
        %v8495 = vpack.c.bf16 %v8428, %v8428
        %v8496 = vpack.c.bf16 %v8429, %v8429
        %v8497 = vpack.c.bf16 %v8430, %v8430
        %v8498 = vpack.c.bf16 %v8431, %v8431
        %v8499 = vpack.c.bf16 %v8432, %v8432
        %v8500 = vpack.c.bf16 %v8433, %v8433
        %v8501 = vpack.c.bf16 %v8434, %v8434
        %v8503 = vshrl.u32 %v8494, 16
        %v8505 = vrot.slane %v8503, 7
        %v8506 = vshll.u32 %v8494, 16
        %v8508 = vor.u32 %v8505, %v8506
        %v8509 = vrot.slane %v8505, 4
        %v8511 = vshrl.u32 %v8495, 16
        %v8513 = vrot.slane %v8511, 7
        %v8514 = vshll.u32 %v8495, 16
        %v8516 = vor.u32 %v8513, %v8514
        %v8517 = vrot.slane %v8513, 4
        %v8519 = vshrl.u32 %v8496, 16
        %v8521 = vrot.slane %v8519, 7
        %v8522 = vshll.u32 %v8496, 16
        %v8524 = vor.u32 %v8521, %v8522
        %v8525 = vrot.slane %v8521, 4
        %v8527 = vshrl.u32 %v8497, 16
        %v8529 = vrot.slane %v8527, 7
        %v8530 = vshll.u32 %v8497, 16
        %v8532 = vor.u32 %v8529, %v8530
        %v8533 = vrot.slane %v8529, 4
        %v8535 = vshrl.u32 %v8498, 16
        %v8537 = vrot.slane %v8535, 7
        %v8538 = vshll.u32 %v8498, 16
        %v8540 = vor.u32 %v8537, %v8538
        %v8541 = vrot.slane %v8537, 4
        %v8543 = vshrl.u32 %v8499, 16
        %v8545 = vrot.slane %v8543, 7
        %v8546 = vshll.u32 %v8499, 16
        %v8548 = vor.u32 %v8545, %v8546
        %v8549 = vrot.slane %v8545, 4
        %v8551 = vshrl.u32 %v8500, 16
        %v8553 = vrot.slane %v8551, 7
        %v8554 = vshll.u32 %v8500, 16
        %v8556 = vor.u32 %v8553, %v8554
        %v8557 = vrot.slane %v8553, 4
        %v8559 = vshrl.u32 %v8501, 16
        %v8561 = vrot.slane %v8559, 7
        %v8562 = vshll.u32 %v8501, 16
        %v8564 = vor.u32 %v8561, %v8562
        %v8565 = vrot.slane %v8561, 4
        %vm8582 = vcmask 125952
        %vm8583 = vmand %vm8582, %vm6809
        %v8584 = vld [vmem:[%s8442] sm:$0xf]
        %v8585 = vsel %vm8583, %v8508, %v8584
        %8586 = vst [vmem:[%s8442] sm:$0xf] %v8585
        %vm8587 = vcmask 122880
        %vm8588 = vmand %vm8587, %vm6783
        %v8589 = vld [vmem:[%s8442 + $0x4] sm:$0x1]
        %v8590 = vsel %vm8588, %v8509, %v8589
        %8591 = vst [vmem:[%s8442 + $0x4] sm:$0x1] %v8590
        %v8592 = vld [vmem:[%s8442 + $0x8] sm:$0xf]
        %v8593 = vsel %vm8583, %v8516, %v8592
        %8594 = vst [vmem:[%s8442 + $0x8] sm:$0xf] %v8593
        %v8595 = vld [vmem:[%s8442 + $0xc] sm:$0x1]
        %v8596 = vsel %vm8588, %v8517, %v8595
        %8597 = vst [vmem:[%s8442 + $0xc] sm:$0x1] %v8596
        %v8598 = vld [vmem:[%s8442 + $0x10] sm:$0xf]
        %v8599 = vsel %vm8583, %v8524, %v8598
        %8600 = vst [vmem:[%s8442 + $0x10] sm:$0xf] %v8599
        %v8601 = vld [vmem:[%s8442 + $0x14] sm:$0x1]
        %v8602 = vsel %vm8588, %v8525, %v8601
        %8603 = vst [vmem:[%s8442 + $0x14] sm:$0x1] %v8602
        %v8604 = vld [vmem:[%s8442 + $0x18] sm:$0xf]
        %v8605 = vsel %vm8583, %v8532, %v8604
        %8606 = vst [vmem:[%s8442 + $0x18] sm:$0xf] %v8605
        %v8607 = vld [vmem:[%s8442 + $0x1c] sm:$0x1]
        %v8608 = vsel %vm8588, %v8533, %v8607
        %8609 = vst [vmem:[%s8442 + $0x1c] sm:$0x1] %v8608
        %v8610 = vld [vmem:[%s8442 + $0x20] sm:$0xf]
        %v8611 = vsel %vm8583, %v8540, %v8610
        %8612 = vst [vmem:[%s8442 + $0x20] sm:$0xf] %v8611
        %v8613 = vld [vmem:[%s8442 + $0x24] sm:$0x1]
        %v8614 = vsel %vm8588, %v8541, %v8613
        %8615 = vst [vmem:[%s8442 + $0x24] sm:$0x1] %v8614
        %v8616 = vld [vmem:[%s8442 + $0x28] sm:$0xf]
        %v8617 = vsel %vm8583, %v8548, %v8616
        %8618 = vst [vmem:[%s8442 + $0x28] sm:$0xf] %v8617
        %v8619 = vld [vmem:[%s8442 + $0x2c] sm:$0x1]
        %v8620 = vsel %vm8588, %v8549, %v8619
        %8621 = vst [vmem:[%s8442 + $0x2c] sm:$0x1] %v8620
        %v8622 = vld [vmem:[%s8442 + $0x30] sm:$0xf]
        %v8623 = vsel %vm8583, %v8556, %v8622
        %8624 = vst [vmem:[%s8442 + $0x30] sm:$0xf] %v8623
        %v8625 = vld [vmem:[%s8442 + $0x34] sm:$0x1]
        %v8626 = vsel %vm8588, %v8557, %v8625
        %8627 = vst [vmem:[%s8442 + $0x34] sm:$0x1] %v8626
        %v8628 = vld [vmem:[%s8442 + $0x38] sm:$0xf]
        %v8629 = vsel %vm8583, %v8564, %v8628
        %8630 = vst [vmem:[%s8442 + $0x38] sm:$0xf] %v8629
        %v8631 = vld [vmem:[%s8442 + $0x3c] sm:$0x1]
        %v8632 = vsel %vm8588, %v8565, %v8631
        %8633 = vst [vmem:[%s8442 + $0x3c] sm:$0x1] %v8632
        %v8634 = vpack.c.bf16 %v2340, %v2340
        %v8635 = vpack.c.bf16 %v2341, %v2341
        %v8636 = vpack.c.bf16 %v2342, %v2342
        %v8637 = vpack.c.bf16 %v2343, %v2343
        %v8638 = vpack.c.bf16 %v2344, %v2344
        %v8639 = vpack.c.bf16 %v2345, %v2345
        %v8640 = vpack.c.bf16 %v2346, %v2346
        %v8641 = vpack.c.bf16 %v2347, %v2347
        %v8643 = vshrl.u32 %v8634, 16
        %v8645 = vrot.slane %v8643, 7
        %v8646 = vshll.u32 %v8634, 16
        %v8648 = vor.u32 %v8645, %v8646
        %v8649 = vrot.slane %v8645, 4
        %v8651 = vshrl.u32 %v8635, 16
        %v8653 = vrot.slane %v8651, 7
        %v8654 = vshll.u32 %v8635, 16
        %v8656 = vor.u32 %v8653, %v8654
        %v8657 = vrot.slane %v8653, 4
        %v8659 = vshrl.u32 %v8636, 16
        %v8661 = vrot.slane %v8659, 7
        %v8662 = vshll.u32 %v8636, 16
        %v8664 = vor.u32 %v8661, %v8662
        %v8665 = vrot.slane %v8661, 4
        %v8667 = vshrl.u32 %v8637, 16
        %v8669 = vrot.slane %v8667, 7
        %v8670 = vshll.u32 %v8637, 16
        %v8672 = vor.u32 %v8669, %v8670
        %v8673 = vrot.slane %v8669, 4
        %v8675 = vshrl.u32 %v8638, 16
        %v8677 = vrot.slane %v8675, 7
        %v8678 = vshll.u32 %v8638, 16
        %v8680 = vor.u32 %v8677, %v8678
        %v8681 = vrot.slane %v8677, 4
        %v8683 = vshrl.u32 %v8639, 16
        %v8685 = vrot.slane %v8683, 7
        %v8686 = vshll.u32 %v8639, 16
        %v8688 = vor.u32 %v8685, %v8686
        %v8689 = vrot.slane %v8685, 4
        %v8691 = vshrl.u32 %v8640, 16
        %v8693 = vrot.slane %v8691, 7
        %v8694 = vshll.u32 %v8640, 16
        %v8696 = vor.u32 %v8693, %v8694
        %v8697 = vrot.slane %v8693, 4
        %v8699 = vshrl.u32 %v8641, 16
        %v8701 = vrot.slane %v8699, 7
        %v8702 = vshll.u32 %v8641, 16
        %v8704 = vor.u32 %v8701, %v8702
        %v8705 = vrot.slane %v8701, 4
        %8706 = vrot.lane.b32.xlu0 %v8648, 16
        %v8707 = vpop.permute.xlu0 %8706
        %8708 = vrot.lane.b32.xlu0 %v8649, 16
        %v8709 = vpop.permute.xlu0 %8708
        %8710 = vrot.lane.b32.xlu0 %v8656, 16
        %v8711 = vpop.permute.xlu0 %8710
        %8712 = vrot.lane.b32.xlu0 %v8657, 16
        %v8713 = vpop.permute.xlu0 %8712
        %8714 = vrot.lane.b32.xlu0 %v8664, 16
        %v8715 = vpop.permute.xlu0 %8714
        %8716 = vrot.lane.b32.xlu0 %v8665, 16
        %v8717 = vpop.permute.xlu0 %8716
        %8718 = vrot.lane.b32.xlu0 %v8672, 16
        %v8719 = vpop.permute.xlu0 %8718
        %8720 = vrot.lane.b32.xlu0 %v8673, 16
        %v8721 = vpop.permute.xlu0 %8720
        %8722 = vrot.lane.b32.xlu0 %v8680, 16
        %v8723 = vpop.permute.xlu0 %8722
        %8724 = vrot.lane.b32.xlu0 %v8681, 16
        %v8725 = vpop.permute.xlu0 %8724
        %8726 = vrot.lane.b32.xlu0 %v8688, 16
        %v8727 = vpop.permute.xlu0 %8726
        %8728 = vrot.lane.b32.xlu0 %v8689, 16
        %v8729 = vpop.permute.xlu0 %8728
        %8730 = vrot.lane.b32.xlu0 %v8696, 16
        %v8731 = vpop.permute.xlu0 %8730
        %8732 = vrot.lane.b32.xlu0 %v8697, 16
        %v8733 = vpop.permute.xlu0 %8732
        %8734 = vrot.lane.b32.xlu0 %v8704, 16
        %v8735 = vpop.permute.xlu0 %8734
        %8736 = vrot.lane.b32.xlu0 %v8705, 16
        %v8737 = vpop.permute.xlu0 %8736
        %vm8754 = vcmask 257152
        %vm8755 = vmand %vm8754, %vm6809
        %v8756 = vld [vmem:[%s8442] sm:$0xf]
        %v8757 = vsel %vm8755, %v8707, %v8756
        %8758 = vst [vmem:[%s8442] sm:$0xf] %v8757
        %vm8759 = vcmask 254080
        %vm8760 = vmand %vm8759, %vm6783
        %v8761 = vld [vmem:[%s8442 + $0x4] sm:$0x1]
        %v8762 = vsel %vm8760, %v8709, %v8761
        %8763 = vst [vmem:[%s8442 + $0x4] sm:$0x1] %v8762
        %v8764 = vld [vmem:[%s8442 + $0x8] sm:$0xf]
        %v8765 = vsel %vm8755, %v8711, %v8764
        %8766 = vst [vmem:[%s8442 + $0x8] sm:$0xf] %v8765
        %v8767 = vld [vmem:[%s8442 + $0xc] sm:$0x1]
        %v8768 = vsel %vm8760, %v8713, %v8767
        %8769 = vst [vmem:[%s8442 + $0xc] sm:$0x1] %v8768
        %v8770 = vld [vmem:[%s8442 + $0x10] sm:$0xf]
        %v8771 = vsel %vm8755, %v8715, %v8770
        %8772 = vst [vmem:[%s8442 + $0x10] sm:$0xf] %v8771
        %v8773 = vld [vmem:[%s8442 + $0x14] sm:$0x1]
        %v8774 = vsel %vm8760, %v8717, %v8773
        %8775 = vst [vmem:[%s8442 + $0x14] sm:$0x1] %v8774
        %v8776 = vld [vmem:[%s8442 + $0x18] sm:$0xf]
        %v8777 = vsel %vm8755, %v8719, %v8776
        %8778 = vst [vmem:[%s8442 + $0x18] sm:$0xf] %v8777
        %v8779 = vld [vmem:[%s8442 + $0x1c] sm:$0x1]
        %v8780 = vsel %vm8760, %v8721, %v8779
        %8781 = vst [vmem:[%s8442 + $0x1c] sm:$0x1] %v8780
        %v8782 = vld [vmem:[%s8442 + $0x20] sm:$0xf]
        %v8783 = vsel %vm8755, %v8723, %v8782
        %8784 = vst [vmem:[%s8442 + $0x20] sm:$0xf] %v8783
        %v8785 = vld [vmem:[%s8442 + $0x24] sm:$0x1]
        %v8786 = vsel %vm8760, %v8725, %v8785
        %8787 = vst [vmem:[%s8442 + $0x24] sm:$0x1] %v8786
        %v8788 = vld [vmem:[%s8442 + $0x28] sm:$0xf]
        %v8789 = vsel %vm8755, %v8727, %v8788
        %8790 = vst [vmem:[%s8442 + $0x28] sm:$0xf] %v8789
        %v8791 = vld [vmem:[%s8442 + $0x2c] sm:$0x1]
        %v8792 = vsel %vm8760, %v8729, %v8791
        %8793 = vst [vmem:[%s8442 + $0x2c] sm:$0x1] %v8792
        %v8794 = vld [vmem:[%s8442 + $0x30] sm:$0xf]
        %v8795 = vsel %vm8755, %v8731, %v8794
        %8796 = vst [vmem:[%s8442 + $0x30] sm:$0xf] %v8795
        %v8797 = vld [vmem:[%s8442 + $0x34] sm:$0x1]
        %v8798 = vsel %vm8760, %v8733, %v8797
        %8799 = vst [vmem:[%s8442 + $0x34] sm:$0x1] %v8798
        %v8800 = vld [vmem:[%s8442 + $0x38] sm:$0xf]
        %v8801 = vsel %vm8755, %v8735, %v8800
        %8802 = vst [vmem:[%s8442 + $0x38] sm:$0xf] %v8801
        %v8803 = vld [vmem:[%s8442 + $0x3c] sm:$0x1]
        %v8804 = vsel %vm8760, %v8737, %v8803
        %8805 = vst [vmem:[%s8442 + $0x3c] sm:$0x1] %v8804
        %v8806 = vld [vmem:[#allocation4] sm:$0xf]
        %v8807 = vld [vmem:[#allocation4 + $0x8] sm:$0xf]
        %v8808 = vld [vmem:[#allocation4 + $0x10] sm:$0xf]
        %v8809 = vld [vmem:[#allocation4 + $0x18] sm:$0xf]
        %v8810 = vld [vmem:[#allocation4 + $0x20] sm:$0xf]
        %v8811 = vld [vmem:[#allocation4 + $0x28] sm:$0xf]
        %v8812 = vld [vmem:[#allocation4 + $0x30] sm:$0xf]
        %v8813 = vld [vmem:[#allocation4 + $0x38] sm:$0xf]
        %8814 = vst.msk [vmem:[#allocation5] sm:$0xf] %vm8435, %v8806
        %8815 = vst.msk [vmem:[#allocation5 + $0x10] sm:$0xf] %vm8435, %v8807
        %8816 = vst.msk [vmem:[#allocation5 + $0x20] sm:$0xf] %vm8435, %v8808
        %8817 = vst.msk [vmem:[#allocation5 + $0x30] sm:$0xf] %vm8435, %v8809
        %8818 = vst.msk [vmem:[#allocation5 + $0x40] sm:$0xf] %vm8435, %v8810
        %8819 = vst.msk [vmem:[#allocation5 + $0x50] sm:$0xf] %vm8435, %v8811
        %8820 = vst.msk [vmem:[#allocation5 + $0x60] sm:$0xf] %vm8435, %v8812
        %8821 = vst.msk [vmem:[#allocation5 + $0x70] sm:$0xf] %vm8435, %v8813
        %v8822 = vld [vmem:[#allocation4] sm:$0xf]
        %v8823 = vld [vmem:[#allocation4 + $0x4] sm:$0x1]
        %v8824 = vld [vmem:[#allocation4 + $0x8] sm:$0xf]
        %v8825 = vld [vmem:[#allocation4 + $0xc] sm:$0x1]
        %v8826 = vld [vmem:[#allocation4 + $0x10] sm:$0xf]
        %v8827 = vld [vmem:[#allocation4 + $0x14] sm:$0x1]
        %v8828 = vld [vmem:[#allocation4 + $0x18] sm:$0xf]
        %v8829 = vld [vmem:[#allocation4 + $0x1c] sm:$0x1]
        %v8830 = vld [vmem:[#allocation4 + $0x20] sm:$0xf]
        %v8831 = vld [vmem:[#allocation4 + $0x24] sm:$0x1]
        %v8832 = vld [vmem:[#allocation4 + $0x28] sm:$0xf]
        %v8833 = vld [vmem:[#allocation4 + $0x2c] sm:$0x1]
        %v8834 = vld [vmem:[#allocation4 + $0x30] sm:$0xf]
        %v8835 = vld [vmem:[#allocation4 + $0x34] sm:$0x1]
        %v8836 = vld [vmem:[#allocation4 + $0x38] sm:$0xf]
        %v8837 = vld [vmem:[#allocation4 + $0x3c] sm:$0x1]
        %v8839 = vshrl.u32 %v8822, 16
        %v8841 = vrot.slane %v8839, 4
        %v8842 = vshll.u32 %v8822, 16
        %v8844 = vrot.slane %v8842, 5
        %v8845 = vor.u32 %v8841, %v8844
        %v8846 = vrot.slane %v8845, 4
        %v8848 = vshll.u32 %v8823, 16
        %v8850 = vrot.slane %v8848, 5
        %v8851 = vsel %vm3721, %v8846, %v8850
        %v8853 = vshrl.u32 %v8824, 16
        %v8855 = vrot.slane %v8853, 4
        %v8856 = vshll.u32 %v8824, 16
        %v8858 = vrot.slane %v8856, 5
        %v8859 = vor.u32 %v8855, %v8858
        %v8860 = vrot.slane %v8859, 4
        %v8862 = vshll.u32 %v8825, 16
        %v8864 = vrot.slane %v8862, 5
        %v8865 = vsel %vm3721, %v8860, %v8864
        %v8867 = vshrl.u32 %v8826, 16
        %v8869 = vrot.slane %v8867, 4
        %v8870 = vshll.u32 %v8826, 16
        %v8872 = vrot.slane %v8870, 5
        %v8873 = vor.u32 %v8869, %v8872
        %v8874 = vrot.slane %v8873, 4
        %v8876 = vshll.u32 %v8827, 16
        %v8878 = vrot.slane %v8876, 5
        %v8879 = vsel %vm3721, %v8874, %v8878
        %v8881 = vshrl.u32 %v8828, 16
        %v8883 = vrot.slane %v8881, 4
        %v8884 = vshll.u32 %v8828, 16
        %v8886 = vrot.slane %v8884, 5
        %v8887 = vor.u32 %v8883, %v8886
        %v8888 = vrot.slane %v8887, 4
        %v8890 = vshll.u32 %v8829, 16
        %v8892 = vrot.slane %v8890, 5
        %v8893 = vsel %vm3721, %v8888, %v8892
        %v8895 = vshrl.u32 %v8830, 16
        %v8897 = vrot.slane %v8895, 4
        %v8898 = vshll.u32 %v8830, 16
        %v8900 = vrot.slane %v8898, 5
        %v8901 = vor.u32 %v8897, %v8900
        %v8902 = vrot.slane %v8901, 4
        %v8904 = vshll.u32 %v8831, 16
        %v8906 = vrot.slane %v8904, 5
        %v8907 = vsel %vm3721, %v8902, %v8906
        %v8909 = vshrl.u32 %v8832, 16
        %v8911 = vrot.slane %v8909, 4
        %v8912 = vshll.u32 %v8832, 16
        %v8914 = vrot.slane %v8912, 5
        %v8915 = vor.u32 %v8911, %v8914
        %v8916 = vrot.slane %v8915, 4
        %v8918 = vshll.u32 %v8833, 16
        %v8920 = vrot.slane %v8918, 5
        %v8921 = vsel %vm3721, %v8916, %v8920
        %v8923 = vshrl.u32 %v8834, 16
        %v8925 = vrot.slane %v8923, 4
        %v8926 = vshll.u32 %v8834, 16
        %v8928 = vrot.slane %v8926, 5
        %v8929 = vor.u32 %v8925, %v8928
        %v8930 = vrot.slane %v8929, 4
        %v8932 = vshll.u32 %v8835, 16
        %v8934 = vrot.slane %v8932, 5
        %v8935 = vsel %vm3721, %v8930, %v8934
        %v8937 = vshrl.u32 %v8836, 16
        %v8939 = vrot.slane %v8937, 4
        %v8940 = vshll.u32 %v8836, 16
        %v8942 = vrot.slane %v8940, 5
        %v8943 = vor.u32 %v8939, %v8942
        %v8944 = vrot.slane %v8943, 4
        %v8946 = vshll.u32 %v8837, 16
        %v8948 = vrot.slane %v8946, 5
        %v8949 = vsel %vm3721, %v8944, %v8948
        %8950 = vrot.lane.b32.xlu0 %v8851, 32
        %v8951 = vpop.permute.xlu0 %8950
        %8952 = vrot.lane.b32.xlu0 %v8865, 32
        %v8953 = vpop.permute.xlu0 %8952
        %8954 = vrot.lane.b32.xlu0 %v8879, 32
        %v8955 = vpop.permute.xlu0 %8954
        %8956 = vrot.lane.b32.xlu0 %v8893, 32
        %v8957 = vpop.permute.xlu0 %8956
        %8958 = vrot.lane.b32.xlu0 %v8907, 32
        %v8959 = vpop.permute.xlu0 %8958
        %8960 = vrot.lane.b32.xlu0 %v8921, 32
        %v8961 = vpop.permute.xlu0 %8960
        %8962 = vrot.lane.b32.xlu0 %v8935, 32
        %v8963 = vpop.permute.xlu0 %8962
        %8964 = vrot.lane.b32.xlu0 %v8949, 32
        %v8965 = vpop.permute.xlu0 %8964
        %vm8974 = vcmask 519424
        %8975 = vst.msk [vmem:[#allocation5] sm:$0xf] %vm8974, %v8951
        %8976 = vst.msk [vmem:[#allocation5 + $0x10] sm:$0xf] %vm8974, %v8953
        %8977 = vst.msk [vmem:[#allocation5 + $0x20] sm:$0xf] %vm8974, %v8955
        %8978 = vst.msk [vmem:[#allocation5 + $0x30] sm:$0xf] %vm8974, %v8957
        %8979 = vst.msk [vmem:[#allocation5 + $0x40] sm:$0xf] %vm8974, %v8959
        %8980 = vst.msk [vmem:[#allocation5 + $0x50] sm:$0xf] %vm8974, %v8961
        %8981 = vst.msk [vmem:[#allocation5 + $0x60] sm:$0xf] %vm8974, %v8963
        %8982 = vst.msk [vmem:[#allocation5 + $0x70] sm:$0xf] %vm8974, %v8965
        %v8983 = vld [vmem:[#allocation4] sm:$0xe]
        %v8984 = vld [vmem:[#allocation4 + $0x4] sm:$0x1]
        %v8985 = vld [vmem:[#allocation4 + $0x8] sm:$0xe]
        %v8986 = vld [vmem:[#allocation4 + $0xc] sm:$0x1]
        %v8987 = vld [vmem:[#allocation4 + $0x10] sm:$0xe]
        %v8988 = vld [vmem:[#allocation4 + $0x14] sm:$0x1]
        %v8989 = vld [vmem:[#allocation4 + $0x18] sm:$0xe]
        %v8990 = vld [vmem:[#allocation4 + $0x1c] sm:$0x1]
        %v8991 = vld [vmem:[#allocation4 + $0x20] sm:$0xe]
        %v8992 = vld [vmem:[#allocation4 + $0x24] sm:$0x1]
        %v8993 = vld [vmem:[#allocation4 + $0x28] sm:$0xe]
        %v8994 = vld [vmem:[#allocation4 + $0x2c] sm:$0x1]
        %v8995 = vld [vmem:[#allocation4 + $0x30] sm:$0xe]
        %v8996 = vld [vmem:[#allocation4 + $0x34] sm:$0x1]
        %v8997 = vld [vmem:[#allocation4 + $0x38] sm:$0xe]
        %v8998 = vld [vmem:[#allocation4 + $0x3c] sm:$0x1]
        %v9015 = vrot.slane %v8983, 5
        %v9016 = vrot.slane %v9015, 4
        %v9017 = vrot.slane %v8984, 5
        %v9018 = vsel %vm2599, %v9016, %v9017
        %v9019 = vrot.slane %v8985, 5
        %v9020 = vrot.slane %v9019, 4
        %v9021 = vrot.slane %v8986, 5
        %v9022 = vsel %vm2599, %v9020, %v9021
        %v9023 = vrot.slane %v8987, 5
        %v9024 = vrot.slane %v9023, 4
        %v9025 = vrot.slane %v8988, 5
        %v9026 = vsel %vm2599, %v9024, %v9025
        %v9027 = vrot.slane %v8989, 5
        %v9028 = vrot.slane %v9027, 4
        %v9029 = vrot.slane %v8990, 5
        %v9030 = vsel %vm2599, %v9028, %v9029
        %v9031 = vrot.slane %v8991, 5
        %v9032 = vrot.slane %v9031, 4
        %v9033 = vrot.slane %v8992, 5
        %v9034 = vsel %vm2599, %v9032, %v9033
        %v9035 = vrot.slane %v8993, 5
        %v9036 = vrot.slane %v9035, 4
        %v9037 = vrot.slane %v8994, 5
        %v9038 = vsel %vm2599, %v9036, %v9037
        %v9039 = vrot.slane %v8995, 5
        %v9040 = vrot.slane %v9039, 4
        %v9041 = vrot.slane %v8996, 5
        %v9042 = vsel %vm2599, %v9040, %v9041
        %v9043 = vrot.slane %v8997, 5
        %v9044 = vrot.slane %v9043, 4
        %v9045 = vrot.slane %v8998, 5
        %v9046 = vsel %vm2599, %v9044, %v9045
        %9047 = vrot.lane.b32.xlu0 %v9018, 64
        %v9048 = vpop.permute.xlu0 %9047
        %9049 = vrot.lane.b32.xlu0 %v9022, 64
        %v9050 = vpop.permute.xlu0 %9049
        %9051 = vrot.lane.b32.xlu0 %v9026, 64
        %v9052 = vpop.permute.xlu0 %9051
        %9053 = vrot.lane.b32.xlu0 %v9030, 64
        %v9054 = vpop.permute.xlu0 %9053
        %9055 = vrot.lane.b32.xlu0 %v9034, 64
        %v9056 = vpop.permute.xlu0 %9055
        %9057 = vrot.lane.b32.xlu0 %v9038, 64
        %v9058 = vpop.permute.xlu0 %9057
        %9059 = vrot.lane.b32.xlu0 %v9042, 64
        %v9060 = vpop.permute.xlu0 %9059
        %9061 = vrot.lane.b32.xlu0 %v9046, 64
        %v9062 = vpop.permute.xlu0 %9061
        %vm9071 = vcmask 781824
        %9072 = vst.msk [vmem:[#allocation5] sm:$0xf] %vm9071, %v9048
        %9073 = vst.msk [vmem:[#allocation5 + $0x10] sm:$0xf] %vm9071, %v9050
        %9074 = vst.msk [vmem:[#allocation5 + $0x20] sm:$0xf] %vm9071, %v9052
        %9075 = vst.msk [vmem:[#allocation5 + $0x30] sm:$0xf] %vm9071, %v9054
        %9076 = vst.msk [vmem:[#allocation5 + $0x40] sm:$0xf] %vm9071, %v9056
        %9077 = vst.msk [vmem:[#allocation5 + $0x50] sm:$0xf] %vm9071, %v9058
        %9078 = vst.msk [vmem:[#allocation5 + $0x60] sm:$0xf] %vm9071, %v9060
        %9079 = vst.msk [vmem:[#allocation5 + $0x70] sm:$0xf] %vm9071, %v9062
        %v9080 = vld [vmem:[%s8442] sm:$0xf]
        %v9081 = vld [vmem:[%s8442 + $0x8] sm:$0xf]
        %v9082 = vld [vmem:[%s8442 + $0x10] sm:$0xf]
        %v9083 = vld [vmem:[%s8442 + $0x18] sm:$0xf]
        %v9084 = vld [vmem:[%s8442 + $0x20] sm:$0xf]
        %v9085 = vld [vmem:[%s8442 + $0x28] sm:$0xf]
        %v9086 = vld [vmem:[%s8442 + $0x30] sm:$0xf]
        %v9087 = vld [vmem:[%s8442 + $0x38] sm:$0xf]
        %9096 = vrot.lane.b32.xlu0 %v9080, 96
        %v9097 = vpop.permute.xlu0 %9096
        %9098 = vrot.lane.b32.xlu0 %v9081, 96
        %v9099 = vpop.permute.xlu0 %9098
        %9100 = vrot.lane.b32.xlu0 %v9082, 96
        %v9101 = vpop.permute.xlu0 %9100
        %9102 = vrot.lane.b32.xlu0 %v9083, 96
        %v9103 = vpop.permute.xlu0 %9102
        %9104 = vrot.lane.b32.xlu0 %v9084, 96
        %v9105 = vpop.permute.xlu0 %9104
        %9106 = vrot.lane.b32.xlu0 %v9085, 96
        %v9107 = vpop.permute.xlu0 %9106
        %9108 = vrot.lane.b32.xlu0 %v9086, 96
        %v9109 = vpop.permute.xlu0 %9108
        %9110 = vrot.lane.b32.xlu0 %v9087, 96
        %v9111 = vpop.permute.xlu0 %9110
        %9120 = vst.msk [vmem:[#allocation5] sm:$0xf] %vm7255, %v9097
        %9121 = vst.msk [vmem:[#allocation5 + $0x10] sm:$0xf] %vm7255, %v9099
        %9122 = vst.msk [vmem:[#allocation5 + $0x20] sm:$0xf] %vm7255, %v9101
        %9123 = vst.msk [vmem:[#allocation5 + $0x30] sm:$0xf] %vm7255, %v9103
        %9124 = vst.msk [vmem:[#allocation5 + $0x40] sm:$0xf] %vm7255, %v9105
        %9125 = vst.msk [vmem:[#allocation5 + $0x50] sm:$0xf] %vm7255, %v9107
        %9126 = vst.msk [vmem:[#allocation5 + $0x60] sm:$0xf] %vm7255, %v9109
        %9127 = vst.msk [vmem:[#allocation5 + $0x70] sm:$0xf] %vm7255, %v9111
        %v9128 = vld [vmem:[%s8442] sm:$0xf]
        %v9129 = vld [vmem:[%s8442 + $0x4] sm:$0x1]
        %v9130 = vld [vmem:[%s8442 + $0x8] sm:$0xf]
        %v9131 = vld [vmem:[%s8442 + $0xc] sm:$0x1]
        %v9132 = vld [vmem:[%s8442 + $0x10] sm:$0xf]
        %v9133 = vld [vmem:[%s8442 + $0x14] sm:$0x1]
        %v9134 = vld [vmem:[%s8442 + $0x18] sm:$0xf]
        %v9135 = vld [vmem:[%s8442 + $0x1c] sm:$0x1]
        %v9136 = vld [vmem:[%s8442 + $0x20] sm:$0xf]
        %v9137 = vld [vmem:[%s8442 + $0x24] sm:$0x1]
        %v9138 = vld [vmem:[%s8442 + $0x28] sm:$0xf]
        %v9139 = vld [vmem:[%s8442 + $0x2c] sm:$0x1]
        %v9140 = vld [vmem:[%s8442 + $0x30] sm:$0xf]
        %v9141 = vld [vmem:[%s8442 + $0x34] sm:$0x1]
        %v9142 = vld [vmem:[%s8442 + $0x38] sm:$0xf]
        %v9143 = vld [vmem:[%s8442 + $0x3c] sm:$0x1]
        %v9145 = vshrl.u32 %v9128, 16
        %v9147 = vrot.slane %v9145, 4
        %v9148 = vshll.u32 %v9128, 16
        %v9150 = vrot.slane %v9148, 5
        %v9151 = vor.u32 %v9147, %v9150
        %v9152 = vrot.slane %v9151, 4
        %v9154 = vshll.u32 %v9129, 16
        %v9156 = vrot.slane %v9154, 5
        %v9157 = vsel %vm3721, %v9152, %v9156
        %v9159 = vshrl.u32 %v9130, 16
        %v9161 = vrot.slane %v9159, 4
        %v9162 = vshll.u32 %v9130, 16
        %v9164 = vrot.slane %v9162, 5
        %v9165 = vor.u32 %v9161, %v9164
        %v9166 = vrot.slane %v9165, 4
        %v9168 = vshll.u32 %v9131, 16
        %v9170 = vrot.slane %v9168, 5
        %v9171 = vsel %vm3721, %v9166, %v9170
        %v9173 = vshrl.u32 %v9132, 16
        %v9175 = vrot.slane %v9173, 4
        %v9176 = vshll.u32 %v9132, 16
        %v9178 = vrot.slane %v9176, 5
        %v9179 = vor.u32 %v9175, %v9178
        %v9180 = vrot.slane %v9179, 4
        %v9182 = vshll.u32 %v9133, 16
        %v9184 = vrot.slane %v9182, 5
        %v9185 = vsel %vm3721, %v9180, %v9184
        %v9187 = vshrl.u32 %v9134, 16
        %v9189 = vrot.slane %v9187, 4
        %v9190 = vshll.u32 %v9134, 16
        %v9192 = vrot.slane %v9190, 5
        %v9193 = vor.u32 %v9189, %v9192
        %v9194 = vrot.slane %v9193, 4
        %v9196 = vshll.u32 %v9135, 16
        %v9198 = vrot.slane %v9196, 5
        %v9199 = vsel %vm3721, %v9194, %v9198
        %v9201 = vshrl.u32 %v9136, 16
        %v9203 = vrot.slane %v9201, 4
        %v9204 = vshll.u32 %v9136, 16
        %v9206 = vrot.slane %v9204, 5
        %v9207 = vor.u32 %v9203, %v9206
        %v9208 = vrot.slane %v9207, 4
        %v9210 = vshll.u32 %v9137, 16
        %v9212 = vrot.slane %v9210, 5
        %v9213 = vsel %vm3721, %v9208, %v9212
        %v9215 = vshrl.u32 %v9138, 16
        %v9217 = vrot.slane %v9215, 4
        %v9218 = vshll.u32 %v9138, 16
        %v9220 = vrot.slane %v9218, 5
        %v9221 = vor.u32 %v9217, %v9220
        %v9222 = vrot.slane %v9221, 4
        %v9224 = vshll.u32 %v9139, 16
        %v9226 = vrot.slane %v9224, 5
        %v9227 = vsel %vm3721, %v9222, %v9226
        %v9229 = vshrl.u32 %v9140, 16
        %v9231 = vrot.slane %v9229, 4
        %v9232 = vshll.u32 %v9140, 16
        %v9234 = vrot.slane %v9232, 5
        %v9235 = vor.u32 %v9231, %v9234
        %v9236 = vrot.slane %v9235, 4
        %v9238 = vshll.u32 %v9141, 16
        %v9240 = vrot.slane %v9238, 5
        %v9241 = vsel %vm3721, %v9236, %v9240
        %v9243 = vshrl.u32 %v9142, 16
        %v9245 = vrot.slane %v9243, 4
        %v9246 = vshll.u32 %v9142, 16
        %v9248 = vrot.slane %v9246, 5
        %v9249 = vor.u32 %v9245, %v9248
        %v9250 = vrot.slane %v9249, 4
        %v9252 = vshll.u32 %v9143, 16
        %v9254 = vrot.slane %v9252, 5
        %v9255 = vsel %vm3721, %v9250, %v9254
        %9264 = vst.msk [vmem:[#allocation5 + $0x4] sm:$0xf] %vm8435, %v9157
        %9265 = vst.msk [vmem:[#allocation5 + $0x14] sm:$0xf] %vm8435, %v9171
        %9266 = vst.msk [vmem:[#allocation5 + $0x24] sm:$0xf] %vm8435, %v9185
        %9267 = vst.msk [vmem:[#allocation5 + $0x34] sm:$0xf] %vm8435, %v9199
        %9268 = vst.msk [vmem:[#allocation5 + $0x44] sm:$0xf] %vm8435, %v9213
        %9269 = vst.msk [vmem:[#allocation5 + $0x54] sm:$0xf] %vm8435, %v9227
        %9270 = vst.msk [vmem:[#allocation5 + $0x64] sm:$0xf] %vm8435, %v9241
        %9271 = vst.msk [vmem:[#allocation5 + $0x74] sm:$0xf] %vm8435, %v9255
        %v9272 = vld [vmem:[%s8442] sm:$0xe]
        %v9273 = vld [vmem:[%s8442 + $0x4] sm:$0x1]
        %v9274 = vld [vmem:[%s8442 + $0x8] sm:$0xe]
        %v9275 = vld [vmem:[%s8442 + $0xc] sm:$0x1]
        %v9276 = vld [vmem:[%s8442 + $0x10] sm:$0xe]
        %v9277 = vld [vmem:[%s8442 + $0x14] sm:$0x1]
        %v9278 = vld [vmem:[%s8442 + $0x18] sm:$0xe]
        %v9279 = vld [vmem:[%s8442 + $0x1c] sm:$0x1]
        %v9280 = vld [vmem:[%s8442 + $0x20] sm:$0xe]
        %v9281 = vld [vmem:[%s8442 + $0x24] sm:$0x1]
        %v9282 = vld [vmem:[%s8442 + $0x28] sm:$0xe]
        %v9283 = vld [vmem:[%s8442 + $0x2c] sm:$0x1]
        %v9284 = vld [vmem:[%s8442 + $0x30] sm:$0xe]
        %v9285 = vld [vmem:[%s8442 + $0x34] sm:$0x1]
        %v9286 = vld [vmem:[%s8442 + $0x38] sm:$0xe]
        %v9287 = vld [vmem:[%s8442 + $0x3c] sm:$0x1]
        %v9304 = vrot.slane %v9272, 5
        %v9305 = vrot.slane %v9304, 4
        %v9306 = vrot.slane %v9273, 5
        %v9307 = vsel %vm2599, %v9305, %v9306
        %v9308 = vrot.slane %v9274, 5
        %v9309 = vrot.slane %v9308, 4
        %v9310 = vrot.slane %v9275, 5
        %v9311 = vsel %vm2599, %v9309, %v9310
        %v9312 = vrot.slane %v9276, 5
        %v9313 = vrot.slane %v9312, 4
        %v9314 = vrot.slane %v9277, 5
        %v9315 = vsel %vm2599, %v9313, %v9314
        %v9316 = vrot.slane %v9278, 5
        %v9317 = vrot.slane %v9316, 4
        %v9318 = vrot.slane %v9279, 5
        %v9319 = vsel %vm2599, %v9317, %v9318
        %v9320 = vrot.slane %v9280, 5
        %v9321 = vrot.slane %v9320, 4
        %v9322 = vrot.slane %v9281, 5
        %v9323 = vsel %vm2599, %v9321, %v9322
        %v9324 = vrot.slane %v9282, 5
        %v9325 = vrot.slane %v9324, 4
        %v9326 = vrot.slane %v9283, 5
        %v9327 = vsel %vm2599, %v9325, %v9326
        %v9328 = vrot.slane %v9284, 5
        %v9329 = vrot.slane %v9328, 4
        %v9330 = vrot.slane %v9285, 5
        %v9331 = vsel %vm2599, %v9329, %v9330
        %v9332 = vrot.slane %v9286, 5
        %v9333 = vrot.slane %v9332, 4
        %v9334 = vrot.slane %v9287, 5
        %v9335 = vsel %vm2599, %v9333, %v9334
        %9336 = vrot.lane.b32.xlu0 %v9307, 32
        %v9337 = vpop.permute.xlu0 %9336
        %9338 = vrot.lane.b32.xlu0 %v9311, 32
        %v9339 = vpop.permute.xlu0 %9338
        %9340 = vrot.lane.b32.xlu0 %v9315, 32
        %v9341 = vpop.permute.xlu0 %9340
        %9342 = vrot.lane.b32.xlu0 %v9319, 32
        %v9343 = vpop.permute.xlu0 %9342
        %9344 = vrot.lane.b32.xlu0 %v9323, 32
        %v9345 = vpop.permute.xlu0 %9344
        %9346 = vrot.lane.b32.xlu0 %v9327, 32
        %v9347 = vpop.permute.xlu0 %9346
        %9348 = vrot.lane.b32.xlu0 %v9331, 32
        %v9349 = vpop.permute.xlu0 %9348
        %9350 = vrot.lane.b32.xlu0 %v9335, 32
        %v9351 = vpop.permute.xlu0 %9350
        %9360 = vst.msk [vmem:[#allocation5 + $0x4] sm:$0xf] %vm8974, %v9337
        %9361 = vst.msk [vmem:[#allocation5 + $0x14] sm:$0xf] %vm8974, %v9339
        %9362 = vst.msk [vmem:[#allocation5 + $0x24] sm:$0xf] %vm8974, %v9341
        %9363 = vst.msk [vmem:[#allocation5 + $0x34] sm:$0xf] %vm8974, %v9343
        %9364 = vst.msk [vmem:[#allocation5 + $0x44] sm:$0xf] %vm8974, %v9345
        %9365 = vst.msk [vmem:[#allocation5 + $0x54] sm:$0xf] %vm8974, %v9347
        %9366 = vst.msk [vmem:[#allocation5 + $0x64] sm:$0xf] %vm8974, %v9349
        %9367 = vst.msk [vmem:[#allocation5 + $0x74] sm:$0xf] %vm8974, %v9351
        %s9368 = scalar_lea.vmem [#allocation4], 16
        %v9369 = vld [vmem:[%s9368] sm:$0xf]
        %v9370 = vld [vmem:[%s9368 + $0x8] sm:$0xf]
        %v9371 = vld [vmem:[%s9368 + $0x10] sm:$0xf]
        %v9372 = vld [vmem:[%s9368 + $0x18] sm:$0xf]
        %v9373 = vld [vmem:[%s9368 + $0x20] sm:$0xf]
        %v9374 = vld [vmem:[%s9368 + $0x28] sm:$0xf]
        %v9375 = vld [vmem:[%s9368 + $0x30] sm:$0xf]
        %v9376 = vld [vmem:[%s9368 + $0x38] sm:$0xf]
        %9385 = vrot.lane.b32.xlu0 %v9369, 64
        %v9386 = vpop.permute.xlu0 %9385
        %9387 = vrot.lane.b32.xlu0 %v9370, 64
        %v9388 = vpop.permute.xlu0 %9387
        %9389 = vrot.lane.b32.xlu0 %v9371, 64
        %v9390 = vpop.permute.xlu0 %9389
        %9391 = vrot.lane.b32.xlu0 %v9372, 64
        %v9392 = vpop.permute.xlu0 %9391
        %9393 = vrot.lane.b32.xlu0 %v9373, 64
        %v9394 = vpop.permute.xlu0 %9393
        %9395 = vrot.lane.b32.xlu0 %v9374, 64
        %v9396 = vpop.permute.xlu0 %9395
        %9397 = vrot.lane.b32.xlu0 %v9375, 64
        %v9398 = vpop.permute.xlu0 %9397
        %9399 = vrot.lane.b32.xlu0 %v9376, 64
        %v9400 = vpop.permute.xlu0 %9399
        %9409 = vst.msk [vmem:[#allocation5 + $0x4] sm:$0xf] %vm9071, %v9386
        %9410 = vst.msk [vmem:[#allocation5 + $0x14] sm:$0xf] %vm9071, %v9388
        %9411 = vst.msk [vmem:[#allocation5 + $0x24] sm:$0xf] %vm9071, %v9390
        %9412 = vst.msk [vmem:[#allocation5 + $0x34] sm:$0xf] %vm9071, %v9392
        %9413 = vst.msk [vmem:[#allocation5 + $0x44] sm:$0xf] %vm9071, %v9394
        %9414 = vst.msk [vmem:[#allocation5 + $0x54] sm:$0xf] %vm9071, %v9396
        %9415 = vst.msk [vmem:[#allocation5 + $0x64] sm:$0xf] %vm9071, %v9398
        %9416 = vst.msk [vmem:[#allocation5 + $0x74] sm:$0xf] %vm9071, %v9400
        %v9417 = vld [vmem:[%s9368] sm:$0xf]
        %v9418 = vld [vmem:[%s9368 + $0x4] sm:$0x1]
        %v9419 = vld [vmem:[%s9368 + $0x8] sm:$0xf]
        %v9420 = vld [vmem:[%s9368 + $0xc] sm:$0x1]
        %v9421 = vld [vmem:[%s9368 + $0x10] sm:$0xf]
        %v9422 = vld [vmem:[%s9368 + $0x14] sm:$0x1]
        %v9423 = vld [vmem:[%s9368 + $0x18] sm:$0xf]
        %v9424 = vld [vmem:[%s9368 + $0x1c] sm:$0x1]
        %v9425 = vld [vmem:[%s9368 + $0x20] sm:$0xf]
        %v9426 = vld [vmem:[%s9368 + $0x24] sm:$0x1]
        %v9427 = vld [vmem:[%s9368 + $0x28] sm:$0xf]
        %v9428 = vld [vmem:[%s9368 + $0x2c] sm:$0x1]
        %v9429 = vld [vmem:[%s9368 + $0x30] sm:$0xf]
        %v9430 = vld [vmem:[%s9368 + $0x34] sm:$0x1]
        %v9431 = vld [vmem:[%s9368 + $0x38] sm:$0xf]
        %v9432 = vld [vmem:[%s9368 + $0x3c] sm:$0x1]
        %v9434 = vshrl.u32 %v9417, 16
        %v9436 = vrot.slane %v9434, 4
        %v9437 = vshll.u32 %v9417, 16
        %v9439 = vrot.slane %v9437, 5
        %v9440 = vor.u32 %v9436, %v9439
        %v9441 = vrot.slane %v9440, 4
        %v9443 = vshll.u32 %v9418, 16
        %v9445 = vrot.slane %v9443, 5
        %v9446 = vsel %vm3721, %v9441, %v9445
        %v9448 = vshrl.u32 %v9419, 16
        %v9450 = vrot.slane %v9448, 4
        %v9451 = vshll.u32 %v9419, 16
        %v9453 = vrot.slane %v9451, 5
        %v9454 = vor.u32 %v9450, %v9453
        %v9455 = vrot.slane %v9454, 4
        %v9457 = vshll.u32 %v9420, 16
        %v9459 = vrot.slane %v9457, 5
        %v9460 = vsel %vm3721, %v9455, %v9459
        %v9462 = vshrl.u32 %v9421, 16
        %v9464 = vrot.slane %v9462, 4
        %v9465 = vshll.u32 %v9421, 16
        %v9467 = vrot.slane %v9465, 5
        %v9468 = vor.u32 %v9464, %v9467
        %v9469 = vrot.slane %v9468, 4
        %v9471 = vshll.u32 %v9422, 16
        %v9473 = vrot.slane %v9471, 5
        %v9474 = vsel %vm3721, %v9469, %v9473
        %v9476 = vshrl.u32 %v9423, 16
        %v9478 = vrot.slane %v9476, 4
        %v9479 = vshll.u32 %v9423, 16
        %v9481 = vrot.slane %v9479, 5
        %v9482 = vor.u32 %v9478, %v9481
        %v9483 = vrot.slane %v9482, 4
        %v9485 = vshll.u32 %v9424, 16
        %v9487 = vrot.slane %v9485, 5
        %v9488 = vsel %vm3721, %v9483, %v9487
        %v9490 = vshrl.u32 %v9425, 16
        %v9492 = vrot.slane %v9490, 4
        %v9493 = vshll.u32 %v9425, 16
        %v9495 = vrot.slane %v9493, 5
        %v9496 = vor.u32 %v9492, %v9495
        %v9497 = vrot.slane %v9496, 4
        %v9499 = vshll.u32 %v9426, 16
        %v9501 = vrot.slane %v9499, 5
        %v9502 = vsel %vm3721, %v9497, %v9501
        %v9504 = vshrl.u32 %v9427, 16
        %v9506 = vrot.slane %v9504, 4
        %v9507 = vshll.u32 %v9427, 16
        %v9509 = vrot.slane %v9507, 5
        %v9510 = vor.u32 %v9506, %v9509
        %v9511 = vrot.slane %v9510, 4
        %v9513 = vshll.u32 %v9428, 16
        %v9515 = vrot.slane %v9513, 5
        %v9516 = vsel %vm3721, %v9511, %v9515
        %v9518 = vshrl.u32 %v9429, 16
        %v9520 = vrot.slane %v9518, 4
        %v9521 = vshll.u32 %v9429, 16
        %v9523 = vrot.slane %v9521, 5
        %v9524 = vor.u32 %v9520, %v9523
        %v9525 = vrot.slane %v9524, 4
        %v9527 = vshll.u32 %v9430, 16
        %v9529 = vrot.slane %v9527, 5
        %v9530 = vsel %vm3721, %v9525, %v9529
        %v9532 = vshrl.u32 %v9431, 16
        %v9534 = vrot.slane %v9532, 4
        %v9535 = vshll.u32 %v9431, 16
        %v9537 = vrot.slane %v9535, 5
        %v9538 = vor.u32 %v9534, %v9537
        %v9539 = vrot.slane %v9538, 4
        %v9541 = vshll.u32 %v9432, 16
        %v9543 = vrot.slane %v9541, 5
        %v9544 = vsel %vm3721, %v9539, %v9543
        %9545 = vrot.lane.b32.xlu0 %v9446, 96
        %v9546 = vpop.permute.xlu0 %9545
        %9547 = vrot.lane.b32.xlu0 %v9460, 96
        %v9548 = vpop.permute.xlu0 %9547
        %9549 = vrot.lane.b32.xlu0 %v9474, 96
        %v9550 = vpop.permute.xlu0 %9549
        %9551 = vrot.lane.b32.xlu0 %v9488, 96
        %v9552 = vpop.permute.xlu0 %9551
        %9553 = vrot.lane.b32.xlu0 %v9502, 96
        %v9554 = vpop.permute.xlu0 %9553
        %9555 = vrot.lane.b32.xlu0 %v9516, 96
        %v9556 = vpop.permute.xlu0 %9555
        %9557 = vrot.lane.b32.xlu0 %v9530, 96
        %v9558 = vpop.permute.xlu0 %9557
        %9559 = vrot.lane.b32.xlu0 %v9544, 96
        %v9560 = vpop.permute.xlu0 %9559
        %9569 = vst.msk [vmem:[#allocation5 + $0x4] sm:$0xf] %vm7255, %v9546
        %9570 = vst.msk [vmem:[#allocation5 + $0x14] sm:$0xf] %vm7255, %v9548
        %9571 = vst.msk [vmem:[#allocation5 + $0x24] sm:$0xf] %vm7255, %v9550
        %9572 = vst.msk [vmem:[#allocation5 + $0x34] sm:$0xf] %vm7255, %v9552
        %9573 = vst.msk [vmem:[#allocation5 + $0x44] sm:$0xf] %vm7255, %v9554
        %9574 = vst.msk [vmem:[#allocation5 + $0x54] sm:$0xf] %vm7255, %v9556
        %9575 = vst.msk [vmem:[#allocation5 + $0x64] sm:$0xf] %vm7255, %v9558
        %9576 = vst.msk [vmem:[#allocation5 + $0x74] sm:$0xf] %vm7255, %v9560
        %v9577 = vld [vmem:[%s9368] sm:$0xe]
        %v9578 = vld [vmem:[%s9368 + $0x4] sm:$0x1]
        %v9579 = vld [vmem:[%s9368 + $0x8] sm:$0xe]
        %v9580 = vld [vmem:[%s9368 + $0xc] sm:$0x1]
        %v9581 = vld [vmem:[%s9368 + $0x10] sm:$0xe]
        %v9582 = vld [vmem:[%s9368 + $0x14] sm:$0x1]
        %v9583 = vld [vmem:[%s9368 + $0x18] sm:$0xe]
        %v9584 = vld [vmem:[%s9368 + $0x1c] sm:$0x1]
        %v9585 = vld [vmem:[%s9368 + $0x20] sm:$0xe]
        %v9586 = vld [vmem:[%s9368 + $0x24] sm:$0x1]
        %v9587 = vld [vmem:[%s9368 + $0x28] sm:$0xe]
        %v9588 = vld [vmem:[%s9368 + $0x2c] sm:$0x1]
        %v9589 = vld [vmem:[%s9368 + $0x30] sm:$0xe]
        %v9590 = vld [vmem:[%s9368 + $0x34] sm:$0x1]
        %v9591 = vld [vmem:[%s9368 + $0x38] sm:$0xe]
        %v9592 = vld [vmem:[%s9368 + $0x3c] sm:$0x1]
        %v9609 = vrot.slane %v9577, 5
        %v9610 = vrot.slane %v9609, 4
        %v9611 = vrot.slane %v9578, 5
        %v9612 = vsel %vm2599, %v9610, %v9611
        %v9613 = vrot.slane %v9579, 5
        %v9614 = vrot.slane %v9613, 4
        %v9615 = vrot.slane %v9580, 5
        %v9616 = vsel %vm2599, %v9614, %v9615
        %v9617 = vrot.slane %v9581, 5
        %v9618 = vrot.slane %v9617, 4
        %v9619 = vrot.slane %v9582, 5
        %v9620 = vsel %vm2599, %v9618, %v9619
        %v9621 = vrot.slane %v9583, 5
        %v9622 = vrot.slane %v9621, 4
        %v9623 = vrot.slane %v9584, 5
        %v9624 = vsel %vm2599, %v9622, %v9623
        %v9625 = vrot.slane %v9585, 5
        %v9626 = vrot.slane %v9625, 4
        %v9627 = vrot.slane %v9586, 5
        %v9628 = vsel %vm2599, %v9626, %v9627
        %v9629 = vrot.slane %v9587, 5
        %v9630 = vrot.slane %v9629, 4
        %v9631 = vrot.slane %v9588, 5
        %v9632 = vsel %vm2599, %v9630, %v9631
        %v9633 = vrot.slane %v9589, 5
        %v9634 = vrot.slane %v9633, 4
        %v9635 = vrot.slane %v9590, 5
        %v9636 = vsel %vm2599, %v9634, %v9635
        %v9637 = vrot.slane %v9591, 5
        %v9638 = vrot.slane %v9637, 4
        %v9639 = vrot.slane %v9592, 5
        %v9640 = vsel %vm2599, %v9638, %v9639
        %9649 = vst.msk [vmem:[#allocation5 + $0x8] sm:$0xf] %vm8435, %v9612
        %9650 = vst.msk [vmem:[#allocation5 + $0x18] sm:$0xf] %vm8435, %v9616
        %9651 = vst.msk [vmem:[#allocation5 + $0x28] sm:$0xf] %vm8435, %v9620
        %9652 = vst.msk [vmem:[#allocation5 + $0x38] sm:$0xf] %vm8435, %v9624
        %9653 = vst.msk [vmem:[#allocation5 + $0x48] sm:$0xf] %vm8435, %v9628
        %9654 = vst.msk [vmem:[#allocation5 + $0x58] sm:$0xf] %vm8435, %v9632
        %9655 = vst.msk [vmem:[#allocation5 + $0x68] sm:$0xf] %vm8435, %v9636
        %9656 = vst.msk [vmem:[#allocation5 + $0x78] sm:$0xf] %vm8435, %v9640
        %v9657 = vld [vmem:[#allocation5] sm:$0xff]
        %v9658 = vld [vmem:[#allocation5 + $0x8] sm:$0xf]
        %v9659 = vld [vmem:[#allocation5 + $0x10] sm:$0xff]
        %v9660 = vld [vmem:[#allocation5 + $0x18] sm:$0xf]
        %v9661 = vld [vmem:[#allocation5 + $0x20] sm:$0xff]
        %v9662 = vld [vmem:[#allocation5 + $0x28] sm:$0xf]
        %v9663 = vld [vmem:[#allocation5 + $0x30] sm:$0xff]
        %v9664 = vld [vmem:[#allocation5 + $0x38] sm:$0xf]
        %v9665 = vld [vmem:[#allocation5 + $0x40] sm:$0xff]
        %v9666 = vld [vmem:[#allocation5 + $0x48] sm:$0xf]
        %v9667 = vld [vmem:[#allocation5 + $0x50] sm:$0xff]
        %v9668 = vld [vmem:[#allocation5 + $0x58] sm:$0xf]
        %v9669 = vld [vmem:[#allocation5 + $0x60] sm:$0xff]
        %v9670 = vld [vmem:[#allocation5 + $0x68] sm:$0xf]
        %v9671 = vld [vmem:[#allocation5 + $0x70] sm:$0xff]
        %v9672 = vld [vmem:[#allocation5 + $0x78] sm:$0xf]
        %v9673 = vld [vmem:[%s21] sm:$0xf]
        %v9674 = vld [vmem:[%s21 + $0x4] sm:$0xf]
        %v9675 = vld [vmem:[%s21 + $0x8] sm:$0xf]
        %v9676 = vld [vmem:[%s21 + $0xc] sm:$0xf]
        %v9677 = vld [vmem:[%s21 + $0x10] sm:$0xf]
        %v9678 = vld [vmem:[%s21 + $0x14] sm:$0xf]
        %v9679 = vld [vmem:[%s21 + $0x18] sm:$0xf]
        %v9680 = vld [vmem:[%s21 + $0x1c] sm:$0xf]
        %v9681 = vld [vmem:[%s21 + $0x20] sm:$0xf]
        %v9682 = vld [vmem:[%s21 + $0x24] sm:$0xf]
        %v9683 = vld [vmem:[%s21 + $0x28] sm:$0xf]
        %v9684 = vld [vmem:[%s21 + $0x2c] sm:$0xf]
        %v9685 = vld [vmem:[%s21 + $0x30] sm:$0xf]
        %v9686 = vld [vmem:[%s21 + $0x34] sm:$0xf]
        %v9687 = vld [vmem:[%s21 + $0x38] sm:$0xf]
        %v9688 = vld [vmem:[%s21 + $0x3c] sm:$0xf]
        %v9689 = vld [vmem:[%s21 + $0x40] sm:$0xf]
        %v9690 = vld [vmem:[%s21 + $0x44] sm:$0xf]
        %v9691 = vld [vmem:[%s21 + $0x48] sm:$0xf]
        %v9692 = vld [vmem:[%s21 + $0x4c] sm:$0xf]
        %v9693 = vld [vmem:[%s21 + $0x50] sm:$0xf]
        %v9694 = vld [vmem:[%s21 + $0x54] sm:$0xf]
        %v9695 = vld [vmem:[%s21 + $0x58] sm:$0xf]
        %v9696 = vld [vmem:[%s21 + $0x5c] sm:$0xf]
        %v9697 = vld [vmem:[%s21 + $0x60] sm:$0xf]
        %v9698 = vld [vmem:[%s21 + $0x64] sm:$0xf]
        %v9699 = vld [vmem:[%s21 + $0x68] sm:$0xf]
        %v9700 = vld [vmem:[%s21 + $0x6c] sm:$0xf]
        %v9701 = vld [vmem:[%s21 + $0x70] sm:$0xf]
        %v9702 = vld [vmem:[%s21 + $0x74] sm:$0xf]
        %v9703 = vld [vmem:[%s21 + $0x78] sm:$0xf]
        %v9704 = vld [vmem:[%s21 + $0x7c] sm:$0xf]
        %v9705 = vld [vmem:[%s21 + $0x80] sm:$0xf]
        %v9706 = vld [vmem:[%s21 + $0x84] sm:$0xf]
        %v9707 = vld [vmem:[%s21 + $0x88] sm:$0xf]
        %v9708 = vld [vmem:[%s21 + $0x8c] sm:$0xf]
        %v9725 = vunpack.c.l.b16 %v9657
        %v9726 = vunpack.c.h.b16 %v9657
        %v9727 = vunpack.c.l.b16 %v9658
        %v9728 = vunpack.c.l.b16 %v9659
        %v9729 = vunpack.c.h.b16 %v9659
        %v9730 = vunpack.c.l.b16 %v9660
        %v9731 = vunpack.c.l.b16 %v9661
        %v9732 = vunpack.c.h.b16 %v9661
        %v9733 = vunpack.c.l.b16 %v9662
        %v9734 = vunpack.c.l.b16 %v9663
        %v9735 = vunpack.c.h.b16 %v9663
        %v9736 = vunpack.c.l.b16 %v9664
        %v9737 = vunpack.c.l.b16 %v9665
        %v9738 = vunpack.c.h.b16 %v9665
        %v9739 = vunpack.c.l.b16 %v9666
        %v9740 = vunpack.c.l.b16 %v9667
        %v9741 = vunpack.c.h.b16 %v9667
        %v9742 = vunpack.c.l.b16 %v9668
        %v9743 = vunpack.c.l.b16 %v9669
        %v9744 = vunpack.c.h.b16 %v9669
        %v9745 = vunpack.c.l.b16 %v9670
        %v9746 = vunpack.c.l.b16 %v9671
        %v9747 = vunpack.c.h.b16 %v9671
        %v9748 = vunpack.c.l.b16 %v9672
        %v9749 = vpack.c.b16 %v9728, %v9725
        %v9750 = vpack.c.b16 %v9729, %v9726
        %v9751 = vpack.c.b16 %v9730, %v9727
        %v9752 = vpack.c.b16 %v9734, %v9731
        %v9753 = vpack.c.b16 %v9735, %v9732
        %v9754 = vpack.c.b16 %v9736, %v9733
        %v9755 = vpack.c.b16 %v9740, %v9737
        %v9756 = vpack.c.b16 %v9741, %v9738
        %v9757 = vpack.c.b16 %v9742, %v9739
        %v9758 = vpack.c.b16 %v9746, %v9743
        %v9759 = vpack.c.b16 %v9747, %v9744
        %v9760 = vpack.c.b16 %v9748, %v9745
        %v9805 = vunpack.c.l.b16 %v9673
        %v9806 = vunpack.c.l.b16 %v9674
        %v9807 = vunpack.c.l.b16 %v9675
        %v9808 = vunpack.c.l.b16 %v9676
        %v9809 = vunpack.c.l.b16 %v9677
        %v9810 = vunpack.c.l.b16 %v9678
        %v9811 = vunpack.c.l.b16 %v9679
        %v9812 = vunpack.c.l.b16 %v9680
        %v9813 = vunpack.c.l.b16 %v9681
        %v9814 = vunpack.c.l.b16 %v9682
        %v9815 = vunpack.c.l.b16 %v9683
        %v9816 = vunpack.c.l.b16 %v9684
        %v9817 = vunpack.c.l.b16 %v9685
        %v9818 = vunpack.c.l.b16 %v9686
        %v9819 = vunpack.c.l.b16 %v9687
        %v9820 = vunpack.c.l.b16 %v9688
        %v9821 = vunpack.c.l.b16 %v9689
        %v9822 = vunpack.c.l.b16 %v9690
        %v9823 = vunpack.c.l.b16 %v9691
        %v9824 = vunpack.c.l.b16 %v9692
        %v9825 = vunpack.c.l.b16 %v9693
        %v9826 = vunpack.c.l.b16 %v9694
        %v9827 = vunpack.c.l.b16 %v9695
        %v9828 = vunpack.c.l.b16 %v9696
        %v9829 = vunpack.c.l.b16 %v9697
        %v9830 = vunpack.c.l.b16 %v9698
        %v9831 = vunpack.c.l.b16 %v9699
        %v9832 = vunpack.c.l.b16 %v9700
        %v9833 = vunpack.c.l.b16 %v9701
        %v9834 = vunpack.c.l.b16 %v9702
        %v9835 = vunpack.c.l.b16 %v9703
        %v9836 = vunpack.c.l.b16 %v9704
        %v9837 = vunpack.c.l.b16 %v9705
        %v9838 = vunpack.c.l.b16 %v9706
        %v9839 = vunpack.c.l.b16 %v9707
        %v9840 = vunpack.c.l.b16 %v9708
        %v9841 = vpack.c.b16 %v9806, %v9805
        %v9842 = vpack.c.b16 %v9808, %v9807
        %v9843 = vpack.c.b16 %v9810, %v9809
        %v9844 = vpack.c.b16 %v9812, %v9811
        %v9845 = vpack.c.b16 %v9814, %v9813
        %v9846 = vpack.c.b16 %v9816, %v9815
        %v9847 = vpack.c.b16 %v9818, %v9817
        %v9848 = vpack.c.b16 %v9820, %v9819
        %v9849 = vpack.c.b16 %v9822, %v9821
        %v9850 = vpack.c.b16 %v9824, %v9823
        %v9851 = vpack.c.b16 %v9826, %v9825
        %v9852 = vpack.c.b16 %v9828, %v9827
        %v9853 = vpack.c.b16 %v9830, %v9829
        %v9854 = vpack.c.b16 %v9832, %v9831
        %v9855 = vpack.c.b16 %v9834, %v9833
        %v9856 = vpack.c.b16 %v9836, %v9835
        %v9857 = vpack.c.b16 %v9838, %v9837
        %v9858 = vpack.c.b16 %v9840, %v9839
        %vm9877 = vcmask 261120
        %v9879 = vsel %vm9877, %v9751, 0
        %v9882 = vsel %vm9877, %v9754, 0
        %v9885 = vsel %vm9877, %v9757, 0
        %v9888 = vsel %vm9877, %v9760, 0
        %9890 = vmatpush.bf16.msra.mxu0 %v9848
        %9891 = vmatpush.bf16.msra.mxu0 %v9847
        %9892 = vmatpush.bf16.msra.mxu0 %v9846
        %9893 = vmatpush.bf16.msra.mxu0 %v9845
        %9894 = vmatpush.bf16.msra.mxu0 %v9844
        %9895 = vmatpush.bf16.msra.mxu0 %v9843
        %9896 = vmatpush.bf16.msra.mxu0 %v9842
        %9897 = vmatpush.bf16.msra.mxu0 %v9841
        %9898 = vmatmul.bf16.gmra.mxu0 %v9749
        %v9899 = vpop.f32.mrf.mxu0
        %v9900 = vadd.f32 0.0, %v9899
        %v9901 = vpop.f32.mrf.mxu0
        %v9902 = vadd.f32 0.0, %v9901
        %9903 = vmatmul.bf16.gmra.mxu0 %v9752
        %v9904 = vpop.f32.mrf.mxu0
        %v9905 = vadd.f32 0.0, %v9904
        %v9906 = vpop.f32.mrf.mxu0
        %v9907 = vadd.f32 0.0, %v9906
        %9908 = vmatmul.bf16.gmra.mxu0 %v9755
        %v9909 = vpop.f32.mrf.mxu0
        %v9910 = vadd.f32 0.0, %v9909
        %v9911 = vpop.f32.mrf.mxu0
        %v9912 = vadd.f32 0.0, %v9911
        %9913 = vmatmul.bf16.gmra.mxu0 %v9758
        %v9914 = vpop.f32.mrf.mxu0
        %v9915 = vadd.f32 0.0, %v9914
        %v9916 = vpop.f32.mrf.mxu0
        %v9917 = vadd.f32 0.0, %v9916
        %9918 = vdwg.mxu0
        %9919 = vmatpush.bf16.msra.mxu0 %v9856
        %9920 = vmatpush.bf16.msra.mxu0 %v9855
        %9921 = vmatpush.bf16.msra.mxu0 %v9854
        %9922 = vmatpush.bf16.msra.mxu0 %v9853
        %9923 = vmatpush.bf16.msra.mxu0 %v9852
        %9924 = vmatpush.bf16.msra.mxu0 %v9851
        %9925 = vmatpush.bf16.msra.mxu0 %v9850
        %9926 = vmatpush.bf16.msra.mxu0 %v9849
        %9927 = vmatmul.bf16.gmra.mxu0 %v9750
        %v9928 = vpop.f32.mrf.mxu0
        %v9929 = vadd.f32 %v9900, %v9928
        %v9930 = vpop.f32.mrf.mxu0
        %v9931 = vadd.f32 %v9902, %v9930
        %9932 = vmatmul.bf16.gmra.mxu0 %v9753
        %v9933 = vpop.f32.mrf.mxu0
        %v9934 = vadd.f32 %v9905, %v9933
        %v9935 = vpop.f32.mrf.mxu0
        %v9936 = vadd.f32 %v9907, %v9935
        %9937 = vmatmul.bf16.gmra.mxu0 %v9756
        %v9938 = vpop.f32.mrf.mxu0
        %v9939 = vadd.f32 %v9910, %v9938
        %v9940 = vpop.f32.mrf.mxu0
        %v9941 = vadd.f32 %v9912, %v9940
        %9942 = vmatmul.bf16.gmra.mxu0 %v9759
        %v9943 = vpop.f32.mrf.mxu0
        %v9944 = vadd.f32 %v9915, %v9943
        %v9945 = vpop.f32.mrf.mxu0
        %v9946 = vadd.f32 %v9917, %v9945
        %9947 = vdwg.mxu0
        %9948 = vmatpush.bf16.msra.mxu0 0
        %9949 = vmatpush.bf16.msra.mxu0 0
        %9950 = vmatpush.bf16.msra.mxu0 0
        %9951 = vmatpush.bf16.msra.mxu0 0
        %9952 = vmatpush.bf16.msra.mxu0 0
        %9953 = vmatpush.bf16.msra.mxu0 0
        %9954 = vmatpush.bf16.msra.mxu0 %v9858
        %9955 = vmatpush.bf16.msra.mxu0 %v9857
        %9956 = vmatmul.bf16.gmra.mxu0 %v9879
        %v9957 = vpop.f32.mrf.mxu0
        %v9958 = vadd.f32 %v9929, %v9957
        %v9959 = vpop.f32.mrf.mxu0
        %v9960 = vadd.f32 %v9931, %v9959
        %9961 = vmatmul.bf16.gmra.mxu0 %v9882
        %v9962 = vpop.f32.mrf.mxu0
        %v9963 = vadd.f32 %v9934, %v9962
        %v9964 = vpop.f32.mrf.mxu0
        %v9965 = vadd.f32 %v9936, %v9964
        %9966 = vmatmul.bf16.gmra.mxu0 %v9885
        %v9967 = vpop.f32.mrf.mxu0
        %v9968 = vadd.f32 %v9939, %v9967
        %v9969 = vpop.f32.mrf.mxu0
        %v9970 = vadd.f32 %v9941, %v9969
        %9971 = vmatmul.bf16.gmra.mxu0 %v9888
        %v9972 = vpop.f32.mrf.mxu0
        %v9973 = vadd.f32 %v9944, %v9972
        %v9974 = vpop.f32.mrf.mxu0
        %v9975 = vadd.f32 %v9946, %v9974
        %9976 = vdwg.mxu0
        %v9977 = vld [vmem:[#allocation33] sm:$0x1]
        %v9979 = vperm.slane %v9977, 0
        %v9981 = vmul.f32 %v9958, %v9979
        %v9982 = vmul.f32 %v9960, %v9979
        %v9983 = vmul.f32 %v9963, %v9979
        %v9984 = vmul.f32 %v9965, %v9979
        %v9985 = vmul.f32 %v9968, %v9979
        %v9986 = vmul.f32 %v9970, %v9979
        %v9987 = vmul.f32 %v9973, %v9979
        %v9988 = vmul.f32 %v9975, %v9979
        %v9989 = vld [vmem:[#allocation35] sm:$0x1]
        %v9991 = vperm.slane %v9989, 0
        %v9993 = vadd.f32 %v9981, %v9991
        %v9994 = vadd.f32 %v9982, %v9991
        %v9995 = vadd.f32 %v9983, %v9991
        %v9996 = vadd.f32 %v9984, %v9991
        %v9997 = vadd.f32 %v9985, %v9991
        %v9998 = vadd.f32 %v9986, %v9991
        %v9999 = vadd.f32 %v9987, %v9991
        %v10000 = vadd.f32 %v9988, %v9991
        %v10001 = vmax.f32 %v9993, 0.0
        %v10002 = vmax.f32 %v9994, 0.0
        %v10003 = vmax.f32 %v9995, 0.0
        %v10004 = vmax.f32 %v9996, 0.0
        %v10005 = vmax.f32 %v9997, 0.0
        %v10006 = vmax.f32 %v9998, 0.0
        %v10007 = vmax.f32 %v9999, 0.0
        %v10008 = vmax.f32 %v10000, 0.0
        %v10009 = vpack.c.bf16 %v10002, %v10001
        %v10010 = vpack.c.bf16 %v10004, %v10003
        %v10011 = vpack.c.bf16 %v10006, %v10005
        %v10012 = vpack.c.bf16 %v10008, %v10007
        %v10013 = vld [vmem:[%s24] sm:$0xf]
        %v10014 = vld [vmem:[%s24 + $0x4] sm:$0xf]
        %v10017 = vunpack.c.l.b16 %v10013
        %v10018 = vunpack.c.l.b16 %v10014
        %v10019 = vpack.c.b16 %v10018, %v10017
        %v10022 = vsel %vm1186, %v10009, 0
        %v10025 = vsel %vm1186, %v10010, 0
        %v10028 = vsel %vm1186, %v10011, 0
        %v10031 = vsel %vm1186, %v10012, 0
        %10033 = vmatpush.bf16.msra.mxu0 0
        %10034 = vmatpush.bf16.msra.mxu0 0
        %10035 = vmatpush.bf16.msra.mxu0 0
        %10036 = vmatpush.bf16.msra.mxu0 0
        %10037 = vmatpush.bf16.msra.mxu0 0
        %10038 = vmatpush.bf16.msra.mxu0 0
        %10039 = vmatpush.bf16.msra.mxu0 0
        %10040 = vmatpush.bf16.msra.mxu0 %v10019
        %10041 = vmatmul.bf16.gmra.mxu0 %v10022
        %v10042 = vpop.f32.mrf.mxu0
        %v10043 = vadd.f32 0.0, %v10042
        %v10044 = vpop.f32.mrf.mxu0
        %v10045 = vadd.f32 0.0, %v10044
        %10046 = vmatmul.bf16.gmra.mxu0 %v10025
        %v10047 = vpop.f32.mrf.mxu0
        %v10048 = vadd.f32 0.0, %v10047
        %v10049 = vpop.f32.mrf.mxu0
        %v10050 = vadd.f32 0.0, %v10049
        %10051 = vmatmul.bf16.gmra.mxu0 %v10028
        %v10052 = vpop.f32.mrf.mxu0
        %v10053 = vadd.f32 0.0, %v10052
        %v10054 = vpop.f32.mrf.mxu0
        %v10055 = vadd.f32 0.0, %v10054
        %10056 = vmatmul.bf16.gmra.mxu0 %v10031
        %v10057 = vpop.f32.mrf.mxu0
        %v10058 = vadd.f32 0.0, %v10057
        %v10059 = vpop.f32.mrf.mxu0
        %v10060 = vadd.f32 0.0, %v10059
        %10061 = vdwg.mxu0
        %v10062 = vld [vmem:[#allocation36] sm:$0x1]
        %v10064 = vperm.slane %v10062, 0
        %v10066 = vmul.f32 %v10043, %v10064
        %v10067 = vmul.f32 %v10045, %v10064
        %v10068 = vmul.f32 %v10048, %v10064
        %v10069 = vmul.f32 %v10050, %v10064
        %v10070 = vmul.f32 %v10053, %v10064
        %v10071 = vmul.f32 %v10055, %v10064
        %v10072 = vmul.f32 %v10058, %v10064
        %v10073 = vmul.f32 %v10060, %v10064
        %v10074 = vld [vmem:[%s26] sm:$0x1]
        %v10076 = vperm.slane %v10074, 0
        %v10078 = vadd.f32 %v10066, %v10076
        %v10079 = vadd.f32 %v10067, %v10076
        %v10080 = vadd.f32 %v10068, %v10076
        %v10081 = vadd.f32 %v10069, %v10076
        %v10082 = vadd.f32 %v10070, %v10076
        %v10083 = vadd.f32 %v10071, %v10076
        %v10084 = vadd.f32 %v10072, %v10076
        %v10085 = vadd.f32 %v10073, %v10076
        %v10086 = vmax.f32 %v10078, 0.0
        %v10087 = vmax.f32 %v10079, 0.0
        %v10088 = vmax.f32 %v10080, 0.0
        %v10089 = vmax.f32 %v10081, 0.0
        %v10090 = vmax.f32 %v10082, 0.0
        %v10091 = vmax.f32 %v10083, 0.0
        %v10092 = vmax.f32 %v10084, 0.0
        %v10093 = vmax.f32 %v10085, 0.0
        %10094 = vst.msk [vmem:[%s1110] sm:$0xff] %vm1186, %v10086
        %10095 = vst.msk [vmem:[%s1110 + $0x8] sm:$0xff] %vm1186, %v10087
        %10096 = vst.msk [vmem:[%s1110 + $0x10] sm:$0xff] %vm1186, %v10088
        %10097 = vst.msk [vmem:[%s1110 + $0x18] sm:$0xff] %vm1186, %v10089
        %10098 = vst.msk [vmem:[%s1110 + $0x20] sm:$0xff] %vm1186, %v10090
        %10099 = vst.msk [vmem:[%s1110 + $0x28] sm:$0xff] %vm1186, %v10091
        %10100 = vst.msk [vmem:[%s1110 + $0x30] sm:$0xff] %vm1186, %v10092
        %10101 = vst.msk [vmem:[%s1110 + $0x38] sm:$0xff] %vm1186, %v10093
        %s10102 = sand.u32 %s637, 1
        %s10103 = scalar_lea.sflag [#allocation9], %s10102
        %s10104 = sand.u32 %s637, 1
        %s10105 = smul.addr %s10104, 64
        %s10106 = scalar_lea.vmem [#allocation38], %s10105
        // Predicated region
        $region205: #{_lambda_.1} parent=127 // pred_check
          %p10107 = pneg %p647
        $region206: #{_lambda_.1} parent=127 // pred_check_branch
          %10109 = sbr.rel (%p10107) target = $region208
        $region207: #{_lambda_.1} parent=127 // pred_region
          %10111 = vsyncadd %s10103, 0
          %s10112 = smul.addr %s52, 8
          %s10113 = smul.addr %s10112, 8
          %s10114 = scalar_lea.hbm %s27, %s10113
          %s10115 = sshll.u32 %s10106, 4
          %s10116 = int_to_ptr.vmem [resolvable:$true] %s10115
          %s10117 = sshll.u32 %s10114, 4
          %s10118 = int_to_ptr.hbm [resolvable:$true] %s10117
          %10123 = dma.vmem_to_hbm [thread:$0]  %s10116, 1024, %s10118, %s10103, 128, 128, 8
        $region208: #{_lambda_.1} parent=127 // pred_fallthru
          _
      $region128: #{_lambda_.1} parent=5 // pred_fallthru
        _
      %p10124 = scmp.le.s32.totalorder 2, %s47
      // Predicated region
      $region209: #{_lambda_.1} parent=5 // pred_check
        %p10125 = pneg %p10124
      $region210: #{_lambda_.1} parent=5 // pred_check_branch
        %10127 = sbr.rel (%p10125) target = $region212
      $region211: #{_lambda_.1} parent=5 // pred_region
        %s10128 = ssub.s32 %s47, 2
        // Predicated region
        $region213: #{_lambda_.1} parent=211 // pred_check
          %p10129 = pneg %p653
        $region214: #{_lambda_.1} parent=211 // pred_check_branch
          %10131 = sbr.rel (%p10129) target = $region216
        $region215: #{_lambda_.1} parent=211 // pred_region
          %s10132 = sand.u32 %s638, 1
          %s10133 = scalar_lea.sflag [#allocation9], %s10132
          %s10134 = sand.u32 %s638, 1
          %s10135 = smul.addr %s10134, 64
          %s10136 = scalar_lea.vmem [#allocation38], %s10135
          %10138 = dma.done %s10133, 1024
        $region216: #{_lambda_.1} parent=211 // pred_fallthru
          _
      $region212: #{_lambda_.1} parent=5 // pred_fallthru
        _
    $region6: #{_lambda_.1} parent=1 // loop_footer
      %s51 = sadd.s32 1, %s47
    $region7: #{_lambda_.1} parent=1 // loop_footer_branch
      %46 = sbr.rel target = $region3
    $region8: #{_lambda_.1} parent=1 // loop_exit
      _
    %10139 = vsyncpa [#allocation8], 1
    %s10140 = scalar_lea.sflag [#allocation8], 1
    %10141 = vsyncpa %s10140, 1
    %10142 = vsyncpa [#allocation13], 1
    %10143 = vsyncpa [#allocation16], 1
    %10144 = vsyncpa [#allocation19], 1
    %10145 = vsyncpa [#allocation22], 1
    %10146 = vsyncpa [#allocation25], 1
    %10147 = vsyncpa [#allocation28], 1
    %10148 = vsyncpa [#allocation31], 1
    %10149 = vsyncpa [#allocation34], 1
    %10150 = vsyncpa [#allocation37], 1
    %10151 = vsyncpa [#allocation9], 1
    %s10152 = scalar_lea.sflag [#allocation9], 1
    %10153 = vsyncpa %s10152, 1
    %10154 = vsyncpa [#allocation10], 1
    %s10155 = scalar_lea.sflag [#allocation10], 1
    %10156 = vsyncpa %s10155, 1

</llo_original>
